<compile_context>
chip_gen: v5e
topology: v5e:2x2
jax: 0.10.0
libtpu: 0.0.40
codegen_flags: <defaults>
</compile_context>

<pallas_src>
import jax
import jax.numpy as jnp
from jax.experimental import pallas as pl
from jax.experimental.pallas import tpu as pltpu

IN_CH = 3        # in_channels
MID_CH = 64      # DoubleConv output channels
SEG_CH = 32      # out_conv1 / out_conv2 output channels
CAT_CH = MID_CH + 2 * SEG_CH   # 128
OUT_CH = 5       # out_put_channels
OUT_PAD = 128    # lane-dense padded output channels
SE_RED = 16
SE_HID = CAT_CH // SE_RED      # 8
K1_PAD = 32                    # 27 conv1 taps + ones column, padded to 32 lanes
K2 = 9 * MID_CH                # 576: conv2 contraction depth (9 taps x 64)


def _round_up(x, m):
    return ((x + m - 1) // m) * m


# ----------------------------------------------------------------------------
# Pallas kernel factory: full forward for one batch element.
# ----------------------------------------------------------------------------
def _make_kernel(H, W, pad_off):
    HW = H * W
    taps = [(dh, dw) for dh in (-1, 0, 1) for dw in (-1, 0, 1)]

    def kernel(xc_ref, cmask_ref, w1_ref, w2_ref, wm_ref, wo12_ref,
               wse1_ref, wse2_ref, wop_ref, bias_ref,
               o_ref, pad_ref, acc_ref):
        cdt = pad_ref.dtype                      # bf16 MXU operand dtype

        # ---- DoubleConv / conv1: single (HW,32)@(32,64) matmul; BN scale and
        #      bias are folded into the host-built weights / ones column.
        h1 = jnp.maximum(
            jnp.dot(xc_ref[0], w1_ref[...],
                    preferred_element_type=jnp.float32), 0.0)     # (HW,64) f32

        # ---- stage h1 into a row-padded flat buffer.  Only two aligned,
        #      contiguous guard slabs are zeroed (EVERY step: scratch is
        #      uninitialized and per-core under "parallel" sharding); the
        #      interior write is one aligned contiguous slab.
        total = pad_ref.shape[0]
        pad_ref[0:pad_off, :] = jnp.zeros((pad_off, MID_CH), cdt)
        pad_ref[pad_off + HW:total, :] = jnp.zeros(
            (total - pad_off - HW, MID_CH), cdt)
        pad_ref[pad_off:pad_off + HW, :] = h1.astype(cdt)

        mask_l = cmask_ref[:, 0:1]               # 0 where col == 0   (dw=-1)
        mask_r = cmask_ref[:, 1:2]               # 0 where col == W-1 (dw=+1)

        # ---- DoubleConv / conv2: 9 accumulating (HW,64)@(64,64) matmuls over
        #      shifted views of the staged buffer (no im2col materialization).
        #      Row-out-of-range reads land in the zero guards; column wrap
        #      rows are zeroed by the edge masks.
        for t, (dh, dw) in enumerate(taps):
            start = pad_off + dh * W + dw        # static Python int
            tap = pad_ref[start:start + HW, :]   # (HW,64) bf16 view/load
            if dw == -1:
                tap = tap * mask_l
            elif dw == 1:
                tap = tap * mask_r
            contrib = jnp.dot(tap, w2_ref[t * MID_CH:(t + 1) * MID_CH, :],
                              preferred_element_type=jnp.float32)
            if t == 0:
                acc_ref[...] = contrib
            else:
                acc_ref[...] += contrib
        x_feat = jnp.maximum(acc_ref[...] + bias_ref[0:1, :MID_CH], 0.0)
        x_feat_b = x_feat.astype(cdt)            # single bf16 cast, reused

        # ---- model1|model2 (1x1 conv + ReLU) fused into one (64,128) matmul,
        #      then out_conv1|out_conv2 as one block-diagonal (128,64) matmul.
        hidden = jnp.maximum(
            jnp.dot(x_feat_b, wm_ref[...],
                    preferred_element_type=jnp.float32)
            + bias_ref[1:2, :], 0.0)                              # (HW,128)
        seg12 = (jnp.dot(hidden.astype(cdt), wo12_ref[...],
                         preferred_element_type=jnp.float32)
                 + bias_ref[2:3, :2 * SEG_CH])                    # (HW,64)
        seg12_b = seg12.astype(cdt)              # single bf16 cast, reused

        # ---- SE block over the implicit concat [x_feat | seg1 | seg2].
        #      Single pooled row, f32 FCs (tiny; one MXU fill/drain each).
        pooled = jnp.concatenate(
            [jnp.mean(x_feat, axis=0, keepdims=True),
             jnp.mean(seg12, axis=0, keepdims=True)], axis=1)     # (1,128) f32
        z = jnp.maximum(
            jnp.dot(pooled, wse1_ref[...],
                    preferred_element_type=jnp.float32)
            + bias_ref[3:4, :SE_HID], 0.0)                        # (1,8)
        gate = jax.nn.sigmoid(
            jnp.dot(z, wse2_ref[...], preferred_element_type=jnp.float32)
            + bias_ref[4:5, :])                                   # (1,128) f32

        # ---- SE gate applied to the final-conv WEIGHT rows (not the HW-sized
        #      activations).  diag(gate) is built with iotas (no lane->sublane
        #      relayout of the gate row) and folded into wop with one tiny
        #      128x128x128 MXU pass.
        ii = jax.lax.broadcasted_iota(jnp.int32, (CAT_CH, CAT_CH), 0)
        jj = jax.lax.broadcasted_iota(jnp.int32, (CAT_CH, CAT_CH), 1)
        gdiag = jnp.where(ii == jj, gate, 0.0)                    # (128,128)
        wop_g = jnp.dot(gdiag, wop_ref[...],
                        preferred_element_type=jnp.float32).astype(cdt)

        # ---- final 1x1 conv without materializing the (HW,128) concat;
        #      output channels padded to 128 -> lane-dense bf16 store.
        out = (jnp.dot(x_feat_b, wop_g[:MID_CH, :],
                       preferred_element_type=jnp.float32)
               + jnp.dot(seg12_b, wop_g[MID_CH:, :],
                         preferred_element_type=jnp.float32)
               + bias_ref[5:6, :])                                # (HW,128) f32
        o_ref[0] = out.astype(o_ref.dtype)

    return kernel


# ----------------------------------------------------------------------------
# Host-side preparation: im2col slab for conv1, edge masks, packed weights.
# ----------------------------------------------------------------------------
def _im2col_3x3(x_nhwc):
    """27 shifted taps + a ones column (carries the folded conv1 BN bias),
    padded to K1_PAD lanes, built directly in bf16, flattened to (N,HW,32)."""
    N, H, W, C = x_nhwc.shape
    xp = jnp.pad(x_nhwc, ((0, 0), (1, 1), (1, 1), (0, 0))).astype(jnp.bfloat16)
    taps = [xp[:, kh:kh + H, kw:kw + W, :]
            for kh in range(3) for kw in range(3)]
    ones = jnp.ones((N, H, W, 1), jnp.bfloat16)
    zpad = jnp.zeros((N, H, W, K1_PAD - 9 * C - 1), jnp.bfloat16)
    cols = jnp.concatenate(taps + [ones, zpad], axis=-1)          # (N,H,W,32)
    return cols.reshape(N, H * W, K1_PAD)


def _edge_masks(H, W):
    """(HW,2) bf16: col0 zero where image col==0, col1 zero where col==W-1."""
    c = jnp.arange(H * W, dtype=jnp.int32) % W
    ml = (c != 0).astype(jnp.bfloat16)
    mr = (c != W - 1).astype(jnp.bfloat16)
    return jnp.stack([ml, mr], axis=1)


def pack_params(p):
    """Fold BN into conv weights, fuse the two branches, pad the final conv to
    128 output lanes, pack all small bias vectors into one (8,128) array."""
    f32, bf16 = jnp.float32, jnp.bfloat16
    # conv1: BN scale into weight columns, BN bias into the ones-column row.
    w1 = p['w1'].reshape(9 * IN_CH, MID_CH) * p['s1'][None, :]
    w1p = jnp.zeros((K1_PAD, MID_CH), f32)
    w1p = w1p.at[:9 * IN_CH, :].set(w1).at[9 * IN_CH, :].set(p['b1'])
    # conv2: BN scale into weight columns; tap-major (576,64) layout.
    w2p = (p['w2'] * p['s2'][None, None, None, :]).reshape(K2, MID_CH)
    # fused branch weights.
    wm = jnp.concatenate([p['wm1'], p['wm2']], axis=1)            # (64,128)
    wo12 = jnp.zeros((2 * MID_CH, 2 * SEG_CH), f32)
    wo12 = wo12.at[:MID_CH, :SEG_CH].set(p['wo1'])
    wo12 = wo12.at[MID_CH:, SEG_CH:].set(p['wo2'])
    # final conv padded to 128 output channels (kept f32; gated in-kernel).
    wop = jnp.zeros((CAT_CH, OUT_PAD), f32).at[:, :OUT_CH].set(p['wo'])
    # all small biases packed into one (8,128) f32 array.
    bias = jnp.zeros((8, 128), f32)
    bias = bias.at[0, :MID_CH].set(p['b2'])
    bias = bias.at[1, :].set(jnp.concatenate([p['bm1'], p['bm2']]))
    bias = bias.at[2, :2 * SEG_CH].set(jnp.concatenate([p['bo1'], p['bo2']]))
    bias = bias.at[3, :SE_HID].set(p['bse1'])
    bias = bias.at[4, :].set(p['bse2'])
    bias = bias.at[5, :OUT_CH].set(p['bo'])
    return [w1p.astype(bf16), w2p.astype(bf16), wm.astype(bf16),
            wo12.astype(bf16), p['wse1'].astype(f32), p['wse2'].astype(f32),
            wop, bias]


# ----------------------------------------------------------------------------
# Host wrapper
# ----------------------------------------------------------------------------
def psp_fusion2(x_nchw, params):
    # layout: NCHW in (PyTorch convention) -> NHWC / (HW, C) slabs in-kernel.
    x = jnp.transpose(x_nchw, (0, 2, 3, 1)).astype(jnp.float32)
    N, H, W, _ = x.shape
    HW = H * W
    x_cols = _im2col_3x3(x)                                       # (N,HW,32) bf16
    consts = [_edge_masks(H, W)] + pack_params(params)

    pad_off = _round_up(W + 1, 16)            # bf16 sublane-pack aligned
    pad_total = pad_off + HW + _round_up(W + 1, 16)
    kernel = _make_kernel(H, W, pad_off)

    def full_spec(a):
        nd = a.ndim
        return pl.BlockSpec(a.shape, lambda n, nd=nd: (0,) * nd)

    in_specs = [pl.BlockSpec((1, HW, K1_PAD), lambda n: (n, 0, 0))]
    in_specs += [full_spec(c) for c in consts]

    out = pl.pallas_call(
        kernel,
        grid=(N,),
        in_specs=in_specs,
        out_specs=pl.BlockSpec((1, HW, OUT_PAD), lambda n: (n, 0, 0)),
        out_shape=jax.ShapeDtypeStruct((N, HW, OUT_PAD), jnp.bfloat16),
        scratch_shapes=[
            pltpu.VMEM((pad_total, MID_CH), jnp.bfloat16),        # staged h1
            pltpu.VMEM((HW, MID_CH), jnp.float32),                # conv2 acc
        ],
        compiler_params=pltpu.CompilerParams(
            dimension_semantics=("parallel",),
            vmem_limit_bytes=32 * 1024 * 1024),
    )(x_cols, *consts)

    # slice away the lane padding and return NCHW like the PyTorch module.
    # TODO(synk): fold this slice/transpose into the consumer at real sizes.
    out = out.reshape(N, H, W, OUT_PAD)[..., :OUT_CH].astype(jnp.float32)
    return jnp.transpose(out, (0, 3, 1, 2))


# ----------------------------------------------------------------------------
# Deterministic parameter construction (synthetic, not a checkpoint load).
# ----------------------------------------------------------------------------
def _bn_fold(c, phase):
    i = jnp.arange(c, dtype=jnp.float32)
    gamma = 1.0 + 0.1 * jnp.sin(i / 7.0 + phase)
    beta = 0.05 * jnp.cos(i / 5.0 + phase)
    mean = 0.02 * jnp.sin(i / 3.0 + phase)
    var = 1.0 + 0.1 * jnp.cos(i / 11.0 + phase) ** 2
    scale = gamma / jnp.sqrt(var + 1e-5)
    bias = beta - mean * scale
    return scale, bias


def init_params(key):
    ks = jax.random.split(key, 12)

    def norm(k, shape, scale=0.1):
        return jax.random.normal(k, shape, jnp.float32) * scale

    p = {}
    # DoubleConv (conv weights stored HWIO; BN folded into scale/bias)
    p['w1'] = norm(ks[0], (3, 3, IN_CH, MID_CH))
    p['s1'], p['b1'] = _bn_fold(MID_CH, 0.1)
    p['w2'] = norm(ks[1], (3, 3, MID_CH, MID_CH))
    p['s2'], p['b2'] = _bn_fold(MID_CH, 0.7)
    # TODO(synk): model1/model2 are undefined constructor args in the source;
    #             replaced with deterministic 1x1 conv + ReLU placeholders.
    p['wm1'] = norm(ks[2], (MID_CH, MID_CH))
    p['bm1'] = norm(ks[3], (MID_CH,), 0.05)
    p['wm2'] = norm(ks[4], (MID_CH, MID_CH))
    p['bm2'] = norm(ks[5], (MID_CH,), 0.05)
    # out_conv1 / out_conv2: 1x1 conv (64->32)
    p['wo1'] = norm(ks[6], (MID_CH, SEG_CH))
    p['bo1'] = norm(ks[7], (SEG_CH,), 0.05)
    p['wo2'] = norm(ks[8], (MID_CH, SEG_CH))
    p['bo2'] = norm(ks[9], (SEG_CH,), 0.05)
    # SE block FCs (128 -> 8 -> 128)
    p['wse1'] = norm(ks[10], (CAT_CH, SE_HID), 0.2)
    p['bse1'] = 0.01 * jnp.ones((SE_HID,), jnp.float32)
    p['wse2'] = norm(ks[11], (SE_HID, CAT_CH), 0.2)
    p['bse2'] = 0.01 * jnp.ones((CAT_CH,), jnp.float32)
    # out_conv: 1x1 conv (128 -> 5)
    p['wo'] = 0.1 * jnp.sin(
        jnp.arange(CAT_CH * OUT_CH, dtype=jnp.float32)).reshape(CAT_CH, OUT_CH)
    p['bo'] = 0.02 * jnp.arange(OUT_CH, dtype=jnp.float32)
    return p


# ----------------------------------------------------------------------------
# Pure-JAX reference (independent f32 code path) for correctness check.
# ----------------------------------------------------------------------------
def ref_forward(x_nchw, p):
    x = jnp.transpose(x_nchw, (0, 2, 3, 1)).astype(jnp.float32)

    def conv3x3_bn_relu(h, w, scale, bias):
        y = jax.lax.conv_general_dilated(
            h, w, (1, 1), 'SAME',
            dimension_numbers=('NHWC', 'HWIO', 'NHWC'))
        return jnp.maximum(y * scale + bias, 0.0)

    h = conv3x3_bn_relu(x, p['w1'], p['s1'], p['b1'])
    h = conv3x3_bn_relu(h, p['w2'], p['s2'], p['b2'])
    seg1 = jnp.maximum(jnp.einsum('nhwc,co->nhwo', h, p['wm1']) + p['bm1'], 0.0)
    seg1 = jnp.einsum('nhwc,co->nhwo', seg1, p['wo1']) + p['bo1']
    seg2 = jnp.maximum(jnp.einsum('nhwc,co->nhwo', h, p['wm2']) + p['bm2'], 0.0)
    seg2 = jnp.einsum('nhwc,co->nhwo', seg2, p['wo2']) + p['bo2']
    res = jnp.concatenate([h, seg1, seg2], axis=-1)
    pooled = res.mean(axis=(1, 2))
    z = jnp.maximum(pooled @ p['wse1'] + p['bse1'], 0.0)
    gate = jax.nn.sigmoid(z @ p['wse2'] + p['bse2'])
    res = res * gate[:, None, None, :]
    out = jnp.einsum('nhwc,co->nhwo', res, p['wo']) + p['bo']
    return jnp.transpose(out, (0, 3, 1, 2))


if __name__ == "__main__":
    key = jax.random.PRNGKey(0)
    pkey, xkey = jax.random.split(key)
    params = init_params(pkey)

    # NCHW input like the PyTorch module: batch=2, channels=3, 16x16 spatial.
    x = jax.random.normal(xkey, (2, IN_CH, 16, 16), jnp.float32)

    out = jax.jit(psp_fusion2)(x, params)
    out = jax.block_until_ready(out)
    assert out.shape == (2, OUT_CH, 16, 16), out.shape

    ref = ref_forward(x, params)
    err = float(jnp.max(jnp.abs(out - ref)))
    # bf16 MXU operands + bf16 output storage, f32 accumulate/epilogue
    # -> loosened tolerance.
    assert jnp.allclose(out, ref, atol=4e-2, rtol=4e-2), f"max abs err {err}"

    print("KERNEL_OK")
</pallas_src>

<mosaic_0001>
module attributes {stable_mosaic.version = 11 : i64} {
  func.func @kernel(%arg0: i32, %arg1: memref<1x256x32xbf16, #tpu.memory_space<vmem>>, %arg2: memref<256x2xbf16, #tpu.memory_space<vmem>>, %arg3: memref<32x64xbf16, #tpu.memory_space<vmem>>, %arg4: memref<576x64xbf16, #tpu.memory_space<vmem>>, %arg5: memref<64x128xbf16, #tpu.memory_space<vmem>>, %arg6: memref<128x64xbf16, #tpu.memory_space<vmem>>, %arg7: memref<128x8xf32, #tpu.memory_space<vmem>>, %arg8: memref<8x128xf32, #tpu.memory_space<vmem>>, %arg9: memref<128x128xf32, #tpu.memory_space<vmem>>, %arg10: memref<8x128xf32, #tpu.memory_space<vmem>>, %arg11: memref<1x256x128xbf16, #tpu.memory_space<vmem>>, %arg12: memref<320x64xbf16, #tpu.memory_space<vmem>>, %arg13: memref<256x64xf32, #tpu.memory_space<vmem>>) attributes {dimension_semantics = [#tpu.dimension_semantics<parallel>], iteration_bounds = array<i64: 2>, scalar_prefetch = 0 : i64, scratch_operands = 2 : i64, tpu.core_type = #tpu.core_type<tc>, window_params = [{transform_indices = @transform_0, window_bounds = array<i64: 1, 256, 32>}, {pipeline_mode = #tpu.pipeline_mode<synchronous>, transform_indices = @transform_1, window_bounds = array<i64: 256, 2>}, {pipeline_mode = #tpu.pipeline_mode<synchronous>, transform_indices = @transform_2, window_bounds = array<i64: 32, 64>}, {pipeline_mode = #tpu.pipeline_mode<synchronous>, transform_indices = @transform_3, window_bounds = array<i64: 576, 64>}, {pipeline_mode = #tpu.pipeline_mode<synchronous>, transform_indices = @transform_4, window_bounds = array<i64: 64, 128>}, {pipeline_mode = #tpu.pipeline_mode<synchronous>, transform_indices = @transform_5, window_bounds = array<i64: 128, 64>}, {pipeline_mode = #tpu.pipeline_mode<synchronous>, transform_indices = @transform_6, window_bounds = array<i64: 128, 8>}, {pipeline_mode = #tpu.pipeline_mode<synchronous>, transform_indices = @transform_7, window_bounds = array<i64: 8, 128>}, {pipeline_mode = #tpu.pipeline_mode<synchronous>, transform_indices = @transform_8, window_bounds = array<i64: 128, 128>}, {pipeline_mode = #tpu.pipeline_mode<synchronous>, transform_indices = @transform_9, window_bounds = array<i64: 8, 128>}, {transform_indices = @transform_10, window_bounds = array<i64: 1, 256, 128>}]} {
    %c0 = arith.constant 0 : index
    %c0_0 = arith.constant 0 : index
    %c0_1 = arith.constant 0 : index
    %0 = vector.load %arg1[%c0, %c0_0, %c0_1] : memref<1x256x32xbf16, #tpu.memory_space<vmem>>, vector<1x256x32xbf16>
    %1 = vector.shape_cast %0 : vector<1x256x32xbf16> to vector<256x32xbf16>
    %c0_2 = arith.constant 0 : index
    %c0_3 = arith.constant 0 : index
    %2 = vector.load %arg3[%c0_2, %c0_3] : memref<32x64xbf16, #tpu.memory_space<vmem>>, vector<32x64xbf16>
    %cst = arith.constant dense<0.000000e+00> : vector<256x64xf32>
    %3 = tpu.matmul %1, %2, %cst {dimension_numbers = #tpu.dot_dimension_numbers<[1], [0], [0], [1], [0, 0, 1, 1], [], []>} : vector<256x32xbf16>, vector<32x64xbf16>, vector<256x64xf32> -> vector<256x64xf32>
    %cst_4 = arith.constant 0.000000e+00 : f32
    %4 = vector.broadcast %cst_4 : f32 to vector<256x64xf32>
    %5 = arith.maximumf %3, %4 : vector<256x64xf32>
    %cst_5 = arith.constant 0.000000e+00 : bf16
    %6 = vector.broadcast %cst_5 : bf16 to vector<32x64xbf16>
    %c0_6 = arith.constant 0 : index
    %c0_7 = arith.constant 0 : index
    %7 = vector.load %arg12[%c0_6, %c0_7] : memref<320x64xbf16, #tpu.memory_space<vmem>>, vector<32x64xbf16>
    tpu.vector_store %arg12[%c0_6, %c0_7], %6 {strides = array<i32>} : memref<320x64xbf16, #tpu.memory_space<vmem>>, vector<32x64xbf16>,
    %cst_8 = arith.constant 0.000000e+00 : bf16
    %8 = vector.broadcast %cst_8 : bf16 to vector<32x64xbf16>
    %c288 = arith.constant 288 : index
    %c0_9 = arith.constant 0 : index
    %9 = vector.load %arg12[%c288, %c0_9] : memref<320x64xbf16, #tpu.memory_space<vmem>>, vector<32x64xbf16>
    tpu.vector_store %arg12[%c288, %c0_9], %8 {strides = array<i32>} : memref<320x64xbf16, #tpu.memory_space<vmem>>, vector<32x64xbf16>,
    %10 = arith.truncf %5 : vector<256x64xf32> to vector<256x64xbf16>
    %c32 = arith.constant 32 : index
    %c0_10 = arith.constant 0 : index
    %11 = vector.load %arg12[%c32, %c0_10] : memref<320x64xbf16, #tpu.memory_space<vmem>>, vector<256x64xbf16>
    tpu.vector_store %arg12[%c32, %c0_10], %10 {strides = array<i32>} : memref<320x64xbf16, #tpu.memory_space<vmem>>, vector<256x64xbf16>,
    %c0_11 = arith.constant 0 : index
    %c0_12 = arith.constant 0 : index
    %12 = vector.load %arg2[%c0_11, %c0_12] : memref<256x2xbf16, #tpu.memory_space<vmem>>, vector<256x1xbf16>
    %c0_13 = arith.constant 0 : index
    %c1 = arith.constant 1 : index
    %13 = vector.load %arg2[%c0_13, %c1] : memref<256x2xbf16, #tpu.memory_space<vmem>>, vector<256x1xbf16>
    %c15 = arith.constant 15 : index
    %c0_14 = arith.constant 0 : index
    %14 = vector.load %arg12[%c15, %c0_14] : memref<320x64xbf16, #tpu.memory_space<vmem>>, vector<256x64xbf16>
    %15 = vector.broadcast %12 : vector<256x1xbf16> to vector<256x64xbf16>
    %16 = arith.mulf %14, %15 : vector<256x64xbf16>
    %c0_15 = arith.constant 0 : index
    %c0_16 = arith.constant 0 : index
    %17 = vector.load %arg4[%c0_15, %c0_16] : memref<576x64xbf16, #tpu.memory_space<vmem>>, vector<64x64xbf16>
    %cst_17 = arith.constant dense<0.000000e+00> : vector<256x64xf32>
    %18 = tpu.matmul %16, %17, %cst_17 {dimension_numbers = #tpu.dot_dimension_numbers<[1], [0], [0], [1], [0, 0, 1, 1], [], []>} : vector<256x64xbf16>, vector<64x64xbf16>, vector<256x64xf32> -> vector<256x64xf32>
    %c0_18 = arith.constant 0 : index
    %c0_19 = arith.constant 0 : index
    %19 = vector.load %arg13[%c0_18, %c0_19] : memref<256x64xf32, #tpu.memory_space<vmem>>, vector<256x64xf32>
    tpu.vector_store %arg13[%c0_18, %c0_19], %18 {strides = array<i32>} : memref<256x64xf32, #tpu.memory_space<vmem>>, vector<256x64xf32>,
    %c16 = arith.constant 16 : index
    %c0_20 = arith.constant 0 : index
    %20 = vector.load %arg12[%c16, %c0_20] : memref<320x64xbf16, #tpu.memory_space<vmem>>, vector<256x64xbf16>
    %c64 = arith.constant 64 : index
    %c0_21 = arith.constant 0 : index
    %21 = vector.load %arg4[%c64, %c0_21] : memref<576x64xbf16, #tpu.memory_space<vmem>>, vector<64x64xbf16>
    %cst_22 = arith.constant dense<0.000000e+00> : vector<256x64xf32>
    %22 = tpu.matmul %20, %21, %cst_22 {dimension_numbers = #tpu.dot_dimension_numbers<[1], [0], [0], [1], [0, 0, 1, 1], [], []>} : vector<256x64xbf16>, vector<64x64xbf16>, vector<256x64xf32> -> vector<256x64xf32>
    %c0_23 = arith.constant 0 : index
    %c0_24 = arith.constant 0 : index
    %23 = vector.load %arg13[%c0_23, %c0_24] : memref<256x64xf32, #tpu.memory_space<vmem>>, vector<256x64xf32>
    %24 = arith.addf %23, %22 : vector<256x64xf32>
    %c0_25 = arith.constant 0 : index
    %c0_26 = arith.constant 0 : index
    %25 = vector.load %arg13[%c0_25, %c0_26] : memref<256x64xf32, #tpu.memory_space<vmem>>, vector<256x64xf32>
    tpu.vector_store %arg13[%c0_25, %c0_26], %24 {strides = array<i32>} : memref<256x64xf32, #tpu.memory_space<vmem>>, vector<256x64xf32>,
    %c17 = arith.constant 17 : index
    %c0_27 = arith.constant 0 : index
    %26 = vector.load %arg12[%c17, %c0_27] : memref<320x64xbf16, #tpu.memory_space<vmem>>, vector<256x64xbf16>
    %27 = vector.broadcast %13 : vector<256x1xbf16> to vector<256x64xbf16>
    %28 = arith.mulf %26, %27 : vector<256x64xbf16>
    %c128 = arith.constant 128 : index
    %c0_28 = arith.constant 0 : index
    %29 = vector.load %arg4[%c128, %c0_28] : memref<576x64xbf16, #tpu.memory_space<vmem>>, vector<64x64xbf16>
    %cst_29 = arith.constant dense<0.000000e+00> : vector<256x64xf32>
    %30 = tpu.matmul %28, %29, %cst_29 {dimension_numbers = #tpu.dot_dimension_numbers<[1], [0], [0], [1], [0, 0, 1, 1], [], []>} : vector<256x64xbf16>, vector<64x64xbf16>, vector<256x64xf32> -> vector<256x64xf32>
    %c0_30 = arith.constant 0 : index
    %c0_31 = arith.constant 0 : index
    %31 = vector.load %arg13[%c0_30, %c0_31] : memref<256x64xf32, #tpu.memory_space<vmem>>, vector<256x64xf32>
    %32 = arith.addf %31, %30 : vector<256x64xf32>
    %c0_32 = arith.constant 0 : index
    %c0_33 = arith.constant 0 : index
    %33 = vector.load %arg13[%c0_32, %c0_33] : memref<256x64xf32, #tpu.memory_space<vmem>>, vector<256x64xf32>
    tpu.vector_store %arg13[%c0_32, %c0_33], %32 {strides = array<i32>} : memref<256x64xf32, #tpu.memory_space<vmem>>, vector<256x64xf32>,
    %c31 = arith.constant 31 : index
    %c0_34 = arith.constant 0 : index
    %34 = vector.load %arg12[%c31, %c0_34] : memref<320x64xbf16, #tpu.memory_space<vmem>>, vector<256x64xbf16>
    %35 = vector.broadcast %12 : vector<256x1xbf16> to vector<256x64xbf16>
    %36 = arith.mulf %34, %35 : vector<256x64xbf16>
    %c192 = arith.constant 192 : index
    %c0_35 = arith.constant 0 : index
    %37 = vector.load %arg4[%c192, %c0_35] : memref<576x64xbf16, #tpu.memory_space<vmem>>, vector<64x64xbf16>
    %cst_36 = arith.constant dense<0.000000e+00> : vector<256x64xf32>
    %38 = tpu.matmul %36, %37, %cst_36 {dimension_numbers = #tpu.dot_dimension_numbers<[1], [0], [0], [1], [0, 0, 1, 1], [], []>} : vector<256x64xbf16>, vector<64x64xbf16>, vector<256x64xf32> -> vector<256x64xf32>
    %c0_37 = arith.constant 0 : index
    %c0_38 = arith.constant 0 : index
    %39 = vector.load %arg13[%c0_37, %c0_38] : memref<256x64xf32, #tpu.memory_space<vmem>>, vector<256x64xf32>
    %40 = arith.addf %39, %38 : vector<256x64xf32>
    %c0_39 = arith.constant 0 : index
    %c0_40 = arith.constant 0 : index
    %41 = vector.load %arg13[%c0_39, %c0_40] : memref<256x64xf32, #tpu.memory_space<vmem>>, vector<256x64xf32>
    tpu.vector_store %arg13[%c0_39, %c0_40], %40 {strides = array<i32>} : memref<256x64xf32, #tpu.memory_space<vmem>>, vector<256x64xf32>,
    %c32_41 = arith.constant 32 : index
    %c0_42 = arith.constant 0 : index
    %42 = vector.load %arg12[%c32_41, %c0_42] : memref<320x64xbf16, #tpu.memory_space<vmem>>, vector<256x64xbf16>
    %c256 = arith.constant 256 : index
    %c0_43 = arith.constant 0 : index
    %43 = vector.load %arg4[%c256, %c0_43] : memref<576x64xbf16, #tpu.memory_space<vmem>>, vector<64x64xbf16>
    %cst_44 = arith.constant dense<0.000000e+00> : vector<256x64xf32>
    %44 = tpu.matmul %42, %43, %cst_44 {dimension_numbers = #tpu.dot_dimension_numbers<[1], [0], [0], [1], [0, 0, 1, 1], [], []>} : vector<256x64xbf16>, vector<64x64xbf16>, vector<256x64xf32> -> vector<256x64xf32>
    %c0_45 = arith.constant 0 : index
    %c0_46 = arith.constant 0 : index
    %45 = vector.load %arg13[%c0_45, %c0_46] : memref<256x64xf32, #tpu.memory_space<vmem>>, vector<256x64xf32>
    %46 = arith.addf %45, %44 : vector<256x64xf32>
    %c0_47 = arith.constant 0 : index
    %c0_48 = arith.constant 0 : index
    %47 = vector.load %arg13[%c0_47, %c0_48] : memref<256x64xf32, #tpu.memory_space<vmem>>, vector<256x64xf32>
    tpu.vector_store %arg13[%c0_47, %c0_48], %46 {strides = array<i32>} : memref<256x64xf32, #tpu.memory_space<vmem>>, vector<256x64xf32>,
    %c33 = arith.constant 33 : index
    %c0_49 = arith.constant 0 : index
    %48 = vector.load %arg12[%c33, %c0_49] : memref<320x64xbf16, #tpu.memory_space<vmem>>, vector<256x64xbf16>
    %49 = vector.broadcast %13 : vector<256x1xbf16> to vector<256x64xbf16>
    %50 = arith.mulf %48, %49 : vector<256x64xbf16>
    %c320 = arith.constant 320 : index
    %c0_50 = arith.constant 0 : index
    %51 = vector.load %arg4[%c320, %c0_50] : memref<576x64xbf16, #tpu.memory_space<vmem>>, vector<64x64xbf16>
    %cst_51 = arith.constant dense<0.000000e+00> : vector<256x64xf32>
    %52 = tpu.matmul %50, %51, %cst_51 {dimension_numbers = #tpu.dot_dimension_numbers<[1], [0], [0], [1], [0, 0, 1, 1], [], []>} : vector<256x64xbf16>, vector<64x64xbf16>, vector<256x64xf32> -> vector<256x64xf32>
    %c0_52 = arith.constant 0 : index
    %c0_53 = arith.constant 0 : index
    %53 = vector.load %arg13[%c0_52, %c0_53] : memref<256x64xf32, #tpu.memory_space<vmem>>, vector<256x64xf32>
    %54 = arith.addf %53, %52 : vector<256x64xf32>
    %c0_54 = arith.constant 0 : index
    %c0_55 = arith.constant 0 : index
    %55 = vector.load %arg13[%c0_54, %c0_55] : memref<256x64xf32, #tpu.memory_space<vmem>>, vector<256x64xf32>
    tpu.vector_store %arg13[%c0_54, %c0_55], %54 {strides = array<i32>} : memref<256x64xf32, #tpu.memory_space<vmem>>, vector<256x64xf32>,
    %c47 = arith.constant 47 : index
    %c0_56 = arith.constant 0 : index
    %56 = vector.load %arg12[%c47, %c0_56] : memref<320x64xbf16, #tpu.memory_space<vmem>>, vector<256x64xbf16>
    %57 = vector.broadcast %12 : vector<256x1xbf16> to vector<256x64xbf16>
    %58 = arith.mulf %56, %57 : vector<256x64xbf16>
    %c384 = arith.constant 384 : index
    %c0_57 = arith.constant 0 : index
    %59 = vector.load %arg4[%c384, %c0_57] : memref<576x64xbf16, #tpu.memory_space<vmem>>, vector<64x64xbf16>
    %cst_58 = arith.constant dense<0.000000e+00> : vector<256x64xf32>
    %60 = tpu.matmul %58, %59, %cst_58 {dimension_numbers = #tpu.dot_dimension_numbers<[1], [0], [0], [1], [0, 0, 1, 1], [], []>} : vector<256x64xbf16>, vector<64x64xbf16>, vector<256x64xf32> -> vector<256x64xf32>
    %c0_59 = arith.constant 0 : index
    %c0_60 = arith.constant 0 : index
    %61 = vector.load %arg13[%c0_59, %c0_60] : memref<256x64xf32, #tpu.memory_space<vmem>>, vector<256x64xf32>
    %62 = arith.addf %61, %60 : vector<256x64xf32>
    %c0_61 = arith.constant 0 : index
    %c0_62 = arith.constant 0 : index
    %63 = vector.load %arg13[%c0_61, %c0_62] : memref<256x64xf32, #tpu.memory_space<vmem>>, vector<256x64xf32>
    tpu.vector_store %arg13[%c0_61, %c0_62], %62 {strides = array<i32>} : memref<256x64xf32, #tpu.memory_space<vmem>>, vector<256x64xf32>,
    %c48 = arith.constant 48 : index
    %c0_63 = arith.constant 0 : index
    %64 = vector.load %arg12[%c48, %c0_63] : memref<320x64xbf16, #tpu.memory_space<vmem>>, vector<256x64xbf16>
    %c448 = arith.constant 448 : index
    %c0_64 = arith.constant 0 : index
    %65 = vector.load %arg4[%c448, %c0_64] : memref<576x64xbf16, #tpu.memory_space<vmem>>, vector<64x64xbf16>
    %cst_65 = arith.constant dense<0.000000e+00> : vector<256x64xf32>
    %66 = tpu.matmul %64, %65, %cst_65 {dimension_numbers = #tpu.dot_dimension_numbers<[1], [0], [0], [1], [0, 0, 1, 1], [], []>} : vector<256x64xbf16>, vector<64x64xbf16>, vector<256x64xf32> -> vector<256x64xf32>
    %c0_66 = arith.constant 0 : index
    %c0_67 = arith.constant 0 : index
    %67 = vector.load %arg13[%c0_66, %c0_67] : memref<256x64xf32, #tpu.memory_space<vmem>>, vector<256x64xf32>
    %68 = arith.addf %67, %66 : vector<256x64xf32>
    %c0_68 = arith.constant 0 : index
    %c0_69 = arith.constant 0 : index
    %69 = vector.load %arg13[%c0_68, %c0_69] : memref<256x64xf32, #tpu.memory_space<vmem>>, vector<256x64xf32>
    tpu.vector_store %arg13[%c0_68, %c0_69], %68 {strides = array<i32>} : memref<256x64xf32, #tpu.memory_space<vmem>>, vector<256x64xf32>,
    %c49 = arith.constant 49 : index
    %c0_70 = arith.constant 0 : index
    %70 = vector.load %arg12[%c49, %c0_70] : memref<320x64xbf16, #tpu.memory_space<vmem>>, vector<256x64xbf16>
    %71 = vector.broadcast %13 : vector<256x1xbf16> to vector<256x64xbf16>
    %72 = arith.mulf %70, %71 : vector<256x64xbf16>
    %c512 = arith.constant 512 : index
    %c0_71 = arith.constant 0 : index
    %73 = vector.load %arg4[%c512, %c0_71] : memref<576x64xbf16, #tpu.memory_space<vmem>>, vector<64x64xbf16>
    %cst_72 = arith.constant dense<0.000000e+00> : vector<256x64xf32>
    %74 = tpu.matmul %72, %73, %cst_72 {dimension_numbers = #tpu.dot_dimension_numbers<[1], [0], [0], [1], [0, 0, 1, 1], [], []>} : vector<256x64xbf16>, vector<64x64xbf16>, vector<256x64xf32> -> vector<256x64xf32>
    %c0_73 = arith.constant 0 : index
    %c0_74 = arith.constant 0 : index
    %75 = vector.load %arg13[%c0_73, %c0_74] : memref<256x64xf32, #tpu.memory_space<vmem>>, vector<256x64xf32>
    %76 = arith.addf %75, %74 : vector<256x64xf32>
    %c0_75 = arith.constant 0 : index
    %c0_76 = arith.constant 0 : index
    %77 = vector.load %arg13[%c0_75, %c0_76] : memref<256x64xf32, #tpu.memory_space<vmem>>, vector<256x64xf32>
    tpu.vector_store %arg13[%c0_75, %c0_76], %76 {strides = array<i32>} : memref<256x64xf32, #tpu.memory_space<vmem>>, vector<256x64xf32>,
    %c0_77 = arith.constant 0 : index
    %c0_78 = arith.constant 0 : index
    %78 = vector.load %arg13[%c0_77, %c0_78] : memref<256x64xf32, #tpu.memory_space<vmem>>, vector<256x64xf32>
    %c0_79 = arith.constant 0 : index
    %c0_80 = arith.constant 0 : index
    %79 = vector.load %arg10[%c0_79, %c0_80] : memref<8x128xf32, #tpu.memory_space<vmem>>, vector<1x64xf32>
    %80 = vector.broadcast %79 : vector<1x64xf32> to vector<256x64xf32>
    %81 = arith.addf %78, %80 : vector<256x64xf32>
    %cst_81 = arith.constant 0.000000e+00 : f32
    %82 = vector.broadcast %cst_81 : f32 to vector<256x64xf32>
    %83 = arith.maximumf %81, %82 : vector<256x64xf32>
    %84 = arith.truncf %83 : vector<256x64xf32> to vector<256x64xbf16>
    %c0_82 = arith.constant 0 : index
    %c0_83 = arith.constant 0 : index
    %85 = vector.load %arg5[%c0_82, %c0_83] : memref<64x128xbf16, #tpu.memory_space<vmem>>, vector<64x128xbf16>
    %cst_84 = arith.constant dense<0.000000e+00> : vector<256x128xf32>
    %86 = tpu.matmul %84, %85, %cst_84 {dimension_numbers = #tpu.dot_dimension_numbers<[1], [0], [0], [1], [0, 0, 1, 1], [], []>} : vector<256x64xbf16>, vector<64x128xbf16>, vector<256x128xf32> -> vector<256x128xf32>
    %c1_85 = arith.constant 1 : index
    %c0_86 = arith.constant 0 : index
    %87 = vector.load %arg10[%c1_85, %c0_86] : memref<8x128xf32, #tpu.memory_space<vmem>>, vector<1x128xf32>
    %88 = vector.broadcast %87 : vector<1x128xf32> to vector<256x128xf32>
    %89 = arith.addf %86, %88 : vector<256x128xf32>
    %cst_87 = arith.constant 0.000000e+00 : f32
    %90 = vector.broadcast %cst_87 : f32 to vector<256x128xf32>
    %91 = arith.maximumf %89, %90 : vector<256x128xf32>
    %92 = arith.truncf %91 : vector<256x128xf32> to vector<256x128xbf16>
    %c0_88 = arith.constant 0 : index
    %c0_89 = arith.constant 0 : index
    %93 = vector.load %arg6[%c0_88, %c0_89] : memref<128x64xbf16, #tpu.memory_space<vmem>>, vector<128x64xbf16>
    %cst_90 = arith.constant dense<0.000000e+00> : vector<256x64xf32>
    %94 = tpu.matmul %92, %93, %cst_90 {dimension_numbers = #tpu.dot_dimension_numbers<[1], [0], [0], [1], [0, 0, 1, 1], [], []>} : vector<256x128xbf16>, vector<128x64xbf16>, vector<256x64xf32> -> vector<256x64xf32>
    %c2 = arith.constant 2 : index
    %c0_91 = arith.constant 0 : index
    %95 = vector.load %arg10[%c2, %c0_91] : memref<8x128xf32, #tpu.memory_space<vmem>>, vector<1x64xf32>
    %96 = vector.broadcast %95 : vector<1x64xf32> to vector<256x64xf32>
    %97 = arith.addf %94, %96 : vector<256x64xf32>
    %98 = arith.truncf %97 : vector<256x64xf32> to vector<256x64xbf16>
    %cst_92 = arith.constant dense<0.000000e+00> : vector<64xf32>
    %99 = vector.multi_reduction <add>, %83, %cst_92 [0] : vector<256x64xf32> to vector<64xf32>
    %100 = vector.shape_cast %99 : vector<64xf32> to vector<1x64xf32>
    %cst_93 = arith.constant 2.560000e+02 : f32
    %101 = vector.broadcast %cst_93 : f32 to vector<1x64xf32>
    %102 = arith.divf %100, %101 : vector<1x64xf32>
    %cst_94 = arith.constant dense<0.000000e+00> : vector<64xf32>
    %103 = vector.multi_reduction <add>, %97, %cst_94 [0] : vector<256x64xf32> to vector<64xf32>
    %104 = vector.shape_cast %103 : vector<64xf32> to vector<1x64xf32>
    %cst_95 = arith.constant 2.560000e+02 : f32
    %105 = vector.broadcast %cst_95 : f32 to vector<1x64xf32>
    %106 = arith.divf %104, %105 : vector<1x64xf32>
    %107 = tpu.concatenate %102, %106 in 1 : vector<1x64xf32>, vector<1x64xf32> -> vector<1x128xf32>
    %c0_96 = arith.constant 0 : index
    %c0_97 = arith.constant 0 : index
    %108 = vector.load %arg7[%c0_96, %c0_97] : memref<128x8xf32, #tpu.memory_space<vmem>>, vector<128x8xf32>
    %cst_98 = arith.constant dense<0.000000e+00> : vector<1x8xf32>
    %109 = tpu.matmul %107, %108, %cst_98 {dimension_numbers = #tpu.dot_dimension_numbers<[1], [0], [0], [1], [0, 0, 1, 1], [], []>} : vector<1x128xf32>, vector<128x8xf32>, vector<1x8xf32> -> vector<1x8xf32>
    %c3 = arith.constant 3 : index
    %c0_99 = arith.constant 0 : index
    %110 = vector.load %arg10[%c3, %c0_99] : memref<8x128xf32, #tpu.memory_space<vmem>>, vector<1x8xf32>
    %111 = arith.addf %109, %110 : vector<1x8xf32>
    %cst_100 = arith.constant 0.000000e+00 : f32
    %112 = vector.broadcast %cst_100 : f32 to vector<1x8xf32>
    %113 = arith.maximumf %111, %112 : vector<1x8xf32>
    %c0_101 = arith.constant 0 : index
    %c0_102 = arith.constant 0 : index
    %114 = vector.load %arg8[%c0_101, %c0_102] : memref<8x128xf32, #tpu.memory_space<vmem>>, vector<8x128xf32>
    %cst_103 = arith.constant dense<0.000000e+00> : vector<1x128xf32>
    %115 = tpu.matmul %113, %114, %cst_103 {dimension_numbers = #tpu.dot_dimension_numbers<[1], [0], [0], [1], [0, 0, 1, 1], [], []>} : vector<1x8xf32>, vector<8x128xf32>, vector<1x128xf32> -> vector<1x128xf32>
    %c4 = arith.constant 4 : index
    %c0_104 = arith.constant 0 : index
    %116 = vector.load %arg10[%c4, %c0_104] : memref<8x128xf32, #tpu.memory_space<vmem>>, vector<1x128xf32>
    %117 = arith.addf %115, %116 : vector<1x128xf32>
    %118 = arith.negf %117 : vector<1x128xf32>
    %119 = math.exp %118 : vector<1x128xf32>
    %cst_105 = arith.constant 1.000000e+00 : f32
    %120 = vector.broadcast %cst_105 : f32 to vector<1x128xf32>
    %121 = arith.addf %120, %119 : vector<1x128xf32>
    %122 = arith.divf %120, %121 : vector<1x128xf32>
    %123 = tpu.iota {dimensions = array<i32: 0>} : vector<128x128xi32>
    %124 = tpu.iota {dimensions = array<i32: 1>} : vector<128x128xi32>
    %125 = arith.cmpi eq, %123, %124 : vector<128x128xi32>
    %cst_106 = arith.constant 0.000000e+00 : f32
    %126 = vector.shape_cast %122 : vector<1x128xf32> to vector<1x128xf32>
    %127 = vector.broadcast %126 : vector<1x128xf32> to vector<128x128xf32>
    %128 = vector.broadcast %cst_106 : f32 to vector<128x128xf32>
    %129 = arith.select %125, %127, %128 : vector<128x128xi1>, vector<128x128xf32>
    %c0_107 = arith.constant 0 : index
    %c0_108 = arith.constant 0 : index
    %130 = vector.load %arg9[%c0_107, %c0_108] : memref<128x128xf32, #tpu.memory_space<vmem>>, vector<128x128xf32>
    %cst_109 = arith.constant dense<0.000000e+00> : vector<128x128xf32>
    %131 = tpu.matmul %129, %130, %cst_109 {dimension_numbers = #tpu.dot_dimension_numbers<[1], [0], [0], [1], [0, 0, 1, 1], [], []>} : vector<128x128xf32>, vector<128x128xf32>, vector<128x128xf32> -> vector<128x128xf32>
    %132 = arith.truncf %131 : vector<128x128xf32> to vector<128x128xbf16>
    %133 = vector.extract_strided_slice %132 {offsets = [0, 0], sizes = [64, 128], strides = [1, 1]} : vector<128x128xbf16> to vector<64x128xbf16>
    %cst_110 = arith.constant dense<0.000000e+00> : vector<256x128xf32>
    %134 = tpu.matmul %84, %133, %cst_110 {dimension_numbers = #tpu.dot_dimension_numbers<[1], [0], [0], [1], [0, 0, 1, 1], [], []>} : vector<256x64xbf16>, vector<64x128xbf16>, vector<256x128xf32> -> vector<256x128xf32>
    %135 = vector.extract_strided_slice %132 {offsets = [64, 0], sizes = [64, 128], strides = [1, 1]} : vector<128x128xbf16> to vector<64x128xbf16>
    %cst_111 = arith.constant dense<0.000000e+00> : vector<256x128xf32>
    %136 = tpu.matmul %98, %135, %cst_111 {dimension_numbers = #tpu.dot_dimension_numbers<[1], [0], [0], [1], [0, 0, 1, 1], [], []>} : vector<256x64xbf16>, vector<64x128xbf16>, vector<256x128xf32> -> vector<256x128xf32>
    %137 = arith.addf %134, %136 : vector<256x128xf32>
    %c5 = arith.constant 5 : index
    %c0_112 = arith.constant 0 : index
    %138 = vector.load %arg10[%c5, %c0_112] : memref<8x128xf32, #tpu.memory_space<vmem>>, vector<1x128xf32>
    %139 = vector.broadcast %138 : vector<1x128xf32> to vector<256x128xf32>
    %140 = arith.addf %137, %139 : vector<256x128xf32>
    %141 = arith.truncf %140 : vector<256x128xf32> to vector<256x128xbf16>
    %c0_113 = arith.constant 0 : index
    %c0_114 = arith.constant 0 : index
    %c0_115 = arith.constant 0 : index
    %142 = vector.load %arg11[%c0_113, %c0_114, %c0_115] : memref<1x256x128xbf16, #tpu.memory_space<vmem>>, vector<1x256x128xbf16>
    %143 = vector.shape_cast %142 : vector<1x256x128xbf16> to vector<256x128xbf16>
    %144 = vector.shape_cast %141 : vector<256x128xbf16> to vector<1x256x128xbf16>
    tpu.vector_store %arg11[%c0_113, %c0_114, %c0_115], %144 {strides = array<i32>} : memref<1x256x128xbf16, #tpu.memory_space<vmem>>, vector<1x256x128xbf16>,
    return
  }
  func.func @transform_0(%arg0: i32) -> (i32, i32, i32) {
    %c0_i32 = arith.constant 0 : i32
    %c0_i32_0 = arith.constant 0 : i32
    %c0_i32_1 = arith.constant 0 : i32
    return %arg0, %c0_i32, %c0_i32_0 : i32, i32, i32
  }
  func.func @transform_1(%arg0: i32) -> (i32, i32) {
    %c0_i32 = arith.constant 0 : i32
    %c0_i32_0 = arith.constant 0 : i32
    %c0_i32_1 = arith.constant 0 : i32
    return %c0_i32, %c0_i32_0 : i32, i32
  }
  func.func @transform_2(%arg0: i32) -> (i32, i32) {
    %c0_i32 = arith.constant 0 : i32
    %c0_i32_0 = arith.constant 0 : i32
    %c0_i32_1 = arith.constant 0 : i32
    return %c0_i32, %c0_i32_0 : i32, i32
  }
  func.func @transform_3(%arg0: i32) -> (i32, i32) {
    %c0_i32 = arith.constant 0 : i32
    %c0_i32_0 = arith.constant 0 : i32
    %c0_i32_1 = arith.constant 0 : i32
    return %c0_i32, %c0_i32_0 : i32, i32
  }
  func.func @transform_4(%arg0: i32) -> (i32, i32) {
    %c0_i32 = arith.constant 0 : i32
    %c0_i32_0 = arith.constant 0 : i32
    %c0_i32_1 = arith.constant 0 : i32
    return %c0_i32, %c0_i32_0 : i32, i32
  }
  func.func @transform_5(%arg0: i32) -> (i32, i32) {
    %c0_i32 = arith.constant 0 : i32
    %c0_i32_0 = arith.constant 0 : i32
    %c0_i32_1 = arith.constant 0 : i32
    return %c0_i32, %c0_i32_0 : i32, i32
  }
  func.func @transform_6(%arg0: i32) -> (i32, i32) {
    %c0_i32 = arith.constant 0 : i32
    %c0_i32_0 = arith.constant 0 : i32
    %c0_i32_1 = arith.constant 0 : i32
    return %c0_i32, %c0_i32_0 : i32, i32
  }
  func.func @transform_7(%arg0: i32) -> (i32, i32) {
    %c0_i32 = arith.constant 0 : i32
    %c0_i32_0 = arith.constant 0 : i32
    %c0_i32_1 = arith.constant 0 : i32
    return %c0_i32, %c0_i32_0 : i32, i32
  }
  func.func @transform_8(%arg0: i32) -> (i32, i32) {
    %c0_i32 = arith.constant 0 : i32
    %c0_i32_0 = arith.constant 0 : i32
    %c0_i32_1 = arith.constant 0 : i32
    return %c0_i32, %c0_i32_0 : i32, i32
  }
  func.func @transform_9(%arg0: i32) -> (i32, i32) {
    %c0_i32 = arith.constant 0 : i32
    %c0_i32_0 = arith.constant 0 : i32
    %c0_i32_1 = arith.constant 0 : i32
    return %c0_i32, %c0_i32_0 : i32, i32
  }
  func.func @transform_10(%arg0: i32) -> (i32, i32, i32) {
    %c0_i32 = arith.constant 0 : i32
    %c0_i32_0 = arith.constant 0 : i32
    %c0_i32_1 = arith.constant 0 : i32
    return %arg0, %c0_i32, %c0_i32_0 : i32, i32, i32
  }
}

</mosaic_0001>

<llo_original>
// kernel: psp_fusion2.1
$region0: #{psp_fusion2.1}
  #allocation0 [shape = 'u32[]', space=smem, size = 0x4, offset = 0x4, fixed_abs, tag = 'smem constant byte address 0x4 - core index']
  #allocation1 [shape = 'u32[72,128]{1,0:T(1,128)}', space=vmem, size = 0x9000, scoped, tag = 'internal scratch']
  #allocation2 [shape = 'bf16[320,64]{1,0:T(8,128)(2,1)}', space=vmem, size = 0x14000, scoped, tag = 'scratch operand']
  #allocation3 [shape = 'f32[256,64]{1,0:T(8,128)}', space=vmem, size = 0x20000, scoped, tag = 'scratch operand']
  %s0 = inlined_call_operand.vmem [shape: bf16[2,256,32], index: 0, kind: input, shape index: {}]
  %s1 = inlined_call_operand.vmem [shape: bf16[256,2], index: 1, kind: input, shape index: {}]
  %s2 = inlined_call_operand.vmem [shape: bf16[32,64], index: 2, kind: input, shape index: {}]
  %s3 = inlined_call_operand.vmem [shape: bf16[576,64], index: 3, kind: input, shape index: {}]
  %s4 = inlined_call_operand.vmem [shape: bf16[64,128], index: 4, kind: input, shape index: {}]
  %s5 = inlined_call_operand.vmem [shape: bf16[128,64], index: 5, kind: input, shape index: {}]
  %s6 = inlined_call_operand.vmem [shape: f32[128,8], index: 6, kind: input, shape index: {}]
  %s7 = inlined_call_operand.vmem [shape: f32[8,128], index: 7, kind: input, shape index: {}]
  %s8 = inlined_call_operand.vmem [shape: f32[128,128], index: 8, kind: input, shape index: {}]
  %s9 = inlined_call_operand.vmem [shape: f32[8,128], index: 9, kind: input, shape index: {}]
  %s10 = inlined_call_operand.vmem [shape: bf16[2,256,128], index: 10, kind: output, shape index: {}]
  %s11 = sld [smem:[#allocation0]]
  $region73: #{psp_fusion2.1} parent=0
    _
  %s13 = ssub.s32 1, %s11
  %s14 = scalar_select 0, %s13, %s11
  loop: start=0, step=1, limit=4
  $region2: #{psp_fusion2.1} parent=0 // loop_pre_header
    _
  $region3: #{psp_fusion2.1} parent=0 // loop_header
    %s16 = sphi 0, %s20
    %p17 = scmp.ge.s32.totalorder %s16, 4
    %s26 = sphi 0, %s28
    %s29 = sphi 0, %s26
    %s30 = sphi 0, %s29
    %s46 = sphi 0, %s30
    %s50 = sphi 0, %s50
    %s52 = sphi 0, %s50
    %s53 = sphi 0, %s52
    %s67 = sphi 0, %s53
    %s71 = sphi 0, %s71
    %s73 = sphi 0, %s71
    %s74 = sphi 0, %s73
    %s88 = sphi 0, %s74
    %s92 = sphi 0, %s92
    %s94 = sphi 0, %s92
    %s95 = sphi 0, %s94
    %s109 = sphi 0, %s95
    %s113 = sphi 0, %s113
    %s115 = sphi 0, %s113
    %s116 = sphi 0, %s115
    %s130 = sphi 0, %s116
    %s134 = sphi 0, %s134
    %s136 = sphi 0, %s134
    %s137 = sphi 0, %s136
    %s151 = sphi 0, %s137
    %s155 = sphi 0, %s155
    %s157 = sphi 0, %s155
    %s158 = sphi 0, %s157
    %s172 = sphi 0, %s158
    %s176 = sphi 0, %s176
    %s178 = sphi 0, %s176
    %s179 = sphi 0, %s178
    %s193 = sphi 0, %s179
    %s197 = sphi 0, %s197
    %s199 = sphi 0, %s197
    %s200 = sphi 0, %s199
    %s214 = sphi 0, %s200
    %s218 = sphi 0, %s218
    %s220 = sphi 0, %s218
    %s221 = sphi 0, %s220
    %s235 = sphi 0, %s221
    %s241 = sphi 0, %s243
    %s244 = sphi 0, %s241
    %s245 = sphi 0, %s244
    %s261 = sphi 0, %s245
  $region4: #{psp_fusion2.1} parent=0 // loop_header_branch
    %19 = sbr.rel (%p17) target = $region8
  $region5: #{psp_fusion2.1} parent=0 // loop_body
    %s21 = ssub.s32 %s16, 1
    %s22 = ssub.s32 %s16, 2
    %s23 = sadd.s32 %s16, 1
    %s24 = ssub.s32 %s16, %s23
    %p25 = scmp.eq.s32.totalorder %s24, 0
    %s27 = sadd.s32 %s26, 1
    %s28 = scalar_select %p25, %s26, %s27
    %p31 = pneg %p25
    %p32 = scmp.eq.s32.totalorder %s16, 1
    %p33 = por %p31, %p32
    %p34 = scmp.ne.s32.totalorder %s26, %s29
    %p35 = scmp.eq.s32.totalorder %s16, 0
    %p36 = por %p34, %p35
    %p37 = scmp.ne.s32.totalorder %s26, %s29
    %p38 = scmp.eq.s32.totalorder %s21, 1
    %p39 = por %p37, %p38
    %p40 = scmp.ne.s32.totalorder %s29, %s30
    %p41 = scmp.eq.s32.totalorder %s21, 0
    %p42 = por %p40, %p41
    %p43 = scmp.ne.s32.totalorder %s29, %s30
    %p44 = scmp.eq.s32.totalorder %s22, 1
    %p45 = por %p43, %p44
    %p47 = scmp.ne.s32.totalorder %s30, %s46
    %p48 = scmp.eq.s32.totalorder %s22, 0
    %p49 = por %p47, %p48
    %s51 = sadd.s32 %s50, 1
    %p54 = scmp.eq.s32.totalorder %s16, 1
    %p55 = scmp.ne.s32.totalorder %s50, %s52
    %p56 = scmp.eq.s32.totalorder %s16, 0
    %p57 = por %p55, %p56
    %p58 = scmp.ne.s32.totalorder %s50, %s52
    %p59 = scmp.eq.s32.totalorder %s21, 1
    %p60 = por %p58, %p59
    %p61 = scmp.ne.s32.totalorder %s52, %s53
    %p62 = scmp.eq.s32.totalorder %s21, 0
    %p63 = por %p61, %p62
    %p64 = scmp.ne.s32.totalorder %s52, %s53
    %p65 = scmp.eq.s32.totalorder %s22, 1
    %p66 = por %p64, %p65
    %p68 = scmp.ne.s32.totalorder %s53, %s67
    %p69 = scmp.eq.s32.totalorder %s22, 0
    %p70 = por %p68, %p69
    %s72 = sadd.s32 %s71, 1
    %p75 = scmp.eq.s32.totalorder %s16, 1
    %p76 = scmp.ne.s32.totalorder %s71, %s73
    %p77 = scmp.eq.s32.totalorder %s16, 0
    %p78 = por %p76, %p77
    %p79 = scmp.ne.s32.totalorder %s71, %s73
    %p80 = scmp.eq.s32.totalorder %s21, 1
    %p81 = por %p79, %p80
    %p82 = scmp.ne.s32.totalorder %s73, %s74
    %p83 = scmp.eq.s32.totalorder %s21, 0
    %p84 = por %p82, %p83
    %p85 = scmp.ne.s32.totalorder %s73, %s74
    %p86 = scmp.eq.s32.totalorder %s22, 1
    %p87 = por %p85, %p86
    %p89 = scmp.ne.s32.totalorder %s74, %s88
    %p90 = scmp.eq.s32.totalorder %s22, 0
    %p91 = por %p89, %p90
    %s93 = sadd.s32 %s92, 1
    %p96 = scmp.eq.s32.totalorder %s16, 1
    %p97 = scmp.ne.s32.totalorder %s92, %s94
    %p98 = scmp.eq.s32.totalorder %s16, 0
    %p99 = por %p97, %p98
    %p100 = scmp.ne.s32.totalorder %s92, %s94
    %p101 = scmp.eq.s32.totalorder %s21, 1
    %p102 = por %p100, %p101
    %p103 = scmp.ne.s32.totalorder %s94, %s95
    %p104 = scmp.eq.s32.totalorder %s21, 0
    %p105 = por %p103, %p104
    %p106 = scmp.ne.s32.totalorder %s94, %s95
    %p107 = scmp.eq.s32.totalorder %s22, 1
    %p108 = por %p106, %p107
    %p110 = scmp.ne.s32.totalorder %s95, %s109
    %p111 = scmp.eq.s32.totalorder %s22, 0
    %p112 = por %p110, %p111
    %s114 = sadd.s32 %s113, 1
    %p117 = scmp.eq.s32.totalorder %s16, 1
    %p118 = scmp.ne.s32.totalorder %s113, %s115
    %p119 = scmp.eq.s32.totalorder %s16, 0
    %p120 = por %p118, %p119
    %p121 = scmp.ne.s32.totalorder %s113, %s115
    %p122 = scmp.eq.s32.totalorder %s21, 1
    %p123 = por %p121, %p122
    %p124 = scmp.ne.s32.totalorder %s115, %s116
    %p125 = scmp.eq.s32.totalorder %s21, 0
    %p126 = por %p124, %p125
    %p127 = scmp.ne.s32.totalorder %s115, %s116
    %p128 = scmp.eq.s32.totalorder %s22, 1
    %p129 = por %p127, %p128
    %p131 = scmp.ne.s32.totalorder %s116, %s130
    %p132 = scmp.eq.s32.totalorder %s22, 0
    %p133 = por %p131, %p132
    %s135 = sadd.s32 %s134, 1
    %p138 = scmp.eq.s32.totalorder %s16, 1
    %p139 = scmp.ne.s32.totalorder %s134, %s136
    %p140 = scmp.eq.s32.totalorder %s16, 0
    %p141 = por %p139, %p140
    %p142 = scmp.ne.s32.totalorder %s134, %s136
    %p143 = scmp.eq.s32.totalorder %s21, 1
    %p144 = por %p142, %p143
    %p145 = scmp.ne.s32.totalorder %s136, %s137
    %p146 = scmp.eq.s32.totalorder %s21, 0
    %p147 = por %p145, %p146
    %p148 = scmp.ne.s32.totalorder %s136, %s137
    %p149 = scmp.eq.s32.totalorder %s22, 1
    %p150 = por %p148, %p149
    %p152 = scmp.ne.s32.totalorder %s137, %s151
    %p153 = scmp.eq.s32.totalorder %s22, 0
    %p154 = por %p152, %p153
    %s156 = sadd.s32 %s155, 1
    %p159 = scmp.eq.s32.totalorder %s16, 1
    %p160 = scmp.ne.s32.totalorder %s155, %s157
    %p161 = scmp.eq.s32.totalorder %s16, 0
    %p162 = por %p160, %p161
    %p163 = scmp.ne.s32.totalorder %s155, %s157
    %p164 = scmp.eq.s32.totalorder %s21, 1
    %p165 = por %p163, %p164
    %p166 = scmp.ne.s32.totalorder %s157, %s158
    %p167 = scmp.eq.s32.totalorder %s21, 0
    %p168 = por %p166, %p167
    %p169 = scmp.ne.s32.totalorder %s157, %s158
    %p170 = scmp.eq.s32.totalorder %s22, 1
    %p171 = por %p169, %p170
    %p173 = scmp.ne.s32.totalorder %s158, %s172
    %p174 = scmp.eq.s32.totalorder %s22, 0
    %p175 = por %p173, %p174
    %s177 = sadd.s32 %s176, 1
    %p180 = scmp.eq.s32.totalorder %s16, 1
    %p181 = scmp.ne.s32.totalorder %s176, %s178
    %p182 = scmp.eq.s32.totalorder %s16, 0
    %p183 = por %p181, %p182
    %p184 = scmp.ne.s32.totalorder %s176, %s178
    %p185 = scmp.eq.s32.totalorder %s21, 1
    %p186 = por %p184, %p185
    %p187 = scmp.ne.s32.totalorder %s178, %s179
    %p188 = scmp.eq.s32.totalorder %s21, 0
    %p189 = por %p187, %p188
    %p190 = scmp.ne.s32.totalorder %s178, %s179
    %p191 = scmp.eq.s32.totalorder %s22, 1
    %p192 = por %p190, %p191
    %p194 = scmp.ne.s32.totalorder %s179, %s193
    %p195 = scmp.eq.s32.totalorder %s22, 0
    %p196 = por %p194, %p195
    %s198 = sadd.s32 %s197, 1
    %p201 = scmp.eq.s32.totalorder %s16, 1
    %p202 = scmp.ne.s32.totalorder %s197, %s199
    %p203 = scmp.eq.s32.totalorder %s16, 0
    %p204 = por %p202, %p203
    %p205 = scmp.ne.s32.totalorder %s197, %s199
    %p206 = scmp.eq.s32.totalorder %s21, 1
    %p207 = por %p205, %p206
    %p208 = scmp.ne.s32.totalorder %s199, %s200
    %p209 = scmp.eq.s32.totalorder %s21, 0
    %p210 = por %p208, %p209
    %p211 = scmp.ne.s32.totalorder %s199, %s200
    %p212 = scmp.eq.s32.totalorder %s22, 1
    %p213 = por %p211, %p212
    %p215 = scmp.ne.s32.totalorder %s200, %s214
    %p216 = scmp.eq.s32.totalorder %s22, 0
    %p217 = por %p215, %p216
    %s219 = sadd.s32 %s218, 1
    %p222 = scmp.eq.s32.totalorder %s16, 1
    %p223 = scmp.ne.s32.totalorder %s218, %s220
    %p224 = scmp.eq.s32.totalorder %s16, 0
    %p225 = por %p223, %p224
    %p226 = scmp.ne.s32.totalorder %s218, %s220
    %p227 = scmp.eq.s32.totalorder %s21, 1
    %p228 = por %p226, %p227
    %p229 = scmp.ne.s32.totalorder %s220, %s221
    %p230 = scmp.eq.s32.totalorder %s21, 0
    %p231 = por %p229, %p230
    %p232 = scmp.ne.s32.totalorder %s220, %s221
    %p233 = scmp.eq.s32.totalorder %s22, 1
    %p234 = por %p232, %p233
    %p236 = scmp.ne.s32.totalorder %s221, %s235
    %p237 = scmp.eq.s32.totalorder %s22, 0
    %p238 = por %p236, %p237
    %s239 = ssub.s32 %s16, %s23
    %p240 = scmp.eq.s32.totalorder %s239, 0
    %s242 = sadd.s32 %s241, 1
    %s243 = scalar_select %p240, %s241, %s242
    %p246 = pneg %p240
    %p247 = scmp.eq.s32.totalorder %s16, 1
    %p248 = por %p246, %p247
    %p249 = scmp.ne.s32.totalorder %s241, %s244
    %p250 = scmp.eq.s32.totalorder %s16, 0
    %p251 = por %p249, %p250
    %p252 = scmp.ne.s32.totalorder %s241, %s244
    %p253 = scmp.eq.s32.totalorder %s21, 1
    %p254 = por %p252, %p253
    %p255 = scmp.ne.s32.totalorder %s244, %s245
    %p256 = scmp.eq.s32.totalorder %s21, 0
    %p257 = por %p255, %p256
    %p258 = scmp.ne.s32.totalorder %s244, %s245
    %p259 = scmp.eq.s32.totalorder %s22, 1
    %p260 = por %p258, %p259
    %p262 = scmp.ne.s32.totalorder %s245, %s261
    %p263 = scmp.eq.s32.totalorder %s22, 0
    %p264 = por %p262, %p263
    %p265 = scmp.le.s32.totalorder 1, %s16
    %p266 = scmp.lt.s32.totalorder %s16, 3
    %p267 = pnand %p265, %p266
    %p268 = pneg %p267
    // Predicated region
    $region9: #{psp_fusion2.1} parent=5 // pred_check
      _
    $region10: #{psp_fusion2.1} parent=5 // pred_check_branch
      %270 = sbr.rel (%p267) target = $region12
    $region11: #{psp_fusion2.1} parent=5 // pred_region
      %s271 = ssub.s32 %s16, 1
      // Predicated region
      $region13: #{psp_fusion2.1} parent=11 // pred_check
        %p272 = pneg %p63
      $region14: #{psp_fusion2.1} parent=11 // pred_check_branch
        %274 = sbr.rel (%p272) target = $region16
      $region15: #{psp_fusion2.1} parent=11 // pred_region
        _
      $region16: #{psp_fusion2.1} parent=11 // pred_fallthru
        _
      // Predicated region
      $region17: #{psp_fusion2.1} parent=11 // pred_check
        %p275 = pneg %p84
      $region18: #{psp_fusion2.1} parent=11 // pred_check_branch
        %277 = sbr.rel (%p275) target = $region20
      $region19: #{psp_fusion2.1} parent=11 // pred_region
        _
      $region20: #{psp_fusion2.1} parent=11 // pred_fallthru
        _
      // Predicated region
      $region21: #{psp_fusion2.1} parent=11 // pred_check
        %p278 = pneg %p105
      $region22: #{psp_fusion2.1} parent=11 // pred_check_branch
        %280 = sbr.rel (%p278) target = $region24
      $region23: #{psp_fusion2.1} parent=11 // pred_region
        _
      $region24: #{psp_fusion2.1} parent=11 // pred_fallthru
        _
      // Predicated region
      $region25: #{psp_fusion2.1} parent=11 // pred_check
        %p281 = pneg %p126
      $region26: #{psp_fusion2.1} parent=11 // pred_check_branch
        %283 = sbr.rel (%p281) target = $region28
      $region27: #{psp_fusion2.1} parent=11 // pred_region
        _
      $region28: #{psp_fusion2.1} parent=11 // pred_fallthru
        _
      // Predicated region
      $region29: #{psp_fusion2.1} parent=11 // pred_check
        %p284 = pneg %p147
      $region30: #{psp_fusion2.1} parent=11 // pred_check_branch
        %286 = sbr.rel (%p284) target = $region32
      $region31: #{psp_fusion2.1} parent=11 // pred_region
        _
      $region32: #{psp_fusion2.1} parent=11 // pred_fallthru
        _
      // Predicated region
      $region33: #{psp_fusion2.1} parent=11 // pred_check
        %p287 = pneg %p168
      $region34: #{psp_fusion2.1} parent=11 // pred_check_branch
        %289 = sbr.rel (%p287) target = $region36
      $region35: #{psp_fusion2.1} parent=11 // pred_region
        _
      $region36: #{psp_fusion2.1} parent=11 // pred_fallthru
        _
      // Predicated region
      $region37: #{psp_fusion2.1} parent=11 // pred_check
        %p290 = pneg %p189
      $region38: #{psp_fusion2.1} parent=11 // pred_check_branch
        %292 = sbr.rel (%p290) target = $region40
      $region39: #{psp_fusion2.1} parent=11 // pred_region
        _
      $region40: #{psp_fusion2.1} parent=11 // pred_fallthru
        _
      // Predicated region
      $region41: #{psp_fusion2.1} parent=11 // pred_check
        %p293 = pneg %p210
      $region42: #{psp_fusion2.1} parent=11 // pred_check_branch
        %295 = sbr.rel (%p293) target = $region44
      $region43: #{psp_fusion2.1} parent=11 // pred_region
        _
      $region44: #{psp_fusion2.1} parent=11 // pred_fallthru
        _
      // Predicated region
      $region45: #{psp_fusion2.1} parent=11 // pred_check
        %p296 = pneg %p231
      $region46: #{psp_fusion2.1} parent=11 // pred_check_branch
        %298 = sbr.rel (%p296) target = $region48
      $region47: #{psp_fusion2.1} parent=11 // pred_region
        _
      $region48: #{psp_fusion2.1} parent=11 // pred_fallthru
        _
    $region12: #{psp_fusion2.1} parent=5 // pred_fallthru
      _
    %p299 = scmp.lt.s32.totalorder %s16, 2
    // Predicated region
    $region49: #{psp_fusion2.1} parent=5 // pred_check
      %p300 = pneg %p299
    $region50: #{psp_fusion2.1} parent=5 // pred_check_branch
      %302 = sbr.rel (%p300) target = $region52
    $region51: #{psp_fusion2.1} parent=5 // pred_region
      // Predicated region
      $region53: #{psp_fusion2.1} parent=51 // pred_check
        %p303 = pneg %p36
      $region54: #{psp_fusion2.1} parent=51 // pred_check_branch
        %305 = sbr.rel (%p303) target = $region56
      $region55: #{psp_fusion2.1} parent=51 // pred_region
        %p306 = scmp.lt.s32.totalorder %s16, 1
        %s307 = scalar_select %p306, %s16, 1
        %s308 = smul.addr %s307, 32
        %s309 = smul.addr %s308, 4
        %s310 = scalar_lea.vmem %s0, %s309
      $region56: #{psp_fusion2.1} parent=51 // pred_fallthru
        _
    $region52: #{psp_fusion2.1} parent=5 // pred_fallthru
      _
    %p311 = scmp.le.s32.totalorder 1, %s16
    %p312 = scmp.lt.s32.totalorder %s16, 3
    %p313 = pnand %p311, %p312
    %p314 = pneg %p313
    // Predicated region
    $region57: #{psp_fusion2.1} parent=5 // pred_check
      _
    $region58: #{psp_fusion2.1} parent=5 // pred_check_branch
      %316 = sbr.rel (%p313) target = $region60
    $region59: #{psp_fusion2.1} parent=5 // pred_region
      %s317 = ssub.s32 %s16, 1
      %p318 = scmp.lt.s32.totalorder %s21, 1
      %s319 = scalar_select %p318, %s21, 1
      %s320 = smul.addr %s319, 32
      %s321 = smul.addr %s320, 4
      %s322 = scalar_lea.vmem %s0, %s321
      %p323 = pneg %p42
      %p324 = pneg %p39
      %p325 = pneg %p63
      %p326 = pneg %p60
      %p327 = pneg %p84
      %p328 = pneg %p81
      %p329 = pneg %p105
      %p330 = pneg %p102
      %p331 = pneg %p126
      %p332 = pneg %p123
      %p333 = pneg %p147
      %p334 = pneg %p144
      %p335 = pneg %p168
      %p336 = pneg %p165
      %p337 = pneg %p189
      %p338 = pneg %p186
      %p339 = pneg %p210
      %p340 = pneg %p207
      %p341 = pneg %p231
      %p342 = pneg %p228
      %p343 = pneg %p257
      %p344 = pneg %p254
      %p345 = scmp.lt.s32.totalorder %s21, 1
      %s346 = scalar_select %p345, %s21, 1
      %s347 = smul.addr %s346, 32
      %s348 = smul.addr %s347, 4
      %s349 = scalar_lea.vmem %s10, %s348
      %p350 = scmp.lt.s32.totalorder %s21, 1
      %s351 = scalar_select %p350, %s21, 1
      %s352 = smul.addr %s351, 32
      %s353 = smul.addr %s352, 4
      %s354 = scalar_lea.vmem %s0, %s353
      %p355 = scmp.lt.s32.totalorder %s21, 1
      %s356 = scalar_select %p355, %s21, 1
      %s357 = smul.addr %s356, 32
      %s358 = smul.addr %s357, 4
      %s359 = scalar_lea.vmem %s10, %s358
      %v361 = vld [vmem:[%s354] sm:$0xf]
      %v362 = vld [vmem:[%s354 + $0x4] sm:$0xf]
      %v363 = vld [vmem:[%s354 + $0x8] sm:$0xf]
      %v364 = vld [vmem:[%s354 + $0xc] sm:$0xf]
      %v365 = vld [vmem:[%s354 + $0x10] sm:$0xf]
      %v366 = vld [vmem:[%s354 + $0x14] sm:$0xf]
      %v367 = vld [vmem:[%s354 + $0x18] sm:$0xf]
      %v368 = vld [vmem:[%s354 + $0x1c] sm:$0xf]
      %v369 = vld [vmem:[%s354 + $0x20] sm:$0xf]
      %v370 = vld [vmem:[%s354 + $0x24] sm:$0xf]
      %v371 = vld [vmem:[%s354 + $0x28] sm:$0xf]
      %v372 = vld [vmem:[%s354 + $0x2c] sm:$0xf]
      %v373 = vld [vmem:[%s354 + $0x30] sm:$0xf]
      %v374 = vld [vmem:[%s354 + $0x34] sm:$0xf]
      %v375 = vld [vmem:[%s354 + $0x38] sm:$0xf]
      %v376 = vld [vmem:[%s354 + $0x3c] sm:$0xf]
      %v377 = vld [vmem:[%s354 + $0x40] sm:$0xf]
      %v378 = vld [vmem:[%s354 + $0x44] sm:$0xf]
      %v379 = vld [vmem:[%s354 + $0x48] sm:$0xf]
      %v380 = vld [vmem:[%s354 + $0x4c] sm:$0xf]
      %v381 = vld [vmem:[%s354 + $0x50] sm:$0xf]
      %v382 = vld [vmem:[%s354 + $0x54] sm:$0xf]
      %v383 = vld [vmem:[%s354 + $0x58] sm:$0xf]
      %v384 = vld [vmem:[%s354 + $0x5c] sm:$0xf]
      %v385 = vld [vmem:[%s354 + $0x60] sm:$0xf]
      %v386 = vld [vmem:[%s354 + $0x64] sm:$0xf]
      %v387 = vld [vmem:[%s354 + $0x68] sm:$0xf]
      %v388 = vld [vmem:[%s354 + $0x6c] sm:$0xf]
      %v389 = vld [vmem:[%s354 + $0x70] sm:$0xf]
      %v390 = vld [vmem:[%s354 + $0x74] sm:$0xf]
      %v391 = vld [vmem:[%s354 + $0x78] sm:$0xf]
      %v392 = vld [vmem:[%s354 + $0x7c] sm:$0xf]
      %v393 = vld [vmem:[%s2] sm:$0xf]
      %v394 = vld [vmem:[%s2 + $0x4] sm:$0xf]
      %v395 = vld [vmem:[%s2 + $0x8] sm:$0xf]
      %v396 = vld [vmem:[%s2 + $0xc] sm:$0xf]
      %v429 = vunpack.c.l.b16 %v361
      %v430 = vunpack.c.l.b16 %v362
      %v431 = vunpack.c.l.b16 %v363
      %v432 = vunpack.c.l.b16 %v364
      %v433 = vunpack.c.l.b16 %v365
      %v434 = vunpack.c.l.b16 %v366
      %v435 = vunpack.c.l.b16 %v367
      %v436 = vunpack.c.l.b16 %v368
      %v437 = vunpack.c.l.b16 %v369
      %v438 = vunpack.c.l.b16 %v370
      %v439 = vunpack.c.l.b16 %v371
      %v440 = vunpack.c.l.b16 %v372
      %v441 = vunpack.c.l.b16 %v373
      %v442 = vunpack.c.l.b16 %v374
      %v443 = vunpack.c.l.b16 %v375
      %v444 = vunpack.c.l.b16 %v376
      %v445 = vunpack.c.l.b16 %v377
      %v446 = vunpack.c.l.b16 %v378
      %v447 = vunpack.c.l.b16 %v379
      %v448 = vunpack.c.l.b16 %v380
      %v449 = vunpack.c.l.b16 %v381
      %v450 = vunpack.c.l.b16 %v382
      %v451 = vunpack.c.l.b16 %v383
      %v452 = vunpack.c.l.b16 %v384
      %v453 = vunpack.c.l.b16 %v385
      %v454 = vunpack.c.l.b16 %v386
      %v455 = vunpack.c.l.b16 %v387
      %v456 = vunpack.c.l.b16 %v388
      %v457 = vunpack.c.l.b16 %v389
      %v458 = vunpack.c.l.b16 %v390
      %v459 = vunpack.c.l.b16 %v391
      %v460 = vunpack.c.l.b16 %v392
      %v461 = vpack.c.b16 %v430, %v429
      %v462 = vpack.c.b16 %v432, %v431
      %v463 = vpack.c.b16 %v434, %v433
      %v464 = vpack.c.b16 %v436, %v435
      %v465 = vpack.c.b16 %v438, %v437
      %v466 = vpack.c.b16 %v440, %v439
      %v467 = vpack.c.b16 %v442, %v441
      %v468 = vpack.c.b16 %v444, %v443
      %v469 = vpack.c.b16 %v446, %v445
      %v470 = vpack.c.b16 %v448, %v447
      %v471 = vpack.c.b16 %v450, %v449
      %v472 = vpack.c.b16 %v452, %v451
      %v473 = vpack.c.b16 %v454, %v453
      %v474 = vpack.c.b16 %v456, %v455
      %v475 = vpack.c.b16 %v458, %v457
      %v476 = vpack.c.b16 %v460, %v459
      %v481 = vunpack.c.l.b16 %v393
      %v482 = vunpack.c.l.b16 %v394
      %v483 = vunpack.c.l.b16 %v395
      %v484 = vunpack.c.l.b16 %v396
      %v485 = vpack.c.b16 %v482, %v481
      %v486 = vpack.c.b16 %v484, %v483
      %vm489 = vcmask 261120
      %v491 = vsel %vm489, %v461, 0
      %v494 = vsel %vm489, %v462, 0
      %v497 = vsel %vm489, %v463, 0
      %v500 = vsel %vm489, %v464, 0
      %v503 = vsel %vm489, %v465, 0
      %v506 = vsel %vm489, %v466, 0
      %v509 = vsel %vm489, %v467, 0
      %v512 = vsel %vm489, %v468, 0
      %v515 = vsel %vm489, %v469, 0
      %v518 = vsel %vm489, %v470, 0
      %v521 = vsel %vm489, %v471, 0
      %v524 = vsel %vm489, %v472, 0
      %v527 = vsel %vm489, %v473, 0
      %v530 = vsel %vm489, %v474, 0
      %v533 = vsel %vm489, %v475, 0
      %v536 = vsel %vm489, %v476, 0
      %538 = vmatpush.bf16.msra.mxu0 0
      %539 = vmatpush.bf16.msra.mxu0 0
      %540 = vmatpush.bf16.msra.mxu0 0
      %541 = vmatpush.bf16.msra.mxu0 0
      %542 = vmatpush.bf16.msra.mxu0 0
      %543 = vmatpush.bf16.msra.mxu0 0
      %544 = vmatpush.bf16.msra.mxu0 %v486
      %545 = vmatpush.bf16.msra.mxu0 %v485
      %546 = vmatmul.bf16.gmra.mxu0 %v491
      %v547 = vpop.f32.mrf.mxu0
      %v548 = vadd.f32 0.0, %v547
      %v549 = vpop.f32.mrf.mxu0
      %v550 = vadd.f32 0.0, %v549
      %551 = vmatmul.bf16.gmra.mxu0 %v494
      %v552 = vpop.f32.mrf.mxu0
      %v553 = vadd.f32 0.0, %v552
      %v554 = vpop.f32.mrf.mxu0
      %v555 = vadd.f32 0.0, %v554
      %556 = vmatmul.bf16.gmra.mxu0 %v497
      %v557 = vpop.f32.mrf.mxu0
      %v558 = vadd.f32 0.0, %v557
      %v559 = vpop.f32.mrf.mxu0
      %v560 = vadd.f32 0.0, %v559
      %561 = vmatmul.bf16.gmra.mxu0 %v500
      %v562 = vpop.f32.mrf.mxu0
      %v563 = vadd.f32 0.0, %v562
      %v564 = vpop.f32.mrf.mxu0
      %v565 = vadd.f32 0.0, %v564
      %566 = vmatmul.bf16.gmra.mxu0 %v503
      %v567 = vpop.f32.mrf.mxu0
      %v568 = vadd.f32 0.0, %v567
      %v569 = vpop.f32.mrf.mxu0
      %v570 = vadd.f32 0.0, %v569
      %571 = vmatmul.bf16.gmra.mxu0 %v506
      %v572 = vpop.f32.mrf.mxu0
      %v573 = vadd.f32 0.0, %v572
      %v574 = vpop.f32.mrf.mxu0
      %v575 = vadd.f32 0.0, %v574
      %576 = vmatmul.bf16.gmra.mxu0 %v509
      %v577 = vpop.f32.mrf.mxu0
      %v578 = vadd.f32 0.0, %v577
      %v579 = vpop.f32.mrf.mxu0
      %v580 = vadd.f32 0.0, %v579
      %581 = vmatmul.bf16.gmra.mxu0 %v512
      %v582 = vpop.f32.mrf.mxu0
      %v583 = vadd.f32 0.0, %v582
      %v584 = vpop.f32.mrf.mxu0
      %v585 = vadd.f32 0.0, %v584
      %586 = vmatmul.bf16.gmra.mxu0 %v515
      %v587 = vpop.f32.mrf.mxu0
      %v588 = vadd.f32 0.0, %v587
      %v589 = vpop.f32.mrf.mxu0
      %v590 = vadd.f32 0.0, %v589
      %591 = vmatmul.bf16.gmra.mxu0 %v518
      %v592 = vpop.f32.mrf.mxu0
      %v593 = vadd.f32 0.0, %v592
      %v594 = vpop.f32.mrf.mxu0
      %v595 = vadd.f32 0.0, %v594
      %596 = vmatmul.bf16.gmra.mxu0 %v521
      %v597 = vpop.f32.mrf.mxu0
      %v598 = vadd.f32 0.0, %v597
      %v599 = vpop.f32.mrf.mxu0
      %v600 = vadd.f32 0.0, %v599
      %601 = vmatmul.bf16.gmra.mxu0 %v524
      %v602 = vpop.f32.mrf.mxu0
      %v603 = vadd.f32 0.0, %v602
      %v604 = vpop.f32.mrf.mxu0
      %v605 = vadd.f32 0.0, %v604
      %606 = vmatmul.bf16.gmra.mxu0 %v527
      %v607 = vpop.f32.mrf.mxu0
      %v608 = vadd.f32 0.0, %v607
      %v609 = vpop.f32.mrf.mxu0
      %v610 = vadd.f32 0.0, %v609
      %611 = vmatmul.bf16.gmra.mxu0 %v530
      %v612 = vpop.f32.mrf.mxu0
      %v613 = vadd.f32 0.0, %v612
      %v614 = vpop.f32.mrf.mxu0
      %v615 = vadd.f32 0.0, %v614
      %616 = vmatmul.bf16.gmra.mxu0 %v533
      %v617 = vpop.f32.mrf.mxu0
      %v618 = vadd.f32 0.0, %v617
      %v619 = vpop.f32.mrf.mxu0
      %v620 = vadd.f32 0.0, %v619
      %621 = vmatmul.bf16.gmra.mxu0 %v536
      %v622 = vpop.f32.mrf.mxu0
      %v623 = vadd.f32 0.0, %v622
      %v624 = vpop.f32.mrf.mxu0
      %v625 = vadd.f32 0.0, %v624
      %626 = vdwg.mxu0
      %v627 = vmax.f32 %v548, 0.0
      %v628 = vmax.f32 %v550, 0.0
      %v629 = vmax.f32 %v553, 0.0
      %v630 = vmax.f32 %v555, 0.0
      %v631 = vmax.f32 %v558, 0.0
      %v632 = vmax.f32 %v560, 0.0
      %v633 = vmax.f32 %v563, 0.0
      %v634 = vmax.f32 %v565, 0.0
      %v635 = vmax.f32 %v568, 0.0
      %v636 = vmax.f32 %v570, 0.0
      %v637 = vmax.f32 %v573, 0.0
      %v638 = vmax.f32 %v575, 0.0
      %v639 = vmax.f32 %v578, 0.0
      %v640 = vmax.f32 %v580, 0.0
      %v641 = vmax.f32 %v583, 0.0
      %v642 = vmax.f32 %v585, 0.0
      %v643 = vmax.f32 %v588, 0.0
      %v644 = vmax.f32 %v590, 0.0
      %v645 = vmax.f32 %v593, 0.0
      %v646 = vmax.f32 %v595, 0.0
      %v647 = vmax.f32 %v598, 0.0
      %v648 = vmax.f32 %v600, 0.0
      %v649 = vmax.f32 %v603, 0.0
      %v650 = vmax.f32 %v605, 0.0
      %v651 = vmax.f32 %v608, 0.0
      %v652 = vmax.f32 %v610, 0.0
      %v653 = vmax.f32 %v613, 0.0
      %v654 = vmax.f32 %v615, 0.0
      %v655 = vmax.f32 %v618, 0.0
      %v656 = vmax.f32 %v620, 0.0
      %v657 = vmax.f32 %v623, 0.0
      %v658 = vmax.f32 %v625, 0.0
      %vm659 = vcmask 519168
      %660 = vst.msk [vmem:[#allocation2] sm:$0xf] %vm659, 0
      %661 = vst.msk [vmem:[#allocation2 + $0x4] sm:$0xf] %vm659, 0
      %662 = vst.msk [vmem:[#allocation2 + $0x8] sm:$0xf] %vm659, 0
      %663 = vst.msk [vmem:[#allocation2 + $0xc] sm:$0xf] %vm659, 0
      %664 = vst.msk [vmem:[#allocation2 + $0x90] sm:$0xf] %vm659, 0
      %665 = vst.msk [vmem:[#allocation2 + $0x94] sm:$0xf] %vm659, 0
      %666 = vst.msk [vmem:[#allocation2 + $0x98] sm:$0xf] %vm659, 0
      %667 = vst.msk [vmem:[#allocation2 + $0x9c] sm:$0xf] %vm659, 0
      %v668 = vpack.c.bf16 %v627, %v627
      %v669 = vpack.c.bf16 %v628, %v628
      %v670 = vpack.c.bf16 %v629, %v629
      %v671 = vpack.c.bf16 %v630, %v630
      %v672 = vpack.c.bf16 %v631, %v631
      %v673 = vpack.c.bf16 %v632, %v632
      %v674 = vpack.c.bf16 %v633, %v633
      %v675 = vpack.c.bf16 %v634, %v634
      %v676 = vpack.c.bf16 %v635, %v635
      %v677 = vpack.c.bf16 %v636, %v636
      %v678 = vpack.c.bf16 %v637, %v637
      %v679 = vpack.c.bf16 %v638, %v638
      %v680 = vpack.c.bf16 %v639, %v639
      %v681 = vpack.c.bf16 %v640, %v640
      %v682 = vpack.c.bf16 %v641, %v641
      %v683 = vpack.c.bf16 %v642, %v642
      %v684 = vpack.c.bf16 %v643, %v643
      %v685 = vpack.c.bf16 %v644, %v644
      %v686 = vpack.c.bf16 %v645, %v645
      %v687 = vpack.c.bf16 %v646, %v646
      %v688 = vpack.c.bf16 %v647, %v647
      %v689 = vpack.c.bf16 %v648, %v648
      %v690 = vpack.c.bf16 %v649, %v649
      %v691 = vpack.c.bf16 %v650, %v650
      %v692 = vpack.c.bf16 %v651, %v651
      %v693 = vpack.c.bf16 %v652, %v652
      %v694 = vpack.c.bf16 %v653, %v653
      %v695 = vpack.c.bf16 %v654, %v654
      %v696 = vpack.c.bf16 %v655, %v655
      %v697 = vpack.c.bf16 %v656, %v656
      %v698 = vpack.c.bf16 %v657, %v657
      %v699 = vpack.c.bf16 %v658, %v658
      %700 = vst.msk [vmem:[#allocation2 + $0x10] sm:$0xf] %vm659, %v668
      %701 = vst.msk [vmem:[#allocation2 + $0x14] sm:$0xf] %vm659, %v669
      %702 = vst.msk [vmem:[#allocation2 + $0x18] sm:$0xf] %vm659, %v670
      %703 = vst.msk [vmem:[#allocation2 + $0x1c] sm:$0xf] %vm659, %v671
      %704 = vst.msk [vmem:[#allocation2 + $0x20] sm:$0xf] %vm659, %v672
      %705 = vst.msk [vmem:[#allocation2 + $0x24] sm:$0xf] %vm659, %v673
      %706 = vst.msk [vmem:[#allocation2 + $0x28] sm:$0xf] %vm659, %v674
      %707 = vst.msk [vmem:[#allocation2 + $0x2c] sm:$0xf] %vm659, %v675
      %708 = vst.msk [vmem:[#allocation2 + $0x30] sm:$0xf] %vm659, %v676
      %709 = vst.msk [vmem:[#allocation2 + $0x34] sm:$0xf] %vm659, %v677
      %710 = vst.msk [vmem:[#allocation2 + $0x38] sm:$0xf] %vm659, %v678
      %711 = vst.msk [vmem:[#allocation2 + $0x3c] sm:$0xf] %vm659, %v679
      %712 = vst.msk [vmem:[#allocation2 + $0x40] sm:$0xf] %vm659, %v680
      %713 = vst.msk [vmem:[#allocation2 + $0x44] sm:$0xf] %vm659, %v681
      %714 = vst.msk [vmem:[#allocation2 + $0x48] sm:$0xf] %vm659, %v682
      %715 = vst.msk [vmem:[#allocation2 + $0x4c] sm:$0xf] %vm659, %v683
      %716 = vst.msk [vmem:[#allocation2 + $0x50] sm:$0xf] %vm659, %v684
      %717 = vst.msk [vmem:[#allocation2 + $0x54] sm:$0xf] %vm659, %v685
      %718 = vst.msk [vmem:[#allocation2 + $0x58] sm:$0xf] %vm659, %v686
      %719 = vst.msk [vmem:[#allocation2 + $0x5c] sm:$0xf] %vm659, %v687
      %720 = vst.msk [vmem:[#allocation2 + $0x60] sm:$0xf] %vm659, %v688
      %721 = vst.msk [vmem:[#allocation2 + $0x64] sm:$0xf] %vm659, %v689
      %722 = vst.msk [vmem:[#allocation2 + $0x68] sm:$0xf] %vm659, %v690
      %723 = vst.msk [vmem:[#allocation2 + $0x6c] sm:$0xf] %vm659, %v691
      %724 = vst.msk [vmem:[#allocation2 + $0x70] sm:$0xf] %vm659, %v692
      %725 = vst.msk [vmem:[#allocation2 + $0x74] sm:$0xf] %vm659, %v693
      %726 = vst.msk [vmem:[#allocation2 + $0x78] sm:$0xf] %vm659, %v694
      %727 = vst.msk [vmem:[#allocation2 + $0x7c] sm:$0xf] %vm659, %v695
      %728 = vst.msk [vmem:[#allocation2 + $0x80] sm:$0xf] %vm659, %v696
      %729 = vst.msk [vmem:[#allocation2 + $0x84] sm:$0xf] %vm659, %v697
      %730 = vst.msk [vmem:[#allocation2 + $0x88] sm:$0xf] %vm659, %v698
      %731 = vst.msk [vmem:[#allocation2 + $0x8c] sm:$0xf] %vm659, %v699
      %v732 = vld [vmem:[%s1] sm:$0xf]
      %v733 = vld [vmem:[%s1 + $0x4] sm:$0xf]
      %v734 = vld [vmem:[%s1 + $0x8] sm:$0xf]
      %v735 = vld [vmem:[%s1 + $0xc] sm:$0xf]
      %v736 = vld [vmem:[%s1 + $0x10] sm:$0xf]
      %v737 = vld [vmem:[%s1 + $0x14] sm:$0xf]
      %v738 = vld [vmem:[%s1 + $0x18] sm:$0xf]
      %v739 = vld [vmem:[%s1 + $0x1c] sm:$0xf]
      %v740 = vld [vmem:[%s1 + $0x20] sm:$0xf]
      %v741 = vld [vmem:[%s1 + $0x24] sm:$0xf]
      %v742 = vld [vmem:[%s1 + $0x28] sm:$0xf]
      %v743 = vld [vmem:[%s1 + $0x2c] sm:$0xf]
      %v744 = vld [vmem:[%s1 + $0x30] sm:$0xf]
      %v745 = vld [vmem:[%s1 + $0x34] sm:$0xf]
      %v746 = vld [vmem:[%s1 + $0x38] sm:$0xf]
      %v747 = vld [vmem:[%s1 + $0x3c] sm:$0xf]
      %v748 = vld [vmem:[%s1 + $0x40] sm:$0xf]
      %v749 = vld [vmem:[%s1 + $0x44] sm:$0xf]
      %v750 = vld [vmem:[%s1 + $0x48] sm:$0xf]
      %v751 = vld [vmem:[%s1 + $0x4c] sm:$0xf]
      %v752 = vld [vmem:[%s1 + $0x50] sm:$0xf]
      %v753 = vld [vmem:[%s1 + $0x54] sm:$0xf]
      %v754 = vld [vmem:[%s1 + $0x58] sm:$0xf]
      %v755 = vld [vmem:[%s1 + $0x5c] sm:$0xf]
      %v756 = vld [vmem:[%s1 + $0x60] sm:$0xf]
      %v757 = vld [vmem:[%s1 + $0x64] sm:$0xf]
      %v758 = vld [vmem:[%s1 + $0x68] sm:$0xf]
      %v759 = vld [vmem:[%s1 + $0x6c] sm:$0xf]
      %v760 = vld [vmem:[%s1 + $0x70] sm:$0xf]
      %v761 = vld [vmem:[%s1 + $0x74] sm:$0xf]
      %v762 = vld [vmem:[%s1 + $0x78] sm:$0xf]
      %v763 = vld [vmem:[%s1 + $0x7c] sm:$0xf]
      %v764 = vld [vmem:[#allocation2 + $0x4] sm:$0x8]
      %v765 = vld [vmem:[#allocation2 + $0x8] sm:$0xf]
      %v766 = vld [vmem:[#allocation2 + $0xc] sm:$0xf]
      %v767 = vld [vmem:[#allocation2 + $0x10] sm:$0xf]
      %v768 = vld [vmem:[#allocation2 + $0x14] sm:$0xf]
      %v769 = vld [vmem:[#allocation2 + $0x18] sm:$0xf]
      %v770 = vld [vmem:[#allocation2 + $0x1c] sm:$0xf]
      %v771 = vld [vmem:[#allocation2 + $0x20] sm:$0xf]
      %v772 = vld [vmem:[#allocation2 + $0x24] sm:$0xf]
      %v773 = vld [vmem:[#allocation2 + $0x28] sm:$0xf]
      %v774 = vld [vmem:[#allocation2 + $0x2c] sm:$0xf]
      %v775 = vld [vmem:[#allocation2 + $0x30] sm:$0xf]
      %v776 = vld [vmem:[#allocation2 + $0x34] sm:$0xf]
      %v777 = vld [vmem:[#allocation2 + $0x38] sm:$0xf]
      %v778 = vld [vmem:[#allocation2 + $0x3c] sm:$0xf]
      %v779 = vld [vmem:[#allocation2 + $0x40] sm:$0xf]
      %v780 = vld [vmem:[#allocation2 + $0x44] sm:$0xf]
      %v781 = vld [vmem:[#allocation2 + $0x48] sm:$0xf]
      %v782 = vld [vmem:[#allocation2 + $0x4c] sm:$0xf]
      %v783 = vld [vmem:[#allocation2 + $0x50] sm:$0xf]
      %v784 = vld [vmem:[#allocation2 + $0x54] sm:$0xf]
      %v785 = vld [vmem:[#allocation2 + $0x58] sm:$0xf]
      %v786 = vld [vmem:[#allocation2 + $0x5c] sm:$0xf]
      %v787 = vld [vmem:[#allocation2 + $0x60] sm:$0xf]
      %v788 = vld [vmem:[#allocation2 + $0x64] sm:$0xf]
      %v789 = vld [vmem:[#allocation2 + $0x68] sm:$0xf]
      %v790 = vld [vmem:[#allocation2 + $0x6c] sm:$0xf]
      %v791 = vld [vmem:[#allocation2 + $0x70] sm:$0xf]
      %v792 = vld [vmem:[#allocation2 + $0x74] sm:$0xf]
      %v793 = vld [vmem:[#allocation2 + $0x78] sm:$0xf]
      %v794 = vld [vmem:[#allocation2 + $0x7c] sm:$0xf]
      %v795 = vld [vmem:[#allocation2 + $0x80] sm:$0xf]
      %v796 = vld [vmem:[#allocation2 + $0x84] sm:$0xf]
      %798 = vset.pattern.permute.xlu0 0
      %799 = vperm.xlu0 %798, %v732
      %v800 = vpop.permute.xlu0 %799
      %v803 = vunpack.c.l.s4 839922192
      %v804 = vunpack.c.0.s8 %v803
      %v805 = vperm.slane %v800, %v804
      %807 = vset.pattern.permute.xlu0 0
      %808 = vperm.xlu0 %807, %v733
      %v809 = vpop.permute.xlu0 %808
      %v812 = vunpack.c.l.s4 839922192
      %v813 = vunpack.c.0.s8 %v812
      %v814 = vperm.slane %v809, %v813
      %816 = vset.pattern.permute.xlu0 0
      %817 = vperm.xlu0 %816, %v734
      %v818 = vpop.permute.xlu0 %817
      %v821 = vunpack.c.l.s4 839922192
      %v822 = vunpack.c.0.s8 %v821
      %v823 = vperm.slane %v818, %v822
      %825 = vset.pattern.permute.xlu0 0
      %826 = vperm.xlu0 %825, %v735
      %v827 = vpop.permute.xlu0 %826
      %v830 = vunpack.c.l.s4 839922192
      %v831 = vunpack.c.0.s8 %v830
      %v832 = vperm.slane %v827, %v831
      %834 = vset.pattern.permute.xlu0 0
      %835 = vperm.xlu0 %834, %v736
      %v836 = vpop.permute.xlu0 %835
      %v839 = vunpack.c.l.s4 839922192
      %v840 = vunpack.c.0.s8 %v839
      %v841 = vperm.slane %v836, %v840
      %843 = vset.pattern.permute.xlu0 0
      %844 = vperm.xlu0 %843, %v737
      %v845 = vpop.permute.xlu0 %844
      %v848 = vunpack.c.l.s4 839922192
      %v849 = vunpack.c.0.s8 %v848
      %v850 = vperm.slane %v845, %v849
      %852 = vset.pattern.permute.xlu0 0
      %853 = vperm.xlu0 %852, %v738
      %v854 = vpop.permute.xlu0 %853
      %v857 = vunpack.c.l.s4 839922192
      %v858 = vunpack.c.0.s8 %v857
      %v859 = vperm.slane %v854, %v858
      %861 = vset.pattern.permute.xlu0 0
      %862 = vperm.xlu0 %861, %v739
      %v863 = vpop.permute.xlu0 %862
      %v866 = vunpack.c.l.s4 839922192
      %v867 = vunpack.c.0.s8 %v866
      %v868 = vperm.slane %v863, %v867
      %870 = vset.pattern.permute.xlu0 0
      %871 = vperm.xlu0 %870, %v740
      %v872 = vpop.permute.xlu0 %871
      %v875 = vunpack.c.l.s4 839922192
      %v876 = vunpack.c.0.s8 %v875
      %v877 = vperm.slane %v872, %v876
      %879 = vset.pattern.permute.xlu0 0
      %880 = vperm.xlu0 %879, %v741
      %v881 = vpop.permute.xlu0 %880
      %v884 = vunpack.c.l.s4 839922192
      %v885 = vunpack.c.0.s8 %v884
      %v886 = vperm.slane %v881, %v885
      %888 = vset.pattern.permute.xlu0 0
      %889 = vperm.xlu0 %888, %v742
      %v890 = vpop.permute.xlu0 %889
      %v893 = vunpack.c.l.s4 839922192
      %v894 = vunpack.c.0.s8 %v893
      %v895 = vperm.slane %v890, %v894
      %897 = vset.pattern.permute.xlu0 0
      %898 = vperm.xlu0 %897, %v743
      %v899 = vpop.permute.xlu0 %898
      %v902 = vunpack.c.l.s4 839922192
      %v903 = vunpack.c.0.s8 %v902
      %v904 = vperm.slane %v899, %v903
      %906 = vset.pattern.permute.xlu0 0
      %907 = vperm.xlu0 %906, %v744
      %v908 = vpop.permute.xlu0 %907
      %v911 = vunpack.c.l.s4 839922192
      %v912 = vunpack.c.0.s8 %v911
      %v913 = vperm.slane %v908, %v912
      %915 = vset.pattern.permute.xlu0 0
      %916 = vperm.xlu0 %915, %v745
      %v917 = vpop.permute.xlu0 %916
      %v920 = vunpack.c.l.s4 839922192
      %v921 = vunpack.c.0.s8 %v920
      %v922 = vperm.slane %v917, %v921
      %924 = vset.pattern.permute.xlu0 0
      %925 = vperm.xlu0 %924, %v746
      %v926 = vpop.permute.xlu0 %925
      %v929 = vunpack.c.l.s4 839922192
      %v930 = vunpack.c.0.s8 %v929
      %v931 = vperm.slane %v926, %v930
      %933 = vset.pattern.permute.xlu0 0
      %934 = vperm.xlu0 %933, %v747
      %v935 = vpop.permute.xlu0 %934
      %v938 = vunpack.c.l.s4 839922192
      %v939 = vunpack.c.0.s8 %v938
      %v940 = vperm.slane %v935, %v939
      %942 = vset.pattern.permute.xlu0 0
      %943 = vperm.xlu0 %942, %v748
      %v944 = vpop.permute.xlu0 %943
      %v947 = vunpack.c.l.s4 839922192
      %v948 = vunpack.c.0.s8 %v947
      %v949 = vperm.slane %v944, %v948
      %951 = vset.pattern.permute.xlu0 0
      %952 = vperm.xlu0 %951, %v749
      %v953 = vpop.permute.xlu0 %952
      %v956 = vunpack.c.l.s4 839922192
      %v957 = vunpack.c.0.s8 %v956
      %v958 = vperm.slane %v953, %v957
      %960 = vset.pattern.permute.xlu0 0
      %961 = vperm.xlu0 %960, %v750
      %v962 = vpop.permute.xlu0 %961
      %v965 = vunpack.c.l.s4 839922192
      %v966 = vunpack.c.0.s8 %v965
      %v967 = vperm.slane %v962, %v966
      %969 = vset.pattern.permute.xlu0 0
      %970 = vperm.xlu0 %969, %v751
      %v971 = vpop.permute.xlu0 %970
      %v974 = vunpack.c.l.s4 839922192
      %v975 = vunpack.c.0.s8 %v974
      %v976 = vperm.slane %v971, %v975
      %978 = vset.pattern.permute.xlu0 0
      %979 = vperm.xlu0 %978, %v752
      %v980 = vpop.permute.xlu0 %979
      %v983 = vunpack.c.l.s4 839922192
      %v984 = vunpack.c.0.s8 %v983
      %v985 = vperm.slane %v980, %v984
      %987 = vset.pattern.permute.xlu0 0
      %988 = vperm.xlu0 %987, %v753
      %v989 = vpop.permute.xlu0 %988
      %v992 = vunpack.c.l.s4 839922192
      %v993 = vunpack.c.0.s8 %v992
      %v994 = vperm.slane %v989, %v993
      %996 = vset.pattern.permute.xlu0 0
      %997 = vperm.xlu0 %996, %v754
      %v998 = vpop.permute.xlu0 %997
      %v1001 = vunpack.c.l.s4 839922192
      %v1002 = vunpack.c.0.s8 %v1001
      %v1003 = vperm.slane %v998, %v1002
      %1005 = vset.pattern.permute.xlu0 0
      %1006 = vperm.xlu0 %1005, %v755
      %v1007 = vpop.permute.xlu0 %1006
      %v1010 = vunpack.c.l.s4 839922192
      %v1011 = vunpack.c.0.s8 %v1010
      %v1012 = vperm.slane %v1007, %v1011
      %1014 = vset.pattern.permute.xlu0 0
      %1015 = vperm.xlu0 %1014, %v756
      %v1016 = vpop.permute.xlu0 %1015
      %v1019 = vunpack.c.l.s4 839922192
      %v1020 = vunpack.c.0.s8 %v1019
      %v1021 = vperm.slane %v1016, %v1020
      %1023 = vset.pattern.permute.xlu0 0
      %1024 = vperm.xlu0 %1023, %v757
      %v1025 = vpop.permute.xlu0 %1024
      %v1028 = vunpack.c.l.s4 839922192
      %v1029 = vunpack.c.0.s8 %v1028
      %v1030 = vperm.slane %v1025, %v1029
      %1032 = vset.pattern.permute.xlu0 0
      %1033 = vperm.xlu0 %1032, %v758
      %v1034 = vpop.permute.xlu0 %1033
      %v1037 = vunpack.c.l.s4 839922192
      %v1038 = vunpack.c.0.s8 %v1037
      %v1039 = vperm.slane %v1034, %v1038
      %1041 = vset.pattern.permute.xlu0 0
      %1042 = vperm.xlu0 %1041, %v759
      %v1043 = vpop.permute.xlu0 %1042
      %v1046 = vunpack.c.l.s4 839922192
      %v1047 = vunpack.c.0.s8 %v1046
      %v1048 = vperm.slane %v1043, %v1047
      %1050 = vset.pattern.permute.xlu0 0
      %1051 = vperm.xlu0 %1050, %v760
      %v1052 = vpop.permute.xlu0 %1051
      %v1055 = vunpack.c.l.s4 839922192
      %v1056 = vunpack.c.0.s8 %v1055
      %v1057 = vperm.slane %v1052, %v1056
      %1059 = vset.pattern.permute.xlu0 0
      %1060 = vperm.xlu0 %1059, %v761
      %v1061 = vpop.permute.xlu0 %1060
      %v1064 = vunpack.c.l.s4 839922192
      %v1065 = vunpack.c.0.s8 %v1064
      %v1066 = vperm.slane %v1061, %v1065
      %1068 = vset.pattern.permute.xlu0 0
      %1069 = vperm.xlu0 %1068, %v762
      %v1070 = vpop.permute.xlu0 %1069
      %v1073 = vunpack.c.l.s4 839922192
      %v1074 = vunpack.c.0.s8 %v1073
      %v1075 = vperm.slane %v1070, %v1074
      %1077 = vset.pattern.permute.xlu0 0
      %1078 = vperm.xlu0 %1077, %v763
      %v1079 = vpop.permute.xlu0 %1078
      %v1082 = vunpack.c.l.s4 839922192
      %v1083 = vunpack.c.0.s8 %v1082
      %v1084 = vperm.slane %v1079, %v1083
      %v1085 = vunpack.c.l.bf16 %v764
      %v1086 = vunpack.c.l.bf16 %v765
      %v1087 = vunpack.c.l.bf16 %v766
      %v1088 = vunpack.c.l.bf16 %v767
      %v1089 = vunpack.c.l.bf16 %v768
      %v1090 = vunpack.c.l.bf16 %v769
      %v1091 = vunpack.c.l.bf16 %v770
      %v1092 = vunpack.c.l.bf16 %v771
      %v1093 = vunpack.c.l.bf16 %v772
      %v1094 = vunpack.c.l.bf16 %v773
      %v1095 = vunpack.c.l.bf16 %v774
      %v1096 = vunpack.c.l.bf16 %v775
      %v1097 = vunpack.c.l.bf16 %v776
      %v1098 = vunpack.c.l.bf16 %v777
      %v1099 = vunpack.c.l.bf16 %v778
      %v1100 = vunpack.c.l.bf16 %v779
      %v1101 = vunpack.c.l.bf16 %v780
      %v1102 = vunpack.c.l.bf16 %v781
      %v1103 = vunpack.c.l.bf16 %v782
      %v1104 = vunpack.c.l.bf16 %v783
      %v1105 = vunpack.c.l.bf16 %v784
      %v1106 = vunpack.c.l.bf16 %v785
      %v1107 = vunpack.c.l.bf16 %v786
      %v1108 = vunpack.c.l.bf16 %v787
      %v1109 = vunpack.c.l.bf16 %v788
      %v1110 = vunpack.c.l.bf16 %v789
      %v1111 = vunpack.c.l.bf16 %v790
      %v1112 = vunpack.c.l.bf16 %v791
      %v1113 = vunpack.c.l.bf16 %v792
      %v1114 = vunpack.c.l.bf16 %v793
      %v1115 = vunpack.c.l.bf16 %v794
      %v1116 = vunpack.c.l.bf16 %v795
      %v1117 = vunpack.c.l.bf16 %v796
      %v1118 = vunpack.c.l.bf16 %v805
      %v1119 = vunpack.c.l.bf16 %v814
      %v1120 = vunpack.c.l.bf16 %v823
      %v1121 = vunpack.c.l.bf16 %v832
      %v1122 = vunpack.c.l.bf16 %v841
      %v1123 = vunpack.c.l.bf16 %v850
      %v1124 = vunpack.c.l.bf16 %v859
      %v1125 = vunpack.c.l.bf16 %v868
      %v1126 = vunpack.c.l.bf16 %v877
      %v1127 = vunpack.c.l.bf16 %v886
      %v1128 = vunpack.c.l.bf16 %v895
      %v1129 = vunpack.c.l.bf16 %v904
      %v1130 = vunpack.c.l.bf16 %v913
      %v1131 = vunpack.c.l.bf16 %v922
      %v1132 = vunpack.c.l.bf16 %v931
      %v1133 = vunpack.c.l.bf16 %v940
      %v1134 = vunpack.c.l.bf16 %v949
      %v1135 = vunpack.c.l.bf16 %v958
      %v1136 = vunpack.c.l.bf16 %v967
      %v1137 = vunpack.c.l.bf16 %v976
      %v1138 = vunpack.c.l.bf16 %v985
      %v1139 = vunpack.c.l.bf16 %v994
      %v1140 = vunpack.c.l.bf16 %v1003
      %v1141 = vunpack.c.l.bf16 %v1012
      %v1142 = vunpack.c.l.bf16 %v1021
      %v1143 = vunpack.c.l.bf16 %v1030
      %v1144 = vunpack.c.l.bf16 %v1039
      %v1145 = vunpack.c.l.bf16 %v1048
      %v1146 = vunpack.c.l.bf16 %v1057
      %v1147 = vunpack.c.l.bf16 %v1066
      %v1148 = vunpack.c.l.bf16 %v1075
      %v1149 = vunpack.c.l.bf16 %v1084
      %vm1182 = vcmask 1046528
      %v1183 = vrot.slane %v1118, 1
      %v1184 = vrot.slane %v1119, 1
      %v1185 = vsel %vm1182, %v1183, %v1184
      %v1186 = vrot.slane %v1120, 1
      %v1187 = vsel %vm1182, %v1184, %v1186
      %v1188 = vrot.slane %v1121, 1
      %v1189 = vsel %vm1182, %v1186, %v1188
      %v1190 = vrot.slane %v1122, 1
      %v1191 = vsel %vm1182, %v1188, %v1190
      %v1192 = vrot.slane %v1123, 1
      %v1193 = vsel %vm1182, %v1190, %v1192
      %v1194 = vrot.slane %v1124, 1
      %v1195 = vsel %vm1182, %v1192, %v1194
      %v1196 = vrot.slane %v1125, 1
      %v1197 = vsel %vm1182, %v1194, %v1196
      %v1198 = vrot.slane %v1126, 1
      %v1199 = vsel %vm1182, %v1196, %v1198
      %v1200 = vrot.slane %v1127, 1
      %v1201 = vsel %vm1182, %v1198, %v1200
      %v1202 = vrot.slane %v1128, 1
      %v1203 = vsel %vm1182, %v1200, %v1202
      %v1204 = vrot.slane %v1129, 1
      %v1205 = vsel %vm1182, %v1202, %v1204
      %v1206 = vrot.slane %v1130, 1
      %v1207 = vsel %vm1182, %v1204, %v1206
      %v1208 = vrot.slane %v1131, 1
      %v1209 = vsel %vm1182, %v1206, %v1208
      %v1210 = vrot.slane %v1132, 1
      %v1211 = vsel %vm1182, %v1208, %v1210
      %v1212 = vrot.slane %v1133, 1
      %v1213 = vsel %vm1182, %v1210, %v1212
      %v1214 = vrot.slane %v1134, 1
      %v1215 = vsel %vm1182, %v1212, %v1214
      %v1216 = vrot.slane %v1135, 1
      %v1217 = vsel %vm1182, %v1214, %v1216
      %v1218 = vrot.slane %v1136, 1
      %v1219 = vsel %vm1182, %v1216, %v1218
      %v1220 = vrot.slane %v1137, 1
      %v1221 = vsel %vm1182, %v1218, %v1220
      %v1222 = vrot.slane %v1138, 1
      %v1223 = vsel %vm1182, %v1220, %v1222
      %v1224 = vrot.slane %v1139, 1
      %v1225 = vsel %vm1182, %v1222, %v1224
      %v1226 = vrot.slane %v1140, 1
      %v1227 = vsel %vm1182, %v1224, %v1226
      %v1228 = vrot.slane %v1141, 1
      %v1229 = vsel %vm1182, %v1226, %v1228
      %v1230 = vrot.slane %v1142, 1
      %v1231 = vsel %vm1182, %v1228, %v1230
      %v1232 = vrot.slane %v1143, 1
      %v1233 = vsel %vm1182, %v1230, %v1232
      %v1234 = vrot.slane %v1144, 1
      %v1235 = vsel %vm1182, %v1232, %v1234
      %v1236 = vrot.slane %v1145, 1
      %v1237 = vsel %vm1182, %v1234, %v1236
      %v1238 = vrot.slane %v1146, 1
      %v1239 = vsel %vm1182, %v1236, %v1238
      %v1240 = vrot.slane %v1147, 1
      %v1241 = vsel %vm1182, %v1238, %v1240
      %v1242 = vrot.slane %v1148, 1
      %v1243 = vsel %vm1182, %v1240, %v1242
      %v1244 = vrot.slane %v1149, 1
      %v1245 = vsel %vm1182, %v1242, %v1244
      %v1279 = vmul.f32 %v1085, %v1183
      %v1280 = vmul.f32 %v1086, %v1185
      %v1281 = vmul.f32 %v1087, %v1187
      %v1282 = vmul.f32 %v1088, %v1189
      %v1283 = vmul.f32 %v1089, %v1191
      %v1284 = vmul.f32 %v1090, %v1193
      %v1285 = vmul.f32 %v1091, %v1195
      %v1286 = vmul.f32 %v1092, %v1197
      %v1287 = vmul.f32 %v1093, %v1199
      %v1288 = vmul.f32 %v1094, %v1201
      %v1289 = vmul.f32 %v1095, %v1203
      %v1290 = vmul.f32 %v1096, %v1205
      %v1291 = vmul.f32 %v1097, %v1207
      %v1292 = vmul.f32 %v1098, %v1209
      %v1293 = vmul.f32 %v1099, %v1211
      %v1294 = vmul.f32 %v1100, %v1213
      %v1295 = vmul.f32 %v1101, %v1215
      %v1296 = vmul.f32 %v1102, %v1217
      %v1297 = vmul.f32 %v1103, %v1219
      %v1298 = vmul.f32 %v1104, %v1221
      %v1299 = vmul.f32 %v1105, %v1223
      %v1300 = vmul.f32 %v1106, %v1225
      %v1301 = vmul.f32 %v1107, %v1227
      %v1302 = vmul.f32 %v1108, %v1229
      %v1303 = vmul.f32 %v1109, %v1231
      %v1304 = vmul.f32 %v1110, %v1233
      %v1305 = vmul.f32 %v1111, %v1235
      %v1306 = vmul.f32 %v1112, %v1237
      %v1307 = vmul.f32 %v1113, %v1239
      %v1308 = vmul.f32 %v1114, %v1241
      %v1309 = vmul.f32 %v1115, %v1243
      %v1310 = vmul.f32 %v1116, %v1245
      %v1311 = vmul.f32 %v1117, %v1244
      %v1312 = vpack.c.bf16 %v1280, %v1279
      %v1313 = vpack.c.bf16 %v1282, %v1281
      %v1314 = vpack.c.bf16 %v1284, %v1283
      %v1315 = vpack.c.bf16 %v1286, %v1285
      %v1316 = vpack.c.bf16 %v1288, %v1287
      %v1317 = vpack.c.bf16 %v1290, %v1289
      %v1318 = vpack.c.bf16 %v1292, %v1291
      %v1319 = vpack.c.bf16 %v1294, %v1293
      %v1320 = vpack.c.bf16 %v1296, %v1295
      %v1321 = vpack.c.bf16 %v1298, %v1297
      %v1322 = vpack.c.bf16 %v1300, %v1299
      %v1323 = vpack.c.bf16 %v1302, %v1301
      %v1324 = vpack.c.bf16 %v1304, %v1303
      %v1325 = vpack.c.bf16 %v1306, %v1305
      %v1326 = vpack.c.bf16 %v1308, %v1307
      %v1327 = vpack.c.bf16 %v1310, %v1309
      %v1328 = vpack.c.bf16 %v1311, %v1311
      %v1329 = vld [vmem:[%s3] sm:$0xf]
      %v1330 = vld [vmem:[%s3 + $0x4] sm:$0xf]
      %v1331 = vld [vmem:[%s3 + $0x8] sm:$0xf]
      %v1332 = vld [vmem:[%s3 + $0xc] sm:$0xf]
      %v1333 = vld [vmem:[%s3 + $0x10] sm:$0xf]
      %v1334 = vld [vmem:[%s3 + $0x14] sm:$0xf]
      %v1335 = vld [vmem:[%s3 + $0x18] sm:$0xf]
      %v1336 = vld [vmem:[%s3 + $0x1c] sm:$0xf]
      %vm1337 = vsmask.f32 4352
      %v1339 = vshrl.u32 %v1312, 16
      %v1341 = vrot.slane %v1339, 3
      %v1342 = vshll.u32 %v1312, 16
      %v1344 = vrot.slane %v1342, 4
      %v1345 = vor.u32 %v1341, %v1344
      %v1347 = vshrl.u32 %v1313, 16
      %v1349 = vrot.slane %v1347, 3
      %v1350 = vshll.u32 %v1313, 16
      %v1352 = vrot.slane %v1350, 4
      %v1353 = vor.u32 %v1349, %v1352
      %v1354 = vsel %vm1337, %v1345, %v1353
      %v1356 = vshrl.u32 %v1314, 16
      %v1358 = vrot.slane %v1356, 3
      %v1359 = vshll.u32 %v1314, 16
      %v1361 = vrot.slane %v1359, 4
      %v1362 = vor.u32 %v1358, %v1361
      %v1363 = vsel %vm1337, %v1353, %v1362
      %v1365 = vshrl.u32 %v1315, 16
      %v1367 = vrot.slane %v1365, 3
      %v1368 = vshll.u32 %v1315, 16
      %v1370 = vrot.slane %v1368, 4
      %v1371 = vor.u32 %v1367, %v1370
      %v1372 = vsel %vm1337, %v1362, %v1371
      %v1374 = vshrl.u32 %v1316, 16
      %v1376 = vrot.slane %v1374, 3
      %v1377 = vshll.u32 %v1316, 16
      %v1379 = vrot.slane %v1377, 4
      %v1380 = vor.u32 %v1376, %v1379
      %v1381 = vsel %vm1337, %v1371, %v1380
      %v1383 = vshrl.u32 %v1317, 16
      %v1385 = vrot.slane %v1383, 3
      %v1386 = vshll.u32 %v1317, 16
      %v1388 = vrot.slane %v1386, 4
      %v1389 = vor.u32 %v1385, %v1388
      %v1390 = vsel %vm1337, %v1380, %v1389
      %v1392 = vshrl.u32 %v1318, 16
      %v1394 = vrot.slane %v1392, 3
      %v1395 = vshll.u32 %v1318, 16
      %v1397 = vrot.slane %v1395, 4
      %v1398 = vor.u32 %v1394, %v1397
      %v1399 = vsel %vm1337, %v1389, %v1398
      %v1401 = vshrl.u32 %v1319, 16
      %v1403 = vrot.slane %v1401, 3
      %v1404 = vshll.u32 %v1319, 16
      %v1406 = vrot.slane %v1404, 4
      %v1407 = vor.u32 %v1403, %v1406
      %v1408 = vsel %vm1337, %v1398, %v1407
      %v1410 = vshrl.u32 %v1320, 16
      %v1412 = vrot.slane %v1410, 3
      %v1413 = vshll.u32 %v1320, 16
      %v1415 = vrot.slane %v1413, 4
      %v1416 = vor.u32 %v1412, %v1415
      %v1417 = vsel %vm1337, %v1407, %v1416
      %v1419 = vshrl.u32 %v1321, 16
      %v1421 = vrot.slane %v1419, 3
      %v1422 = vshll.u32 %v1321, 16
      %v1424 = vrot.slane %v1422, 4
      %v1425 = vor.u32 %v1421, %v1424
      %v1426 = vsel %vm1337, %v1416, %v1425
      %v1428 = vshrl.u32 %v1322, 16
      %v1430 = vrot.slane %v1428, 3
      %v1431 = vshll.u32 %v1322, 16
      %v1433 = vrot.slane %v1431, 4
      %v1434 = vor.u32 %v1430, %v1433
      %v1435 = vsel %vm1337, %v1425, %v1434
      %v1437 = vshrl.u32 %v1323, 16
      %v1439 = vrot.slane %v1437, 3
      %v1440 = vshll.u32 %v1323, 16
      %v1442 = vrot.slane %v1440, 4
      %v1443 = vor.u32 %v1439, %v1442
      %v1444 = vsel %vm1337, %v1434, %v1443
      %v1446 = vshrl.u32 %v1324, 16
      %v1448 = vrot.slane %v1446, 3
      %v1449 = vshll.u32 %v1324, 16
      %v1451 = vrot.slane %v1449, 4
      %v1452 = vor.u32 %v1448, %v1451
      %v1453 = vsel %vm1337, %v1443, %v1452
      %v1455 = vshrl.u32 %v1325, 16
      %v1457 = vrot.slane %v1455, 3
      %v1458 = vshll.u32 %v1325, 16
      %v1460 = vrot.slane %v1458, 4
      %v1461 = vor.u32 %v1457, %v1460
      %v1462 = vsel %vm1337, %v1452, %v1461
      %v1464 = vshrl.u32 %v1326, 16
      %v1466 = vrot.slane %v1464, 3
      %v1467 = vshll.u32 %v1326, 16
      %v1469 = vrot.slane %v1467, 4
      %v1470 = vor.u32 %v1466, %v1469
      %v1471 = vsel %vm1337, %v1461, %v1470
      %v1473 = vshrl.u32 %v1327, 16
      %v1475 = vrot.slane %v1473, 3
      %v1476 = vshll.u32 %v1327, 16
      %v1478 = vrot.slane %v1476, 4
      %v1479 = vor.u32 %v1475, %v1478
      %v1480 = vsel %vm1337, %v1470, %v1479
      %v1482 = vshrl.u32 %v1328, 16
      %v1484 = vrot.slane %v1482, 3
      %v1485 = vshll.u32 %v1328, 16
      %v1487 = vrot.slane %v1485, 4
      %v1488 = vor.u32 %v1484, %v1487
      %v1489 = vsel %vm1337, %v1479, %v1488
      %v1498 = vunpack.c.l.b16 %v1329
      %v1499 = vunpack.c.l.b16 %v1330
      %v1500 = vunpack.c.l.b16 %v1331
      %v1501 = vunpack.c.l.b16 %v1332
      %v1502 = vunpack.c.l.b16 %v1333
      %v1503 = vunpack.c.l.b16 %v1334
      %v1504 = vunpack.c.l.b16 %v1335
      %v1505 = vunpack.c.l.b16 %v1336
      %v1506 = vpack.c.b16 %v1499, %v1498
      %v1507 = vpack.c.b16 %v1501, %v1500
      %v1508 = vpack.c.b16 %v1503, %v1502
      %v1509 = vpack.c.b16 %v1505, %v1504
      %vm1514 = vcmask 523264
      %v1516 = vsel %vm1514, %v1354, 0
      %v1519 = vsel %vm1514, %v1363, 0
      %v1522 = vsel %vm1514, %v1372, 0
      %v1525 = vsel %vm1514, %v1381, 0
      %v1528 = vsel %vm1514, %v1390, 0
      %v1531 = vsel %vm1514, %v1399, 0
      %v1534 = vsel %vm1514, %v1408, 0
      %v1537 = vsel %vm1514, %v1417, 0
      %v1540 = vsel %vm1514, %v1426, 0
      %v1543 = vsel %vm1514, %v1435, 0
      %v1546 = vsel %vm1514, %v1444, 0
      %v1549 = vsel %vm1514, %v1453, 0
      %v1552 = vsel %vm1514, %v1462, 0
      %v1555 = vsel %vm1514, %v1471, 0
      %v1558 = vsel %vm1514, %v1480, 0
      %v1561 = vsel %vm1514, %v1489, 0
      %1563 = vmatpush.bf16.msra.mxu0 0
      %1564 = vmatpush.bf16.msra.mxu0 0
      %1565 = vmatpush.bf16.msra.mxu0 0
      %1566 = vmatpush.bf16.msra.mxu0 0
      %1567 = vmatpush.bf16.msra.mxu0 %v1509
      %1568 = vmatpush.bf16.msra.mxu0 %v1508
      %1569 = vmatpush.bf16.msra.mxu0 %v1507
      %1570 = vmatpush.bf16.msra.mxu0 %v1506
      %1571 = vmatmul.bf16.gmra.mxu0 %v1516
      %v1572 = vpop.f32.mrf.mxu0
      %v1573 = vadd.f32 0.0, %v1572
      %v1574 = vpop.f32.mrf.mxu0
      %v1575 = vadd.f32 0.0, %v1574
      %1576 = vmatmul.bf16.gmra.mxu0 %v1519
      %v1577 = vpop.f32.mrf.mxu0
      %v1578 = vadd.f32 0.0, %v1577
      %v1579 = vpop.f32.mrf.mxu0
      %v1580 = vadd.f32 0.0, %v1579
      %1581 = vmatmul.bf16.gmra.mxu0 %v1522
      %v1582 = vpop.f32.mrf.mxu0
      %v1583 = vadd.f32 0.0, %v1582
      %v1584 = vpop.f32.mrf.mxu0
      %v1585 = vadd.f32 0.0, %v1584
      %1586 = vmatmul.bf16.gmra.mxu0 %v1525
      %v1587 = vpop.f32.mrf.mxu0
      %v1588 = vadd.f32 0.0, %v1587
      %v1589 = vpop.f32.mrf.mxu0
      %v1590 = vadd.f32 0.0, %v1589
      %1591 = vmatmul.bf16.gmra.mxu0 %v1528
      %v1592 = vpop.f32.mrf.mxu0
      %v1593 = vadd.f32 0.0, %v1592
      %v1594 = vpop.f32.mrf.mxu0
      %v1595 = vadd.f32 0.0, %v1594
      %1596 = vmatmul.bf16.gmra.mxu0 %v1531
      %v1597 = vpop.f32.mrf.mxu0
      %v1598 = vadd.f32 0.0, %v1597
      %v1599 = vpop.f32.mrf.mxu0
      %v1600 = vadd.f32 0.0, %v1599
      %1601 = vmatmul.bf16.gmra.mxu0 %v1534
      %v1602 = vpop.f32.mrf.mxu0
      %v1603 = vadd.f32 0.0, %v1602
      %v1604 = vpop.f32.mrf.mxu0
      %v1605 = vadd.f32 0.0, %v1604
      %1606 = vmatmul.bf16.gmra.mxu0 %v1537
      %v1607 = vpop.f32.mrf.mxu0
      %v1608 = vadd.f32 0.0, %v1607
      %v1609 = vpop.f32.mrf.mxu0
      %v1610 = vadd.f32 0.0, %v1609
      %1611 = vmatmul.bf16.gmra.mxu0 %v1540
      %v1612 = vpop.f32.mrf.mxu0
      %v1613 = vadd.f32 0.0, %v1612
      %v1614 = vpop.f32.mrf.mxu0
      %v1615 = vadd.f32 0.0, %v1614
      %1616 = vmatmul.bf16.gmra.mxu0 %v1543
      %v1617 = vpop.f32.mrf.mxu0
      %v1618 = vadd.f32 0.0, %v1617
      %v1619 = vpop.f32.mrf.mxu0
      %v1620 = vadd.f32 0.0, %v1619
      %1621 = vmatmul.bf16.gmra.mxu0 %v1546
      %v1622 = vpop.f32.mrf.mxu0
      %v1623 = vadd.f32 0.0, %v1622
      %v1624 = vpop.f32.mrf.mxu0
      %v1625 = vadd.f32 0.0, %v1624
      %1626 = vmatmul.bf16.gmra.mxu0 %v1549
      %v1627 = vpop.f32.mrf.mxu0
      %v1628 = vadd.f32 0.0, %v1627
      %v1629 = vpop.f32.mrf.mxu0
      %v1630 = vadd.f32 0.0, %v1629
      %1631 = vmatmul.bf16.gmra.mxu0 %v1552
      %v1632 = vpop.f32.mrf.mxu0
      %v1633 = vadd.f32 0.0, %v1632
      %v1634 = vpop.f32.mrf.mxu0
      %v1635 = vadd.f32 0.0, %v1634
      %1636 = vmatmul.bf16.gmra.mxu0 %v1555
      %v1637 = vpop.f32.mrf.mxu0
      %v1638 = vadd.f32 0.0, %v1637
      %v1639 = vpop.f32.mrf.mxu0
      %v1640 = vadd.f32 0.0, %v1639
      %1641 = vmatmul.bf16.gmra.mxu0 %v1558
      %v1642 = vpop.f32.mrf.mxu0
      %v1643 = vadd.f32 0.0, %v1642
      %v1644 = vpop.f32.mrf.mxu0
      %v1645 = vadd.f32 0.0, %v1644
      %1646 = vmatmul.bf16.gmra.mxu0 %v1561
      %v1647 = vpop.f32.mrf.mxu0
      %v1648 = vadd.f32 0.0, %v1647
      %v1649 = vpop.f32.mrf.mxu0
      %v1650 = vadd.f32 0.0, %v1649
      %1651 = vdwg.mxu0
      %1652 = vst.msk [vmem:[#allocation3] sm:$0xff] %vm1514, %v1573
      %1653 = vst.msk [vmem:[#allocation3 + $0x8] sm:$0xff] %vm1514, %v1575
      %1654 = vst.msk [vmem:[#allocation3 + $0x10] sm:$0xff] %vm1514, %v1578
      %1655 = vst.msk [vmem:[#allocation3 + $0x18] sm:$0xff] %vm1514, %v1580
      %1656 = vst.msk [vmem:[#allocation3 + $0x20] sm:$0xff] %vm1514, %v1583
      %1657 = vst.msk [vmem:[#allocation3 + $0x28] sm:$0xff] %vm1514, %v1585
      %1658 = vst.msk [vmem:[#allocation3 + $0x30] sm:$0xff] %vm1514, %v1588
      %1659 = vst.msk [vmem:[#allocation3 + $0x38] sm:$0xff] %vm1514, %v1590
      %1660 = vst.msk [vmem:[#allocation3 + $0x40] sm:$0xff] %vm1514, %v1593
      %1661 = vst.msk [vmem:[#allocation3 + $0x48] sm:$0xff] %vm1514, %v1595
      %1662 = vst.msk [vmem:[#allocation3 + $0x50] sm:$0xff] %vm1514, %v1598
      %1663 = vst.msk [vmem:[#allocation3 + $0x58] sm:$0xff] %vm1514, %v1600
      %1664 = vst.msk [vmem:[#allocation3 + $0x60] sm:$0xff] %vm1514, %v1603
      %1665 = vst.msk [vmem:[#allocation3 + $0x68] sm:$0xff] %vm1514, %v1605
      %1666 = vst.msk [vmem:[#allocation3 + $0x70] sm:$0xff] %vm1514, %v1608
      %1667 = vst.msk [vmem:[#allocation3 + $0x78] sm:$0xff] %vm1514, %v1610
      %1668 = vst.msk [vmem:[#allocation3 + $0x80] sm:$0xff] %vm1514, %v1613
      %1669 = vst.msk [vmem:[#allocation3 + $0x88] sm:$0xff] %vm1514, %v1615
      %1670 = vst.msk [vmem:[#allocation3 + $0x90] sm:$0xff] %vm1514, %v1618
      %1671 = vst.msk [vmem:[#allocation3 + $0x98] sm:$0xff] %vm1514, %v1620
      %1672 = vst.msk [vmem:[#allocation3 + $0xa0] sm:$0xff] %vm1514, %v1623
      %1673 = vst.msk [vmem:[#allocation3 + $0xa8] sm:$0xff] %vm1514, %v1625
      %1674 = vst.msk [vmem:[#allocation3 + $0xb0] sm:$0xff] %vm1514, %v1628
      %1675 = vst.msk [vmem:[#allocation3 + $0xb8] sm:$0xff] %vm1514, %v1630
      %1676 = vst.msk [vmem:[#allocation3 + $0xc0] sm:$0xff] %vm1514, %v1633
      %1677 = vst.msk [vmem:[#allocation3 + $0xc8] sm:$0xff] %vm1514, %v1635
      %1678 = vst.msk [vmem:[#allocation3 + $0xd0] sm:$0xff] %vm1514, %v1638
      %1679 = vst.msk [vmem:[#allocation3 + $0xd8] sm:$0xff] %vm1514, %v1640
      %1680 = vst.msk [vmem:[#allocation3 + $0xe0] sm:$0xff] %vm1514, %v1643
      %1681 = vst.msk [vmem:[#allocation3 + $0xe8] sm:$0xff] %vm1514, %v1645
      %1682 = vst.msk [vmem:[#allocation3 + $0xf0] sm:$0xff] %vm1514, %v1648
      %1683 = vst.msk [vmem:[#allocation3 + $0xf8] sm:$0xff] %vm1514, %v1650
      %v1684 = vld [vmem:[#allocation2 + $0x8] sm:$0xf]
      %v1685 = vld [vmem:[#allocation2 + $0xc] sm:$0xf]
      %v1686 = vld [vmem:[#allocation2 + $0x10] sm:$0xf]
      %v1687 = vld [vmem:[#allocation2 + $0x14] sm:$0xf]
      %v1688 = vld [vmem:[#allocation2 + $0x18] sm:$0xf]
      %v1689 = vld [vmem:[#allocation2 + $0x1c] sm:$0xf]
      %v1690 = vld [vmem:[#allocation2 + $0x20] sm:$0xf]
      %v1691 = vld [vmem:[#allocation2 + $0x24] sm:$0xf]
      %v1692 = vld [vmem:[#allocation2 + $0x28] sm:$0xf]
      %v1693 = vld [vmem:[#allocation2 + $0x2c] sm:$0xf]
      %v1694 = vld [vmem:[#allocation2 + $0x30] sm:$0xf]
      %v1695 = vld [vmem:[#allocation2 + $0x34] sm:$0xf]
      %v1696 = vld [vmem:[#allocation2 + $0x38] sm:$0xf]
      %v1697 = vld [vmem:[#allocation2 + $0x3c] sm:$0xf]
      %v1698 = vld [vmem:[#allocation2 + $0x40] sm:$0xf]
      %v1699 = vld [vmem:[#allocation2 + $0x44] sm:$0xf]
      %v1700 = vld [vmem:[#allocation2 + $0x48] sm:$0xf]
      %v1701 = vld [vmem:[#allocation2 + $0x4c] sm:$0xf]
      %v1702 = vld [vmem:[#allocation2 + $0x50] sm:$0xf]
      %v1703 = vld [vmem:[#allocation2 + $0x54] sm:$0xf]
      %v1704 = vld [vmem:[#allocation2 + $0x58] sm:$0xf]
      %v1705 = vld [vmem:[#allocation2 + $0x5c] sm:$0xf]
      %v1706 = vld [vmem:[#allocation2 + $0x60] sm:$0xf]
      %v1707 = vld [vmem:[#allocation2 + $0x64] sm:$0xf]
      %v1708 = vld [vmem:[#allocation2 + $0x68] sm:$0xf]
      %v1709 = vld [vmem:[#allocation2 + $0x6c] sm:$0xf]
      %v1710 = vld [vmem:[#allocation2 + $0x70] sm:$0xf]
      %v1711 = vld [vmem:[#allocation2 + $0x74] sm:$0xf]
      %v1712 = vld [vmem:[#allocation2 + $0x78] sm:$0xf]
      %v1713 = vld [vmem:[#allocation2 + $0x7c] sm:$0xf]
      %v1714 = vld [vmem:[#allocation2 + $0x80] sm:$0xf]
      %v1715 = vld [vmem:[#allocation2 + $0x84] sm:$0xf]
      %v1716 = vld [vmem:[%s3 + $0x20] sm:$0xf]
      %v1717 = vld [vmem:[%s3 + $0x24] sm:$0xf]
      %v1718 = vld [vmem:[%s3 + $0x28] sm:$0xf]
      %v1719 = vld [vmem:[%s3 + $0x2c] sm:$0xf]
      %v1720 = vld [vmem:[%s3 + $0x30] sm:$0xf]
      %v1721 = vld [vmem:[%s3 + $0x34] sm:$0xf]
      %v1722 = vld [vmem:[%s3 + $0x38] sm:$0xf]
      %v1723 = vld [vmem:[%s3 + $0x3c] sm:$0xf]
      %v1756 = vunpack.c.l.b16 %v1684
      %v1757 = vunpack.c.l.b16 %v1685
      %v1758 = vunpack.c.l.b16 %v1686
      %v1759 = vunpack.c.l.b16 %v1687
      %v1760 = vunpack.c.l.b16 %v1688
      %v1761 = vunpack.c.l.b16 %v1689
      %v1762 = vunpack.c.l.b16 %v1690
      %v1763 = vunpack.c.l.b16 %v1691
      %v1764 = vunpack.c.l.b16 %v1692
      %v1765 = vunpack.c.l.b16 %v1693
      %v1766 = vunpack.c.l.b16 %v1694
      %v1767 = vunpack.c.l.b16 %v1695
      %v1768 = vunpack.c.l.b16 %v1696
      %v1769 = vunpack.c.l.b16 %v1697
      %v1770 = vunpack.c.l.b16 %v1698
      %v1771 = vunpack.c.l.b16 %v1699
      %v1772 = vunpack.c.l.b16 %v1700
      %v1773 = vunpack.c.l.b16 %v1701
      %v1774 = vunpack.c.l.b16 %v1702
      %v1775 = vunpack.c.l.b16 %v1703
      %v1776 = vunpack.c.l.b16 %v1704
      %v1777 = vunpack.c.l.b16 %v1705
      %v1778 = vunpack.c.l.b16 %v1706
      %v1779 = vunpack.c.l.b16 %v1707
      %v1780 = vunpack.c.l.b16 %v1708
      %v1781 = vunpack.c.l.b16 %v1709
      %v1782 = vunpack.c.l.b16 %v1710
      %v1783 = vunpack.c.l.b16 %v1711
      %v1784 = vunpack.c.l.b16 %v1712
      %v1785 = vunpack.c.l.b16 %v1713
      %v1786 = vunpack.c.l.b16 %v1714
      %v1787 = vunpack.c.l.b16 %v1715
      %v1788 = vpack.c.b16 %v1757, %v1756
      %v1789 = vpack.c.b16 %v1759, %v1758
      %v1790 = vpack.c.b16 %v1761, %v1760
      %v1791 = vpack.c.b16 %v1763, %v1762
      %v1792 = vpack.c.b16 %v1765, %v1764
      %v1793 = vpack.c.b16 %v1767, %v1766
      %v1794 = vpack.c.b16 %v1769, %v1768
      %v1795 = vpack.c.b16 %v1771, %v1770
      %v1796 = vpack.c.b16 %v1773, %v1772
      %v1797 = vpack.c.b16 %v1775, %v1774
      %v1798 = vpack.c.b16 %v1777, %v1776
      %v1799 = vpack.c.b16 %v1779, %v1778
      %v1800 = vpack.c.b16 %v1781, %v1780
      %v1801 = vpack.c.b16 %v1783, %v1782
      %v1802 = vpack.c.b16 %v1785, %v1784
      %v1803 = vpack.c.b16 %v1787, %v1786
      %v1812 = vunpack.c.l.b16 %v1716
      %v1813 = vunpack.c.l.b16 %v1717
      %v1814 = vunpack.c.l.b16 %v1718
      %v1815 = vunpack.c.l.b16 %v1719
      %v1816 = vunpack.c.l.b16 %v1720
      %v1817 = vunpack.c.l.b16 %v1721
      %v1818 = vunpack.c.l.b16 %v1722
      %v1819 = vunpack.c.l.b16 %v1723
      %v1820 = vpack.c.b16 %v1813, %v1812
      %v1821 = vpack.c.b16 %v1815, %v1814
      %v1822 = vpack.c.b16 %v1817, %v1816
      %v1823 = vpack.c.b16 %v1819, %v1818
      %v1829 = vsel %vm1514, %v1788, 0
      %v1832 = vsel %vm1514, %v1789, 0
      %v1835 = vsel %vm1514, %v1790, 0
      %v1838 = vsel %vm1514, %v1791, 0
      %v1841 = vsel %vm1514, %v1792, 0
      %v1844 = vsel %vm1514, %v1793, 0
      %v1847 = vsel %vm1514, %v1794, 0
      %v1850 = vsel %vm1514, %v1795, 0
      %v1853 = vsel %vm1514, %v1796, 0
      %v1856 = vsel %vm1514, %v1797, 0
      %v1859 = vsel %vm1514, %v1798, 0
      %v1862 = vsel %vm1514, %v1799, 0
      %v1865 = vsel %vm1514, %v1800, 0
      %v1868 = vsel %vm1514, %v1801, 0
      %v1871 = vsel %vm1514, %v1802, 0
      %v1874 = vsel %vm1514, %v1803, 0
      %1876 = vmatpush.bf16.msra.mxu0 0
      %1877 = vmatpush.bf16.msra.mxu0 0
      %1878 = vmatpush.bf16.msra.mxu0 0
      %1879 = vmatpush.bf16.msra.mxu0 0
      %1880 = vmatpush.bf16.msra.mxu0 %v1823
      %1881 = vmatpush.bf16.msra.mxu0 %v1822
      %1882 = vmatpush.bf16.msra.mxu0 %v1821
      %1883 = vmatpush.bf16.msra.mxu0 %v1820
      %1884 = vmatmul.bf16.gmra.mxu0 %v1829
      %v1885 = vpop.f32.mrf.mxu0
      %v1886 = vadd.f32 0.0, %v1885
      %v1887 = vpop.f32.mrf.mxu0
      %v1888 = vadd.f32 0.0, %v1887
      %1889 = vmatmul.bf16.gmra.mxu0 %v1832
      %v1890 = vpop.f32.mrf.mxu0
      %v1891 = vadd.f32 0.0, %v1890
      %v1892 = vpop.f32.mrf.mxu0
      %v1893 = vadd.f32 0.0, %v1892
      %1894 = vmatmul.bf16.gmra.mxu0 %v1835
      %v1895 = vpop.f32.mrf.mxu0
      %v1896 = vadd.f32 0.0, %v1895
      %v1897 = vpop.f32.mrf.mxu0
      %v1898 = vadd.f32 0.0, %v1897
      %1899 = vmatmul.bf16.gmra.mxu0 %v1838
      %v1900 = vpop.f32.mrf.mxu0
      %v1901 = vadd.f32 0.0, %v1900
      %v1902 = vpop.f32.mrf.mxu0
      %v1903 = vadd.f32 0.0, %v1902
      %1904 = vmatmul.bf16.gmra.mxu0 %v1841
      %v1905 = vpop.f32.mrf.mxu0
      %v1906 = vadd.f32 0.0, %v1905
      %v1907 = vpop.f32.mrf.mxu0
      %v1908 = vadd.f32 0.0, %v1907
      %1909 = vmatmul.bf16.gmra.mxu0 %v1844
      %v1910 = vpop.f32.mrf.mxu0
      %v1911 = vadd.f32 0.0, %v1910
      %v1912 = vpop.f32.mrf.mxu0
      %v1913 = vadd.f32 0.0, %v1912
      %1914 = vmatmul.bf16.gmra.mxu0 %v1847
      %v1915 = vpop.f32.mrf.mxu0
      %v1916 = vadd.f32 0.0, %v1915
      %v1917 = vpop.f32.mrf.mxu0
      %v1918 = vadd.f32 0.0, %v1917
      %1919 = vmatmul.bf16.gmra.mxu0 %v1850
      %v1920 = vpop.f32.mrf.mxu0
      %v1921 = vadd.f32 0.0, %v1920
      %v1922 = vpop.f32.mrf.mxu0
      %v1923 = vadd.f32 0.0, %v1922
      %1924 = vmatmul.bf16.gmra.mxu0 %v1853
      %v1925 = vpop.f32.mrf.mxu0
      %v1926 = vadd.f32 0.0, %v1925
      %v1927 = vpop.f32.mrf.mxu0
      %v1928 = vadd.f32 0.0, %v1927
      %1929 = vmatmul.bf16.gmra.mxu0 %v1856
      %v1930 = vpop.f32.mrf.mxu0
      %v1931 = vadd.f32 0.0, %v1930
      %v1932 = vpop.f32.mrf.mxu0
      %v1933 = vadd.f32 0.0, %v1932
      %1934 = vmatmul.bf16.gmra.mxu0 %v1859
      %v1935 = vpop.f32.mrf.mxu0
      %v1936 = vadd.f32 0.0, %v1935
      %v1937 = vpop.f32.mrf.mxu0
      %v1938 = vadd.f32 0.0, %v1937
      %1939 = vmatmul.bf16.gmra.mxu0 %v1862
      %v1940 = vpop.f32.mrf.mxu0
      %v1941 = vadd.f32 0.0, %v1940
      %v1942 = vpop.f32.mrf.mxu0
      %v1943 = vadd.f32 0.0, %v1942
      %1944 = vmatmul.bf16.gmra.mxu0 %v1865
      %v1945 = vpop.f32.mrf.mxu0
      %v1946 = vadd.f32 0.0, %v1945
      %v1947 = vpop.f32.mrf.mxu0
      %v1948 = vadd.f32 0.0, %v1947
      %1949 = vmatmul.bf16.gmra.mxu0 %v1868
      %v1950 = vpop.f32.mrf.mxu0
      %v1951 = vadd.f32 0.0, %v1950
      %v1952 = vpop.f32.mrf.mxu0
      %v1953 = vadd.f32 0.0, %v1952
      %1954 = vmatmul.bf16.gmra.mxu0 %v1871
      %v1955 = vpop.f32.mrf.mxu0
      %v1956 = vadd.f32 0.0, %v1955
      %v1957 = vpop.f32.mrf.mxu0
      %v1958 = vadd.f32 0.0, %v1957
      %1959 = vmatmul.bf16.gmra.mxu0 %v1874
      %v1960 = vpop.f32.mrf.mxu0
      %v1961 = vadd.f32 0.0, %v1960
      %v1962 = vpop.f32.mrf.mxu0
      %v1963 = vadd.f32 0.0, %v1962
      %1964 = vdwg.mxu0
      %v1965 = vld [vmem:[#allocation3] sm:$0xff]
      %v1966 = vld [vmem:[#allocation3 + $0x8] sm:$0xff]
      %v1967 = vld [vmem:[#allocation3 + $0x10] sm:$0xff]
      %v1968 = vld [vmem:[#allocation3 + $0x18] sm:$0xff]
      %v1969 = vld [vmem:[#allocation3 + $0x20] sm:$0xff]
      %v1970 = vld [vmem:[#allocation3 + $0x28] sm:$0xff]
      %v1971 = vld [vmem:[#allocation3 + $0x30] sm:$0xff]
      %v1972 = vld [vmem:[#allocation3 + $0x38] sm:$0xff]
      %v1973 = vld [vmem:[#allocation3 + $0x40] sm:$0xff]
      %v1974 = vld [vmem:[#allocation3 + $0x48] sm:$0xff]
      %v1975 = vld [vmem:[#allocation3 + $0x50] sm:$0xff]
      %v1976 = vld [vmem:[#allocation3 + $0x58] sm:$0xff]
      %v1977 = vld [vmem:[#allocation3 + $0x60] sm:$0xff]
      %v1978 = vld [vmem:[#allocation3 + $0x68] sm:$0xff]
      %v1979 = vld [vmem:[#allocation3 + $0x70] sm:$0xff]
      %v1980 = vld [vmem:[#allocation3 + $0x78] sm:$0xff]
      %v1981 = vld [vmem:[#allocation3 + $0x80] sm:$0xff]
      %v1982 = vld [vmem:[#allocation3 + $0x88] sm:$0xff]
      %v1983 = vld [vmem:[#allocation3 + $0x90] sm:$0xff]
      %v1984 = vld [vmem:[#allocation3 + $0x98] sm:$0xff]
      %v1985 = vld [vmem:[#allocation3 + $0xa0] sm:$0xff]
      %v1986 = vld [vmem:[#allocation3 + $0xa8] sm:$0xff]
      %v1987 = vld [vmem:[#allocation3 + $0xb0] sm:$0xff]
      %v1988 = vld [vmem:[#allocation3 + $0xb8] sm:$0xff]
      %v1989 = vld [vmem:[#allocation3 + $0xc0] sm:$0xff]
      %v1990 = vld [vmem:[#allocation3 + $0xc8] sm:$0xff]
      %v1991 = vld [vmem:[#allocation3 + $0xd0] sm:$0xff]
      %v1992 = vld [vmem:[#allocation3 + $0xd8] sm:$0xff]
      %v1993 = vld [vmem:[#allocation3 + $0xe0] sm:$0xff]
      %v1994 = vld [vmem:[#allocation3 + $0xe8] sm:$0xff]
      %v1995 = vld [vmem:[#allocation3 + $0xf0] sm:$0xff]
      %v1996 = vld [vmem:[#allocation3 + $0xf8] sm:$0xff]
      %v1997 = vadd.f32 %v1965, %v1886
      %v1998 = vadd.f32 %v1966, %v1888
      %v1999 = vadd.f32 %v1967, %v1891
      %v2000 = vadd.f32 %v1968, %v1893
      %v2001 = vadd.f32 %v1969, %v1896
      %v2002 = vadd.f32 %v1970, %v1898
      %v2003 = vadd.f32 %v1971, %v1901
      %v2004 = vadd.f32 %v1972, %v1903
      %v2005 = vadd.f32 %v1973, %v1906
      %v2006 = vadd.f32 %v1974, %v1908
      %v2007 = vadd.f32 %v1975, %v1911
      %v2008 = vadd.f32 %v1976, %v1913
      %v2009 = vadd.f32 %v1977, %v1916
      %v2010 = vadd.f32 %v1978, %v1918
      %v2011 = vadd.f32 %v1979, %v1921
      %v2012 = vadd.f32 %v1980, %v1923
      %v2013 = vadd.f32 %v1981, %v1926
      %v2014 = vadd.f32 %v1982, %v1928
      %v2015 = vadd.f32 %v1983, %v1931
      %v2016 = vadd.f32 %v1984, %v1933
      %v2017 = vadd.f32 %v1985, %v1936
      %v2018 = vadd.f32 %v1986, %v1938
      %v2019 = vadd.f32 %v1987, %v1941
      %v2020 = vadd.f32 %v1988, %v1943
      %v2021 = vadd.f32 %v1989, %v1946
      %v2022 = vadd.f32 %v1990, %v1948
      %v2023 = vadd.f32 %v1991, %v1951
      %v2024 = vadd.f32 %v1992, %v1953
      %v2025 = vadd.f32 %v1993, %v1956
      %v2026 = vadd.f32 %v1994, %v1958
      %v2027 = vadd.f32 %v1995, %v1961
      %v2028 = vadd.f32 %v1996, %v1963
      %2029 = vst.msk [vmem:[#allocation3] sm:$0xff] %vm1514, %v1997
      %2030 = vst.msk [vmem:[#allocation3 + $0x8] sm:$0xff] %vm1514, %v1998
      %2031 = vst.msk [vmem:[#allocation3 + $0x10] sm:$0xff] %vm1514, %v1999
      %2032 = vst.msk [vmem:[#allocation3 + $0x18] sm:$0xff] %vm1514, %v2000
      %2033 = vst.msk [vmem:[#allocation3 + $0x20] sm:$0xff] %vm1514, %v2001
      %2034 = vst.msk [vmem:[#allocation3 + $0x28] sm:$0xff] %vm1514, %v2002
      %2035 = vst.msk [vmem:[#allocation3 + $0x30] sm:$0xff] %vm1514, %v2003
      %2036 = vst.msk [vmem:[#allocation3 + $0x38] sm:$0xff] %vm1514, %v2004
      %2037 = vst.msk [vmem:[#allocation3 + $0x40] sm:$0xff] %vm1514, %v2005
      %2038 = vst.msk [vmem:[#allocation3 + $0x48] sm:$0xff] %vm1514, %v2006
      %2039 = vst.msk [vmem:[#allocation3 + $0x50] sm:$0xff] %vm1514, %v2007
      %2040 = vst.msk [vmem:[#allocation3 + $0x58] sm:$0xff] %vm1514, %v2008
      %2041 = vst.msk [vmem:[#allocation3 + $0x60] sm:$0xff] %vm1514, %v2009
      %2042 = vst.msk [vmem:[#allocation3 + $0x68] sm:$0xff] %vm1514, %v2010
      %2043 = vst.msk [vmem:[#allocation3 + $0x70] sm:$0xff] %vm1514, %v2011
      %2044 = vst.msk [vmem:[#allocation3 + $0x78] sm:$0xff] %vm1514, %v2012
      %2045 = vst.msk [vmem:[#allocation3 + $0x80] sm:$0xff] %vm1514, %v2013
      %2046 = vst.msk [vmem:[#allocation3 + $0x88] sm:$0xff] %vm1514, %v2014
      %2047 = vst.msk [vmem:[#allocation3 + $0x90] sm:$0xff] %vm1514, %v2015
      %2048 = vst.msk [vmem:[#allocation3 + $0x98] sm:$0xff] %vm1514, %v2016
      %2049 = vst.msk [vmem:[#allocation3 + $0xa0] sm:$0xff] %vm1514, %v2017
      %2050 = vst.msk [vmem:[#allocation3 + $0xa8] sm:$0xff] %vm1514, %v2018
      %2051 = vst.msk [vmem:[#allocation3 + $0xb0] sm:$0xff] %vm1514, %v2019
      %2052 = vst.msk [vmem:[#allocation3 + $0xb8] sm:$0xff] %vm1514, %v2020
      %2053 = vst.msk [vmem:[#allocation3 + $0xc0] sm:$0xff] %vm1514, %v2021
      %2054 = vst.msk [vmem:[#allocation3 + $0xc8] sm:$0xff] %vm1514, %v2022
      %2055 = vst.msk [vmem:[#allocation3 + $0xd0] sm:$0xff] %vm1514, %v2023
      %2056 = vst.msk [vmem:[#allocation3 + $0xd8] sm:$0xff] %vm1514, %v2024
      %2057 = vst.msk [vmem:[#allocation3 + $0xe0] sm:$0xff] %vm1514, %v2025
      %2058 = vst.msk [vmem:[#allocation3 + $0xe8] sm:$0xff] %vm1514, %v2026
      %2059 = vst.msk [vmem:[#allocation3 + $0xf0] sm:$0xff] %vm1514, %v2027
      %2060 = vst.msk [vmem:[#allocation3 + $0xf8] sm:$0xff] %vm1514, %v2028
      %v2061 = vld [vmem:[#allocation2 + $0x8] sm:$0xf]
      %v2062 = vld [vmem:[#allocation2 + $0xc] sm:$0xf]
      %v2063 = vld [vmem:[#allocation2 + $0x10] sm:$0xf]
      %v2064 = vld [vmem:[#allocation2 + $0x14] sm:$0xf]
      %v2065 = vld [vmem:[#allocation2 + $0x18] sm:$0xf]
      %v2066 = vld [vmem:[#allocation2 + $0x1c] sm:$0xf]
      %v2067 = vld [vmem:[#allocation2 + $0x20] sm:$0xf]
      %v2068 = vld [vmem:[#allocation2 + $0x24] sm:$0xf]
      %v2069 = vld [vmem:[#allocation2 + $0x28] sm:$0xf]
      %v2070 = vld [vmem:[#allocation2 + $0x2c] sm:$0xf]
      %v2071 = vld [vmem:[#allocation2 + $0x30] sm:$0xf]
      %v2072 = vld [vmem:[#allocation2 + $0x34] sm:$0xf]
      %v2073 = vld [vmem:[#allocation2 + $0x38] sm:$0xf]
      %v2074 = vld [vmem:[#allocation2 + $0x3c] sm:$0xf]
      %v2075 = vld [vmem:[#allocation2 + $0x40] sm:$0xf]
      %v2076 = vld [vmem:[#allocation2 + $0x44] sm:$0xf]
      %v2077 = vld [vmem:[#allocation2 + $0x48] sm:$0xf]
      %v2078 = vld [vmem:[#allocation2 + $0x4c] sm:$0xf]
      %v2079 = vld [vmem:[#allocation2 + $0x50] sm:$0xf]
      %v2080 = vld [vmem:[#allocation2 + $0x54] sm:$0xf]
      %v2081 = vld [vmem:[#allocation2 + $0x58] sm:$0xf]
      %v2082 = vld [vmem:[#allocation2 + $0x5c] sm:$0xf]
      %v2083 = vld [vmem:[#allocation2 + $0x60] sm:$0xf]
      %v2084 = vld [vmem:[#allocation2 + $0x64] sm:$0xf]
      %v2085 = vld [vmem:[#allocation2 + $0x68] sm:$0xf]
      %v2086 = vld [vmem:[#allocation2 + $0x6c] sm:$0xf]
      %v2087 = vld [vmem:[#allocation2 + $0x70] sm:$0xf]
      %v2088 = vld [vmem:[#allocation2 + $0x74] sm:$0xf]
      %v2089 = vld [vmem:[#allocation2 + $0x78] sm:$0xf]
      %v2090 = vld [vmem:[#allocation2 + $0x7c] sm:$0xf]
      %v2091 = vld [vmem:[#allocation2 + $0x80] sm:$0xf]
      %v2092 = vld [vmem:[#allocation2 + $0x84] sm:$0xf]
      %v2093 = vld [vmem:[#allocation2 + $0x88] sm:$0x1]
      %2094 = vset.pattern.permute.xlu0 1
      %2095 = vperm.xlu0 %2094, %v732
      %v2096 = vpop.permute.xlu0 %2095
      %v2099 = vunpack.c.l.s4 839922192
      %v2100 = vunpack.c.0.s8 %v2099
      %v2101 = vperm.slane %v2096, %v2100
      %2102 = vset.pattern.permute.xlu0 1
      %2103 = vperm.xlu0 %2102, %v733
      %v2104 = vpop.permute.xlu0 %2103
      %v2107 = vunpack.c.l.s4 839922192
      %v2108 = vunpack.c.0.s8 %v2107
      %v2109 = vperm.slane %v2104, %v2108
      %2110 = vset.pattern.permute.xlu0 1
      %2111 = vperm.xlu0 %2110, %v734
      %v2112 = vpop.permute.xlu0 %2111
      %v2115 = vunpack.c.l.s4 839922192
      %v2116 = vunpack.c.0.s8 %v2115
      %v2117 = vperm.slane %v2112, %v2116
      %2118 = vset.pattern.permute.xlu0 1
      %2119 = vperm.xlu0 %2118, %v735
      %v2120 = vpop.permute.xlu0 %2119
      %v2123 = vunpack.c.l.s4 839922192
      %v2124 = vunpack.c.0.s8 %v2123
      %v2125 = vperm.slane %v2120, %v2124
      %2126 = vset.pattern.permute.xlu0 1
      %2127 = vperm.xlu0 %2126, %v736
      %v2128 = vpop.permute.xlu0 %2127
      %v2131 = vunpack.c.l.s4 839922192
      %v2132 = vunpack.c.0.s8 %v2131
      %v2133 = vperm.slane %v2128, %v2132
      %2134 = vset.pattern.permute.xlu0 1
      %2135 = vperm.xlu0 %2134, %v737
      %v2136 = vpop.permute.xlu0 %2135
      %v2139 = vunpack.c.l.s4 839922192
      %v2140 = vunpack.c.0.s8 %v2139
      %v2141 = vperm.slane %v2136, %v2140
      %2142 = vset.pattern.permute.xlu0 1
      %2143 = vperm.xlu0 %2142, %v738
      %v2144 = vpop.permute.xlu0 %2143
      %v2147 = vunpack.c.l.s4 839922192
      %v2148 = vunpack.c.0.s8 %v2147
      %v2149 = vperm.slane %v2144, %v2148
      %2150 = vset.pattern.permute.xlu0 1
      %2151 = vperm.xlu0 %2150, %v739
      %v2152 = vpop.permute.xlu0 %2151
      %v2155 = vunpack.c.l.s4 839922192
      %v2156 = vunpack.c.0.s8 %v2155
      %v2157 = vperm.slane %v2152, %v2156
      %2158 = vset.pattern.permute.xlu0 1
      %2159 = vperm.xlu0 %2158, %v740
      %v2160 = vpop.permute.xlu0 %2159
      %v2163 = vunpack.c.l.s4 839922192
      %v2164 = vunpack.c.0.s8 %v2163
      %v2165 = vperm.slane %v2160, %v2164
      %2166 = vset.pattern.permute.xlu0 1
      %2167 = vperm.xlu0 %2166, %v741
      %v2168 = vpop.permute.xlu0 %2167
      %v2171 = vunpack.c.l.s4 839922192
      %v2172 = vunpack.c.0.s8 %v2171
      %v2173 = vperm.slane %v2168, %v2172
      %2174 = vset.pattern.permute.xlu0 1
      %2175 = vperm.xlu0 %2174, %v742
      %v2176 = vpop.permute.xlu0 %2175
      %v2179 = vunpack.c.l.s4 839922192
      %v2180 = vunpack.c.0.s8 %v2179
      %v2181 = vperm.slane %v2176, %v2180
      %2182 = vset.pattern.permute.xlu0 1
      %2183 = vperm.xlu0 %2182, %v743
      %v2184 = vpop.permute.xlu0 %2183
      %v2187 = vunpack.c.l.s4 839922192
      %v2188 = vunpack.c.0.s8 %v2187
      %v2189 = vperm.slane %v2184, %v2188
      %2190 = vset.pattern.permute.xlu0 1
      %2191 = vperm.xlu0 %2190, %v744
      %v2192 = vpop.permute.xlu0 %2191
      %v2195 = vunpack.c.l.s4 839922192
      %v2196 = vunpack.c.0.s8 %v2195
      %v2197 = vperm.slane %v2192, %v2196
      %2198 = vset.pattern.permute.xlu0 1
      %2199 = vperm.xlu0 %2198, %v745
      %v2200 = vpop.permute.xlu0 %2199
      %v2203 = vunpack.c.l.s4 839922192
      %v2204 = vunpack.c.0.s8 %v2203
      %v2205 = vperm.slane %v2200, %v2204
      %2206 = vset.pattern.permute.xlu0 1
      %2207 = vperm.xlu0 %2206, %v746
      %v2208 = vpop.permute.xlu0 %2207
      %v2211 = vunpack.c.l.s4 839922192
      %v2212 = vunpack.c.0.s8 %v2211
      %v2213 = vperm.slane %v2208, %v2212
      %2214 = vset.pattern.permute.xlu0 1
      %2215 = vperm.xlu0 %2214, %v747
      %v2216 = vpop.permute.xlu0 %2215
      %v2219 = vunpack.c.l.s4 839922192
      %v2220 = vunpack.c.0.s8 %v2219
      %v2221 = vperm.slane %v2216, %v2220
      %2222 = vset.pattern.permute.xlu0 1
      %2223 = vperm.xlu0 %2222, %v748
      %v2224 = vpop.permute.xlu0 %2223
      %v2227 = vunpack.c.l.s4 839922192
      %v2228 = vunpack.c.0.s8 %v2227
      %v2229 = vperm.slane %v2224, %v2228
      %2230 = vset.pattern.permute.xlu0 1
      %2231 = vperm.xlu0 %2230, %v749
      %v2232 = vpop.permute.xlu0 %2231
      %v2235 = vunpack.c.l.s4 839922192
      %v2236 = vunpack.c.0.s8 %v2235
      %v2237 = vperm.slane %v2232, %v2236
      %2238 = vset.pattern.permute.xlu0 1
      %2239 = vperm.xlu0 %2238, %v750
      %v2240 = vpop.permute.xlu0 %2239
      %v2243 = vunpack.c.l.s4 839922192
      %v2244 = vunpack.c.0.s8 %v2243
      %v2245 = vperm.slane %v2240, %v2244
      %2246 = vset.pattern.permute.xlu0 1
      %2247 = vperm.xlu0 %2246, %v751
      %v2248 = vpop.permute.xlu0 %2247
      %v2251 = vunpack.c.l.s4 839922192
      %v2252 = vunpack.c.0.s8 %v2251
      %v2253 = vperm.slane %v2248, %v2252
      %2254 = vset.pattern.permute.xlu0 1
      %2255 = vperm.xlu0 %2254, %v752
      %v2256 = vpop.permute.xlu0 %2255
      %v2259 = vunpack.c.l.s4 839922192
      %v2260 = vunpack.c.0.s8 %v2259
      %v2261 = vperm.slane %v2256, %v2260
      %2262 = vset.pattern.permute.xlu0 1
      %2263 = vperm.xlu0 %2262, %v753
      %v2264 = vpop.permute.xlu0 %2263
      %v2267 = vunpack.c.l.s4 839922192
      %v2268 = vunpack.c.0.s8 %v2267
      %v2269 = vperm.slane %v2264, %v2268
      %2270 = vset.pattern.permute.xlu0 1
      %2271 = vperm.xlu0 %2270, %v754
      %v2272 = vpop.permute.xlu0 %2271
      %v2275 = vunpack.c.l.s4 839922192
      %v2276 = vunpack.c.0.s8 %v2275
      %v2277 = vperm.slane %v2272, %v2276
      %2278 = vset.pattern.permute.xlu0 1
      %2279 = vperm.xlu0 %2278, %v755
      %v2280 = vpop.permute.xlu0 %2279
      %v2283 = vunpack.c.l.s4 839922192
      %v2284 = vunpack.c.0.s8 %v2283
      %v2285 = vperm.slane %v2280, %v2284
      %2286 = vset.pattern.permute.xlu0 1
      %2287 = vperm.xlu0 %2286, %v756
      %v2288 = vpop.permute.xlu0 %2287
      %v2291 = vunpack.c.l.s4 839922192
      %v2292 = vunpack.c.0.s8 %v2291
      %v2293 = vperm.slane %v2288, %v2292
      %2294 = vset.pattern.permute.xlu0 1
      %2295 = vperm.xlu0 %2294, %v757
      %v2296 = vpop.permute.xlu0 %2295
      %v2299 = vunpack.c.l.s4 839922192
      %v2300 = vunpack.c.0.s8 %v2299
      %v2301 = vperm.slane %v2296, %v2300
      %2302 = vset.pattern.permute.xlu0 1
      %2303 = vperm.xlu0 %2302, %v758
      %v2304 = vpop.permute.xlu0 %2303
      %v2307 = vunpack.c.l.s4 839922192
      %v2308 = vunpack.c.0.s8 %v2307
      %v2309 = vperm.slane %v2304, %v2308
      %2310 = vset.pattern.permute.xlu0 1
      %2311 = vperm.xlu0 %2310, %v759
      %v2312 = vpop.permute.xlu0 %2311
      %v2315 = vunpack.c.l.s4 839922192
      %v2316 = vunpack.c.0.s8 %v2315
      %v2317 = vperm.slane %v2312, %v2316
      %2318 = vset.pattern.permute.xlu0 1
      %2319 = vperm.xlu0 %2318, %v760
      %v2320 = vpop.permute.xlu0 %2319
      %v2323 = vunpack.c.l.s4 839922192
      %v2324 = vunpack.c.0.s8 %v2323
      %v2325 = vperm.slane %v2320, %v2324
      %2326 = vset.pattern.permute.xlu0 1
      %2327 = vperm.xlu0 %2326, %v761
      %v2328 = vpop.permute.xlu0 %2327
      %v2331 = vunpack.c.l.s4 839922192
      %v2332 = vunpack.c.0.s8 %v2331
      %v2333 = vperm.slane %v2328, %v2332
      %2334 = vset.pattern.permute.xlu0 1
      %2335 = vperm.xlu0 %2334, %v762
      %v2336 = vpop.permute.xlu0 %2335
      %v2339 = vunpack.c.l.s4 839922192
      %v2340 = vunpack.c.0.s8 %v2339
      %v2341 = vperm.slane %v2336, %v2340
      %2342 = vset.pattern.permute.xlu0 1
      %2343 = vperm.xlu0 %2342, %v763
      %v2344 = vpop.permute.xlu0 %2343
      %v2347 = vunpack.c.l.s4 839922192
      %v2348 = vunpack.c.0.s8 %v2347
      %v2349 = vperm.slane %v2344, %v2348
      %v2350 = vunpack.c.l.bf16 %v2061
      %v2351 = vunpack.c.l.bf16 %v2062
      %v2352 = vunpack.c.l.bf16 %v2063
      %v2353 = vunpack.c.l.bf16 %v2064
      %v2354 = vunpack.c.l.bf16 %v2065
      %v2355 = vunpack.c.l.bf16 %v2066
      %v2356 = vunpack.c.l.bf16 %v2067
      %v2357 = vunpack.c.l.bf16 %v2068
      %v2358 = vunpack.c.l.bf16 %v2069
      %v2359 = vunpack.c.l.bf16 %v2070
      %v2360 = vunpack.c.l.bf16 %v2071
      %v2361 = vunpack.c.l.bf16 %v2072
      %v2362 = vunpack.c.l.bf16 %v2073
      %v2363 = vunpack.c.l.bf16 %v2074
      %v2364 = vunpack.c.l.bf16 %v2075
      %v2365 = vunpack.c.l.bf16 %v2076
      %v2366 = vunpack.c.l.bf16 %v2077
      %v2367 = vunpack.c.l.bf16 %v2078
      %v2368 = vunpack.c.l.bf16 %v2079
      %v2369 = vunpack.c.l.bf16 %v2080
      %v2370 = vunpack.c.l.bf16 %v2081
      %v2371 = vunpack.c.l.bf16 %v2082
      %v2372 = vunpack.c.l.bf16 %v2083
      %v2373 = vunpack.c.l.bf16 %v2084
      %v2374 = vunpack.c.l.bf16 %v2085
      %v2375 = vunpack.c.l.bf16 %v2086
      %v2376 = vunpack.c.l.bf16 %v2087
      %v2377 = vunpack.c.l.bf16 %v2088
      %v2378 = vunpack.c.l.bf16 %v2089
      %v2379 = vunpack.c.l.bf16 %v2090
      %v2380 = vunpack.c.l.bf16 %v2091
      %v2381 = vunpack.c.l.bf16 %v2092
      %v2382 = vunpack.c.l.bf16 %v2093
      %v2383 = vunpack.c.l.bf16 %v2101
      %v2384 = vunpack.c.l.bf16 %v2109
      %v2385 = vunpack.c.l.bf16 %v2117
      %v2386 = vunpack.c.l.bf16 %v2125
      %v2387 = vunpack.c.l.bf16 %v2133
      %v2388 = vunpack.c.l.bf16 %v2141
      %v2389 = vunpack.c.l.bf16 %v2149
      %v2390 = vunpack.c.l.bf16 %v2157
      %v2391 = vunpack.c.l.bf16 %v2165
      %v2392 = vunpack.c.l.bf16 %v2173
      %v2393 = vunpack.c.l.bf16 %v2181
      %v2394 = vunpack.c.l.bf16 %v2189
      %v2395 = vunpack.c.l.bf16 %v2197
      %v2396 = vunpack.c.l.bf16 %v2205
      %v2397 = vunpack.c.l.bf16 %v2213
      %v2398 = vunpack.c.l.bf16 %v2221
      %v2399 = vunpack.c.l.bf16 %v2229
      %v2400 = vunpack.c.l.bf16 %v2237
      %v2401 = vunpack.c.l.bf16 %v2245
      %v2402 = vunpack.c.l.bf16 %v2253
      %v2403 = vunpack.c.l.bf16 %v2261
      %v2404 = vunpack.c.l.bf16 %v2269
      %v2405 = vunpack.c.l.bf16 %v2277
      %v2406 = vunpack.c.l.bf16 %v2285
      %v2407 = vunpack.c.l.bf16 %v2293
      %v2408 = vunpack.c.l.bf16 %v2301
      %v2409 = vunpack.c.l.bf16 %v2309
      %v2410 = vunpack.c.l.bf16 %v2317
      %v2411 = vunpack.c.l.bf16 %v2325
      %v2412 = vunpack.c.l.bf16 %v2333
      %v2413 = vunpack.c.l.bf16 %v2341
      %v2414 = vunpack.c.l.bf16 %v2349
      %vm2447 = vcmask 1040384
      %v2448 = vrot.slane %v2383, 7
      %v2449 = vrot.slane %v2384, 7
      %v2450 = vsel %vm2447, %v2448, %v2449
      %v2451 = vrot.slane %v2385, 7
      %v2452 = vsel %vm2447, %v2449, %v2451
      %v2453 = vrot.slane %v2386, 7
      %v2454 = vsel %vm2447, %v2451, %v2453
      %v2455 = vrot.slane %v2387, 7
      %v2456 = vsel %vm2447, %v2453, %v2455
      %v2457 = vrot.slane %v2388, 7
      %v2458 = vsel %vm2447, %v2455, %v2457
      %v2459 = vrot.slane %v2389, 7
      %v2460 = vsel %vm2447, %v2457, %v2459
      %v2461 = vrot.slane %v2390, 7
      %v2462 = vsel %vm2447, %v2459, %v2461
      %v2463 = vrot.slane %v2391, 7
      %v2464 = vsel %vm2447, %v2461, %v2463
      %v2465 = vrot.slane %v2392, 7
      %v2466 = vsel %vm2447, %v2463, %v2465
      %v2467 = vrot.slane %v2393, 7
      %v2468 = vsel %vm2447, %v2465, %v2467
      %v2469 = vrot.slane %v2394, 7
      %v2470 = vsel %vm2447, %v2467, %v2469
      %v2471 = vrot.slane %v2395, 7
      %v2472 = vsel %vm2447, %v2469, %v2471
      %v2473 = vrot.slane %v2396, 7
      %v2474 = vsel %vm2447, %v2471, %v2473
      %v2475 = vrot.slane %v2397, 7
      %v2476 = vsel %vm2447, %v2473, %v2475
      %v2477 = vrot.slane %v2398, 7
      %v2478 = vsel %vm2447, %v2475, %v2477
      %v2479 = vrot.slane %v2399, 7
      %v2480 = vsel %vm2447, %v2477, %v2479
      %v2481 = vrot.slane %v2400, 7
      %v2482 = vsel %vm2447, %v2479, %v2481
      %v2483 = vrot.slane %v2401, 7
      %v2484 = vsel %vm2447, %v2481, %v2483
      %v2485 = vrot.slane %v2402, 7
      %v2486 = vsel %vm2447, %v2483, %v2485
      %v2487 = vrot.slane %v2403, 7
      %v2488 = vsel %vm2447, %v2485, %v2487
      %v2489 = vrot.slane %v2404, 7
      %v2490 = vsel %vm2447, %v2487, %v2489
      %v2491 = vrot.slane %v2405, 7
      %v2492 = vsel %vm2447, %v2489, %v2491
      %v2493 = vrot.slane %v2406, 7
      %v2494 = vsel %vm2447, %v2491, %v2493
      %v2495 = vrot.slane %v2407, 7
      %v2496 = vsel %vm2447, %v2493, %v2495
      %v2497 = vrot.slane %v2408, 7
      %v2498 = vsel %vm2447, %v2495, %v2497
      %v2499 = vrot.slane %v2409, 7
      %v2500 = vsel %vm2447, %v2497, %v2499
      %v2501 = vrot.slane %v2410, 7
      %v2502 = vsel %vm2447, %v2499, %v2501
      %v2503 = vrot.slane %v2411, 7
      %v2504 = vsel %vm2447, %v2501, %v2503
      %v2505 = vrot.slane %v2412, 7
      %v2506 = vsel %vm2447, %v2503, %v2505
      %v2507 = vrot.slane %v2413, 7
      %v2508 = vsel %vm2447, %v2505, %v2507
      %v2509 = vrot.slane %v2414, 7
      %v2510 = vsel %vm2447, %v2507, %v2509
      %v2544 = vmul.f32 %v2350, %v2448
      %v2545 = vmul.f32 %v2351, %v2450
      %v2546 = vmul.f32 %v2352, %v2452
      %v2547 = vmul.f32 %v2353, %v2454
      %v2548 = vmul.f32 %v2354, %v2456
      %v2549 = vmul.f32 %v2355, %v2458
      %v2550 = vmul.f32 %v2356, %v2460
      %v2551 = vmul.f32 %v2357, %v2462
      %v2552 = vmul.f32 %v2358, %v2464
      %v2553 = vmul.f32 %v2359, %v2466
      %v2554 = vmul.f32 %v2360, %v2468
      %v2555 = vmul.f32 %v2361, %v2470
      %v2556 = vmul.f32 %v2362, %v2472
      %v2557 = vmul.f32 %v2363, %v2474
      %v2558 = vmul.f32 %v2364, %v2476
      %v2559 = vmul.f32 %v2365, %v2478
      %v2560 = vmul.f32 %v2366, %v2480
      %v2561 = vmul.f32 %v2367, %v2482
      %v2562 = vmul.f32 %v2368, %v2484
      %v2563 = vmul.f32 %v2369, %v2486
      %v2564 = vmul.f32 %v2370, %v2488
      %v2565 = vmul.f32 %v2371, %v2490
      %v2566 = vmul.f32 %v2372, %v2492
      %v2567 = vmul.f32 %v2373, %v2494
      %v2568 = vmul.f32 %v2374, %v2496
      %v2569 = vmul.f32 %v2375, %v2498
      %v2570 = vmul.f32 %v2376, %v2500
      %v2571 = vmul.f32 %v2377, %v2502
      %v2572 = vmul.f32 %v2378, %v2504
      %v2573 = vmul.f32 %v2379, %v2506
      %v2574 = vmul.f32 %v2380, %v2508
      %v2575 = vmul.f32 %v2381, %v2510
      %v2576 = vmul.f32 %v2382, %v2509
      %v2577 = vpack.c.bf16 %v2545, %v2544
      %v2578 = vpack.c.bf16 %v2547, %v2546
      %v2579 = vpack.c.bf16 %v2549, %v2548
      %v2580 = vpack.c.bf16 %v2551, %v2550
      %v2581 = vpack.c.bf16 %v2553, %v2552
      %v2582 = vpack.c.bf16 %v2555, %v2554
      %v2583 = vpack.c.bf16 %v2557, %v2556
      %v2584 = vpack.c.bf16 %v2559, %v2558
      %v2585 = vpack.c.bf16 %v2561, %v2560
      %v2586 = vpack.c.bf16 %v2563, %v2562
      %v2587 = vpack.c.bf16 %v2565, %v2564
      %v2588 = vpack.c.bf16 %v2567, %v2566
      %v2589 = vpack.c.bf16 %v2569, %v2568
      %v2590 = vpack.c.bf16 %v2571, %v2570
      %v2591 = vpack.c.bf16 %v2573, %v2572
      %v2592 = vpack.c.bf16 %v2575, %v2574
      %v2593 = vpack.c.bf16 %v2576, %v2576
      %v2594 = vld [vmem:[%s3 + $0x40] sm:$0xf]
      %v2595 = vld [vmem:[%s3 + $0x44] sm:$0xf]
      %v2596 = vld [vmem:[%s3 + $0x48] sm:$0xf]
      %v2597 = vld [vmem:[%s3 + $0x4c] sm:$0xf]
      %v2598 = vld [vmem:[%s3 + $0x50] sm:$0xf]
      %v2599 = vld [vmem:[%s3 + $0x54] sm:$0xf]
      %v2600 = vld [vmem:[%s3 + $0x58] sm:$0xf]
      %v2601 = vld [vmem:[%s3 + $0x5c] sm:$0xf]
      %vm2602 = vsmask.f32 7424
      %v2604 = vshrl.u32 %v2577, 16
      %v2606 = vshll.u32 %v2577, 16
      %v2608 = vrot.slane %v2606, 1
      %v2609 = vor.u32 %v2604, %v2608
      %v2611 = vshll.u32 %v2578, 16
      %v2613 = vrot.slane %v2611, 1
      %v2614 = vsel %vm2602, %v2609, %v2613
      %v2615 = vshrl.u32 %v2578, 16
      %v2617 = vor.u32 %v2615, %v2613
      %v2619 = vshll.u32 %v2579, 16
      %v2621 = vrot.slane %v2619, 1
      %v2622 = vsel %vm2602, %v2617, %v2621
      %v2623 = vshrl.u32 %v2579, 16
      %v2625 = vor.u32 %v2623, %v2621
      %v2627 = vshll.u32 %v2580, 16
      %v2629 = vrot.slane %v2627, 1
      %v2630 = vsel %vm2602, %v2625, %v2629
      %v2631 = vshrl.u32 %v2580, 16
      %v2633 = vor.u32 %v2631, %v2629
      %v2635 = vshll.u32 %v2581, 16
      %v2637 = vrot.slane %v2635, 1
      %v2638 = vsel %vm2602, %v2633, %v2637
      %v2639 = vshrl.u32 %v2581, 16
      %v2641 = vor.u32 %v2639, %v2637
      %v2643 = vshll.u32 %v2582, 16
      %v2645 = vrot.slane %v2643, 1
      %v2646 = vsel %vm2602, %v2641, %v2645
      %v2647 = vshrl.u32 %v2582, 16
      %v2649 = vor.u32 %v2647, %v2645
      %v2651 = vshll.u32 %v2583, 16
      %v2653 = vrot.slane %v2651, 1
      %v2654 = vsel %vm2602, %v2649, %v2653
      %v2655 = vshrl.u32 %v2583, 16
      %v2657 = vor.u32 %v2655, %v2653
      %v2659 = vshll.u32 %v2584, 16
      %v2661 = vrot.slane %v2659, 1
      %v2662 = vsel %vm2602, %v2657, %v2661
      %v2663 = vshrl.u32 %v2584, 16
      %v2665 = vor.u32 %v2663, %v2661
      %v2667 = vshll.u32 %v2585, 16
      %v2669 = vrot.slane %v2667, 1
      %v2670 = vsel %vm2602, %v2665, %v2669
      %v2671 = vshrl.u32 %v2585, 16
      %v2673 = vor.u32 %v2671, %v2669
      %v2675 = vshll.u32 %v2586, 16
      %v2677 = vrot.slane %v2675, 1
      %v2678 = vsel %vm2602, %v2673, %v2677
      %v2679 = vshrl.u32 %v2586, 16
      %v2681 = vor.u32 %v2679, %v2677
      %v2683 = vshll.u32 %v2587, 16
      %v2685 = vrot.slane %v2683, 1
      %v2686 = vsel %vm2602, %v2681, %v2685
      %v2687 = vshrl.u32 %v2587, 16
      %v2689 = vor.u32 %v2687, %v2685
      %v2691 = vshll.u32 %v2588, 16
      %v2693 = vrot.slane %v2691, 1
      %v2694 = vsel %vm2602, %v2689, %v2693
      %v2695 = vshrl.u32 %v2588, 16
      %v2697 = vor.u32 %v2695, %v2693
      %v2699 = vshll.u32 %v2589, 16
      %v2701 = vrot.slane %v2699, 1
      %v2702 = vsel %vm2602, %v2697, %v2701
      %v2703 = vshrl.u32 %v2589, 16
      %v2705 = vor.u32 %v2703, %v2701
      %v2707 = vshll.u32 %v2590, 16
      %v2709 = vrot.slane %v2707, 1
      %v2710 = vsel %vm2602, %v2705, %v2709
      %v2711 = vshrl.u32 %v2590, 16
      %v2713 = vor.u32 %v2711, %v2709
      %v2715 = vshll.u32 %v2591, 16
      %v2717 = vrot.slane %v2715, 1
      %v2718 = vsel %vm2602, %v2713, %v2717
      %v2719 = vshrl.u32 %v2591, 16
      %v2721 = vor.u32 %v2719, %v2717
      %v2723 = vshll.u32 %v2592, 16
      %v2725 = vrot.slane %v2723, 1
      %v2726 = vsel %vm2602, %v2721, %v2725
      %v2727 = vshrl.u32 %v2592, 16
      %v2729 = vor.u32 %v2727, %v2725
      %v2731 = vshll.u32 %v2593, 16
      %v2733 = vrot.slane %v2731, 1
      %v2734 = vsel %vm2602, %v2729, %v2733
      %v2743 = vunpack.c.l.b16 %v2594
      %v2744 = vunpack.c.l.b16 %v2595
      %v2745 = vunpack.c.l.b16 %v2596
      %v2746 = vunpack.c.l.b16 %v2597
      %v2747 = vunpack.c.l.b16 %v2598
      %v2748 = vunpack.c.l.b16 %v2599
      %v2749 = vunpack.c.l.b16 %v2600
      %v2750 = vunpack.c.l.b16 %v2601
      %v2751 = vpack.c.b16 %v2744, %v2743
      %v2752 = vpack.c.b16 %v2746, %v2745
      %v2753 = vpack.c.b16 %v2748, %v2747
      %v2754 = vpack.c.b16 %v2750, %v2749
      %v2760 = vsel %vm1514, %v2614, 0
      %v2763 = vsel %vm1514, %v2622, 0
      %v2766 = vsel %vm1514, %v2630, 0
      %v2769 = vsel %vm1514, %v2638, 0
      %v2772 = vsel %vm1514, %v2646, 0
      %v2775 = vsel %vm1514, %v2654, 0
      %v2778 = vsel %vm1514, %v2662, 0
      %v2781 = vsel %vm1514, %v2670, 0
      %v2784 = vsel %vm1514, %v2678, 0
      %v2787 = vsel %vm1514, %v2686, 0
      %v2790 = vsel %vm1514, %v2694, 0
      %v2793 = vsel %vm1514, %v2702, 0
      %v2796 = vsel %vm1514, %v2710, 0
      %v2799 = vsel %vm1514, %v2718, 0
      %v2802 = vsel %vm1514, %v2726, 0
      %v2805 = vsel %vm1514, %v2734, 0
      %2807 = vmatpush.bf16.msra.mxu0 0
      %2808 = vmatpush.bf16.msra.mxu0 0
      %2809 = vmatpush.bf16.msra.mxu0 0
      %2810 = vmatpush.bf16.msra.mxu0 0
      %2811 = vmatpush.bf16.msra.mxu0 %v2754
      %2812 = vmatpush.bf16.msra.mxu0 %v2753
      %2813 = vmatpush.bf16.msra.mxu0 %v2752
      %2814 = vmatpush.bf16.msra.mxu0 %v2751
      %2815 = vmatmul.bf16.gmra.mxu0 %v2760
      %v2816 = vpop.f32.mrf.mxu0
      %v2817 = vadd.f32 0.0, %v2816
      %v2818 = vpop.f32.mrf.mxu0
      %v2819 = vadd.f32 0.0, %v2818
      %2820 = vmatmul.bf16.gmra.mxu0 %v2763
      %v2821 = vpop.f32.mrf.mxu0
      %v2822 = vadd.f32 0.0, %v2821
      %v2823 = vpop.f32.mrf.mxu0
      %v2824 = vadd.f32 0.0, %v2823
      %2825 = vmatmul.bf16.gmra.mxu0 %v2766
      %v2826 = vpop.f32.mrf.mxu0
      %v2827 = vadd.f32 0.0, %v2826
      %v2828 = vpop.f32.mrf.mxu0
      %v2829 = vadd.f32 0.0, %v2828
      %2830 = vmatmul.bf16.gmra.mxu0 %v2769
      %v2831 = vpop.f32.mrf.mxu0
      %v2832 = vadd.f32 0.0, %v2831
      %v2833 = vpop.f32.mrf.mxu0
      %v2834 = vadd.f32 0.0, %v2833
      %2835 = vmatmul.bf16.gmra.mxu0 %v2772
      %v2836 = vpop.f32.mrf.mxu0
      %v2837 = vadd.f32 0.0, %v2836
      %v2838 = vpop.f32.mrf.mxu0
      %v2839 = vadd.f32 0.0, %v2838
      %2840 = vmatmul.bf16.gmra.mxu0 %v2775
      %v2841 = vpop.f32.mrf.mxu0
      %v2842 = vadd.f32 0.0, %v2841
      %v2843 = vpop.f32.mrf.mxu0
      %v2844 = vadd.f32 0.0, %v2843
      %2845 = vmatmul.bf16.gmra.mxu0 %v2778
      %v2846 = vpop.f32.mrf.mxu0
      %v2847 = vadd.f32 0.0, %v2846
      %v2848 = vpop.f32.mrf.mxu0
      %v2849 = vadd.f32 0.0, %v2848
      %2850 = vmatmul.bf16.gmra.mxu0 %v2781
      %v2851 = vpop.f32.mrf.mxu0
      %v2852 = vadd.f32 0.0, %v2851
      %v2853 = vpop.f32.mrf.mxu0
      %v2854 = vadd.f32 0.0, %v2853
      %2855 = vmatmul.bf16.gmra.mxu0 %v2784
      %v2856 = vpop.f32.mrf.mxu0
      %v2857 = vadd.f32 0.0, %v2856
      %v2858 = vpop.f32.mrf.mxu0
      %v2859 = vadd.f32 0.0, %v2858
      %2860 = vmatmul.bf16.gmra.mxu0 %v2787
      %v2861 = vpop.f32.mrf.mxu0
      %v2862 = vadd.f32 0.0, %v2861
      %v2863 = vpop.f32.mrf.mxu0
      %v2864 = vadd.f32 0.0, %v2863
      %2865 = vmatmul.bf16.gmra.mxu0 %v2790
      %v2866 = vpop.f32.mrf.mxu0
      %v2867 = vadd.f32 0.0, %v2866
      %v2868 = vpop.f32.mrf.mxu0
      %v2869 = vadd.f32 0.0, %v2868
      %2870 = vmatmul.bf16.gmra.mxu0 %v2793
      %v2871 = vpop.f32.mrf.mxu0
      %v2872 = vadd.f32 0.0, %v2871
      %v2873 = vpop.f32.mrf.mxu0
      %v2874 = vadd.f32 0.0, %v2873
      %2875 = vmatmul.bf16.gmra.mxu0 %v2796
      %v2876 = vpop.f32.mrf.mxu0
      %v2877 = vadd.f32 0.0, %v2876
      %v2878 = vpop.f32.mrf.mxu0
      %v2879 = vadd.f32 0.0, %v2878
      %2880 = vmatmul.bf16.gmra.mxu0 %v2799
      %v2881 = vpop.f32.mrf.mxu0
      %v2882 = vadd.f32 0.0, %v2881
      %v2883 = vpop.f32.mrf.mxu0
      %v2884 = vadd.f32 0.0, %v2883
      %2885 = vmatmul.bf16.gmra.mxu0 %v2802
      %v2886 = vpop.f32.mrf.mxu0
      %v2887 = vadd.f32 0.0, %v2886
      %v2888 = vpop.f32.mrf.mxu0
      %v2889 = vadd.f32 0.0, %v2888
      %2890 = vmatmul.bf16.gmra.mxu0 %v2805
      %v2891 = vpop.f32.mrf.mxu0
      %v2892 = vadd.f32 0.0, %v2891
      %v2893 = vpop.f32.mrf.mxu0
      %v2894 = vadd.f32 0.0, %v2893
      %2895 = vdwg.mxu0
      %v2896 = vld [vmem:[#allocation3] sm:$0xff]
      %v2897 = vld [vmem:[#allocation3 + $0x8] sm:$0xff]
      %v2898 = vld [vmem:[#allocation3 + $0x10] sm:$0xff]
      %v2899 = vld [vmem:[#allocation3 + $0x18] sm:$0xff]
      %v2900 = vld [vmem:[#allocation3 + $0x20] sm:$0xff]
      %v2901 = vld [vmem:[#allocation3 + $0x28] sm:$0xff]
      %v2902 = vld [vmem:[#allocation3 + $0x30] sm:$0xff]
      %v2903 = vld [vmem:[#allocation3 + $0x38] sm:$0xff]
      %v2904 = vld [vmem:[#allocation3 + $0x40] sm:$0xff]
      %v2905 = vld [vmem:[#allocation3 + $0x48] sm:$0xff]
      %v2906 = vld [vmem:[#allocation3 + $0x50] sm:$0xff]
      %v2907 = vld [vmem:[#allocation3 + $0x58] sm:$0xff]
      %v2908 = vld [vmem:[#allocation3 + $0x60] sm:$0xff]
      %v2909 = vld [vmem:[#allocation3 + $0x68] sm:$0xff]
      %v2910 = vld [vmem:[#allocation3 + $0x70] sm:$0xff]
      %v2911 = vld [vmem:[#allocation3 + $0x78] sm:$0xff]
      %v2912 = vld [vmem:[#allocation3 + $0x80] sm:$0xff]
      %v2913 = vld [vmem:[#allocation3 + $0x88] sm:$0xff]
      %v2914 = vld [vmem:[#allocation3 + $0x90] sm:$0xff]
      %v2915 = vld [vmem:[#allocation3 + $0x98] sm:$0xff]
      %v2916 = vld [vmem:[#allocation3 + $0xa0] sm:$0xff]
      %v2917 = vld [vmem:[#allocation3 + $0xa8] sm:$0xff]
      %v2918 = vld [vmem:[#allocation3 + $0xb0] sm:$0xff]
      %v2919 = vld [vmem:[#allocation3 + $0xb8] sm:$0xff]
      %v2920 = vld [vmem:[#allocation3 + $0xc0] sm:$0xff]
      %v2921 = vld [vmem:[#allocation3 + $0xc8] sm:$0xff]
      %v2922 = vld [vmem:[#allocation3 + $0xd0] sm:$0xff]
      %v2923 = vld [vmem:[#allocation3 + $0xd8] sm:$0xff]
      %v2924 = vld [vmem:[#allocation3 + $0xe0] sm:$0xff]
      %v2925 = vld [vmem:[#allocation3 + $0xe8] sm:$0xff]
      %v2926 = vld [vmem:[#allocation3 + $0xf0] sm:$0xff]
      %v2927 = vld [vmem:[#allocation3 + $0xf8] sm:$0xff]
      %v2928 = vadd.f32 %v2896, %v2817
      %v2929 = vadd.f32 %v2897, %v2819
      %v2930 = vadd.f32 %v2898, %v2822
      %v2931 = vadd.f32 %v2899, %v2824
      %v2932 = vadd.f32 %v2900, %v2827
      %v2933 = vadd.f32 %v2901, %v2829
      %v2934 = vadd.f32 %v2902, %v2832
      %v2935 = vadd.f32 %v2903, %v2834
      %v2936 = vadd.f32 %v2904, %v2837
      %v2937 = vadd.f32 %v2905, %v2839
      %v2938 = vadd.f32 %v2906, %v2842
      %v2939 = vadd.f32 %v2907, %v2844
      %v2940 = vadd.f32 %v2908, %v2847
      %v2941 = vadd.f32 %v2909, %v2849
      %v2942 = vadd.f32 %v2910, %v2852
      %v2943 = vadd.f32 %v2911, %v2854
      %v2944 = vadd.f32 %v2912, %v2857
      %v2945 = vadd.f32 %v2913, %v2859
      %v2946 = vadd.f32 %v2914, %v2862
      %v2947 = vadd.f32 %v2915, %v2864
      %v2948 = vadd.f32 %v2916, %v2867
      %v2949 = vadd.f32 %v2917, %v2869
      %v2950 = vadd.f32 %v2918, %v2872
      %v2951 = vadd.f32 %v2919, %v2874
      %v2952 = vadd.f32 %v2920, %v2877
      %v2953 = vadd.f32 %v2921, %v2879
      %v2954 = vadd.f32 %v2922, %v2882
      %v2955 = vadd.f32 %v2923, %v2884
      %v2956 = vadd.f32 %v2924, %v2887
      %v2957 = vadd.f32 %v2925, %v2889
      %v2958 = vadd.f32 %v2926, %v2892
      %v2959 = vadd.f32 %v2927, %v2894
      %2960 = vst.msk [vmem:[#allocation3] sm:$0xff] %vm1514, %v2928
      %2961 = vst.msk [vmem:[#allocation3 + $0x8] sm:$0xff] %vm1514, %v2929
      %2962 = vst.msk [vmem:[#allocation3 + $0x10] sm:$0xff] %vm1514, %v2930
      %2963 = vst.msk [vmem:[#allocation3 + $0x18] sm:$0xff] %vm1514, %v2931
      %2964 = vst.msk [vmem:[#allocation3 + $0x20] sm:$0xff] %vm1514, %v2932
      %2965 = vst.msk [vmem:[#allocation3 + $0x28] sm:$0xff] %vm1514, %v2933
      %2966 = vst.msk [vmem:[#allocation3 + $0x30] sm:$0xff] %vm1514, %v2934
      %2967 = vst.msk [vmem:[#allocation3 + $0x38] sm:$0xff] %vm1514, %v2935
      %2968 = vst.msk [vmem:[#allocation3 + $0x40] sm:$0xff] %vm1514, %v2936
      %2969 = vst.msk [vmem:[#allocation3 + $0x48] sm:$0xff] %vm1514, %v2937
      %2970 = vst.msk [vmem:[#allocation3 + $0x50] sm:$0xff] %vm1514, %v2938
      %2971 = vst.msk [vmem:[#allocation3 + $0x58] sm:$0xff] %vm1514, %v2939
      %2972 = vst.msk [vmem:[#allocation3 + $0x60] sm:$0xff] %vm1514, %v2940
      %2973 = vst.msk [vmem:[#allocation3 + $0x68] sm:$0xff] %vm1514, %v2941
      %2974 = vst.msk [vmem:[#allocation3 + $0x70] sm:$0xff] %vm1514, %v2942
      %2975 = vst.msk [vmem:[#allocation3 + $0x78] sm:$0xff] %vm1514, %v2943
      %2976 = vst.msk [vmem:[#allocation3 + $0x80] sm:$0xff] %vm1514, %v2944
      %2977 = vst.msk [vmem:[#allocation3 + $0x88] sm:$0xff] %vm1514, %v2945
      %2978 = vst.msk [vmem:[#allocation3 + $0x90] sm:$0xff] %vm1514, %v2946
      %2979 = vst.msk [vmem:[#allocation3 + $0x98] sm:$0xff] %vm1514, %v2947
      %2980 = vst.msk [vmem:[#allocation3 + $0xa0] sm:$0xff] %vm1514, %v2948
      %2981 = vst.msk [vmem:[#allocation3 + $0xa8] sm:$0xff] %vm1514, %v2949
      %2982 = vst.msk [vmem:[#allocation3 + $0xb0] sm:$0xff] %vm1514, %v2950
      %2983 = vst.msk [vmem:[#allocation3 + $0xb8] sm:$0xff] %vm1514, %v2951
      %2984 = vst.msk [vmem:[#allocation3 + $0xc0] sm:$0xff] %vm1514, %v2952
      %2985 = vst.msk [vmem:[#allocation3 + $0xc8] sm:$0xff] %vm1514, %v2953
      %2986 = vst.msk [vmem:[#allocation3 + $0xd0] sm:$0xff] %vm1514, %v2954
      %2987 = vst.msk [vmem:[#allocation3 + $0xd8] sm:$0xff] %vm1514, %v2955
      %2988 = vst.msk [vmem:[#allocation3 + $0xe0] sm:$0xff] %vm1514, %v2956
      %2989 = vst.msk [vmem:[#allocation3 + $0xe8] sm:$0xff] %vm1514, %v2957
      %2990 = vst.msk [vmem:[#allocation3 + $0xf0] sm:$0xff] %vm1514, %v2958
      %2991 = vst.msk [vmem:[#allocation3 + $0xf8] sm:$0xff] %vm1514, %v2959
      %v2992 = vld [vmem:[#allocation2 + $0xc] sm:$0x8]
      %v2993 = vld [vmem:[#allocation2 + $0x10] sm:$0xf]
      %v2994 = vld [vmem:[#allocation2 + $0x14] sm:$0xf]
      %v2995 = vld [vmem:[#allocation2 + $0x18] sm:$0xf]
      %v2996 = vld [vmem:[#allocation2 + $0x1c] sm:$0xf]
      %v2997 = vld [vmem:[#allocation2 + $0x20] sm:$0xf]
      %v2998 = vld [vmem:[#allocation2 + $0x24] sm:$0xf]
      %v2999 = vld [vmem:[#allocation2 + $0x28] sm:$0xf]
      %v3000 = vld [vmem:[#allocation2 + $0x2c] sm:$0xf]
      %v3001 = vld [vmem:[#allocation2 + $0x30] sm:$0xf]
      %v3002 = vld [vmem:[#allocation2 + $0x34] sm:$0xf]
      %v3003 = vld [vmem:[#allocation2 + $0x38] sm:$0xf]
      %v3004 = vld [vmem:[#allocation2 + $0x3c] sm:$0xf]
      %v3005 = vld [vmem:[#allocation2 + $0x40] sm:$0xf]
      %v3006 = vld [vmem:[#allocation2 + $0x44] sm:$0xf]
      %v3007 = vld [vmem:[#allocation2 + $0x48] sm:$0xf]
      %v3008 = vld [vmem:[#allocation2 + $0x4c] sm:$0xf]
      %v3009 = vld [vmem:[#allocation2 + $0x50] sm:$0xf]
      %v3010 = vld [vmem:[#allocation2 + $0x54] sm:$0xf]
      %v3011 = vld [vmem:[#allocation2 + $0x58] sm:$0xf]
      %v3012 = vld [vmem:[#allocation2 + $0x5c] sm:$0xf]
      %v3013 = vld [vmem:[#allocation2 + $0x60] sm:$0xf]
      %v3014 = vld [vmem:[#allocation2 + $0x64] sm:$0xf]
      %v3015 = vld [vmem:[#allocation2 + $0x68] sm:$0xf]
      %v3016 = vld [vmem:[#allocation2 + $0x6c] sm:$0xf]
      %v3017 = vld [vmem:[#allocation2 + $0x70] sm:$0xf]
      %v3018 = vld [vmem:[#allocation2 + $0x74] sm:$0xf]
      %v3019 = vld [vmem:[#allocation2 + $0x78] sm:$0xf]
      %v3020 = vld [vmem:[#allocation2 + $0x7c] sm:$0xf]
      %v3021 = vld [vmem:[#allocation2 + $0x80] sm:$0xf]
      %v3022 = vld [vmem:[#allocation2 + $0x84] sm:$0xf]
      %v3023 = vld [vmem:[#allocation2 + $0x88] sm:$0xf]
      %v3024 = vld [vmem:[#allocation2 + $0x8c] sm:$0xf]
      %v3025 = vunpack.c.l.bf16 %v2992
      %v3026 = vunpack.c.l.bf16 %v2993
      %v3027 = vunpack.c.l.bf16 %v2994
      %v3028 = vunpack.c.l.bf16 %v2995
      %v3029 = vunpack.c.l.bf16 %v2996
      %v3030 = vunpack.c.l.bf16 %v2997
      %v3031 = vunpack.c.l.bf16 %v2998
      %v3032 = vunpack.c.l.bf16 %v2999
      %v3033 = vunpack.c.l.bf16 %v3000
      %v3034 = vunpack.c.l.bf16 %v3001
      %v3035 = vunpack.c.l.bf16 %v3002
      %v3036 = vunpack.c.l.bf16 %v3003
      %v3037 = vunpack.c.l.bf16 %v3004
      %v3038 = vunpack.c.l.bf16 %v3005
      %v3039 = vunpack.c.l.bf16 %v3006
      %v3040 = vunpack.c.l.bf16 %v3007
      %v3041 = vunpack.c.l.bf16 %v3008
      %v3042 = vunpack.c.l.bf16 %v3009
      %v3043 = vunpack.c.l.bf16 %v3010
      %v3044 = vunpack.c.l.bf16 %v3011
      %v3045 = vunpack.c.l.bf16 %v3012
      %v3046 = vunpack.c.l.bf16 %v3013
      %v3047 = vunpack.c.l.bf16 %v3014
      %v3048 = vunpack.c.l.bf16 %v3015
      %v3049 = vunpack.c.l.bf16 %v3016
      %v3050 = vunpack.c.l.bf16 %v3017
      %v3051 = vunpack.c.l.bf16 %v3018
      %v3052 = vunpack.c.l.bf16 %v3019
      %v3053 = vunpack.c.l.bf16 %v3020
      %v3054 = vunpack.c.l.bf16 %v3021
      %v3055 = vunpack.c.l.bf16 %v3022
      %v3056 = vunpack.c.l.bf16 %v3023
      %v3057 = vunpack.c.l.bf16 %v3024
      %v3058 = vmul.f32 %v3025, %v1183
      %v3059 = vmul.f32 %v3026, %v1185
      %v3060 = vmul.f32 %v3027, %v1187
      %v3061 = vmul.f32 %v3028, %v1189
      %v3062 = vmul.f32 %v3029, %v1191
      %v3063 = vmul.f32 %v3030, %v1193
      %v3064 = vmul.f32 %v3031, %v1195
      %v3065 = vmul.f32 %v3032, %v1197
      %v3066 = vmul.f32 %v3033, %v1199
      %v3067 = vmul.f32 %v3034, %v1201
      %v3068 = vmul.f32 %v3035, %v1203
      %v3069 = vmul.f32 %v3036, %v1205
      %v3070 = vmul.f32 %v3037, %v1207
      %v3071 = vmul.f32 %v3038, %v1209
      %v3072 = vmul.f32 %v3039, %v1211
      %v3073 = vmul.f32 %v3040, %v1213
      %v3074 = vmul.f32 %v3041, %v1215
      %v3075 = vmul.f32 %v3042, %v1217
      %v3076 = vmul.f32 %v3043, %v1219
      %v3077 = vmul.f32 %v3044, %v1221
      %v3078 = vmul.f32 %v3045, %v1223
      %v3079 = vmul.f32 %v3046, %v1225
      %v3080 = vmul.f32 %v3047, %v1227
      %v3081 = vmul.f32 %v3048, %v1229
      %v3082 = vmul.f32 %v3049, %v1231
      %v3083 = vmul.f32 %v3050, %v1233
      %v3084 = vmul.f32 %v3051, %v1235
      %v3085 = vmul.f32 %v3052, %v1237
      %v3086 = vmul.f32 %v3053, %v1239
      %v3087 = vmul.f32 %v3054, %v1241
      %v3088 = vmul.f32 %v3055, %v1243
      %v3089 = vmul.f32 %v3056, %v1245
      %v3090 = vmul.f32 %v3057, %v1244
      %v3091 = vpack.c.bf16 %v3059, %v3058
      %v3092 = vpack.c.bf16 %v3061, %v3060
      %v3093 = vpack.c.bf16 %v3063, %v3062
      %v3094 = vpack.c.bf16 %v3065, %v3064
      %v3095 = vpack.c.bf16 %v3067, %v3066
      %v3096 = vpack.c.bf16 %v3069, %v3068
      %v3097 = vpack.c.bf16 %v3071, %v3070
      %v3098 = vpack.c.bf16 %v3073, %v3072
      %v3099 = vpack.c.bf16 %v3075, %v3074
      %v3100 = vpack.c.bf16 %v3077, %v3076
      %v3101 = vpack.c.bf16 %v3079, %v3078
      %v3102 = vpack.c.bf16 %v3081, %v3080
      %v3103 = vpack.c.bf16 %v3083, %v3082
      %v3104 = vpack.c.bf16 %v3085, %v3084
      %v3105 = vpack.c.bf16 %v3087, %v3086
      %v3106 = vpack.c.bf16 %v3089, %v3088
      %v3107 = vpack.c.bf16 %v3090, %v3090
      %v3108 = vld [vmem:[%s3 + $0x60] sm:$0xf]
      %v3109 = vld [vmem:[%s3 + $0x64] sm:$0xf]
      %v3110 = vld [vmem:[%s3 + $0x68] sm:$0xf]
      %v3111 = vld [vmem:[%s3 + $0x6c] sm:$0xf]
      %v3112 = vld [vmem:[%s3 + $0x70] sm:$0xf]
      %v3113 = vld [vmem:[%s3 + $0x74] sm:$0xf]
      %v3114 = vld [vmem:[%s3 + $0x78] sm:$0xf]
      %v3115 = vld [vmem:[%s3 + $0x7c] sm:$0xf]
      %v3117 = vshrl.u32 %v3091, 16
      %v3119 = vrot.slane %v3117, 3
      %v3120 = vshll.u32 %v3091, 16
      %v3122 = vrot.slane %v3120, 4
      %v3123 = vor.u32 %v3119, %v3122
      %v3125 = vshrl.u32 %v3092, 16
      %v3127 = vrot.slane %v3125, 3
      %v3128 = vshll.u32 %v3092, 16
      %v3130 = vrot.slane %v3128, 4
      %v3131 = vor.u32 %v3127, %v3130
      %v3132 = vsel %vm1337, %v3123, %v3131
      %v3134 = vshrl.u32 %v3093, 16
      %v3136 = vrot.slane %v3134, 3
      %v3137 = vshll.u32 %v3093, 16
      %v3139 = vrot.slane %v3137, 4
      %v3140 = vor.u32 %v3136, %v3139
      %v3141 = vsel %vm1337, %v3131, %v3140
      %v3143 = vshrl.u32 %v3094, 16
      %v3145 = vrot.slane %v3143, 3
      %v3146 = vshll.u32 %v3094, 16
      %v3148 = vrot.slane %v3146, 4
      %v3149 = vor.u32 %v3145, %v3148
      %v3150 = vsel %vm1337, %v3140, %v3149
      %v3152 = vshrl.u32 %v3095, 16
      %v3154 = vrot.slane %v3152, 3
      %v3155 = vshll.u32 %v3095, 16
      %v3157 = vrot.slane %v3155, 4
      %v3158 = vor.u32 %v3154, %v3157
      %v3159 = vsel %vm1337, %v3149, %v3158
      %v3161 = vshrl.u32 %v3096, 16
      %v3163 = vrot.slane %v3161, 3
      %v3164 = vshll.u32 %v3096, 16
      %v3166 = vrot.slane %v3164, 4
      %v3167 = vor.u32 %v3163, %v3166
      %v3168 = vsel %vm1337, %v3158, %v3167
      %v3170 = vshrl.u32 %v3097, 16
      %v3172 = vrot.slane %v3170, 3
      %v3173 = vshll.u32 %v3097, 16
      %v3175 = vrot.slane %v3173, 4
      %v3176 = vor.u32 %v3172, %v3175
      %v3177 = vsel %vm1337, %v3167, %v3176
      %v3179 = vshrl.u32 %v3098, 16
      %v3181 = vrot.slane %v3179, 3
      %v3182 = vshll.u32 %v3098, 16
      %v3184 = vrot.slane %v3182, 4
      %v3185 = vor.u32 %v3181, %v3184
      %v3186 = vsel %vm1337, %v3176, %v3185
      %v3188 = vshrl.u32 %v3099, 16
      %v3190 = vrot.slane %v3188, 3
      %v3191 = vshll.u32 %v3099, 16
      %v3193 = vrot.slane %v3191, 4
      %v3194 = vor.u32 %v3190, %v3193
      %v3195 = vsel %vm1337, %v3185, %v3194
      %v3197 = vshrl.u32 %v3100, 16
      %v3199 = vrot.slane %v3197, 3
      %v3200 = vshll.u32 %v3100, 16
      %v3202 = vrot.slane %v3200, 4
      %v3203 = vor.u32 %v3199, %v3202
      %v3204 = vsel %vm1337, %v3194, %v3203
      %v3206 = vshrl.u32 %v3101, 16
      %v3208 = vrot.slane %v3206, 3
      %v3209 = vshll.u32 %v3101, 16
      %v3211 = vrot.slane %v3209, 4
      %v3212 = vor.u32 %v3208, %v3211
      %v3213 = vsel %vm1337, %v3203, %v3212
      %v3215 = vshrl.u32 %v3102, 16
      %v3217 = vrot.slane %v3215, 3
      %v3218 = vshll.u32 %v3102, 16
      %v3220 = vrot.slane %v3218, 4
      %v3221 = vor.u32 %v3217, %v3220
      %v3222 = vsel %vm1337, %v3212, %v3221
      %v3224 = vshrl.u32 %v3103, 16
      %v3226 = vrot.slane %v3224, 3
      %v3227 = vshll.u32 %v3103, 16
      %v3229 = vrot.slane %v3227, 4
      %v3230 = vor.u32 %v3226, %v3229
      %v3231 = vsel %vm1337, %v3221, %v3230
      %v3233 = vshrl.u32 %v3104, 16
      %v3235 = vrot.slane %v3233, 3
      %v3236 = vshll.u32 %v3104, 16
      %v3238 = vrot.slane %v3236, 4
      %v3239 = vor.u32 %v3235, %v3238
      %v3240 = vsel %vm1337, %v3230, %v3239
      %v3242 = vshrl.u32 %v3105, 16
      %v3244 = vrot.slane %v3242, 3
      %v3245 = vshll.u32 %v3105, 16
      %v3247 = vrot.slane %v3245, 4
      %v3248 = vor.u32 %v3244, %v3247
      %v3249 = vsel %vm1337, %v3239, %v3248
      %v3251 = vshrl.u32 %v3106, 16
      %v3253 = vrot.slane %v3251, 3
      %v3254 = vshll.u32 %v3106, 16
      %v3256 = vrot.slane %v3254, 4
      %v3257 = vor.u32 %v3253, %v3256
      %v3258 = vsel %vm1337, %v3248, %v3257
      %v3260 = vshrl.u32 %v3107, 16
      %v3262 = vrot.slane %v3260, 3
      %v3263 = vshll.u32 %v3107, 16
      %v3265 = vrot.slane %v3263, 4
      %v3266 = vor.u32 %v3262, %v3265
      %v3267 = vsel %vm1337, %v3257, %v3266
      %v3276 = vunpack.c.l.b16 %v3108
      %v3277 = vunpack.c.l.b16 %v3109
      %v3278 = vunpack.c.l.b16 %v3110
      %v3279 = vunpack.c.l.b16 %v3111
      %v3280 = vunpack.c.l.b16 %v3112
      %v3281 = vunpack.c.l.b16 %v3113
      %v3282 = vunpack.c.l.b16 %v3114
      %v3283 = vunpack.c.l.b16 %v3115
      %v3284 = vpack.c.b16 %v3277, %v3276
      %v3285 = vpack.c.b16 %v3279, %v3278
      %v3286 = vpack.c.b16 %v3281, %v3280
      %v3287 = vpack.c.b16 %v3283, %v3282
      %v3293 = vsel %vm1514, %v3132, 0
      %v3296 = vsel %vm1514, %v3141, 0
      %v3299 = vsel %vm1514, %v3150, 0
      %v3302 = vsel %vm1514, %v3159, 0
      %v3305 = vsel %vm1514, %v3168, 0
      %v3308 = vsel %vm1514, %v3177, 0
      %v3311 = vsel %vm1514, %v3186, 0
      %v3314 = vsel %vm1514, %v3195, 0
      %v3317 = vsel %vm1514, %v3204, 0
      %v3320 = vsel %vm1514, %v3213, 0
      %v3323 = vsel %vm1514, %v3222, 0
      %v3326 = vsel %vm1514, %v3231, 0
      %v3329 = vsel %vm1514, %v3240, 0
      %v3332 = vsel %vm1514, %v3249, 0
      %v3335 = vsel %vm1514, %v3258, 0
      %v3338 = vsel %vm1514, %v3267, 0
      %3340 = vmatpush.bf16.msra.mxu0 0
      %3341 = vmatpush.bf16.msra.mxu0 0
      %3342 = vmatpush.bf16.msra.mxu0 0
      %3343 = vmatpush.bf16.msra.mxu0 0
      %3344 = vmatpush.bf16.msra.mxu0 %v3287
      %3345 = vmatpush.bf16.msra.mxu0 %v3286
      %3346 = vmatpush.bf16.msra.mxu0 %v3285
      %3347 = vmatpush.bf16.msra.mxu0 %v3284
      %3348 = vmatmul.bf16.gmra.mxu0 %v3293
      %v3349 = vpop.f32.mrf.mxu0
      %v3350 = vadd.f32 0.0, %v3349
      %v3351 = vpop.f32.mrf.mxu0
      %v3352 = vadd.f32 0.0, %v3351
      %3353 = vmatmul.bf16.gmra.mxu0 %v3296
      %v3354 = vpop.f32.mrf.mxu0
      %v3355 = vadd.f32 0.0, %v3354
      %v3356 = vpop.f32.mrf.mxu0
      %v3357 = vadd.f32 0.0, %v3356
      %3358 = vmatmul.bf16.gmra.mxu0 %v3299
      %v3359 = vpop.f32.mrf.mxu0
      %v3360 = vadd.f32 0.0, %v3359
      %v3361 = vpop.f32.mrf.mxu0
      %v3362 = vadd.f32 0.0, %v3361
      %3363 = vmatmul.bf16.gmra.mxu0 %v3302
      %v3364 = vpop.f32.mrf.mxu0
      %v3365 = vadd.f32 0.0, %v3364
      %v3366 = vpop.f32.mrf.mxu0
      %v3367 = vadd.f32 0.0, %v3366
      %3368 = vmatmul.bf16.gmra.mxu0 %v3305
      %v3369 = vpop.f32.mrf.mxu0
      %v3370 = vadd.f32 0.0, %v3369
      %v3371 = vpop.f32.mrf.mxu0
      %v3372 = vadd.f32 0.0, %v3371
      %3373 = vmatmul.bf16.gmra.mxu0 %v3308
      %v3374 = vpop.f32.mrf.mxu0
      %v3375 = vadd.f32 0.0, %v3374
      %v3376 = vpop.f32.mrf.mxu0
      %v3377 = vadd.f32 0.0, %v3376
      %3378 = vmatmul.bf16.gmra.mxu0 %v3311
      %v3379 = vpop.f32.mrf.mxu0
      %v3380 = vadd.f32 0.0, %v3379
      %v3381 = vpop.f32.mrf.mxu0
      %v3382 = vadd.f32 0.0, %v3381
      %3383 = vmatmul.bf16.gmra.mxu0 %v3314
      %v3384 = vpop.f32.mrf.mxu0
      %v3385 = vadd.f32 0.0, %v3384
      %v3386 = vpop.f32.mrf.mxu0
      %v3387 = vadd.f32 0.0, %v3386
      %3388 = vmatmul.bf16.gmra.mxu0 %v3317
      %v3389 = vpop.f32.mrf.mxu0
      %v3390 = vadd.f32 0.0, %v3389
      %v3391 = vpop.f32.mrf.mxu0
      %v3392 = vadd.f32 0.0, %v3391
      %3393 = vmatmul.bf16.gmra.mxu0 %v3320
      %v3394 = vpop.f32.mrf.mxu0
      %v3395 = vadd.f32 0.0, %v3394
      %v3396 = vpop.f32.mrf.mxu0
      %v3397 = vadd.f32 0.0, %v3396
      %3398 = vmatmul.bf16.gmra.mxu0 %v3323
      %v3399 = vpop.f32.mrf.mxu0
      %v3400 = vadd.f32 0.0, %v3399
      %v3401 = vpop.f32.mrf.mxu0
      %v3402 = vadd.f32 0.0, %v3401
      %3403 = vmatmul.bf16.gmra.mxu0 %v3326
      %v3404 = vpop.f32.mrf.mxu0
      %v3405 = vadd.f32 0.0, %v3404
      %v3406 = vpop.f32.mrf.mxu0
      %v3407 = vadd.f32 0.0, %v3406
      %3408 = vmatmul.bf16.gmra.mxu0 %v3329
      %v3409 = vpop.f32.mrf.mxu0
      %v3410 = vadd.f32 0.0, %v3409
      %v3411 = vpop.f32.mrf.mxu0
      %v3412 = vadd.f32 0.0, %v3411
      %3413 = vmatmul.bf16.gmra.mxu0 %v3332
      %v3414 = vpop.f32.mrf.mxu0
      %v3415 = vadd.f32 0.0, %v3414
      %v3416 = vpop.f32.mrf.mxu0
      %v3417 = vadd.f32 0.0, %v3416
      %3418 = vmatmul.bf16.gmra.mxu0 %v3335
      %v3419 = vpop.f32.mrf.mxu0
      %v3420 = vadd.f32 0.0, %v3419
      %v3421 = vpop.f32.mrf.mxu0
      %v3422 = vadd.f32 0.0, %v3421
      %3423 = vmatmul.bf16.gmra.mxu0 %v3338
      %v3424 = vpop.f32.mrf.mxu0
      %v3425 = vadd.f32 0.0, %v3424
      %v3426 = vpop.f32.mrf.mxu0
      %v3427 = vadd.f32 0.0, %v3426
      %3428 = vdwg.mxu0
      %v3429 = vld [vmem:[#allocation3] sm:$0xff]
      %v3430 = vld [vmem:[#allocation3 + $0x8] sm:$0xff]
      %v3431 = vld [vmem:[#allocation3 + $0x10] sm:$0xff]
      %v3432 = vld [vmem:[#allocation3 + $0x18] sm:$0xff]
      %v3433 = vld [vmem:[#allocation3 + $0x20] sm:$0xff]
      %v3434 = vld [vmem:[#allocation3 + $0x28] sm:$0xff]
      %v3435 = vld [vmem:[#allocation3 + $0x30] sm:$0xff]
      %v3436 = vld [vmem:[#allocation3 + $0x38] sm:$0xff]
      %v3437 = vld [vmem:[#allocation3 + $0x40] sm:$0xff]
      %v3438 = vld [vmem:[#allocation3 + $0x48] sm:$0xff]
      %v3439 = vld [vmem:[#allocation3 + $0x50] sm:$0xff]
      %v3440 = vld [vmem:[#allocation3 + $0x58] sm:$0xff]
      %v3441 = vld [vmem:[#allocation3 + $0x60] sm:$0xff]
      %v3442 = vld [vmem:[#allocation3 + $0x68] sm:$0xff]
      %v3443 = vld [vmem:[#allocation3 + $0x70] sm:$0xff]
      %v3444 = vld [vmem:[#allocation3 + $0x78] sm:$0xff]
      %v3445 = vld [vmem:[#allocation3 + $0x80] sm:$0xff]
      %v3446 = vld [vmem:[#allocation3 + $0x88] sm:$0xff]
      %v3447 = vld [vmem:[#allocation3 + $0x90] sm:$0xff]
      %v3448 = vld [vmem:[#allocation3 + $0x98] sm:$0xff]
      %v3449 = vld [vmem:[#allocation3 + $0xa0] sm:$0xff]
      %v3450 = vld [vmem:[#allocation3 + $0xa8] sm:$0xff]
      %v3451 = vld [vmem:[#allocation3 + $0xb0] sm:$0xff]
      %v3452 = vld [vmem:[#allocation3 + $0xb8] sm:$0xff]
      %v3453 = vld [vmem:[#allocation3 + $0xc0] sm:$0xff]
      %v3454 = vld [vmem:[#allocation3 + $0xc8] sm:$0xff]
      %v3455 = vld [vmem:[#allocation3 + $0xd0] sm:$0xff]
      %v3456 = vld [vmem:[#allocation3 + $0xd8] sm:$0xff]
      %v3457 = vld [vmem:[#allocation3 + $0xe0] sm:$0xff]
      %v3458 = vld [vmem:[#allocation3 + $0xe8] sm:$0xff]
      %v3459 = vld [vmem:[#allocation3 + $0xf0] sm:$0xff]
      %v3460 = vld [vmem:[#allocation3 + $0xf8] sm:$0xff]
      %v3461 = vadd.f32 %v3429, %v3350
      %v3462 = vadd.f32 %v3430, %v3352
      %v3463 = vadd.f32 %v3431, %v3355
      %v3464 = vadd.f32 %v3432, %v3357
      %v3465 = vadd.f32 %v3433, %v3360
      %v3466 = vadd.f32 %v3434, %v3362
      %v3467 = vadd.f32 %v3435, %v3365
      %v3468 = vadd.f32 %v3436, %v3367
      %v3469 = vadd.f32 %v3437, %v3370
      %v3470 = vadd.f32 %v3438, %v3372
      %v3471 = vadd.f32 %v3439, %v3375
      %v3472 = vadd.f32 %v3440, %v3377
      %v3473 = vadd.f32 %v3441, %v3380
      %v3474 = vadd.f32 %v3442, %v3382
      %v3475 = vadd.f32 %v3443, %v3385
      %v3476 = vadd.f32 %v3444, %v3387
      %v3477 = vadd.f32 %v3445, %v3390
      %v3478 = vadd.f32 %v3446, %v3392
      %v3479 = vadd.f32 %v3447, %v3395
      %v3480 = vadd.f32 %v3448, %v3397
      %v3481 = vadd.f32 %v3449, %v3400
      %v3482 = vadd.f32 %v3450, %v3402
      %v3483 = vadd.f32 %v3451, %v3405
      %v3484 = vadd.f32 %v3452, %v3407
      %v3485 = vadd.f32 %v3453, %v3410
      %v3486 = vadd.f32 %v3454, %v3412
      %v3487 = vadd.f32 %v3455, %v3415
      %v3488 = vadd.f32 %v3456, %v3417
      %v3489 = vadd.f32 %v3457, %v3420
      %v3490 = vadd.f32 %v3458, %v3422
      %v3491 = vadd.f32 %v3459, %v3425
      %v3492 = vadd.f32 %v3460, %v3427
      %3493 = vst.msk [vmem:[#allocation3] sm:$0xff] %vm1514, %v3461
      %3494 = vst.msk [vmem:[#allocation3 + $0x8] sm:$0xff] %vm1514, %v3462
      %3495 = vst.msk [vmem:[#allocation3 + $0x10] sm:$0xff] %vm1514, %v3463
      %3496 = vst.msk [vmem:[#allocation3 + $0x18] sm:$0xff] %vm1514, %v3464
      %3497 = vst.msk [vmem:[#allocation3 + $0x20] sm:$0xff] %vm1514, %v3465
      %3498 = vst.msk [vmem:[#allocation3 + $0x28] sm:$0xff] %vm1514, %v3466
      %3499 = vst.msk [vmem:[#allocation3 + $0x30] sm:$0xff] %vm1514, %v3467
      %3500 = vst.msk [vmem:[#allocation3 + $0x38] sm:$0xff] %vm1514, %v3468
      %3501 = vst.msk [vmem:[#allocation3 + $0x40] sm:$0xff] %vm1514, %v3469
      %3502 = vst.msk [vmem:[#allocation3 + $0x48] sm:$0xff] %vm1514, %v3470
      %3503 = vst.msk [vmem:[#allocation3 + $0x50] sm:$0xff] %vm1514, %v3471
      %3504 = vst.msk [vmem:[#allocation3 + $0x58] sm:$0xff] %vm1514, %v3472
      %3505 = vst.msk [vmem:[#allocation3 + $0x60] sm:$0xff] %vm1514, %v3473
      %3506 = vst.msk [vmem:[#allocation3 + $0x68] sm:$0xff] %vm1514, %v3474
      %3507 = vst.msk [vmem:[#allocation3 + $0x70] sm:$0xff] %vm1514, %v3475
      %3508 = vst.msk [vmem:[#allocation3 + $0x78] sm:$0xff] %vm1514, %v3476
      %3509 = vst.msk [vmem:[#allocation3 + $0x80] sm:$0xff] %vm1514, %v3477
      %3510 = vst.msk [vmem:[#allocation3 + $0x88] sm:$0xff] %vm1514, %v3478
      %3511 = vst.msk [vmem:[#allocation3 + $0x90] sm:$0xff] %vm1514, %v3479
      %3512 = vst.msk [vmem:[#allocation3 + $0x98] sm:$0xff] %vm1514, %v3480
      %3513 = vst.msk [vmem:[#allocation3 + $0xa0] sm:$0xff] %vm1514, %v3481
      %3514 = vst.msk [vmem:[#allocation3 + $0xa8] sm:$0xff] %vm1514, %v3482
      %3515 = vst.msk [vmem:[#allocation3 + $0xb0] sm:$0xff] %vm1514, %v3483
      %3516 = vst.msk [vmem:[#allocation3 + $0xb8] sm:$0xff] %vm1514, %v3484
      %3517 = vst.msk [vmem:[#allocation3 + $0xc0] sm:$0xff] %vm1514, %v3485
      %3518 = vst.msk [vmem:[#allocation3 + $0xc8] sm:$0xff] %vm1514, %v3486
      %3519 = vst.msk [vmem:[#allocation3 + $0xd0] sm:$0xff] %vm1514, %v3487
      %3520 = vst.msk [vmem:[#allocation3 + $0xd8] sm:$0xff] %vm1514, %v3488
      %3521 = vst.msk [vmem:[#allocation3 + $0xe0] sm:$0xff] %vm1514, %v3489
      %3522 = vst.msk [vmem:[#allocation3 + $0xe8] sm:$0xff] %vm1514, %v3490
      %3523 = vst.msk [vmem:[#allocation3 + $0xf0] sm:$0xff] %vm1514, %v3491
      %3524 = vst.msk [vmem:[#allocation3 + $0xf8] sm:$0xff] %vm1514, %v3492
      %v3525 = vld [vmem:[#allocation2 + $0x10] sm:$0xf]
      %v3526 = vld [vmem:[#allocation2 + $0x14] sm:$0xf]
      %v3527 = vld [vmem:[#allocation2 + $0x18] sm:$0xf]
      %v3528 = vld [vmem:[#allocation2 + $0x1c] sm:$0xf]
      %v3529 = vld [vmem:[#allocation2 + $0x20] sm:$0xf]
      %v3530 = vld [vmem:[#allocation2 + $0x24] sm:$0xf]
      %v3531 = vld [vmem:[#allocation2 + $0x28] sm:$0xf]
      %v3532 = vld [vmem:[#allocation2 + $0x2c] sm:$0xf]
      %v3533 = vld [vmem:[#allocation2 + $0x30] sm:$0xf]
      %v3534 = vld [vmem:[#allocation2 + $0x34] sm:$0xf]
      %v3535 = vld [vmem:[#allocation2 + $0x38] sm:$0xf]
      %v3536 = vld [vmem:[#allocation2 + $0x3c] sm:$0xf]
      %v3537 = vld [vmem:[#allocation2 + $0x40] sm:$0xf]
      %v3538 = vld [vmem:[#allocation2 + $0x44] sm:$0xf]
      %v3539 = vld [vmem:[#allocation2 + $0x48] sm:$0xf]
      %v3540 = vld [vmem:[#allocation2 + $0x4c] sm:$0xf]
      %v3541 = vld [vmem:[#allocation2 + $0x50] sm:$0xf]
      %v3542 = vld [vmem:[#allocation2 + $0x54] sm:$0xf]
      %v3543 = vld [vmem:[#allocation2 + $0x58] sm:$0xf]
      %v3544 = vld [vmem:[#allocation2 + $0x5c] sm:$0xf]
      %v3545 = vld [vmem:[#allocation2 + $0x60] sm:$0xf]
      %v3546 = vld [vmem:[#allocation2 + $0x64] sm:$0xf]
      %v3547 = vld [vmem:[#allocation2 + $0x68] sm:$0xf]
      %v3548 = vld [vmem:[#allocation2 + $0x6c] sm:$0xf]
      %v3549 = vld [vmem:[#allocation2 + $0x70] sm:$0xf]
      %v3550 = vld [vmem:[#allocation2 + $0x74] sm:$0xf]
      %v3551 = vld [vmem:[#allocation2 + $0x78] sm:$0xf]
      %v3552 = vld [vmem:[#allocation2 + $0x7c] sm:$0xf]
      %v3553 = vld [vmem:[#allocation2 + $0x80] sm:$0xf]
      %v3554 = vld [vmem:[#allocation2 + $0x84] sm:$0xf]
      %v3555 = vld [vmem:[#allocation2 + $0x88] sm:$0xf]
      %v3556 = vld [vmem:[#allocation2 + $0x8c] sm:$0xf]
      %v3557 = vld [vmem:[%s3 + $0x80] sm:$0xf]
      %v3558 = vld [vmem:[%s3 + $0x84] sm:$0xf]
      %v3559 = vld [vmem:[%s3 + $0x88] sm:$0xf]
      %v3560 = vld [vmem:[%s3 + $0x8c] sm:$0xf]
      %v3561 = vld [vmem:[%s3 + $0x90] sm:$0xf]
      %v3562 = vld [vmem:[%s3 + $0x94] sm:$0xf]
      %v3563 = vld [vmem:[%s3 + $0x98] sm:$0xf]
      %v3564 = vld [vmem:[%s3 + $0x9c] sm:$0xf]
      %v3597 = vunpack.c.l.b16 %v3525
      %v3598 = vunpack.c.l.b16 %v3526
      %v3599 = vunpack.c.l.b16 %v3527
      %v3600 = vunpack.c.l.b16 %v3528
      %v3601 = vunpack.c.l.b16 %v3529
      %v3602 = vunpack.c.l.b16 %v3530
      %v3603 = vunpack.c.l.b16 %v3531
      %v3604 = vunpack.c.l.b16 %v3532
      %v3605 = vunpack.c.l.b16 %v3533
      %v3606 = vunpack.c.l.b16 %v3534
      %v3607 = vunpack.c.l.b16 %v3535
      %v3608 = vunpack.c.l.b16 %v3536
      %v3609 = vunpack.c.l.b16 %v3537
      %v3610 = vunpack.c.l.b16 %v3538
      %v3611 = vunpack.c.l.b16 %v3539
      %v3612 = vunpack.c.l.b16 %v3540
      %v3613 = vunpack.c.l.b16 %v3541
      %v3614 = vunpack.c.l.b16 %v3542
      %v3615 = vunpack.c.l.b16 %v3543
      %v3616 = vunpack.c.l.b16 %v3544
      %v3617 = vunpack.c.l.b16 %v3545
      %v3618 = vunpack.c.l.b16 %v3546
      %v3619 = vunpack.c.l.b16 %v3547
      %v3620 = vunpack.c.l.b16 %v3548
      %v3621 = vunpack.c.l.b16 %v3549
      %v3622 = vunpack.c.l.b16 %v3550
      %v3623 = vunpack.c.l.b16 %v3551
      %v3624 = vunpack.c.l.b16 %v3552
      %v3625 = vunpack.c.l.b16 %v3553
      %v3626 = vunpack.c.l.b16 %v3554
      %v3627 = vunpack.c.l.b16 %v3555
      %v3628 = vunpack.c.l.b16 %v3556
      %v3629 = vpack.c.b16 %v3598, %v3597
      %v3630 = vpack.c.b16 %v3600, %v3599
      %v3631 = vpack.c.b16 %v3602, %v3601
      %v3632 = vpack.c.b16 %v3604, %v3603
      %v3633 = vpack.c.b16 %v3606, %v3605
      %v3634 = vpack.c.b16 %v3608, %v3607
      %v3635 = vpack.c.b16 %v3610, %v3609
      %v3636 = vpack.c.b16 %v3612, %v3611
      %v3637 = vpack.c.b16 %v3614, %v3613
      %v3638 = vpack.c.b16 %v3616, %v3615
      %v3639 = vpack.c.b16 %v3618, %v3617
      %v3640 = vpack.c.b16 %v3620, %v3619
      %v3641 = vpack.c.b16 %v3622, %v3621
      %v3642 = vpack.c.b16 %v3624, %v3623
      %v3643 = vpack.c.b16 %v3626, %v3625
      %v3644 = vpack.c.b16 %v3628, %v3627
      %v3653 = vunpack.c.l.b16 %v3557
      %v3654 = vunpack.c.l.b16 %v3558
      %v3655 = vunpack.c.l.b16 %v3559
      %v3656 = vunpack.c.l.b16 %v3560
      %v3657 = vunpack.c.l.b16 %v3561
      %v3658 = vunpack.c.l.b16 %v3562
      %v3659 = vunpack.c.l.b16 %v3563
      %v3660 = vunpack.c.l.b16 %v3564
      %v3661 = vpack.c.b16 %v3654, %v3653
      %v3662 = vpack.c.b16 %v3656, %v3655
      %v3663 = vpack.c.b16 %v3658, %v3657
      %v3664 = vpack.c.b16 %v3660, %v3659
      %v3670 = vsel %vm1514, %v3629, 0
      %v3673 = vsel %vm1514, %v3630, 0
      %v3676 = vsel %vm1514, %v3631, 0
      %v3679 = vsel %vm1514, %v3632, 0
      %v3682 = vsel %vm1514, %v3633, 0
      %v3685 = vsel %vm1514, %v3634, 0
      %v3688 = vsel %vm1514, %v3635, 0
      %v3691 = vsel %vm1514, %v3636, 0
      %v3694 = vsel %vm1514, %v3637, 0
      %v3697 = vsel %vm1514, %v3638, 0
      %v3700 = vsel %vm1514, %v3639, 0
      %v3703 = vsel %vm1514, %v3640, 0
      %v3706 = vsel %vm1514, %v3641, 0
      %v3709 = vsel %vm1514, %v3642, 0
      %v3712 = vsel %vm1514, %v3643, 0
      %v3715 = vsel %vm1514, %v3644, 0
      %3717 = vmatpush.bf16.msra.mxu0 0
      %3718 = vmatpush.bf16.msra.mxu0 0
      %3719 = vmatpush.bf16.msra.mxu0 0
      %3720 = vmatpush.bf16.msra.mxu0 0
      %3721 = vmatpush.bf16.msra.mxu0 %v3664
      %3722 = vmatpush.bf16.msra.mxu0 %v3663
      %3723 = vmatpush.bf16.msra.mxu0 %v3662
      %3724 = vmatpush.bf16.msra.mxu0 %v3661
      %3725 = vmatmul.bf16.gmra.mxu0 %v3670
      %v3726 = vpop.f32.mrf.mxu0
      %v3727 = vadd.f32 0.0, %v3726
      %v3728 = vpop.f32.mrf.mxu0
      %v3729 = vadd.f32 0.0, %v3728
      %3730 = vmatmul.bf16.gmra.mxu0 %v3673
      %v3731 = vpop.f32.mrf.mxu0
      %v3732 = vadd.f32 0.0, %v3731
      %v3733 = vpop.f32.mrf.mxu0
      %v3734 = vadd.f32 0.0, %v3733
      %3735 = vmatmul.bf16.gmra.mxu0 %v3676
      %v3736 = vpop.f32.mrf.mxu0
      %v3737 = vadd.f32 0.0, %v3736
      %v3738 = vpop.f32.mrf.mxu0
      %v3739 = vadd.f32 0.0, %v3738
      %3740 = vmatmul.bf16.gmra.mxu0 %v3679
      %v3741 = vpop.f32.mrf.mxu0
      %v3742 = vadd.f32 0.0, %v3741
      %v3743 = vpop.f32.mrf.mxu0
      %v3744 = vadd.f32 0.0, %v3743
      %3745 = vmatmul.bf16.gmra.mxu0 %v3682
      %v3746 = vpop.f32.mrf.mxu0
      %v3747 = vadd.f32 0.0, %v3746
      %v3748 = vpop.f32.mrf.mxu0
      %v3749 = vadd.f32 0.0, %v3748
      %3750 = vmatmul.bf16.gmra.mxu0 %v3685
      %v3751 = vpop.f32.mrf.mxu0
      %v3752 = vadd.f32 0.0, %v3751
      %v3753 = vpop.f32.mrf.mxu0
      %v3754 = vadd.f32 0.0, %v3753
      %3755 = vmatmul.bf16.gmra.mxu0 %v3688
      %v3756 = vpop.f32.mrf.mxu0
      %v3757 = vadd.f32 0.0, %v3756
      %v3758 = vpop.f32.mrf.mxu0
      %v3759 = vadd.f32 0.0, %v3758
      %3760 = vmatmul.bf16.gmra.mxu0 %v3691
      %v3761 = vpop.f32.mrf.mxu0
      %v3762 = vadd.f32 0.0, %v3761
      %v3763 = vpop.f32.mrf.mxu0
      %v3764 = vadd.f32 0.0, %v3763
      %3765 = vmatmul.bf16.gmra.mxu0 %v3694
      %v3766 = vpop.f32.mrf.mxu0
      %v3767 = vadd.f32 0.0, %v3766
      %v3768 = vpop.f32.mrf.mxu0
      %v3769 = vadd.f32 0.0, %v3768
      %3770 = vmatmul.bf16.gmra.mxu0 %v3697
      %v3771 = vpop.f32.mrf.mxu0
      %v3772 = vadd.f32 0.0, %v3771
      %v3773 = vpop.f32.mrf.mxu0
      %v3774 = vadd.f32 0.0, %v3773
      %3775 = vmatmul.bf16.gmra.mxu0 %v3700
      %v3776 = vpop.f32.mrf.mxu0
      %v3777 = vadd.f32 0.0, %v3776
      %v3778 = vpop.f32.mrf.mxu0
      %v3779 = vadd.f32 0.0, %v3778
      %3780 = vmatmul.bf16.gmra.mxu0 %v3703
      %v3781 = vpop.f32.mrf.mxu0
      %v3782 = vadd.f32 0.0, %v3781
      %v3783 = vpop.f32.mrf.mxu0
      %v3784 = vadd.f32 0.0, %v3783
      %3785 = vmatmul.bf16.gmra.mxu0 %v3706
      %v3786 = vpop.f32.mrf.mxu0
      %v3787 = vadd.f32 0.0, %v3786
      %v3788 = vpop.f32.mrf.mxu0
      %v3789 = vadd.f32 0.0, %v3788
      %3790 = vmatmul.bf16.gmra.mxu0 %v3709
      %v3791 = vpop.f32.mrf.mxu0
      %v3792 = vadd.f32 0.0, %v3791
      %v3793 = vpop.f32.mrf.mxu0
      %v3794 = vadd.f32 0.0, %v3793
      %3795 = vmatmul.bf16.gmra.mxu0 %v3712
      %v3796 = vpop.f32.mrf.mxu0
      %v3797 = vadd.f32 0.0, %v3796
      %v3798 = vpop.f32.mrf.mxu0
      %v3799 = vadd.f32 0.0, %v3798
      %3800 = vmatmul.bf16.gmra.mxu0 %v3715
      %v3801 = vpop.f32.mrf.mxu0
      %v3802 = vadd.f32 0.0, %v3801
      %v3803 = vpop.f32.mrf.mxu0
      %v3804 = vadd.f32 0.0, %v3803
      %3805 = vdwg.mxu0
      %v3806 = vld [vmem:[#allocation3] sm:$0xff]
      %v3807 = vld [vmem:[#allocation3 + $0x8] sm:$0xff]
      %v3808 = vld [vmem:[#allocation3 + $0x10] sm:$0xff]
      %v3809 = vld [vmem:[#allocation3 + $0x18] sm:$0xff]
      %v3810 = vld [vmem:[#allocation3 + $0x20] sm:$0xff]
      %v3811 = vld [vmem:[#allocation3 + $0x28] sm:$0xff]
      %v3812 = vld [vmem:[#allocation3 + $0x30] sm:$0xff]
      %v3813 = vld [vmem:[#allocation3 + $0x38] sm:$0xff]
      %v3814 = vld [vmem:[#allocation3 + $0x40] sm:$0xff]
      %v3815 = vld [vmem:[#allocation3 + $0x48] sm:$0xff]
      %v3816 = vld [vmem:[#allocation3 + $0x50] sm:$0xff]
      %v3817 = vld [vmem:[#allocation3 + $0x58] sm:$0xff]
      %v3818 = vld [vmem:[#allocation3 + $0x60] sm:$0xff]
      %v3819 = vld [vmem:[#allocation3 + $0x68] sm:$0xff]
      %v3820 = vld [vmem:[#allocation3 + $0x70] sm:$0xff]
      %v3821 = vld [vmem:[#allocation3 + $0x78] sm:$0xff]
      %v3822 = vld [vmem:[#allocation3 + $0x80] sm:$0xff]
      %v3823 = vld [vmem:[#allocation3 + $0x88] sm:$0xff]
      %v3824 = vld [vmem:[#allocation3 + $0x90] sm:$0xff]
      %v3825 = vld [vmem:[#allocation3 + $0x98] sm:$0xff]
      %v3826 = vld [vmem:[#allocation3 + $0xa0] sm:$0xff]
      %v3827 = vld [vmem:[#allocation3 + $0xa8] sm:$0xff]
      %v3828 = vld [vmem:[#allocation3 + $0xb0] sm:$0xff]
      %v3829 = vld [vmem:[#allocation3 + $0xb8] sm:$0xff]
      %v3830 = vld [vmem:[#allocation3 + $0xc0] sm:$0xff]
      %v3831 = vld [vmem:[#allocation3 + $0xc8] sm:$0xff]
      %v3832 = vld [vmem:[#allocation3 + $0xd0] sm:$0xff]
      %v3833 = vld [vmem:[#allocation3 + $0xd8] sm:$0xff]
      %v3834 = vld [vmem:[#allocation3 + $0xe0] sm:$0xff]
      %v3835 = vld [vmem:[#allocation3 + $0xe8] sm:$0xff]
      %v3836 = vld [vmem:[#allocation3 + $0xf0] sm:$0xff]
      %v3837 = vld [vmem:[#allocation3 + $0xf8] sm:$0xff]
      %v3838 = vadd.f32 %v3806, %v3727
      %v3839 = vadd.f32 %v3807, %v3729
      %v3840 = vadd.f32 %v3808, %v3732
      %v3841 = vadd.f32 %v3809, %v3734
      %v3842 = vadd.f32 %v3810, %v3737
      %v3843 = vadd.f32 %v3811, %v3739
      %v3844 = vadd.f32 %v3812, %v3742
      %v3845 = vadd.f32 %v3813, %v3744
      %v3846 = vadd.f32 %v3814, %v3747
      %v3847 = vadd.f32 %v3815, %v3749
      %v3848 = vadd.f32 %v3816, %v3752
      %v3849 = vadd.f32 %v3817, %v3754
      %v3850 = vadd.f32 %v3818, %v3757
      %v3851 = vadd.f32 %v3819, %v3759
      %v3852 = vadd.f32 %v3820, %v3762
      %v3853 = vadd.f32 %v3821, %v3764
      %v3854 = vadd.f32 %v3822, %v3767
      %v3855 = vadd.f32 %v3823, %v3769
      %v3856 = vadd.f32 %v3824, %v3772
      %v3857 = vadd.f32 %v3825, %v3774
      %v3858 = vadd.f32 %v3826, %v3777
      %v3859 = vadd.f32 %v3827, %v3779
      %v3860 = vadd.f32 %v3828, %v3782
      %v3861 = vadd.f32 %v3829, %v3784
      %v3862 = vadd.f32 %v3830, %v3787
      %v3863 = vadd.f32 %v3831, %v3789
      %v3864 = vadd.f32 %v3832, %v3792
      %v3865 = vadd.f32 %v3833, %v3794
      %v3866 = vadd.f32 %v3834, %v3797
      %v3867 = vadd.f32 %v3835, %v3799
      %v3868 = vadd.f32 %v3836, %v3802
      %v3869 = vadd.f32 %v3837, %v3804
      %3870 = vst.msk [vmem:[#allocation3] sm:$0xff] %vm1514, %v3838
      %3871 = vst.msk [vmem:[#allocation3 + $0x8] sm:$0xff] %vm1514, %v3839
      %3872 = vst.msk [vmem:[#allocation3 + $0x10] sm:$0xff] %vm1514, %v3840
      %3873 = vst.msk [vmem:[#allocation3 + $0x18] sm:$0xff] %vm1514, %v3841
      %3874 = vst.msk [vmem:[#allocation3 + $0x20] sm:$0xff] %vm1514, %v3842
      %3875 = vst.msk [vmem:[#allocation3 + $0x28] sm:$0xff] %vm1514, %v3843
      %3876 = vst.msk [vmem:[#allocation3 + $0x30] sm:$0xff] %vm1514, %v3844
      %3877 = vst.msk [vmem:[#allocation3 + $0x38] sm:$0xff] %vm1514, %v3845
      %3878 = vst.msk [vmem:[#allocation3 + $0x40] sm:$0xff] %vm1514, %v3846
      %3879 = vst.msk [vmem:[#allocation3 + $0x48] sm:$0xff] %vm1514, %v3847
      %3880 = vst.msk [vmem:[#allocation3 + $0x50] sm:$0xff] %vm1514, %v3848
      %3881 = vst.msk [vmem:[#allocation3 + $0x58] sm:$0xff] %vm1514, %v3849
      %3882 = vst.msk [vmem:[#allocation3 + $0x60] sm:$0xff] %vm1514, %v3850
      %3883 = vst.msk [vmem:[#allocation3 + $0x68] sm:$0xff] %vm1514, %v3851
      %3884 = vst.msk [vmem:[#allocation3 + $0x70] sm:$0xff] %vm1514, %v3852
      %3885 = vst.msk [vmem:[#allocation3 + $0x78] sm:$0xff] %vm1514, %v3853
      %3886 = vst.msk [vmem:[#allocation3 + $0x80] sm:$0xff] %vm1514, %v3854
      %3887 = vst.msk [vmem:[#allocation3 + $0x88] sm:$0xff] %vm1514, %v3855
      %3888 = vst.msk [vmem:[#allocation3 + $0x90] sm:$0xff] %vm1514, %v3856
      %3889 = vst.msk [vmem:[#allocation3 + $0x98] sm:$0xff] %vm1514, %v3857
      %3890 = vst.msk [vmem:[#allocation3 + $0xa0] sm:$0xff] %vm1514, %v3858
      %3891 = vst.msk [vmem:[#allocation3 + $0xa8] sm:$0xff] %vm1514, %v3859
      %3892 = vst.msk [vmem:[#allocation3 + $0xb0] sm:$0xff] %vm1514, %v3860
      %3893 = vst.msk [vmem:[#allocation3 + $0xb8] sm:$0xff] %vm1514, %v3861
      %3894 = vst.msk [vmem:[#allocation3 + $0xc0] sm:$0xff] %vm1514, %v3862
      %3895 = vst.msk [vmem:[#allocation3 + $0xc8] sm:$0xff] %vm1514, %v3863
      %3896 = vst.msk [vmem:[#allocation3 + $0xd0] sm:$0xff] %vm1514, %v3864
      %3897 = vst.msk [vmem:[#allocation3 + $0xd8] sm:$0xff] %vm1514, %v3865
      %3898 = vst.msk [vmem:[#allocation3 + $0xe0] sm:$0xff] %vm1514, %v3866
      %3899 = vst.msk [vmem:[#allocation3 + $0xe8] sm:$0xff] %vm1514, %v3867
      %3900 = vst.msk [vmem:[#allocation3 + $0xf0] sm:$0xff] %vm1514, %v3868
      %3901 = vst.msk [vmem:[#allocation3 + $0xf8] sm:$0xff] %vm1514, %v3869
      %v3902 = vld [vmem:[#allocation2 + $0x10] sm:$0xf]
      %v3903 = vld [vmem:[#allocation2 + $0x14] sm:$0xf]
      %v3904 = vld [vmem:[#allocation2 + $0x18] sm:$0xf]
      %v3905 = vld [vmem:[#allocation2 + $0x1c] sm:$0xf]
      %v3906 = vld [vmem:[#allocation2 + $0x20] sm:$0xf]
      %v3907 = vld [vmem:[#allocation2 + $0x24] sm:$0xf]
      %v3908 = vld [vmem:[#allocation2 + $0x28] sm:$0xf]
      %v3909 = vld [vmem:[#allocation2 + $0x2c] sm:$0xf]
      %v3910 = vld [vmem:[#allocation2 + $0x30] sm:$0xf]
      %v3911 = vld [vmem:[#allocation2 + $0x34] sm:$0xf]
      %v3912 = vld [vmem:[#allocation2 + $0x38] sm:$0xf]
      %v3913 = vld [vmem:[#allocation2 + $0x3c] sm:$0xf]
      %v3914 = vld [vmem:[#allocation2 + $0x40] sm:$0xf]
      %v3915 = vld [vmem:[#allocation2 + $0x44] sm:$0xf]
      %v3916 = vld [vmem:[#allocation2 + $0x48] sm:$0xf]
      %v3917 = vld [vmem:[#allocation2 + $0x4c] sm:$0xf]
      %v3918 = vld [vmem:[#allocation2 + $0x50] sm:$0xf]
      %v3919 = vld [vmem:[#allocation2 + $0x54] sm:$0xf]
      %v3920 = vld [vmem:[#allocation2 + $0x58] sm:$0xf]
      %v3921 = vld [vmem:[#allocation2 + $0x5c] sm:$0xf]
      %v3922 = vld [vmem:[#allocation2 + $0x60] sm:$0xf]
      %v3923 = vld [vmem:[#allocation2 + $0x64] sm:$0xf]
      %v3924 = vld [vmem:[#allocation2 + $0x68] sm:$0xf]
      %v3925 = vld [vmem:[#allocation2 + $0x6c] sm:$0xf]
      %v3926 = vld [vmem:[#allocation2 + $0x70] sm:$0xf]
      %v3927 = vld [vmem:[#allocation2 + $0x74] sm:$0xf]
      %v3928 = vld [vmem:[#allocation2 + $0x78] sm:$0xf]
      %v3929 = vld [vmem:[#allocation2 + $0x7c] sm:$0xf]
      %v3930 = vld [vmem:[#allocation2 + $0x80] sm:$0xf]
      %v3931 = vld [vmem:[#allocation2 + $0x84] sm:$0xf]
      %v3932 = vld [vmem:[#allocation2 + $0x88] sm:$0xf]
      %v3933 = vld [vmem:[#allocation2 + $0x8c] sm:$0xf]
      %v3934 = vld [vmem:[#allocation2 + $0x90] sm:$0x1]
      %v3935 = vunpack.c.l.bf16 %v3902
      %v3936 = vunpack.c.l.bf16 %v3903
      %v3937 = vunpack.c.l.bf16 %v3904
      %v3938 = vunpack.c.l.bf16 %v3905
      %v3939 = vunpack.c.l.bf16 %v3906
      %v3940 = vunpack.c.l.bf16 %v3907
      %v3941 = vunpack.c.l.bf16 %v3908
      %v3942 = vunpack.c.l.bf16 %v3909
      %v3943 = vunpack.c.l.bf16 %v3910
      %v3944 = vunpack.c.l.bf16 %v3911
      %v3945 = vunpack.c.l.bf16 %v3912
      %v3946 = vunpack.c.l.bf16 %v3913
      %v3947 = vunpack.c.l.bf16 %v3914
      %v3948 = vunpack.c.l.bf16 %v3915
      %v3949 = vunpack.c.l.bf16 %v3916
      %v3950 = vunpack.c.l.bf16 %v3917
      %v3951 = vunpack.c.l.bf16 %v3918
      %v3952 = vunpack.c.l.bf16 %v3919
      %v3953 = vunpack.c.l.bf16 %v3920
      %v3954 = vunpack.c.l.bf16 %v3921
      %v3955 = vunpack.c.l.bf16 %v3922
      %v3956 = vunpack.c.l.bf16 %v3923
      %v3957 = vunpack.c.l.bf16 %v3924
      %v3958 = vunpack.c.l.bf16 %v3925
      %v3959 = vunpack.c.l.bf16 %v3926
      %v3960 = vunpack.c.l.bf16 %v3927
      %v3961 = vunpack.c.l.bf16 %v3928
      %v3962 = vunpack.c.l.bf16 %v3929
      %v3963 = vunpack.c.l.bf16 %v3930
      %v3964 = vunpack.c.l.bf16 %v3931
      %v3965 = vunpack.c.l.bf16 %v3932
      %v3966 = vunpack.c.l.bf16 %v3933
      %v3967 = vunpack.c.l.bf16 %v3934
      %v3968 = vmul.f32 %v3935, %v2448
      %v3969 = vmul.f32 %v3936, %v2450
      %v3970 = vmul.f32 %v3937, %v2452
      %v3971 = vmul.f32 %v3938, %v2454
      %v3972 = vmul.f32 %v3939, %v2456
      %v3973 = vmul.f32 %v3940, %v2458
      %v3974 = vmul.f32 %v3941, %v2460
      %v3975 = vmul.f32 %v3942, %v2462
      %v3976 = vmul.f32 %v3943, %v2464
      %v3977 = vmul.f32 %v3944, %v2466
      %v3978 = vmul.f32 %v3945, %v2468
      %v3979 = vmul.f32 %v3946, %v2470
      %v3980 = vmul.f32 %v3947, %v2472
      %v3981 = vmul.f32 %v3948, %v2474
      %v3982 = vmul.f32 %v3949, %v2476
      %v3983 = vmul.f32 %v3950, %v2478
      %v3984 = vmul.f32 %v3951, %v2480
      %v3985 = vmul.f32 %v3952, %v2482
      %v3986 = vmul.f32 %v3953, %v2484
      %v3987 = vmul.f32 %v3954, %v2486
      %v3988 = vmul.f32 %v3955, %v2488
      %v3989 = vmul.f32 %v3956, %v2490
      %v3990 = vmul.f32 %v3957, %v2492
      %v3991 = vmul.f32 %v3958, %v2494
      %v3992 = vmul.f32 %v3959, %v2496
      %v3993 = vmul.f32 %v3960, %v2498
      %v3994 = vmul.f32 %v3961, %v2500
      %v3995 = vmul.f32 %v3962, %v2502
      %v3996 = vmul.f32 %v3963, %v2504
      %v3997 = vmul.f32 %v3964, %v2506
      %v3998 = vmul.f32 %v3965, %v2508
      %v3999 = vmul.f32 %v3966, %v2510
      %v4000 = vmul.f32 %v3967, %v2509
      %v4001 = vpack.c.bf16 %v3969, %v3968
      %v4002 = vpack.c.bf16 %v3971, %v3970
      %v4003 = vpack.c.bf16 %v3973, %v3972
      %v4004 = vpack.c.bf16 %v3975, %v3974
      %v4005 = vpack.c.bf16 %v3977, %v3976
      %v4006 = vpack.c.bf16 %v3979, %v3978
      %v4007 = vpack.c.bf16 %v3981, %v3980
      %v4008 = vpack.c.bf16 %v3983, %v3982
      %v4009 = vpack.c.bf16 %v3985, %v3984
      %v4010 = vpack.c.bf16 %v3987, %v3986
      %v4011 = vpack.c.bf16 %v3989, %v3988
      %v4012 = vpack.c.bf16 %v3991, %v3990
      %v4013 = vpack.c.bf16 %v3993, %v3992
      %v4014 = vpack.c.bf16 %v3995, %v3994
      %v4015 = vpack.c.bf16 %v3997, %v3996
      %v4016 = vpack.c.bf16 %v3999, %v3998
      %v4017 = vpack.c.bf16 %v4000, %v4000
      %v4018 = vld [vmem:[%s3 + $0xa0] sm:$0xf]
      %v4019 = vld [vmem:[%s3 + $0xa4] sm:$0xf]
      %v4020 = vld [vmem:[%s3 + $0xa8] sm:$0xf]
      %v4021 = vld [vmem:[%s3 + $0xac] sm:$0xf]
      %v4022 = vld [vmem:[%s3 + $0xb0] sm:$0xf]
      %v4023 = vld [vmem:[%s3 + $0xb4] sm:$0xf]
      %v4024 = vld [vmem:[%s3 + $0xb8] sm:$0xf]
      %v4025 = vld [vmem:[%s3 + $0xbc] sm:$0xf]
      %v4027 = vshrl.u32 %v4001, 16
      %v4029 = vshll.u32 %v4001, 16
      %v4031 = vrot.slane %v4029, 1
      %v4032 = vor.u32 %v4027, %v4031
      %v4034 = vshll.u32 %v4002, 16
      %v4036 = vrot.slane %v4034, 1
      %v4037 = vsel %vm2602, %v4032, %v4036
      %v4038 = vshrl.u32 %v4002, 16
      %v4040 = vor.u32 %v4038, %v4036
      %v4042 = vshll.u32 %v4003, 16
      %v4044 = vrot.slane %v4042, 1
      %v4045 = vsel %vm2602, %v4040, %v4044
      %v4046 = vshrl.u32 %v4003, 16
      %v4048 = vor.u32 %v4046, %v4044
      %v4050 = vshll.u32 %v4004, 16
      %v4052 = vrot.slane %v4050, 1
      %v4053 = vsel %vm2602, %v4048, %v4052
      %v4054 = vshrl.u32 %v4004, 16
      %v4056 = vor.u32 %v4054, %v4052
      %v4058 = vshll.u32 %v4005, 16
      %v4060 = vrot.slane %v4058, 1
      %v4061 = vsel %vm2602, %v4056, %v4060
      %v4062 = vshrl.u32 %v4005, 16
      %v4064 = vor.u32 %v4062, %v4060
      %v4066 = vshll.u32 %v4006, 16
      %v4068 = vrot.slane %v4066, 1
      %v4069 = vsel %vm2602, %v4064, %v4068
      %v4070 = vshrl.u32 %v4006, 16
      %v4072 = vor.u32 %v4070, %v4068
      %v4074 = vshll.u32 %v4007, 16
      %v4076 = vrot.slane %v4074, 1
      %v4077 = vsel %vm2602, %v4072, %v4076
      %v4078 = vshrl.u32 %v4007, 16
      %v4080 = vor.u32 %v4078, %v4076
      %v4082 = vshll.u32 %v4008, 16
      %v4084 = vrot.slane %v4082, 1
      %v4085 = vsel %vm2602, %v4080, %v4084
      %v4086 = vshrl.u32 %v4008, 16
      %v4088 = vor.u32 %v4086, %v4084
      %v4090 = vshll.u32 %v4009, 16
      %v4092 = vrot.slane %v4090, 1
      %v4093 = vsel %vm2602, %v4088, %v4092
      %v4094 = vshrl.u32 %v4009, 16
      %v4096 = vor.u32 %v4094, %v4092
      %v4098 = vshll.u32 %v4010, 16
      %v4100 = vrot.slane %v4098, 1
      %v4101 = vsel %vm2602, %v4096, %v4100
      %v4102 = vshrl.u32 %v4010, 16
      %v4104 = vor.u32 %v4102, %v4100
      %v4106 = vshll.u32 %v4011, 16
      %v4108 = vrot.slane %v4106, 1
      %v4109 = vsel %vm2602, %v4104, %v4108
      %v4110 = vshrl.u32 %v4011, 16
      %v4112 = vor.u32 %v4110, %v4108
      %v4114 = vshll.u32 %v4012, 16
      %v4116 = vrot.slane %v4114, 1
      %v4117 = vsel %vm2602, %v4112, %v4116
      %v4118 = vshrl.u32 %v4012, 16
      %v4120 = vor.u32 %v4118, %v4116
      %v4122 = vshll.u32 %v4013, 16
      %v4124 = vrot.slane %v4122, 1
      %v4125 = vsel %vm2602, %v4120, %v4124
      %v4126 = vshrl.u32 %v4013, 16
      %v4128 = vor.u32 %v4126, %v4124
      %v4130 = vshll.u32 %v4014, 16
      %v4132 = vrot.slane %v4130, 1
      %v4133 = vsel %vm2602, %v4128, %v4132
      %v4134 = vshrl.u32 %v4014, 16
      %v4136 = vor.u32 %v4134, %v4132
      %v4138 = vshll.u32 %v4015, 16
      %v4140 = vrot.slane %v4138, 1
      %v4141 = vsel %vm2602, %v4136, %v4140
      %v4142 = vshrl.u32 %v4015, 16
      %v4144 = vor.u32 %v4142, %v4140
      %v4146 = vshll.u32 %v4016, 16
      %v4148 = vrot.slane %v4146, 1
      %v4149 = vsel %vm2602, %v4144, %v4148
      %v4150 = vshrl.u32 %v4016, 16
      %v4152 = vor.u32 %v4150, %v4148
      %v4154 = vshll.u32 %v4017, 16
      %v4156 = vrot.slane %v4154, 1
      %v4157 = vsel %vm2602, %v4152, %v4156
      %v4166 = vunpack.c.l.b16 %v4018
      %v4167 = vunpack.c.l.b16 %v4019
      %v4168 = vunpack.c.l.b16 %v4020
      %v4169 = vunpack.c.l.b16 %v4021
      %v4170 = vunpack.c.l.b16 %v4022
      %v4171 = vunpack.c.l.b16 %v4023
      %v4172 = vunpack.c.l.b16 %v4024
      %v4173 = vunpack.c.l.b16 %v4025
      %v4174 = vpack.c.b16 %v4167, %v4166
      %v4175 = vpack.c.b16 %v4169, %v4168
      %v4176 = vpack.c.b16 %v4171, %v4170
      %v4177 = vpack.c.b16 %v4173, %v4172
      %v4183 = vsel %vm1514, %v4037, 0
      %v4186 = vsel %vm1514, %v4045, 0
      %v4189 = vsel %vm1514, %v4053, 0
      %v4192 = vsel %vm1514, %v4061, 0
      %v4195 = vsel %vm1514, %v4069, 0
      %v4198 = vsel %vm1514, %v4077, 0
      %v4201 = vsel %vm1514, %v4085, 0
      %v4204 = vsel %vm1514, %v4093, 0
      %v4207 = vsel %vm1514, %v4101, 0
      %v4210 = vsel %vm1514, %v4109, 0
      %v4213 = vsel %vm1514, %v4117, 0
      %v4216 = vsel %vm1514, %v4125, 0
      %v4219 = vsel %vm1514, %v4133, 0
      %v4222 = vsel %vm1514, %v4141, 0
      %v4225 = vsel %vm1514, %v4149, 0
      %v4228 = vsel %vm1514, %v4157, 0
      %4230 = vmatpush.bf16.msra.mxu0 0
      %4231 = vmatpush.bf16.msra.mxu0 0
      %4232 = vmatpush.bf16.msra.mxu0 0
      %4233 = vmatpush.bf16.msra.mxu0 0
      %4234 = vmatpush.bf16.msra.mxu0 %v4177
      %4235 = vmatpush.bf16.msra.mxu0 %v4176
      %4236 = vmatpush.bf16.msra.mxu0 %v4175
      %4237 = vmatpush.bf16.msra.mxu0 %v4174
      %4238 = vmatmul.bf16.gmra.mxu0 %v4183
      %v4239 = vpop.f32.mrf.mxu0
      %v4240 = vadd.f32 0.0, %v4239
      %v4241 = vpop.f32.mrf.mxu0
      %v4242 = vadd.f32 0.0, %v4241
      %4243 = vmatmul.bf16.gmra.mxu0 %v4186
      %v4244 = vpop.f32.mrf.mxu0
      %v4245 = vadd.f32 0.0, %v4244
      %v4246 = vpop.f32.mrf.mxu0
      %v4247 = vadd.f32 0.0, %v4246
      %4248 = vmatmul.bf16.gmra.mxu0 %v4189
      %v4249 = vpop.f32.mrf.mxu0
      %v4250 = vadd.f32 0.0, %v4249
      %v4251 = vpop.f32.mrf.mxu0
      %v4252 = vadd.f32 0.0, %v4251
      %4253 = vmatmul.bf16.gmra.mxu0 %v4192
      %v4254 = vpop.f32.mrf.mxu0
      %v4255 = vadd.f32 0.0, %v4254
      %v4256 = vpop.f32.mrf.mxu0
      %v4257 = vadd.f32 0.0, %v4256
      %4258 = vmatmul.bf16.gmra.mxu0 %v4195
      %v4259 = vpop.f32.mrf.mxu0
      %v4260 = vadd.f32 0.0, %v4259
      %v4261 = vpop.f32.mrf.mxu0
      %v4262 = vadd.f32 0.0, %v4261
      %4263 = vmatmul.bf16.gmra.mxu0 %v4198
      %v4264 = vpop.f32.mrf.mxu0
      %v4265 = vadd.f32 0.0, %v4264
      %v4266 = vpop.f32.mrf.mxu0
      %v4267 = vadd.f32 0.0, %v4266
      %4268 = vmatmul.bf16.gmra.mxu0 %v4201
      %v4269 = vpop.f32.mrf.mxu0
      %v4270 = vadd.f32 0.0, %v4269
      %v4271 = vpop.f32.mrf.mxu0
      %v4272 = vadd.f32 0.0, %v4271
      %4273 = vmatmul.bf16.gmra.mxu0 %v4204
      %v4274 = vpop.f32.mrf.mxu0
      %v4275 = vadd.f32 0.0, %v4274
      %v4276 = vpop.f32.mrf.mxu0
      %v4277 = vadd.f32 0.0, %v4276
      %4278 = vmatmul.bf16.gmra.mxu0 %v4207
      %v4279 = vpop.f32.mrf.mxu0
      %v4280 = vadd.f32 0.0, %v4279
      %v4281 = vpop.f32.mrf.mxu0
      %v4282 = vadd.f32 0.0, %v4281
      %4283 = vmatmul.bf16.gmra.mxu0 %v4210
      %v4284 = vpop.f32.mrf.mxu0
      %v4285 = vadd.f32 0.0, %v4284
      %v4286 = vpop.f32.mrf.mxu0
      %v4287 = vadd.f32 0.0, %v4286
      %4288 = vmatmul.bf16.gmra.mxu0 %v4213
      %v4289 = vpop.f32.mrf.mxu0
      %v4290 = vadd.f32 0.0, %v4289
      %v4291 = vpop.f32.mrf.mxu0
      %v4292 = vadd.f32 0.0, %v4291
      %4293 = vmatmul.bf16.gmra.mxu0 %v4216
      %v4294 = vpop.f32.mrf.mxu0
      %v4295 = vadd.f32 0.0, %v4294
      %v4296 = vpop.f32.mrf.mxu0
      %v4297 = vadd.f32 0.0, %v4296
      %4298 = vmatmul.bf16.gmra.mxu0 %v4219
      %v4299 = vpop.f32.mrf.mxu0
      %v4300 = vadd.f32 0.0, %v4299
      %v4301 = vpop.f32.mrf.mxu0
      %v4302 = vadd.f32 0.0, %v4301
      %4303 = vmatmul.bf16.gmra.mxu0 %v4222
      %v4304 = vpop.f32.mrf.mxu0
      %v4305 = vadd.f32 0.0, %v4304
      %v4306 = vpop.f32.mrf.mxu0
      %v4307 = vadd.f32 0.0, %v4306
      %4308 = vmatmul.bf16.gmra.mxu0 %v4225
      %v4309 = vpop.f32.mrf.mxu0
      %v4310 = vadd.f32 0.0, %v4309
      %v4311 = vpop.f32.mrf.mxu0
      %v4312 = vadd.f32 0.0, %v4311
      %4313 = vmatmul.bf16.gmra.mxu0 %v4228
      %v4314 = vpop.f32.mrf.mxu0
      %v4315 = vadd.f32 0.0, %v4314
      %v4316 = vpop.f32.mrf.mxu0
      %v4317 = vadd.f32 0.0, %v4316
      %4318 = vdwg.mxu0
      %v4319 = vld [vmem:[#allocation3] sm:$0xff]
      %v4320 = vld [vmem:[#allocation3 + $0x8] sm:$0xff]
      %v4321 = vld [vmem:[#allocation3 + $0x10] sm:$0xff]
      %v4322 = vld [vmem:[#allocation3 + $0x18] sm:$0xff]
      %v4323 = vld [vmem:[#allocation3 + $0x20] sm:$0xff]
      %v4324 = vld [vmem:[#allocation3 + $0x28] sm:$0xff]
      %v4325 = vld [vmem:[#allocation3 + $0x30] sm:$0xff]
      %v4326 = vld [vmem:[#allocation3 + $0x38] sm:$0xff]
      %v4327 = vld [vmem:[#allocation3 + $0x40] sm:$0xff]
      %v4328 = vld [vmem:[#allocation3 + $0x48] sm:$0xff]
      %v4329 = vld [vmem:[#allocation3 + $0x50] sm:$0xff]
      %v4330 = vld [vmem:[#allocation3 + $0x58] sm:$0xff]
      %v4331 = vld [vmem:[#allocation3 + $0x60] sm:$0xff]
      %v4332 = vld [vmem:[#allocation3 + $0x68] sm:$0xff]
      %v4333 = vld [vmem:[#allocation3 + $0x70] sm:$0xff]
      %v4334 = vld [vmem:[#allocation3 + $0x78] sm:$0xff]
      %v4335 = vld [vmem:[#allocation3 + $0x80] sm:$0xff]
      %v4336 = vld [vmem:[#allocation3 + $0x88] sm:$0xff]
      %v4337 = vld [vmem:[#allocation3 + $0x90] sm:$0xff]
      %v4338 = vld [vmem:[#allocation3 + $0x98] sm:$0xff]
      %v4339 = vld [vmem:[#allocation3 + $0xa0] sm:$0xff]
      %v4340 = vld [vmem:[#allocation3 + $0xa8] sm:$0xff]
      %v4341 = vld [vmem:[#allocation3 + $0xb0] sm:$0xff]
      %v4342 = vld [vmem:[#allocation3 + $0xb8] sm:$0xff]
      %v4343 = vld [vmem:[#allocation3 + $0xc0] sm:$0xff]
      %v4344 = vld [vmem:[#allocation3 + $0xc8] sm:$0xff]
      %v4345 = vld [vmem:[#allocation3 + $0xd0] sm:$0xff]
      %v4346 = vld [vmem:[#allocation3 + $0xd8] sm:$0xff]
      %v4347 = vld [vmem:[#allocation3 + $0xe0] sm:$0xff]
      %v4348 = vld [vmem:[#allocation3 + $0xe8] sm:$0xff]
      %v4349 = vld [vmem:[#allocation3 + $0xf0] sm:$0xff]
      %v4350 = vld [vmem:[#allocation3 + $0xf8] sm:$0xff]
      %v4351 = vadd.f32 %v4319, %v4240
      %v4352 = vadd.f32 %v4320, %v4242
      %v4353 = vadd.f32 %v4321, %v4245
      %v4354 = vadd.f32 %v4322, %v4247
      %v4355 = vadd.f32 %v4323, %v4250
      %v4356 = vadd.f32 %v4324, %v4252
      %v4357 = vadd.f32 %v4325, %v4255
      %v4358 = vadd.f32 %v4326, %v4257
      %v4359 = vadd.f32 %v4327, %v4260
      %v4360 = vadd.f32 %v4328, %v4262
      %v4361 = vadd.f32 %v4329, %v4265
      %v4362 = vadd.f32 %v4330, %v4267
      %v4363 = vadd.f32 %v4331, %v4270
      %v4364 = vadd.f32 %v4332, %v4272
      %v4365 = vadd.f32 %v4333, %v4275
      %v4366 = vadd.f32 %v4334, %v4277
      %v4367 = vadd.f32 %v4335, %v4280
      %v4368 = vadd.f32 %v4336, %v4282
      %v4369 = vadd.f32 %v4337, %v4285
      %v4370 = vadd.f32 %v4338, %v4287
      %v4371 = vadd.f32 %v4339, %v4290
      %v4372 = vadd.f32 %v4340, %v4292
      %v4373 = vadd.f32 %v4341, %v4295
      %v4374 = vadd.f32 %v4342, %v4297
      %v4375 = vadd.f32 %v4343, %v4300
      %v4376 = vadd.f32 %v4344, %v4302
      %v4377 = vadd.f32 %v4345, %v4305
      %v4378 = vadd.f32 %v4346, %v4307
      %v4379 = vadd.f32 %v4347, %v4310
      %v4380 = vadd.f32 %v4348, %v4312
      %v4381 = vadd.f32 %v4349, %v4315
      %v4382 = vadd.f32 %v4350, %v4317
      %4383 = vst.msk [vmem:[#allocation3] sm:$0xff] %vm1514, %v4351
      %4384 = vst.msk [vmem:[#allocation3 + $0x8] sm:$0xff] %vm1514, %v4352
      %4385 = vst.msk [vmem:[#allocation3 + $0x10] sm:$0xff] %vm1514, %v4353
      %4386 = vst.msk [vmem:[#allocation3 + $0x18] sm:$0xff] %vm1514, %v4354
      %4387 = vst.msk [vmem:[#allocation3 + $0x20] sm:$0xff] %vm1514, %v4355
      %4388 = vst.msk [vmem:[#allocation3 + $0x28] sm:$0xff] %vm1514, %v4356
      %4389 = vst.msk [vmem:[#allocation3 + $0x30] sm:$0xff] %vm1514, %v4357
      %4390 = vst.msk [vmem:[#allocation3 + $0x38] sm:$0xff] %vm1514, %v4358
      %4391 = vst.msk [vmem:[#allocation3 + $0x40] sm:$0xff] %vm1514, %v4359
      %4392 = vst.msk [vmem:[#allocation3 + $0x48] sm:$0xff] %vm1514, %v4360
      %4393 = vst.msk [vmem:[#allocation3 + $0x50] sm:$0xff] %vm1514, %v4361
      %4394 = vst.msk [vmem:[#allocation3 + $0x58] sm:$0xff] %vm1514, %v4362
      %4395 = vst.msk [vmem:[#allocation3 + $0x60] sm:$0xff] %vm1514, %v4363
      %4396 = vst.msk [vmem:[#allocation3 + $0x68] sm:$0xff] %vm1514, %v4364
      %4397 = vst.msk [vmem:[#allocation3 + $0x70] sm:$0xff] %vm1514, %v4365
      %4398 = vst.msk [vmem:[#allocation3 + $0x78] sm:$0xff] %vm1514, %v4366
      %4399 = vst.msk [vmem:[#allocation3 + $0x80] sm:$0xff] %vm1514, %v4367
      %4400 = vst.msk [vmem:[#allocation3 + $0x88] sm:$0xff] %vm1514, %v4368
      %4401 = vst.msk [vmem:[#allocation3 + $0x90] sm:$0xff] %vm1514, %v4369
      %4402 = vst.msk [vmem:[#allocation3 + $0x98] sm:$0xff] %vm1514, %v4370
      %4403 = vst.msk [vmem:[#allocation3 + $0xa0] sm:$0xff] %vm1514, %v4371
      %4404 = vst.msk [vmem:[#allocation3 + $0xa8] sm:$0xff] %vm1514, %v4372
      %4405 = vst.msk [vmem:[#allocation3 + $0xb0] sm:$0xff] %vm1514, %v4373
      %4406 = vst.msk [vmem:[#allocation3 + $0xb8] sm:$0xff] %vm1514, %v4374
      %4407 = vst.msk [vmem:[#allocation3 + $0xc0] sm:$0xff] %vm1514, %v4375
      %4408 = vst.msk [vmem:[#allocation3 + $0xc8] sm:$0xff] %vm1514, %v4376
      %4409 = vst.msk [vmem:[#allocation3 + $0xd0] sm:$0xff] %vm1514, %v4377
      %4410 = vst.msk [vmem:[#allocation3 + $0xd8] sm:$0xff] %vm1514, %v4378
      %4411 = vst.msk [vmem:[#allocation3 + $0xe0] sm:$0xff] %vm1514, %v4379
      %4412 = vst.msk [vmem:[#allocation3 + $0xe8] sm:$0xff] %vm1514, %v4380
      %4413 = vst.msk [vmem:[#allocation3 + $0xf0] sm:$0xff] %vm1514, %v4381
      %4414 = vst.msk [vmem:[#allocation3 + $0xf8] sm:$0xff] %vm1514, %v4382
      %v4415 = vld [vmem:[#allocation2 + $0x14] sm:$0x8]
      %v4416 = vld [vmem:[#allocation2 + $0x18] sm:$0xf]
      %v4417 = vld [vmem:[#allocation2 + $0x1c] sm:$0xf]
      %v4418 = vld [vmem:[#allocation2 + $0x20] sm:$0xf]
      %v4419 = vld [vmem:[#allocation2 + $0x24] sm:$0xf]
      %v4420 = vld [vmem:[#allocation2 + $0x28] sm:$0xf]
      %v4421 = vld [vmem:[#allocation2 + $0x2c] sm:$0xf]
      %v4422 = vld [vmem:[#allocation2 + $0x30] sm:$0xf]
      %v4423 = vld [vmem:[#allocation2 + $0x34] sm:$0xf]
      %v4424 = vld [vmem:[#allocation2 + $0x38] sm:$0xf]
      %v4425 = vld [vmem:[#allocation2 + $0x3c] sm:$0xf]
      %v4426 = vld [vmem:[#allocation2 + $0x40] sm:$0xf]
      %v4427 = vld [vmem:[#allocation2 + $0x44] sm:$0xf]
      %v4428 = vld [vmem:[#allocation2 + $0x48] sm:$0xf]
      %v4429 = vld [vmem:[#allocation2 + $0x4c] sm:$0xf]
      %v4430 = vld [vmem:[#allocation2 + $0x50] sm:$0xf]
      %v4431 = vld [vmem:[#allocation2 + $0x54] sm:$0xf]
      %v4432 = vld [vmem:[#allocation2 + $0x58] sm:$0xf]
      %v4433 = vld [vmem:[#allocation2 + $0x5c] sm:$0xf]
      %v4434 = vld [vmem:[#allocation2 + $0x60] sm:$0xf]
      %v4435 = vld [vmem:[#allocation2 + $0x64] sm:$0xf]
      %v4436 = vld [vmem:[#allocation2 + $0x68] sm:$0xf]
      %v4437 = vld [vmem:[#allocation2 + $0x6c] sm:$0xf]
      %v4438 = vld [vmem:[#allocation2 + $0x70] sm:$0xf]
      %v4439 = vld [vmem:[#allocation2 + $0x74] sm:$0xf]
      %v4440 = vld [vmem:[#allocation2 + $0x78] sm:$0xf]
      %v4441 = vld [vmem:[#allocation2 + $0x7c] sm:$0xf]
      %v4442 = vld [vmem:[#allocation2 + $0x80] sm:$0xf]
      %v4443 = vld [vmem:[#allocation2 + $0x84] sm:$0xf]
      %v4444 = vld [vmem:[#allocation2 + $0x88] sm:$0xf]
      %v4445 = vld [vmem:[#allocation2 + $0x8c] sm:$0xf]
      %v4446 = vld [vmem:[#allocation2 + $0x90] sm:$0xf]
      %v4447 = vld [vmem:[#allocation2 + $0x94] sm:$0xf]
      %v4448 = vunpack.c.l.bf16 %v4415
      %v4449 = vunpack.c.l.bf16 %v4416
      %v4450 = vunpack.c.l.bf16 %v4417
      %v4451 = vunpack.c.l.bf16 %v4418
      %v4452 = vunpack.c.l.bf16 %v4419
      %v4453 = vunpack.c.l.bf16 %v4420
      %v4454 = vunpack.c.l.bf16 %v4421
      %v4455 = vunpack.c.l.bf16 %v4422
      %v4456 = vunpack.c.l.bf16 %v4423
      %v4457 = vunpack.c.l.bf16 %v4424
      %v4458 = vunpack.c.l.bf16 %v4425
      %v4459 = vunpack.c.l.bf16 %v4426
      %v4460 = vunpack.c.l.bf16 %v4427
      %v4461 = vunpack.c.l.bf16 %v4428
      %v4462 = vunpack.c.l.bf16 %v4429
      %v4463 = vunpack.c.l.bf16 %v4430
      %v4464 = vunpack.c.l.bf16 %v4431
      %v4465 = vunpack.c.l.bf16 %v4432
      %v4466 = vunpack.c.l.bf16 %v4433
      %v4467 = vunpack.c.l.bf16 %v4434
      %v4468 = vunpack.c.l.bf16 %v4435
      %v4469 = vunpack.c.l.bf16 %v4436
      %v4470 = vunpack.c.l.bf16 %v4437
      %v4471 = vunpack.c.l.bf16 %v4438
      %v4472 = vunpack.c.l.bf16 %v4439
      %v4473 = vunpack.c.l.bf16 %v4440
      %v4474 = vunpack.c.l.bf16 %v4441
      %v4475 = vunpack.c.l.bf16 %v4442
      %v4476 = vunpack.c.l.bf16 %v4443
      %v4477 = vunpack.c.l.bf16 %v4444
      %v4478 = vunpack.c.l.bf16 %v4445
      %v4479 = vunpack.c.l.bf16 %v4446
      %v4480 = vunpack.c.l.bf16 %v4447
      %v4481 = vmul.f32 %v4448, %v1183
      %v4482 = vmul.f32 %v4449, %v1185
      %v4483 = vmul.f32 %v4450, %v1187
      %v4484 = vmul.f32 %v4451, %v1189
      %v4485 = vmul.f32 %v4452, %v1191
      %v4486 = vmul.f32 %v4453, %v1193
      %v4487 = vmul.f32 %v4454, %v1195
      %v4488 = vmul.f32 %v4455, %v1197
      %v4489 = vmul.f32 %v4456, %v1199
      %v4490 = vmul.f32 %v4457, %v1201
      %v4491 = vmul.f32 %v4458, %v1203
      %v4492 = vmul.f32 %v4459, %v1205
      %v4493 = vmul.f32 %v4460, %v1207
      %v4494 = vmul.f32 %v4461, %v1209
      %v4495 = vmul.f32 %v4462, %v1211
      %v4496 = vmul.f32 %v4463, %v1213
      %v4497 = vmul.f32 %v4464, %v1215
      %v4498 = vmul.f32 %v4465, %v1217
      %v4499 = vmul.f32 %v4466, %v1219
      %v4500 = vmul.f32 %v4467, %v1221
      %v4501 = vmul.f32 %v4468, %v1223
      %v4502 = vmul.f32 %v4469, %v1225
      %v4503 = vmul.f32 %v4470, %v1227
      %v4504 = vmul.f32 %v4471, %v1229
      %v4505 = vmul.f32 %v4472, %v1231
      %v4506 = vmul.f32 %v4473, %v1233
      %v4507 = vmul.f32 %v4474, %v1235
      %v4508 = vmul.f32 %v4475, %v1237
      %v4509 = vmul.f32 %v4476, %v1239
      %v4510 = vmul.f32 %v4477, %v1241
      %v4511 = vmul.f32 %v4478, %v1243
      %v4512 = vmul.f32 %v4479, %v1245
      %v4513 = vmul.f32 %v4480, %v1244
      %v4514 = vpack.c.bf16 %v4482, %v4481
      %v4515 = vpack.c.bf16 %v4484, %v4483
      %v4516 = vpack.c.bf16 %v4486, %v4485
      %v4517 = vpack.c.bf16 %v4488, %v4487
      %v4518 = vpack.c.bf16 %v4490, %v4489
      %v4519 = vpack.c.bf16 %v4492, %v4491
      %v4520 = vpack.c.bf16 %v4494, %v4493
      %v4521 = vpack.c.bf16 %v4496, %v4495
      %v4522 = vpack.c.bf16 %v4498, %v4497
      %v4523 = vpack.c.bf16 %v4500, %v4499
      %v4524 = vpack.c.bf16 %v4502, %v4501
      %v4525 = vpack.c.bf16 %v4504, %v4503
      %v4526 = vpack.c.bf16 %v4506, %v4505
      %v4527 = vpack.c.bf16 %v4508, %v4507
      %v4528 = vpack.c.bf16 %v4510, %v4509
      %v4529 = vpack.c.bf16 %v4512, %v4511
      %v4530 = vpack.c.bf16 %v4513, %v4513
      %v4531 = vld [vmem:[%s3 + $0xc0] sm:$0xf]
      %v4532 = vld [vmem:[%s3 + $0xc4] sm:$0xf]
      %v4533 = vld [vmem:[%s3 + $0xc8] sm:$0xf]
      %v4534 = vld [vmem:[%s3 + $0xcc] sm:$0xf]
      %v4535 = vld [vmem:[%s3 + $0xd0] sm:$0xf]
      %v4536 = vld [vmem:[%s3 + $0xd4] sm:$0xf]
      %v4537 = vld [vmem:[%s3 + $0xd8] sm:$0xf]
      %v4538 = vld [vmem:[%s3 + $0xdc] sm:$0xf]
      %v4540 = vshrl.u32 %v4514, 16
      %v4542 = vrot.slane %v4540, 3
      %v4543 = vshll.u32 %v4514, 16
      %v4545 = vrot.slane %v4543, 4
      %v4546 = vor.u32 %v4542, %v4545
      %v4548 = vshrl.u32 %v4515, 16
      %v4550 = vrot.slane %v4548, 3
      %v4551 = vshll.u32 %v4515, 16
      %v4553 = vrot.slane %v4551, 4
      %v4554 = vor.u32 %v4550, %v4553
      %v4555 = vsel %vm1337, %v4546, %v4554
      %v4557 = vshrl.u32 %v4516, 16
      %v4559 = vrot.slane %v4557, 3
      %v4560 = vshll.u32 %v4516, 16
      %v4562 = vrot.slane %v4560, 4
      %v4563 = vor.u32 %v4559, %v4562
      %v4564 = vsel %vm1337, %v4554, %v4563
      %v4566 = vshrl.u32 %v4517, 16
      %v4568 = vrot.slane %v4566, 3
      %v4569 = vshll.u32 %v4517, 16
      %v4571 = vrot.slane %v4569, 4
      %v4572 = vor.u32 %v4568, %v4571
      %v4573 = vsel %vm1337, %v4563, %v4572
      %v4575 = vshrl.u32 %v4518, 16
      %v4577 = vrot.slane %v4575, 3
      %v4578 = vshll.u32 %v4518, 16
      %v4580 = vrot.slane %v4578, 4
      %v4581 = vor.u32 %v4577, %v4580
      %v4582 = vsel %vm1337, %v4572, %v4581
      %v4584 = vshrl.u32 %v4519, 16
      %v4586 = vrot.slane %v4584, 3
      %v4587 = vshll.u32 %v4519, 16
      %v4589 = vrot.slane %v4587, 4
      %v4590 = vor.u32 %v4586, %v4589
      %v4591 = vsel %vm1337, %v4581, %v4590
      %v4593 = vshrl.u32 %v4520, 16
      %v4595 = vrot.slane %v4593, 3
      %v4596 = vshll.u32 %v4520, 16
      %v4598 = vrot.slane %v4596, 4
      %v4599 = vor.u32 %v4595, %v4598
      %v4600 = vsel %vm1337, %v4590, %v4599
      %v4602 = vshrl.u32 %v4521, 16
      %v4604 = vrot.slane %v4602, 3
      %v4605 = vshll.u32 %v4521, 16
      %v4607 = vrot.slane %v4605, 4
      %v4608 = vor.u32 %v4604, %v4607
      %v4609 = vsel %vm1337, %v4599, %v4608
      %v4611 = vshrl.u32 %v4522, 16
      %v4613 = vrot.slane %v4611, 3
      %v4614 = vshll.u32 %v4522, 16
      %v4616 = vrot.slane %v4614, 4
      %v4617 = vor.u32 %v4613, %v4616
      %v4618 = vsel %vm1337, %v4608, %v4617
      %v4620 = vshrl.u32 %v4523, 16
      %v4622 = vrot.slane %v4620, 3
      %v4623 = vshll.u32 %v4523, 16
      %v4625 = vrot.slane %v4623, 4
      %v4626 = vor.u32 %v4622, %v4625
      %v4627 = vsel %vm1337, %v4617, %v4626
      %v4629 = vshrl.u32 %v4524, 16
      %v4631 = vrot.slane %v4629, 3
      %v4632 = vshll.u32 %v4524, 16
      %v4634 = vrot.slane %v4632, 4
      %v4635 = vor.u32 %v4631, %v4634
      %v4636 = vsel %vm1337, %v4626, %v4635
      %v4638 = vshrl.u32 %v4525, 16
      %v4640 = vrot.slane %v4638, 3
      %v4641 = vshll.u32 %v4525, 16
      %v4643 = vrot.slane %v4641, 4
      %v4644 = vor.u32 %v4640, %v4643
      %v4645 = vsel %vm1337, %v4635, %v4644
      %v4647 = vshrl.u32 %v4526, 16
      %v4649 = vrot.slane %v4647, 3
      %v4650 = vshll.u32 %v4526, 16
      %v4652 = vrot.slane %v4650, 4
      %v4653 = vor.u32 %v4649, %v4652
      %v4654 = vsel %vm1337, %v4644, %v4653
      %v4656 = vshrl.u32 %v4527, 16
      %v4658 = vrot.slane %v4656, 3
      %v4659 = vshll.u32 %v4527, 16
      %v4661 = vrot.slane %v4659, 4
      %v4662 = vor.u32 %v4658, %v4661
      %v4663 = vsel %vm1337, %v4653, %v4662
      %v4665 = vshrl.u32 %v4528, 16
      %v4667 = vrot.slane %v4665, 3
      %v4668 = vshll.u32 %v4528, 16
      %v4670 = vrot.slane %v4668, 4
      %v4671 = vor.u32 %v4667, %v4670
      %v4672 = vsel %vm1337, %v4662, %v4671
      %v4674 = vshrl.u32 %v4529, 16
      %v4676 = vrot.slane %v4674, 3
      %v4677 = vshll.u32 %v4529, 16
      %v4679 = vrot.slane %v4677, 4
      %v4680 = vor.u32 %v4676, %v4679
      %v4681 = vsel %vm1337, %v4671, %v4680
      %v4683 = vshrl.u32 %v4530, 16
      %v4685 = vrot.slane %v4683, 3
      %v4686 = vshll.u32 %v4530, 16
      %v4688 = vrot.slane %v4686, 4
      %v4689 = vor.u32 %v4685, %v4688
      %v4690 = vsel %vm1337, %v4680, %v4689
      %v4699 = vunpack.c.l.b16 %v4531
      %v4700 = vunpack.c.l.b16 %v4532
      %v4701 = vunpack.c.l.b16 %v4533
      %v4702 = vunpack.c.l.b16 %v4534
      %v4703 = vunpack.c.l.b16 %v4535
      %v4704 = vunpack.c.l.b16 %v4536
      %v4705 = vunpack.c.l.b16 %v4537
      %v4706 = vunpack.c.l.b16 %v4538
      %v4707 = vpack.c.b16 %v4700, %v4699
      %v4708 = vpack.c.b16 %v4702, %v4701
      %v4709 = vpack.c.b16 %v4704, %v4703
      %v4710 = vpack.c.b16 %v4706, %v4705
      %v4716 = vsel %vm1514, %v4555, 0
      %v4719 = vsel %vm1514, %v4564, 0
      %v4722 = vsel %vm1514, %v4573, 0
      %v4725 = vsel %vm1514, %v4582, 0
      %v4728 = vsel %vm1514, %v4591, 0
      %v4731 = vsel %vm1514, %v4600, 0
      %v4734 = vsel %vm1514, %v4609, 0
      %v4737 = vsel %vm1514, %v4618, 0
      %v4740 = vsel %vm1514, %v4627, 0
      %v4743 = vsel %vm1514, %v4636, 0
      %v4746 = vsel %vm1514, %v4645, 0
      %v4749 = vsel %vm1514, %v4654, 0
      %v4752 = vsel %vm1514, %v4663, 0
      %v4755 = vsel %vm1514, %v4672, 0
      %v4758 = vsel %vm1514, %v4681, 0
      %v4761 = vsel %vm1514, %v4690, 0
      %4763 = vmatpush.bf16.msra.mxu0 0
      %4764 = vmatpush.bf16.msra.mxu0 0
      %4765 = vmatpush.bf16.msra.mxu0 0
      %4766 = vmatpush.bf16.msra.mxu0 0
      %4767 = vmatpush.bf16.msra.mxu0 %v4710
      %4768 = vmatpush.bf16.msra.mxu0 %v4709
      %4769 = vmatpush.bf16.msra.mxu0 %v4708
      %4770 = vmatpush.bf16.msra.mxu0 %v4707
      %4771 = vmatmul.bf16.gmra.mxu0 %v4716
      %v4772 = vpop.f32.mrf.mxu0
      %v4773 = vadd.f32 0.0, %v4772
      %v4774 = vpop.f32.mrf.mxu0
      %v4775 = vadd.f32 0.0, %v4774
      %4776 = vmatmul.bf16.gmra.mxu0 %v4719
      %v4777 = vpop.f32.mrf.mxu0
      %v4778 = vadd.f32 0.0, %v4777
      %v4779 = vpop.f32.mrf.mxu0
      %v4780 = vadd.f32 0.0, %v4779
      %4781 = vmatmul.bf16.gmra.mxu0 %v4722
      %v4782 = vpop.f32.mrf.mxu0
      %v4783 = vadd.f32 0.0, %v4782
      %v4784 = vpop.f32.mrf.mxu0
      %v4785 = vadd.f32 0.0, %v4784
      %4786 = vmatmul.bf16.gmra.mxu0 %v4725
      %v4787 = vpop.f32.mrf.mxu0
      %v4788 = vadd.f32 0.0, %v4787
      %v4789 = vpop.f32.mrf.mxu0
      %v4790 = vadd.f32 0.0, %v4789
      %4791 = vmatmul.bf16.gmra.mxu0 %v4728
      %v4792 = vpop.f32.mrf.mxu0
      %v4793 = vadd.f32 0.0, %v4792
      %v4794 = vpop.f32.mrf.mxu0
      %v4795 = vadd.f32 0.0, %v4794
      %4796 = vmatmul.bf16.gmra.mxu0 %v4731
      %v4797 = vpop.f32.mrf.mxu0
      %v4798 = vadd.f32 0.0, %v4797
      %v4799 = vpop.f32.mrf.mxu0
      %v4800 = vadd.f32 0.0, %v4799
      %4801 = vmatmul.bf16.gmra.mxu0 %v4734
      %v4802 = vpop.f32.mrf.mxu0
      %v4803 = vadd.f32 0.0, %v4802
      %v4804 = vpop.f32.mrf.mxu0
      %v4805 = vadd.f32 0.0, %v4804
      %4806 = vmatmul.bf16.gmra.mxu0 %v4737
      %v4807 = vpop.f32.mrf.mxu0
      %v4808 = vadd.f32 0.0, %v4807
      %v4809 = vpop.f32.mrf.mxu0
      %v4810 = vadd.f32 0.0, %v4809
      %4811 = vmatmul.bf16.gmra.mxu0 %v4740
      %v4812 = vpop.f32.mrf.mxu0
      %v4813 = vadd.f32 0.0, %v4812
      %v4814 = vpop.f32.mrf.mxu0
      %v4815 = vadd.f32 0.0, %v4814
      %4816 = vmatmul.bf16.gmra.mxu0 %v4743
      %v4817 = vpop.f32.mrf.mxu0
      %v4818 = vadd.f32 0.0, %v4817
      %v4819 = vpop.f32.mrf.mxu0
      %v4820 = vadd.f32 0.0, %v4819
      %4821 = vmatmul.bf16.gmra.mxu0 %v4746
      %v4822 = vpop.f32.mrf.mxu0
      %v4823 = vadd.f32 0.0, %v4822
      %v4824 = vpop.f32.mrf.mxu0
      %v4825 = vadd.f32 0.0, %v4824
      %4826 = vmatmul.bf16.gmra.mxu0 %v4749
      %v4827 = vpop.f32.mrf.mxu0
      %v4828 = vadd.f32 0.0, %v4827
      %v4829 = vpop.f32.mrf.mxu0
      %v4830 = vadd.f32 0.0, %v4829
      %4831 = vmatmul.bf16.gmra.mxu0 %v4752
      %v4832 = vpop.f32.mrf.mxu0
      %v4833 = vadd.f32 0.0, %v4832
      %v4834 = vpop.f32.mrf.mxu0
      %v4835 = vadd.f32 0.0, %v4834
      %4836 = vmatmul.bf16.gmra.mxu0 %v4755
      %v4837 = vpop.f32.mrf.mxu0
      %v4838 = vadd.f32 0.0, %v4837
      %v4839 = vpop.f32.mrf.mxu0
      %v4840 = vadd.f32 0.0, %v4839
      %4841 = vmatmul.bf16.gmra.mxu0 %v4758
      %v4842 = vpop.f32.mrf.mxu0
      %v4843 = vadd.f32 0.0, %v4842
      %v4844 = vpop.f32.mrf.mxu0
      %v4845 = vadd.f32 0.0, %v4844
      %4846 = vmatmul.bf16.gmra.mxu0 %v4761
      %v4847 = vpop.f32.mrf.mxu0
      %v4848 = vadd.f32 0.0, %v4847
      %v4849 = vpop.f32.mrf.mxu0
      %v4850 = vadd.f32 0.0, %v4849
      %4851 = vdwg.mxu0
      %v4852 = vld [vmem:[#allocation3] sm:$0xff]
      %v4853 = vld [vmem:[#allocation3 + $0x8] sm:$0xff]
      %v4854 = vld [vmem:[#allocation3 + $0x10] sm:$0xff]
      %v4855 = vld [vmem:[#allocation3 + $0x18] sm:$0xff]
      %v4856 = vld [vmem:[#allocation3 + $0x20] sm:$0xff]
      %v4857 = vld [vmem:[#allocation3 + $0x28] sm:$0xff]
      %v4858 = vld [vmem:[#allocation3 + $0x30] sm:$0xff]
      %v4859 = vld [vmem:[#allocation3 + $0x38] sm:$0xff]
      %v4860 = vld [vmem:[#allocation3 + $0x40] sm:$0xff]
      %v4861 = vld [vmem:[#allocation3 + $0x48] sm:$0xff]
      %v4862 = vld [vmem:[#allocation3 + $0x50] sm:$0xff]
      %v4863 = vld [vmem:[#allocation3 + $0x58] sm:$0xff]
      %v4864 = vld [vmem:[#allocation3 + $0x60] sm:$0xff]
      %v4865 = vld [vmem:[#allocation3 + $0x68] sm:$0xff]
      %v4866 = vld [vmem:[#allocation3 + $0x70] sm:$0xff]
      %v4867 = vld [vmem:[#allocation3 + $0x78] sm:$0xff]
      %v4868 = vld [vmem:[#allocation3 + $0x80] sm:$0xff]
      %v4869 = vld [vmem:[#allocation3 + $0x88] sm:$0xff]
      %v4870 = vld [vmem:[#allocation3 + $0x90] sm:$0xff]
      %v4871 = vld [vmem:[#allocation3 + $0x98] sm:$0xff]
      %v4872 = vld [vmem:[#allocation3 + $0xa0] sm:$0xff]
      %v4873 = vld [vmem:[#allocation3 + $0xa8] sm:$0xff]
      %v4874 = vld [vmem:[#allocation3 + $0xb0] sm:$0xff]
      %v4875 = vld [vmem:[#allocation3 + $0xb8] sm:$0xff]
      %v4876 = vld [vmem:[#allocation3 + $0xc0] sm:$0xff]
      %v4877 = vld [vmem:[#allocation3 + $0xc8] sm:$0xff]
      %v4878 = vld [vmem:[#allocation3 + $0xd0] sm:$0xff]
      %v4879 = vld [vmem:[#allocation3 + $0xd8] sm:$0xff]
      %v4880 = vld [vmem:[#allocation3 + $0xe0] sm:$0xff]
      %v4881 = vld [vmem:[#allocation3 + $0xe8] sm:$0xff]
      %v4882 = vld [vmem:[#allocation3 + $0xf0] sm:$0xff]
      %v4883 = vld [vmem:[#allocation3 + $0xf8] sm:$0xff]
      %v4884 = vadd.f32 %v4852, %v4773
      %v4885 = vadd.f32 %v4853, %v4775
      %v4886 = vadd.f32 %v4854, %v4778
      %v4887 = vadd.f32 %v4855, %v4780
      %v4888 = vadd.f32 %v4856, %v4783
      %v4889 = vadd.f32 %v4857, %v4785
      %v4890 = vadd.f32 %v4858, %v4788
      %v4891 = vadd.f32 %v4859, %v4790
      %v4892 = vadd.f32 %v4860, %v4793
      %v4893 = vadd.f32 %v4861, %v4795
      %v4894 = vadd.f32 %v4862, %v4798
      %v4895 = vadd.f32 %v4863, %v4800
      %v4896 = vadd.f32 %v4864, %v4803
      %v4897 = vadd.f32 %v4865, %v4805
      %v4898 = vadd.f32 %v4866, %v4808
      %v4899 = vadd.f32 %v4867, %v4810
      %v4900 = vadd.f32 %v4868, %v4813
      %v4901 = vadd.f32 %v4869, %v4815
      %v4902 = vadd.f32 %v4870, %v4818
      %v4903 = vadd.f32 %v4871, %v4820
      %v4904 = vadd.f32 %v4872, %v4823
      %v4905 = vadd.f32 %v4873, %v4825
      %v4906 = vadd.f32 %v4874, %v4828
      %v4907 = vadd.f32 %v4875, %v4830
      %v4908 = vadd.f32 %v4876, %v4833
      %v4909 = vadd.f32 %v4877, %v4835
      %v4910 = vadd.f32 %v4878, %v4838
      %v4911 = vadd.f32 %v4879, %v4840
      %v4912 = vadd.f32 %v4880, %v4843
      %v4913 = vadd.f32 %v4881, %v4845
      %v4914 = vadd.f32 %v4882, %v4848
      %v4915 = vadd.f32 %v4883, %v4850
      %4916 = vst.msk [vmem:[#allocation3] sm:$0xff] %vm1514, %v4884
      %4917 = vst.msk [vmem:[#allocation3 + $0x8] sm:$0xff] %vm1514, %v4885
      %4918 = vst.msk [vmem:[#allocation3 + $0x10] sm:$0xff] %vm1514, %v4886
      %4919 = vst.msk [vmem:[#allocation3 + $0x18] sm:$0xff] %vm1514, %v4887
      %4920 = vst.msk [vmem:[#allocation3 + $0x20] sm:$0xff] %vm1514, %v4888
      %4921 = vst.msk [vmem:[#allocation3 + $0x28] sm:$0xff] %vm1514, %v4889
      %4922 = vst.msk [vmem:[#allocation3 + $0x30] sm:$0xff] %vm1514, %v4890
      %4923 = vst.msk [vmem:[#allocation3 + $0x38] sm:$0xff] %vm1514, %v4891
      %4924 = vst.msk [vmem:[#allocation3 + $0x40] sm:$0xff] %vm1514, %v4892
      %4925 = vst.msk [vmem:[#allocation3 + $0x48] sm:$0xff] %vm1514, %v4893
      %4926 = vst.msk [vmem:[#allocation3 + $0x50] sm:$0xff] %vm1514, %v4894
      %4927 = vst.msk [vmem:[#allocation3 + $0x58] sm:$0xff] %vm1514, %v4895
      %4928 = vst.msk [vmem:[#allocation3 + $0x60] sm:$0xff] %vm1514, %v4896
      %4929 = vst.msk [vmem:[#allocation3 + $0x68] sm:$0xff] %vm1514, %v4897
      %4930 = vst.msk [vmem:[#allocation3 + $0x70] sm:$0xff] %vm1514, %v4898
      %4931 = vst.msk [vmem:[#allocation3 + $0x78] sm:$0xff] %vm1514, %v4899
      %4932 = vst.msk [vmem:[#allocation3 + $0x80] sm:$0xff] %vm1514, %v4900
      %4933 = vst.msk [vmem:[#allocation3 + $0x88] sm:$0xff] %vm1514, %v4901
      %4934 = vst.msk [vmem:[#allocation3 + $0x90] sm:$0xff] %vm1514, %v4902
      %4935 = vst.msk [vmem:[#allocation3 + $0x98] sm:$0xff] %vm1514, %v4903
      %4936 = vst.msk [vmem:[#allocation3 + $0xa0] sm:$0xff] %vm1514, %v4904
      %4937 = vst.msk [vmem:[#allocation3 + $0xa8] sm:$0xff] %vm1514, %v4905
      %4938 = vst.msk [vmem:[#allocation3 + $0xb0] sm:$0xff] %vm1514, %v4906
      %4939 = vst.msk [vmem:[#allocation3 + $0xb8] sm:$0xff] %vm1514, %v4907
      %4940 = vst.msk [vmem:[#allocation3 + $0xc0] sm:$0xff] %vm1514, %v4908
      %4941 = vst.msk [vmem:[#allocation3 + $0xc8] sm:$0xff] %vm1514, %v4909
      %4942 = vst.msk [vmem:[#allocation3 + $0xd0] sm:$0xff] %vm1514, %v4910
      %4943 = vst.msk [vmem:[#allocation3 + $0xd8] sm:$0xff] %vm1514, %v4911
      %4944 = vst.msk [vmem:[#allocation3 + $0xe0] sm:$0xff] %vm1514, %v4912
      %4945 = vst.msk [vmem:[#allocation3 + $0xe8] sm:$0xff] %vm1514, %v4913
      %4946 = vst.msk [vmem:[#allocation3 + $0xf0] sm:$0xff] %vm1514, %v4914
      %4947 = vst.msk [vmem:[#allocation3 + $0xf8] sm:$0xff] %vm1514, %v4915
      %v4948 = vld [vmem:[#allocation2 + $0x18] sm:$0xf]
      %v4949 = vld [vmem:[#allocation2 + $0x1c] sm:$0xf]
      %v4950 = vld [vmem:[#allocation2 + $0x20] sm:$0xf]
      %v4951 = vld [vmem:[#allocation2 + $0x24] sm:$0xf]
      %v4952 = vld [vmem:[#allocation2 + $0x28] sm:$0xf]
      %v4953 = vld [vmem:[#allocation2 + $0x2c] sm:$0xf]
      %v4954 = vld [vmem:[#allocation2 + $0x30] sm:$0xf]
      %v4955 = vld [vmem:[#allocation2 + $0x34] sm:$0xf]
      %v4956 = vld [vmem:[#allocation2 + $0x38] sm:$0xf]
      %v4957 = vld [vmem:[#allocation2 + $0x3c] sm:$0xf]
      %v4958 = vld [vmem:[#allocation2 + $0x40] sm:$0xf]
      %v4959 = vld [vmem:[#allocation2 + $0x44] sm:$0xf]
      %v4960 = vld [vmem:[#allocation2 + $0x48] sm:$0xf]
      %v4961 = vld [vmem:[#allocation2 + $0x4c] sm:$0xf]
      %v4962 = vld [vmem:[#allocation2 + $0x50] sm:$0xf]
      %v4963 = vld [vmem:[#allocation2 + $0x54] sm:$0xf]
      %v4964 = vld [vmem:[#allocation2 + $0x58] sm:$0xf]
      %v4965 = vld [vmem:[#allocation2 + $0x5c] sm:$0xf]
      %v4966 = vld [vmem:[#allocation2 + $0x60] sm:$0xf]
      %v4967 = vld [vmem:[#allocation2 + $0x64] sm:$0xf]
      %v4968 = vld [vmem:[#allocation2 + $0x68] sm:$0xf]
      %v4969 = vld [vmem:[#allocation2 + $0x6c] sm:$0xf]
      %v4970 = vld [vmem:[#allocation2 + $0x70] sm:$0xf]
      %v4971 = vld [vmem:[#allocation2 + $0x74] sm:$0xf]
      %v4972 = vld [vmem:[#allocation2 + $0x78] sm:$0xf]
      %v4973 = vld [vmem:[#allocation2 + $0x7c] sm:$0xf]
      %v4974 = vld [vmem:[#allocation2 + $0x80] sm:$0xf]
      %v4975 = vld [vmem:[#allocation2 + $0x84] sm:$0xf]
      %v4976 = vld [vmem:[#allocation2 + $0x88] sm:$0xf]
      %v4977 = vld [vmem:[#allocation2 + $0x8c] sm:$0xf]
      %v4978 = vld [vmem:[#allocation2 + $0x90] sm:$0xf]
      %v4979 = vld [vmem:[#allocation2 + $0x94] sm:$0xf]
      %v4980 = vld [vmem:[%s3 + $0xe0] sm:$0xf]
      %v4981 = vld [vmem:[%s3 + $0xe4] sm:$0xf]
      %v4982 = vld [vmem:[%s3 + $0xe8] sm:$0xf]
      %v4983 = vld [vmem:[%s3 + $0xec] sm:$0xf]
      %v4984 = vld [vmem:[%s3 + $0xf0] sm:$0xf]
      %v4985 = vld [vmem:[%s3 + $0xf4] sm:$0xf]
      %v4986 = vld [vmem:[%s3 + $0xf8] sm:$0xf]
      %v4987 = vld [vmem:[%s3 + $0xfc] sm:$0xf]
      %v5020 = vunpack.c.l.b16 %v4948
      %v5021 = vunpack.c.l.b16 %v4949
      %v5022 = vunpack.c.l.b16 %v4950
      %v5023 = vunpack.c.l.b16 %v4951
      %v5024 = vunpack.c.l.b16 %v4952
      %v5025 = vunpack.c.l.b16 %v4953
      %v5026 = vunpack.c.l.b16 %v4954
      %v5027 = vunpack.c.l.b16 %v4955
      %v5028 = vunpack.c.l.b16 %v4956
      %v5029 = vunpack.c.l.b16 %v4957
      %v5030 = vunpack.c.l.b16 %v4958
      %v5031 = vunpack.c.l.b16 %v4959
      %v5032 = vunpack.c.l.b16 %v4960
      %v5033 = vunpack.c.l.b16 %v4961
      %v5034 = vunpack.c.l.b16 %v4962
      %v5035 = vunpack.c.l.b16 %v4963
      %v5036 = vunpack.c.l.b16 %v4964
      %v5037 = vunpack.c.l.b16 %v4965
      %v5038 = vunpack.c.l.b16 %v4966
      %v5039 = vunpack.c.l.b16 %v4967
      %v5040 = vunpack.c.l.b16 %v4968
      %v5041 = vunpack.c.l.b16 %v4969
      %v5042 = vunpack.c.l.b16 %v4970
      %v5043 = vunpack.c.l.b16 %v4971
      %v5044 = vunpack.c.l.b16 %v4972
      %v5045 = vunpack.c.l.b16 %v4973
      %v5046 = vunpack.c.l.b16 %v4974
      %v5047 = vunpack.c.l.b16 %v4975
      %v5048 = vunpack.c.l.b16 %v4976
      %v5049 = vunpack.c.l.b16 %v4977
      %v5050 = vunpack.c.l.b16 %v4978
      %v5051 = vunpack.c.l.b16 %v4979
      %v5052 = vpack.c.b16 %v5021, %v5020
      %v5053 = vpack.c.b16 %v5023, %v5022
      %v5054 = vpack.c.b16 %v5025, %v5024
      %v5055 = vpack.c.b16 %v5027, %v5026
      %v5056 = vpack.c.b16 %v5029, %v5028
      %v5057 = vpack.c.b16 %v5031, %v5030
      %v5058 = vpack.c.b16 %v5033, %v5032
      %v5059 = vpack.c.b16 %v5035, %v5034
      %v5060 = vpack.c.b16 %v5037, %v5036
      %v5061 = vpack.c.b16 %v5039, %v5038
      %v5062 = vpack.c.b16 %v5041, %v5040
      %v5063 = vpack.c.b16 %v5043, %v5042
      %v5064 = vpack.c.b16 %v5045, %v5044
      %v5065 = vpack.c.b16 %v5047, %v5046
      %v5066 = vpack.c.b16 %v5049, %v5048
      %v5067 = vpack.c.b16 %v5051, %v5050
      %v5076 = vunpack.c.l.b16 %v4980
      %v5077 = vunpack.c.l.b16 %v4981
      %v5078 = vunpack.c.l.b16 %v4982
      %v5079 = vunpack.c.l.b16 %v4983
      %v5080 = vunpack.c.l.b16 %v4984
      %v5081 = vunpack.c.l.b16 %v4985
      %v5082 = vunpack.c.l.b16 %v4986
      %v5083 = vunpack.c.l.b16 %v4987
      %v5084 = vpack.c.b16 %v5077, %v5076
      %v5085 = vpack.c.b16 %v5079, %v5078
      %v5086 = vpack.c.b16 %v5081, %v5080
      %v5087 = vpack.c.b16 %v5083, %v5082
      %v5093 = vsel %vm1514, %v5052, 0
      %v5096 = vsel %vm1514, %v5053, 0
      %v5099 = vsel %vm1514, %v5054, 0
      %v5102 = vsel %vm1514, %v5055, 0
      %v5105 = vsel %vm1514, %v5056, 0
      %v5108 = vsel %vm1514, %v5057, 0
      %v5111 = vsel %vm1514, %v5058, 0
      %v5114 = vsel %vm1514, %v5059, 0
      %v5117 = vsel %vm1514, %v5060, 0
      %v5120 = vsel %vm1514, %v5061, 0
      %v5123 = vsel %vm1514, %v5062, 0
      %v5126 = vsel %vm1514, %v5063, 0
      %v5129 = vsel %vm1514, %v5064, 0
      %v5132 = vsel %vm1514, %v5065, 0
      %v5135 = vsel %vm1514, %v5066, 0
      %v5138 = vsel %vm1514, %v5067, 0
      %5140 = vmatpush.bf16.msra.mxu0 0
      %5141 = vmatpush.bf16.msra.mxu0 0
      %5142 = vmatpush.bf16.msra.mxu0 0
      %5143 = vmatpush.bf16.msra.mxu0 0
      %5144 = vmatpush.bf16.msra.mxu0 %v5087
      %5145 = vmatpush.bf16.msra.mxu0 %v5086
      %5146 = vmatpush.bf16.msra.mxu0 %v5085
      %5147 = vmatpush.bf16.msra.mxu0 %v5084
      %5148 = vmatmul.bf16.gmra.mxu0 %v5093
      %v5149 = vpop.f32.mrf.mxu0
      %v5150 = vadd.f32 0.0, %v5149
      %v5151 = vpop.f32.mrf.mxu0
      %v5152 = vadd.f32 0.0, %v5151
      %5153 = vmatmul.bf16.gmra.mxu0 %v5096
      %v5154 = vpop.f32.mrf.mxu0
      %v5155 = vadd.f32 0.0, %v5154
      %v5156 = vpop.f32.mrf.mxu0
      %v5157 = vadd.f32 0.0, %v5156
      %5158 = vmatmul.bf16.gmra.mxu0 %v5099
      %v5159 = vpop.f32.mrf.mxu0
      %v5160 = vadd.f32 0.0, %v5159
      %v5161 = vpop.f32.mrf.mxu0
      %v5162 = vadd.f32 0.0, %v5161
      %5163 = vmatmul.bf16.gmra.mxu0 %v5102
      %v5164 = vpop.f32.mrf.mxu0
      %v5165 = vadd.f32 0.0, %v5164
      %v5166 = vpop.f32.mrf.mxu0
      %v5167 = vadd.f32 0.0, %v5166
      %5168 = vmatmul.bf16.gmra.mxu0 %v5105
      %v5169 = vpop.f32.mrf.mxu0
      %v5170 = vadd.f32 0.0, %v5169
      %v5171 = vpop.f32.mrf.mxu0
      %v5172 = vadd.f32 0.0, %v5171
      %5173 = vmatmul.bf16.gmra.mxu0 %v5108
      %v5174 = vpop.f32.mrf.mxu0
      %v5175 = vadd.f32 0.0, %v5174
      %v5176 = vpop.f32.mrf.mxu0
      %v5177 = vadd.f32 0.0, %v5176
      %5178 = vmatmul.bf16.gmra.mxu0 %v5111
      %v5179 = vpop.f32.mrf.mxu0
      %v5180 = vadd.f32 0.0, %v5179
      %v5181 = vpop.f32.mrf.mxu0
      %v5182 = vadd.f32 0.0, %v5181
      %5183 = vmatmul.bf16.gmra.mxu0 %v5114
      %v5184 = vpop.f32.mrf.mxu0
      %v5185 = vadd.f32 0.0, %v5184
      %v5186 = vpop.f32.mrf.mxu0
      %v5187 = vadd.f32 0.0, %v5186
      %5188 = vmatmul.bf16.gmra.mxu0 %v5117
      %v5189 = vpop.f32.mrf.mxu0
      %v5190 = vadd.f32 0.0, %v5189
      %v5191 = vpop.f32.mrf.mxu0
      %v5192 = vadd.f32 0.0, %v5191
      %5193 = vmatmul.bf16.gmra.mxu0 %v5120
      %v5194 = vpop.f32.mrf.mxu0
      %v5195 = vadd.f32 0.0, %v5194
      %v5196 = vpop.f32.mrf.mxu0
      %v5197 = vadd.f32 0.0, %v5196
      %5198 = vmatmul.bf16.gmra.mxu0 %v5123
      %v5199 = vpop.f32.mrf.mxu0
      %v5200 = vadd.f32 0.0, %v5199
      %v5201 = vpop.f32.mrf.mxu0
      %v5202 = vadd.f32 0.0, %v5201
      %5203 = vmatmul.bf16.gmra.mxu0 %v5126
      %v5204 = vpop.f32.mrf.mxu0
      %v5205 = vadd.f32 0.0, %v5204
      %v5206 = vpop.f32.mrf.mxu0
      %v5207 = vadd.f32 0.0, %v5206
      %5208 = vmatmul.bf16.gmra.mxu0 %v5129
      %v5209 = vpop.f32.mrf.mxu0
      %v5210 = vadd.f32 0.0, %v5209
      %v5211 = vpop.f32.mrf.mxu0
      %v5212 = vadd.f32 0.0, %v5211
      %5213 = vmatmul.bf16.gmra.mxu0 %v5132
      %v5214 = vpop.f32.mrf.mxu0
      %v5215 = vadd.f32 0.0, %v5214
      %v5216 = vpop.f32.mrf.mxu0
      %v5217 = vadd.f32 0.0, %v5216
      %5218 = vmatmul.bf16.gmra.mxu0 %v5135
      %v5219 = vpop.f32.mrf.mxu0
      %v5220 = vadd.f32 0.0, %v5219
      %v5221 = vpop.f32.mrf.mxu0
      %v5222 = vadd.f32 0.0, %v5221
      %5223 = vmatmul.bf16.gmra.mxu0 %v5138
      %v5224 = vpop.f32.mrf.mxu0
      %v5225 = vadd.f32 0.0, %v5224
      %v5226 = vpop.f32.mrf.mxu0
      %v5227 = vadd.f32 0.0, %v5226
      %5228 = vdwg.mxu0
      %v5229 = vld [vmem:[#allocation3] sm:$0xff]
      %v5230 = vld [vmem:[#allocation3 + $0x8] sm:$0xff]
      %v5231 = vld [vmem:[#allocation3 + $0x10] sm:$0xff]
      %v5232 = vld [vmem:[#allocation3 + $0x18] sm:$0xff]
      %v5233 = vld [vmem:[#allocation3 + $0x20] sm:$0xff]
      %v5234 = vld [vmem:[#allocation3 + $0x28] sm:$0xff]
      %v5235 = vld [vmem:[#allocation3 + $0x30] sm:$0xff]
      %v5236 = vld [vmem:[#allocation3 + $0x38] sm:$0xff]
      %v5237 = vld [vmem:[#allocation3 + $0x40] sm:$0xff]
      %v5238 = vld [vmem:[#allocation3 + $0x48] sm:$0xff]
      %v5239 = vld [vmem:[#allocation3 + $0x50] sm:$0xff]
      %v5240 = vld [vmem:[#allocation3 + $0x58] sm:$0xff]
      %v5241 = vld [vmem:[#allocation3 + $0x60] sm:$0xff]
      %v5242 = vld [vmem:[#allocation3 + $0x68] sm:$0xff]
      %v5243 = vld [vmem:[#allocation3 + $0x70] sm:$0xff]
      %v5244 = vld [vmem:[#allocation3 + $0x78] sm:$0xff]
      %v5245 = vld [vmem:[#allocation3 + $0x80] sm:$0xff]
      %v5246 = vld [vmem:[#allocation3 + $0x88] sm:$0xff]
      %v5247 = vld [vmem:[#allocation3 + $0x90] sm:$0xff]
      %v5248 = vld [vmem:[#allocation3 + $0x98] sm:$0xff]
      %v5249 = vld [vmem:[#allocation3 + $0xa0] sm:$0xff]
      %v5250 = vld [vmem:[#allocation3 + $0xa8] sm:$0xff]
      %v5251 = vld [vmem:[#allocation3 + $0xb0] sm:$0xff]
      %v5252 = vld [vmem:[#allocation3 + $0xb8] sm:$0xff]
      %v5253 = vld [vmem:[#allocation3 + $0xc0] sm:$0xff]
      %v5254 = vld [vmem:[#allocation3 + $0xc8] sm:$0xff]
      %v5255 = vld [vmem:[#allocation3 + $0xd0] sm:$0xff]
      %v5256 = vld [vmem:[#allocation3 + $0xd8] sm:$0xff]
      %v5257 = vld [vmem:[#allocation3 + $0xe0] sm:$0xff]
      %v5258 = vld [vmem:[#allocation3 + $0xe8] sm:$0xff]
      %v5259 = vld [vmem:[#allocation3 + $0xf0] sm:$0xff]
      %v5260 = vld [vmem:[#allocation3 + $0xf8] sm:$0xff]
      %v5261 = vadd.f32 %v5229, %v5150
      %v5262 = vadd.f32 %v5230, %v5152
      %v5263 = vadd.f32 %v5231, %v5155
      %v5264 = vadd.f32 %v5232, %v5157
      %v5265 = vadd.f32 %v5233, %v5160
      %v5266 = vadd.f32 %v5234, %v5162
      %v5267 = vadd.f32 %v5235, %v5165
      %v5268 = vadd.f32 %v5236, %v5167
      %v5269 = vadd.f32 %v5237, %v5170
      %v5270 = vadd.f32 %v5238, %v5172
      %v5271 = vadd.f32 %v5239, %v5175
      %v5272 = vadd.f32 %v5240, %v5177
      %v5273 = vadd.f32 %v5241, %v5180
      %v5274 = vadd.f32 %v5242, %v5182
      %v5275 = vadd.f32 %v5243, %v5185
      %v5276 = vadd.f32 %v5244, %v5187
      %v5277 = vadd.f32 %v5245, %v5190
      %v5278 = vadd.f32 %v5246, %v5192
      %v5279 = vadd.f32 %v5247, %v5195
      %v5280 = vadd.f32 %v5248, %v5197
      %v5281 = vadd.f32 %v5249, %v5200
      %v5282 = vadd.f32 %v5250, %v5202
      %v5283 = vadd.f32 %v5251, %v5205
      %v5284 = vadd.f32 %v5252, %v5207
      %v5285 = vadd.f32 %v5253, %v5210
      %v5286 = vadd.f32 %v5254, %v5212
      %v5287 = vadd.f32 %v5255, %v5215
      %v5288 = vadd.f32 %v5256, %v5217
      %v5289 = vadd.f32 %v5257, %v5220
      %v5290 = vadd.f32 %v5258, %v5222
      %v5291 = vadd.f32 %v5259, %v5225
      %v5292 = vadd.f32 %v5260, %v5227
      %5293 = vst.msk [vmem:[#allocation3] sm:$0xff] %vm1514, %v5261
      %5294 = vst.msk [vmem:[#allocation3 + $0x8] sm:$0xff] %vm1514, %v5262
      %5295 = vst.msk [vmem:[#allocation3 + $0x10] sm:$0xff] %vm1514, %v5263
      %5296 = vst.msk [vmem:[#allocation3 + $0x18] sm:$0xff] %vm1514, %v5264
      %5297 = vst.msk [vmem:[#allocation3 + $0x20] sm:$0xff] %vm1514, %v5265
      %5298 = vst.msk [vmem:[#allocation3 + $0x28] sm:$0xff] %vm1514, %v5266
      %5299 = vst.msk [vmem:[#allocation3 + $0x30] sm:$0xff] %vm1514, %v5267
      %5300 = vst.msk [vmem:[#allocation3 + $0x38] sm:$0xff] %vm1514, %v5268
      %5301 = vst.msk [vmem:[#allocation3 + $0x40] sm:$0xff] %vm1514, %v5269
      %5302 = vst.msk [vmem:[#allocation3 + $0x48] sm:$0xff] %vm1514, %v5270
      %5303 = vst.msk [vmem:[#allocation3 + $0x50] sm:$0xff] %vm1514, %v5271
      %5304 = vst.msk [vmem:[#allocation3 + $0x58] sm:$0xff] %vm1514, %v5272
      %5305 = vst.msk [vmem:[#allocation3 + $0x60] sm:$0xff] %vm1514, %v5273
      %5306 = vst.msk [vmem:[#allocation3 + $0x68] sm:$0xff] %vm1514, %v5274
      %5307 = vst.msk [vmem:[#allocation3 + $0x70] sm:$0xff] %vm1514, %v5275
      %5308 = vst.msk [vmem:[#allocation3 + $0x78] sm:$0xff] %vm1514, %v5276
      %5309 = vst.msk [vmem:[#allocation3 + $0x80] sm:$0xff] %vm1514, %v5277
      %5310 = vst.msk [vmem:[#allocation3 + $0x88] sm:$0xff] %vm1514, %v5278
      %5311 = vst.msk [vmem:[#allocation3 + $0x90] sm:$0xff] %vm1514, %v5279
      %5312 = vst.msk [vmem:[#allocation3 + $0x98] sm:$0xff] %vm1514, %v5280
      %5313 = vst.msk [vmem:[#allocation3 + $0xa0] sm:$0xff] %vm1514, %v5281
      %5314 = vst.msk [vmem:[#allocation3 + $0xa8] sm:$0xff] %vm1514, %v5282
      %5315 = vst.msk [vmem:[#allocation3 + $0xb0] sm:$0xff] %vm1514, %v5283
      %5316 = vst.msk [vmem:[#allocation3 + $0xb8] sm:$0xff] %vm1514, %v5284
      %5317 = vst.msk [vmem:[#allocation3 + $0xc0] sm:$0xff] %vm1514, %v5285
      %5318 = vst.msk [vmem:[#allocation3 + $0xc8] sm:$0xff] %vm1514, %v5286
      %5319 = vst.msk [vmem:[#allocation3 + $0xd0] sm:$0xff] %vm1514, %v5287
      %5320 = vst.msk [vmem:[#allocation3 + $0xd8] sm:$0xff] %vm1514, %v5288
      %5321 = vst.msk [vmem:[#allocation3 + $0xe0] sm:$0xff] %vm1514, %v5289
      %5322 = vst.msk [vmem:[#allocation3 + $0xe8] sm:$0xff] %vm1514, %v5290
      %5323 = vst.msk [vmem:[#allocation3 + $0xf0] sm:$0xff] %vm1514, %v5291
      %5324 = vst.msk [vmem:[#allocation3 + $0xf8] sm:$0xff] %vm1514, %v5292
      %v5325 = vld [vmem:[#allocation2 + $0x18] sm:$0xf]
      %v5326 = vld [vmem:[#allocation2 + $0x1c] sm:$0xf]
      %v5327 = vld [vmem:[#allocation2 + $0x20] sm:$0xf]
      %v5328 = vld [vmem:[#allocation2 + $0x24] sm:$0xf]
      %v5329 = vld [vmem:[#allocation2 + $0x28] sm:$0xf]
      %v5330 = vld [vmem:[#allocation2 + $0x2c] sm:$0xf]
      %v5331 = vld [vmem:[#allocation2 + $0x30] sm:$0xf]
      %v5332 = vld [vmem:[#allocation2 + $0x34] sm:$0xf]
      %v5333 = vld [vmem:[#allocation2 + $0x38] sm:$0xf]
      %v5334 = vld [vmem:[#allocation2 + $0x3c] sm:$0xf]
      %v5335 = vld [vmem:[#allocation2 + $0x40] sm:$0xf]
      %v5336 = vld [vmem:[#allocation2 + $0x44] sm:$0xf]
      %v5337 = vld [vmem:[#allocation2 + $0x48] sm:$0xf]
      %v5338 = vld [vmem:[#allocation2 + $0x4c] sm:$0xf]
      %v5339 = vld [vmem:[#allocation2 + $0x50] sm:$0xf]
      %v5340 = vld [vmem:[#allocation2 + $0x54] sm:$0xf]
      %v5341 = vld [vmem:[#allocation2 + $0x58] sm:$0xf]
      %v5342 = vld [vmem:[#allocation2 + $0x5c] sm:$0xf]
      %v5343 = vld [vmem:[#allocation2 + $0x60] sm:$0xf]
      %v5344 = vld [vmem:[#allocation2 + $0x64] sm:$0xf]
      %v5345 = vld [vmem:[#allocation2 + $0x68] sm:$0xf]
      %v5346 = vld [vmem:[#allocation2 + $0x6c] sm:$0xf]
      %v5347 = vld [vmem:[#allocation2 + $0x70] sm:$0xf]
      %v5348 = vld [vmem:[#allocation2 + $0x74] sm:$0xf]
      %v5349 = vld [vmem:[#allocation2 + $0x78] sm:$0xf]
      %v5350 = vld [vmem:[#allocation2 + $0x7c] sm:$0xf]
      %v5351 = vld [vmem:[#allocation2 + $0x80] sm:$0xf]
      %v5352 = vld [vmem:[#allocation2 + $0x84] sm:$0xf]
      %v5353 = vld [vmem:[#allocation2 + $0x88] sm:$0xf]
      %v5354 = vld [vmem:[#allocation2 + $0x8c] sm:$0xf]
      %v5355 = vld [vmem:[#allocation2 + $0x90] sm:$0xf]
      %v5356 = vld [vmem:[#allocation2 + $0x94] sm:$0xf]
      %v5357 = vld [vmem:[#allocation2 + $0x98] sm:$0x1]
      %v5358 = vunpack.c.l.bf16 %v5325
      %v5359 = vunpack.c.l.bf16 %v5326
      %v5360 = vunpack.c.l.bf16 %v5327
      %v5361 = vunpack.c.l.bf16 %v5328
      %v5362 = vunpack.c.l.bf16 %v5329
      %v5363 = vunpack.c.l.bf16 %v5330
      %v5364 = vunpack.c.l.bf16 %v5331
      %v5365 = vunpack.c.l.bf16 %v5332
      %v5366 = vunpack.c.l.bf16 %v5333
      %v5367 = vunpack.c.l.bf16 %v5334
      %v5368 = vunpack.c.l.bf16 %v5335
      %v5369 = vunpack.c.l.bf16 %v5336
      %v5370 = vunpack.c.l.bf16 %v5337
      %v5371 = vunpack.c.l.bf16 %v5338
      %v5372 = vunpack.c.l.bf16 %v5339
      %v5373 = vunpack.c.l.bf16 %v5340
      %v5374 = vunpack.c.l.bf16 %v5341
      %v5375 = vunpack.c.l.bf16 %v5342
      %v5376 = vunpack.c.l.bf16 %v5343
      %v5377 = vunpack.c.l.bf16 %v5344
      %v5378 = vunpack.c.l.bf16 %v5345
      %v5379 = vunpack.c.l.bf16 %v5346
      %v5380 = vunpack.c.l.bf16 %v5347
      %v5381 = vunpack.c.l.bf16 %v5348
      %v5382 = vunpack.c.l.bf16 %v5349
      %v5383 = vunpack.c.l.bf16 %v5350
      %v5384 = vunpack.c.l.bf16 %v5351
      %v5385 = vunpack.c.l.bf16 %v5352
      %v5386 = vunpack.c.l.bf16 %v5353
      %v5387 = vunpack.c.l.bf16 %v5354
      %v5388 = vunpack.c.l.bf16 %v5355
      %v5389 = vunpack.c.l.bf16 %v5356
      %v5390 = vunpack.c.l.bf16 %v5357
      %v5391 = vmul.f32 %v5358, %v2448
      %v5392 = vmul.f32 %v5359, %v2450
      %v5393 = vmul.f32 %v5360, %v2452
      %v5394 = vmul.f32 %v5361, %v2454
      %v5395 = vmul.f32 %v5362, %v2456
      %v5396 = vmul.f32 %v5363, %v2458
      %v5397 = vmul.f32 %v5364, %v2460
      %v5398 = vmul.f32 %v5365, %v2462
      %v5399 = vmul.f32 %v5366, %v2464
      %v5400 = vmul.f32 %v5367, %v2466
      %v5401 = vmul.f32 %v5368, %v2468
      %v5402 = vmul.f32 %v5369, %v2470
      %v5403 = vmul.f32 %v5370, %v2472
      %v5404 = vmul.f32 %v5371, %v2474
      %v5405 = vmul.f32 %v5372, %v2476
      %v5406 = vmul.f32 %v5373, %v2478
      %v5407 = vmul.f32 %v5374, %v2480
      %v5408 = vmul.f32 %v5375, %v2482
      %v5409 = vmul.f32 %v5376, %v2484
      %v5410 = vmul.f32 %v5377, %v2486
      %v5411 = vmul.f32 %v5378, %v2488
      %v5412 = vmul.f32 %v5379, %v2490
      %v5413 = vmul.f32 %v5380, %v2492
      %v5414 = vmul.f32 %v5381, %v2494
      %v5415 = vmul.f32 %v5382, %v2496
      %v5416 = vmul.f32 %v5383, %v2498
      %v5417 = vmul.f32 %v5384, %v2500
      %v5418 = vmul.f32 %v5385, %v2502
      %v5419 = vmul.f32 %v5386, %v2504
      %v5420 = vmul.f32 %v5387, %v2506
      %v5421 = vmul.f32 %v5388, %v2508
      %v5422 = vmul.f32 %v5389, %v2510
      %v5423 = vmul.f32 %v5390, %v2509
      %v5424 = vpack.c.bf16 %v5392, %v5391
      %v5425 = vpack.c.bf16 %v5394, %v5393
      %v5426 = vpack.c.bf16 %v5396, %v5395
      %v5427 = vpack.c.bf16 %v5398, %v5397
      %v5428 = vpack.c.bf16 %v5400, %v5399
      %v5429 = vpack.c.bf16 %v5402, %v5401
      %v5430 = vpack.c.bf16 %v5404, %v5403
      %v5431 = vpack.c.bf16 %v5406, %v5405
      %v5432 = vpack.c.bf16 %v5408, %v5407
      %v5433 = vpack.c.bf16 %v5410, %v5409
      %v5434 = vpack.c.bf16 %v5412, %v5411
      %v5435 = vpack.c.bf16 %v5414, %v5413
      %v5436 = vpack.c.bf16 %v5416, %v5415
      %v5437 = vpack.c.bf16 %v5418, %v5417
      %v5438 = vpack.c.bf16 %v5420, %v5419
      %v5439 = vpack.c.bf16 %v5422, %v5421
      %v5440 = vpack.c.bf16 %v5423, %v5423
      %v5441 = vld [vmem:[%s3 + $0x100] sm:$0xf]
      %v5442 = vld [vmem:[%s3 + $0x104] sm:$0xf]
      %v5443 = vld [vmem:[%s3 + $0x108] sm:$0xf]
      %v5444 = vld [vmem:[%s3 + $0x10c] sm:$0xf]
      %v5445 = vld [vmem:[%s3 + $0x110] sm:$0xf]
      %v5446 = vld [vmem:[%s3 + $0x114] sm:$0xf]
      %v5447 = vld [vmem:[%s3 + $0x118] sm:$0xf]
      %v5448 = vld [vmem:[%s3 + $0x11c] sm:$0xf]
      %v5450 = vshrl.u32 %v5424, 16
      %v5452 = vshll.u32 %v5424, 16
      %v5454 = vrot.slane %v5452, 1
      %v5455 = vor.u32 %v5450, %v5454
      %v5457 = vshll.u32 %v5425, 16
      %v5459 = vrot.slane %v5457, 1
      %v5460 = vsel %vm2602, %v5455, %v5459
      %v5461 = vshrl.u32 %v5425, 16
      %v5463 = vor.u32 %v5461, %v5459
      %v5465 = vshll.u32 %v5426, 16
      %v5467 = vrot.slane %v5465, 1
      %v5468 = vsel %vm2602, %v5463, %v5467
      %v5469 = vshrl.u32 %v5426, 16
      %v5471 = vor.u32 %v5469, %v5467
      %v5473 = vshll.u32 %v5427, 16
      %v5475 = vrot.slane %v5473, 1
      %v5476 = vsel %vm2602, %v5471, %v5475
      %v5477 = vshrl.u32 %v5427, 16
      %v5479 = vor.u32 %v5477, %v5475
      %v5481 = vshll.u32 %v5428, 16
      %v5483 = vrot.slane %v5481, 1
      %v5484 = vsel %vm2602, %v5479, %v5483
      %v5485 = vshrl.u32 %v5428, 16
      %v5487 = vor.u32 %v5485, %v5483
      %v5489 = vshll.u32 %v5429, 16
      %v5491 = vrot.slane %v5489, 1
      %v5492 = vsel %vm2602, %v5487, %v5491
      %v5493 = vshrl.u32 %v5429, 16
      %v5495 = vor.u32 %v5493, %v5491
      %v5497 = vshll.u32 %v5430, 16
      %v5499 = vrot.slane %v5497, 1
      %v5500 = vsel %vm2602, %v5495, %v5499
      %v5501 = vshrl.u32 %v5430, 16
      %v5503 = vor.u32 %v5501, %v5499
      %v5505 = vshll.u32 %v5431, 16
      %v5507 = vrot.slane %v5505, 1
      %v5508 = vsel %vm2602, %v5503, %v5507
      %v5509 = vshrl.u32 %v5431, 16
      %v5511 = vor.u32 %v5509, %v5507
      %v5513 = vshll.u32 %v5432, 16
      %v5515 = vrot.slane %v5513, 1
      %v5516 = vsel %vm2602, %v5511, %v5515
      %v5517 = vshrl.u32 %v5432, 16
      %v5519 = vor.u32 %v5517, %v5515
      %v5521 = vshll.u32 %v5433, 16
      %v5523 = vrot.slane %v5521, 1
      %v5524 = vsel %vm2602, %v5519, %v5523
      %v5525 = vshrl.u32 %v5433, 16
      %v5527 = vor.u32 %v5525, %v5523
      %v5529 = vshll.u32 %v5434, 16
      %v5531 = vrot.slane %v5529, 1
      %v5532 = vsel %vm2602, %v5527, %v5531
      %v5533 = vshrl.u32 %v5434, 16
      %v5535 = vor.u32 %v5533, %v5531
      %v5537 = vshll.u32 %v5435, 16
      %v5539 = vrot.slane %v5537, 1
      %v5540 = vsel %vm2602, %v5535, %v5539
      %v5541 = vshrl.u32 %v5435, 16
      %v5543 = vor.u32 %v5541, %v5539
      %v5545 = vshll.u32 %v5436, 16
      %v5547 = vrot.slane %v5545, 1
      %v5548 = vsel %vm2602, %v5543, %v5547
      %v5549 = vshrl.u32 %v5436, 16
      %v5551 = vor.u32 %v5549, %v5547
      %v5553 = vshll.u32 %v5437, 16
      %v5555 = vrot.slane %v5553, 1
      %v5556 = vsel %vm2602, %v5551, %v5555
      %v5557 = vshrl.u32 %v5437, 16
      %v5559 = vor.u32 %v5557, %v5555
      %v5561 = vshll.u32 %v5438, 16
      %v5563 = vrot.slane %v5561, 1
      %v5564 = vsel %vm2602, %v5559, %v5563
      %v5565 = vshrl.u32 %v5438, 16
      %v5567 = vor.u32 %v5565, %v5563
      %v5569 = vshll.u32 %v5439, 16
      %v5571 = vrot.slane %v5569, 1
      %v5572 = vsel %vm2602, %v5567, %v5571
      %v5573 = vshrl.u32 %v5439, 16
      %v5575 = vor.u32 %v5573, %v5571
      %v5577 = vshll.u32 %v5440, 16
      %v5579 = vrot.slane %v5577, 1
      %v5580 = vsel %vm2602, %v5575, %v5579
      %v5589 = vunpack.c.l.b16 %v5441
      %v5590 = vunpack.c.l.b16 %v5442
      %v5591 = vunpack.c.l.b16 %v5443
      %v5592 = vunpack.c.l.b16 %v5444
      %v5593 = vunpack.c.l.b16 %v5445
      %v5594 = vunpack.c.l.b16 %v5446
      %v5595 = vunpack.c.l.b16 %v5447
      %v5596 = vunpack.c.l.b16 %v5448
      %v5597 = vpack.c.b16 %v5590, %v5589
      %v5598 = vpack.c.b16 %v5592, %v5591
      %v5599 = vpack.c.b16 %v5594, %v5593
      %v5600 = vpack.c.b16 %v5596, %v5595
      %v5606 = vsel %vm1514, %v5460, 0
      %v5609 = vsel %vm1514, %v5468, 0
      %v5612 = vsel %vm1514, %v5476, 0
      %v5615 = vsel %vm1514, %v5484, 0
      %v5618 = vsel %vm1514, %v5492, 0
      %v5621 = vsel %vm1514, %v5500, 0
      %v5624 = vsel %vm1514, %v5508, 0
      %v5627 = vsel %vm1514, %v5516, 0
      %v5630 = vsel %vm1514, %v5524, 0
      %v5633 = vsel %vm1514, %v5532, 0
      %v5636 = vsel %vm1514, %v5540, 0
      %v5639 = vsel %vm1514, %v5548, 0
      %v5642 = vsel %vm1514, %v5556, 0
      %v5645 = vsel %vm1514, %v5564, 0
      %v5648 = vsel %vm1514, %v5572, 0
      %v5651 = vsel %vm1514, %v5580, 0
      %5653 = vmatpush.bf16.msra.mxu0 0
      %5654 = vmatpush.bf16.msra.mxu0 0
      %5655 = vmatpush.bf16.msra.mxu0 0
      %5656 = vmatpush.bf16.msra.mxu0 0
      %5657 = vmatpush.bf16.msra.mxu0 %v5600
      %5658 = vmatpush.bf16.msra.mxu0 %v5599
      %5659 = vmatpush.bf16.msra.mxu0 %v5598
      %5660 = vmatpush.bf16.msra.mxu0 %v5597
      %5661 = vmatmul.bf16.gmra.mxu0 %v5606
      %v5662 = vpop.f32.mrf.mxu0
      %v5663 = vadd.f32 0.0, %v5662
      %v5664 = vpop.f32.mrf.mxu0
      %v5665 = vadd.f32 0.0, %v5664
      %5666 = vmatmul.bf16.gmra.mxu0 %v5609
      %v5667 = vpop.f32.mrf.mxu0
      %v5668 = vadd.f32 0.0, %v5667
      %v5669 = vpop.f32.mrf.mxu0
      %v5670 = vadd.f32 0.0, %v5669
      %5671 = vmatmul.bf16.gmra.mxu0 %v5612
      %v5672 = vpop.f32.mrf.mxu0
      %v5673 = vadd.f32 0.0, %v5672
      %v5674 = vpop.f32.mrf.mxu0
      %v5675 = vadd.f32 0.0, %v5674
      %5676 = vmatmul.bf16.gmra.mxu0 %v5615
      %v5677 = vpop.f32.mrf.mxu0
      %v5678 = vadd.f32 0.0, %v5677
      %v5679 = vpop.f32.mrf.mxu0
      %v5680 = vadd.f32 0.0, %v5679
      %5681 = vmatmul.bf16.gmra.mxu0 %v5618
      %v5682 = vpop.f32.mrf.mxu0
      %v5683 = vadd.f32 0.0, %v5682
      %v5684 = vpop.f32.mrf.mxu0
      %v5685 = vadd.f32 0.0, %v5684
      %5686 = vmatmul.bf16.gmra.mxu0 %v5621
      %v5687 = vpop.f32.mrf.mxu0
      %v5688 = vadd.f32 0.0, %v5687
      %v5689 = vpop.f32.mrf.mxu0
      %v5690 = vadd.f32 0.0, %v5689
      %5691 = vmatmul.bf16.gmra.mxu0 %v5624
      %v5692 = vpop.f32.mrf.mxu0
      %v5693 = vadd.f32 0.0, %v5692
      %v5694 = vpop.f32.mrf.mxu0
      %v5695 = vadd.f32 0.0, %v5694
      %5696 = vmatmul.bf16.gmra.mxu0 %v5627
      %v5697 = vpop.f32.mrf.mxu0
      %v5698 = vadd.f32 0.0, %v5697
      %v5699 = vpop.f32.mrf.mxu0
      %v5700 = vadd.f32 0.0, %v5699
      %5701 = vmatmul.bf16.gmra.mxu0 %v5630
      %v5702 = vpop.f32.mrf.mxu0
      %v5703 = vadd.f32 0.0, %v5702
      %v5704 = vpop.f32.mrf.mxu0
      %v5705 = vadd.f32 0.0, %v5704
      %5706 = vmatmul.bf16.gmra.mxu0 %v5633
      %v5707 = vpop.f32.mrf.mxu0
      %v5708 = vadd.f32 0.0, %v5707
      %v5709 = vpop.f32.mrf.mxu0
      %v5710 = vadd.f32 0.0, %v5709
      %5711 = vmatmul.bf16.gmra.mxu0 %v5636
      %v5712 = vpop.f32.mrf.mxu0
      %v5713 = vadd.f32 0.0, %v5712
      %v5714 = vpop.f32.mrf.mxu0
      %v5715 = vadd.f32 0.0, %v5714
      %5716 = vmatmul.bf16.gmra.mxu0 %v5639
      %v5717 = vpop.f32.mrf.mxu0
      %v5718 = vadd.f32 0.0, %v5717
      %v5719 = vpop.f32.mrf.mxu0
      %v5720 = vadd.f32 0.0, %v5719
      %5721 = vmatmul.bf16.gmra.mxu0 %v5642
      %v5722 = vpop.f32.mrf.mxu0
      %v5723 = vadd.f32 0.0, %v5722
      %v5724 = vpop.f32.mrf.mxu0
      %v5725 = vadd.f32 0.0, %v5724
      %5726 = vmatmul.bf16.gmra.mxu0 %v5645
      %v5727 = vpop.f32.mrf.mxu0
      %v5728 = vadd.f32 0.0, %v5727
      %v5729 = vpop.f32.mrf.mxu0
      %v5730 = vadd.f32 0.0, %v5729
      %5731 = vmatmul.bf16.gmra.mxu0 %v5648
      %v5732 = vpop.f32.mrf.mxu0
      %v5733 = vadd.f32 0.0, %v5732
      %v5734 = vpop.f32.mrf.mxu0
      %v5735 = vadd.f32 0.0, %v5734
      %5736 = vmatmul.bf16.gmra.mxu0 %v5651
      %v5737 = vpop.f32.mrf.mxu0
      %v5738 = vadd.f32 0.0, %v5737
      %v5739 = vpop.f32.mrf.mxu0
      %v5740 = vadd.f32 0.0, %v5739
      %5741 = vdwg.mxu0
      %v5742 = vld [vmem:[#allocation3] sm:$0xff]
      %v5743 = vld [vmem:[#allocation3 + $0x8] sm:$0xff]
      %v5744 = vld [vmem:[#allocation3 + $0x10] sm:$0xff]
      %v5745 = vld [vmem:[#allocation3 + $0x18] sm:$0xff]
      %v5746 = vld [vmem:[#allocation3 + $0x20] sm:$0xff]
      %v5747 = vld [vmem:[#allocation3 + $0x28] sm:$0xff]
      %v5748 = vld [vmem:[#allocation3 + $0x30] sm:$0xff]
      %v5749 = vld [vmem:[#allocation3 + $0x38] sm:$0xff]
      %v5750 = vld [vmem:[#allocation3 + $0x40] sm:$0xff]
      %v5751 = vld [vmem:[#allocation3 + $0x48] sm:$0xff]
      %v5752 = vld [vmem:[#allocation3 + $0x50] sm:$0xff]
      %v5753 = vld [vmem:[#allocation3 + $0x58] sm:$0xff]
      %v5754 = vld [vmem:[#allocation3 + $0x60] sm:$0xff]
      %v5755 = vld [vmem:[#allocation3 + $0x68] sm:$0xff]
      %v5756 = vld [vmem:[#allocation3 + $0x70] sm:$0xff]
      %v5757 = vld [vmem:[#allocation3 + $0x78] sm:$0xff]
      %v5758 = vld [vmem:[#allocation3 + $0x80] sm:$0xff]
      %v5759 = vld [vmem:[#allocation3 + $0x88] sm:$0xff]
      %v5760 = vld [vmem:[#allocation3 + $0x90] sm:$0xff]
      %v5761 = vld [vmem:[#allocation3 + $0x98] sm:$0xff]
      %v5762 = vld [vmem:[#allocation3 + $0xa0] sm:$0xff]
      %v5763 = vld [vmem:[#allocation3 + $0xa8] sm:$0xff]
      %v5764 = vld [vmem:[#allocation3 + $0xb0] sm:$0xff]
      %v5765 = vld [vmem:[#allocation3 + $0xb8] sm:$0xff]
      %v5766 = vld [vmem:[#allocation3 + $0xc0] sm:$0xff]
      %v5767 = vld [vmem:[#allocation3 + $0xc8] sm:$0xff]
      %v5768 = vld [vmem:[#allocation3 + $0xd0] sm:$0xff]
      %v5769 = vld [vmem:[#allocation3 + $0xd8] sm:$0xff]
      %v5770 = vld [vmem:[#allocation3 + $0xe0] sm:$0xff]
      %v5771 = vld [vmem:[#allocation3 + $0xe8] sm:$0xff]
      %v5772 = vld [vmem:[#allocation3 + $0xf0] sm:$0xff]
      %v5773 = vld [vmem:[#allocation3 + $0xf8] sm:$0xff]
      %v5774 = vadd.f32 %v5742, %v5663
      %v5775 = vadd.f32 %v5743, %v5665
      %v5776 = vadd.f32 %v5744, %v5668
      %v5777 = vadd.f32 %v5745, %v5670
      %v5778 = vadd.f32 %v5746, %v5673
      %v5779 = vadd.f32 %v5747, %v5675
      %v5780 = vadd.f32 %v5748, %v5678
      %v5781 = vadd.f32 %v5749, %v5680
      %v5782 = vadd.f32 %v5750, %v5683
      %v5783 = vadd.f32 %v5751, %v5685
      %v5784 = vadd.f32 %v5752, %v5688
      %v5785 = vadd.f32 %v5753, %v5690
      %v5786 = vadd.f32 %v5754, %v5693
      %v5787 = vadd.f32 %v5755, %v5695
      %v5788 = vadd.f32 %v5756, %v5698
      %v5789 = vadd.f32 %v5757, %v5700
      %v5790 = vadd.f32 %v5758, %v5703
      %v5791 = vadd.f32 %v5759, %v5705
      %v5792 = vadd.f32 %v5760, %v5708
      %v5793 = vadd.f32 %v5761, %v5710
      %v5794 = vadd.f32 %v5762, %v5713
      %v5795 = vadd.f32 %v5763, %v5715
      %v5796 = vadd.f32 %v5764, %v5718
      %v5797 = vadd.f32 %v5765, %v5720
      %v5798 = vadd.f32 %v5766, %v5723
      %v5799 = vadd.f32 %v5767, %v5725
      %v5800 = vadd.f32 %v5768, %v5728
      %v5801 = vadd.f32 %v5769, %v5730
      %v5802 = vadd.f32 %v5770, %v5733
      %v5803 = vadd.f32 %v5771, %v5735
      %v5804 = vadd.f32 %v5772, %v5738
      %v5805 = vadd.f32 %v5773, %v5740
      %5806 = vst.msk [vmem:[#allocation3] sm:$0xff] %vm1514, %v5774
      %5807 = vst.msk [vmem:[#allocation3 + $0x8] sm:$0xff] %vm1514, %v5775
      %5808 = vst.msk [vmem:[#allocation3 + $0x10] sm:$0xff] %vm1514, %v5776
      %5809 = vst.msk [vmem:[#allocation3 + $0x18] sm:$0xff] %vm1514, %v5777
      %5810 = vst.msk [vmem:[#allocation3 + $0x20] sm:$0xff] %vm1514, %v5778
      %5811 = vst.msk [vmem:[#allocation3 + $0x28] sm:$0xff] %vm1514, %v5779
      %5812 = vst.msk [vmem:[#allocation3 + $0x30] sm:$0xff] %vm1514, %v5780
      %5813 = vst.msk [vmem:[#allocation3 + $0x38] sm:$0xff] %vm1514, %v5781
      %5814 = vst.msk [vmem:[#allocation3 + $0x40] sm:$0xff] %vm1514, %v5782
      %5815 = vst.msk [vmem:[#allocation3 + $0x48] sm:$0xff] %vm1514, %v5783
      %5816 = vst.msk [vmem:[#allocation3 + $0x50] sm:$0xff] %vm1514, %v5784
      %5817 = vst.msk [vmem:[#allocation3 + $0x58] sm:$0xff] %vm1514, %v5785
      %5818 = vst.msk [vmem:[#allocation3 + $0x60] sm:$0xff] %vm1514, %v5786
      %5819 = vst.msk [vmem:[#allocation3 + $0x68] sm:$0xff] %vm1514, %v5787
      %5820 = vst.msk [vmem:[#allocation3 + $0x70] sm:$0xff] %vm1514, %v5788
      %5821 = vst.msk [vmem:[#allocation3 + $0x78] sm:$0xff] %vm1514, %v5789
      %5822 = vst.msk [vmem:[#allocation3 + $0x80] sm:$0xff] %vm1514, %v5790
      %5823 = vst.msk [vmem:[#allocation3 + $0x88] sm:$0xff] %vm1514, %v5791
      %5824 = vst.msk [vmem:[#allocation3 + $0x90] sm:$0xff] %vm1514, %v5792
      %5825 = vst.msk [vmem:[#allocation3 + $0x98] sm:$0xff] %vm1514, %v5793
      %5826 = vst.msk [vmem:[#allocation3 + $0xa0] sm:$0xff] %vm1514, %v5794
      %5827 = vst.msk [vmem:[#allocation3 + $0xa8] sm:$0xff] %vm1514, %v5795
      %5828 = vst.msk [vmem:[#allocation3 + $0xb0] sm:$0xff] %vm1514, %v5796
      %5829 = vst.msk [vmem:[#allocation3 + $0xb8] sm:$0xff] %vm1514, %v5797
      %5830 = vst.msk [vmem:[#allocation3 + $0xc0] sm:$0xff] %vm1514, %v5798
      %5831 = vst.msk [vmem:[#allocation3 + $0xc8] sm:$0xff] %vm1514, %v5799
      %5832 = vst.msk [vmem:[#allocation3 + $0xd0] sm:$0xff] %vm1514, %v5800
      %5833 = vst.msk [vmem:[#allocation3 + $0xd8] sm:$0xff] %vm1514, %v5801
      %5834 = vst.msk [vmem:[#allocation3 + $0xe0] sm:$0xff] %vm1514, %v5802
      %5835 = vst.msk [vmem:[#allocation3 + $0xe8] sm:$0xff] %vm1514, %v5803
      %5836 = vst.msk [vmem:[#allocation3 + $0xf0] sm:$0xff] %vm1514, %v5804
      %5837 = vst.msk [vmem:[#allocation3 + $0xf8] sm:$0xff] %vm1514, %v5805
      %v5838 = vld [vmem:[#allocation3] sm:$0xff]
      %v5839 = vld [vmem:[#allocation3 + $0x8] sm:$0xff]
      %v5840 = vld [vmem:[#allocation3 + $0x10] sm:$0xff]
      %v5841 = vld [vmem:[#allocation3 + $0x18] sm:$0xff]
      %v5842 = vld [vmem:[#allocation3 + $0x20] sm:$0xff]
      %v5843 = vld [vmem:[#allocation3 + $0x28] sm:$0xff]
      %v5844 = vld [vmem:[#allocation3 + $0x30] sm:$0xff]
      %v5845 = vld [vmem:[#allocation3 + $0x38] sm:$0xff]
      %v5846 = vld [vmem:[#allocation3 + $0x40] sm:$0xff]
      %v5847 = vld [vmem:[#allocation3 + $0x48] sm:$0xff]
      %v5848 = vld [vmem:[#allocation3 + $0x50] sm:$0xff]
      %v5849 = vld [vmem:[#allocation3 + $0x58] sm:$0xff]
      %v5850 = vld [vmem:[#allocation3 + $0x60] sm:$0xff]
      %v5851 = vld [vmem:[#allocation3 + $0x68] sm:$0xff]
      %v5852 = vld [vmem:[#allocation3 + $0x70] sm:$0xff]
      %v5853 = vld [vmem:[#allocation3 + $0x78] sm:$0xff]
      %v5854 = vld [vmem:[#allocation3 + $0x80] sm:$0xff]
      %v5855 = vld [vmem:[#allocation3 + $0x88] sm:$0xff]
      %v5856 = vld [vmem:[#allocation3 + $0x90] sm:$0xff]
      %v5857 = vld [vmem:[#allocation3 + $0x98] sm:$0xff]
      %v5858 = vld [vmem:[#allocation3 + $0xa0] sm:$0xff]
      %v5859 = vld [vmem:[#allocation3 + $0xa8] sm:$0xff]
      %v5860 = vld [vmem:[#allocation3 + $0xb0] sm:$0xff]
      %v5861 = vld [vmem:[#allocation3 + $0xb8] sm:$0xff]
      %v5862 = vld [vmem:[#allocation3 + $0xc0] sm:$0xff]
      %v5863 = vld [vmem:[#allocation3 + $0xc8] sm:$0xff]
      %v5864 = vld [vmem:[#allocation3 + $0xd0] sm:$0xff]
      %v5865 = vld [vmem:[#allocation3 + $0xd8] sm:$0xff]
      %v5866 = vld [vmem:[#allocation3 + $0xe0] sm:$0xff]
      %v5867 = vld [vmem:[#allocation3 + $0xe8] sm:$0xff]
      %v5868 = vld [vmem:[#allocation3 + $0xf0] sm:$0xff]
      %v5869 = vld [vmem:[#allocation3 + $0xf8] sm:$0xff]
      %v5870 = vld [vmem:[%s9] sm:$0x1]
      %v5871 = vperm.slane %v5870, 0
      %v5872 = vadd.f32 %v5838, %v5871
      %v5873 = vadd.f32 %v5839, %v5871
      %v5874 = vadd.f32 %v5840, %v5871
      %v5875 = vadd.f32 %v5841, %v5871
      %v5876 = vadd.f32 %v5842, %v5871
      %v5877 = vadd.f32 %v5843, %v5871
      %v5878 = vadd.f32 %v5844, %v5871
      %v5879 = vadd.f32 %v5845, %v5871
      %v5880 = vadd.f32 %v5846, %v5871
      %v5881 = vadd.f32 %v5847, %v5871
      %v5882 = vadd.f32 %v5848, %v5871
      %v5883 = vadd.f32 %v5849, %v5871
      %v5884 = vadd.f32 %v5850, %v5871
      %v5885 = vadd.f32 %v5851, %v5871
      %v5886 = vadd.f32 %v5852, %v5871
      %v5887 = vadd.f32 %v5853, %v5871
      %v5888 = vadd.f32 %v5854, %v5871
      %v5889 = vadd.f32 %v5855, %v5871
      %v5890 = vadd.f32 %v5856, %v5871
      %v5891 = vadd.f32 %v5857, %v5871
      %v5892 = vadd.f32 %v5858, %v5871
      %v5893 = vadd.f32 %v5859, %v5871
      %v5894 = vadd.f32 %v5860, %v5871
      %v5895 = vadd.f32 %v5861, %v5871
      %v5896 = vadd.f32 %v5862, %v5871
      %v5897 = vadd.f32 %v5863, %v5871
      %v5898 = vadd.f32 %v5864, %v5871
      %v5899 = vadd.f32 %v5865, %v5871
      %v5900 = vadd.f32 %v5866, %v5871
      %v5901 = vadd.f32 %v5867, %v5871
      %v5902 = vadd.f32 %v5868, %v5871
      %v5903 = vadd.f32 %v5869, %v5871
      %v5904 = vmax.f32 %v5872, 0.0
      %v5905 = vmax.f32 %v5873, 0.0
      %v5906 = vmax.f32 %v5874, 0.0
      %v5907 = vmax.f32 %v5875, 0.0
      %v5908 = vmax.f32 %v5876, 0.0
      %v5909 = vmax.f32 %v5877, 0.0
      %v5910 = vmax.f32 %v5878, 0.0
      %v5911 = vmax.f32 %v5879, 0.0
      %v5912 = vmax.f32 %v5880, 0.0
      %v5913 = vmax.f32 %v5881, 0.0
      %v5914 = vmax.f32 %v5882, 0.0
      %v5915 = vmax.f32 %v5883, 0.0
      %v5916 = vmax.f32 %v5884, 0.0
      %v5917 = vmax.f32 %v5885, 0.0
      %v5918 = vmax.f32 %v5886, 0.0
      %v5919 = vmax.f32 %v5887, 0.0
      %v5920 = vmax.f32 %v5888, 0.0
      %v5921 = vmax.f32 %v5889, 0.0
      %v5922 = vmax.f32 %v5890, 0.0
      %v5923 = vmax.f32 %v5891, 0.0
      %v5924 = vmax.f32 %v5892, 0.0
      %v5925 = vmax.f32 %v5893, 0.0
      %v5926 = vmax.f32 %v5894, 0.0
      %v5927 = vmax.f32 %v5895, 0.0
      %v5928 = vmax.f32 %v5896, 0.0
      %v5929 = vmax.f32 %v5897, 0.0
      %v5930 = vmax.f32 %v5898, 0.0
      %v5931 = vmax.f32 %v5899, 0.0
      %v5932 = vmax.f32 %v5900, 0.0
      %v5933 = vmax.f32 %v5901, 0.0
      %v5934 = vmax.f32 %v5902, 0.0
      %v5935 = vmax.f32 %v5903, 0.0
      %v5936 = vpack.c.bf16 %v5905, %v5904
      %v5937 = vpack.c.bf16 %v5907, %v5906
      %v5938 = vpack.c.bf16 %v5909, %v5908
      %v5939 = vpack.c.bf16 %v5911, %v5910
      %v5940 = vpack.c.bf16 %v5913, %v5912
      %v5941 = vpack.c.bf16 %v5915, %v5914
      %v5942 = vpack.c.bf16 %v5917, %v5916
      %v5943 = vpack.c.bf16 %v5919, %v5918
      %v5944 = vpack.c.bf16 %v5921, %v5920
      %v5945 = vpack.c.bf16 %v5923, %v5922
      %v5946 = vpack.c.bf16 %v5925, %v5924
      %v5947 = vpack.c.bf16 %v5927, %v5926
      %v5948 = vpack.c.bf16 %v5929, %v5928
      %v5949 = vpack.c.bf16 %v5931, %v5930
      %v5950 = vpack.c.bf16 %v5933, %v5932
      %v5951 = vpack.c.bf16 %v5935, %v5934
      %v5952 = vld [vmem:[%s4] sm:$0xf]
      %v5953 = vld [vmem:[%s4 + $0x4] sm:$0xf]
      %v5954 = vld [vmem:[%s4 + $0x8] sm:$0xf]
      %v5955 = vld [vmem:[%s4 + $0xc] sm:$0xf]
      %v5956 = vld [vmem:[%s4 + $0x10] sm:$0xf]
      %v5957 = vld [vmem:[%s4 + $0x14] sm:$0xf]
      %v5958 = vld [vmem:[%s4 + $0x18] sm:$0xf]
      %v5959 = vld [vmem:[%s4 + $0x1c] sm:$0xf]
      %v5960 = vld [vmem:[%s9 + $0x1] sm:$0x1]
      %v5961 = vperm.slane %v5960, 0
      %v5970 = vunpack.c.l.b16 %v5952
      %v5971 = vunpack.c.l.b16 %v5953
      %v5972 = vunpack.c.l.b16 %v5954
      %v5973 = vunpack.c.l.b16 %v5955
      %v5974 = vunpack.c.l.b16 %v5956
      %v5975 = vunpack.c.l.b16 %v5957
      %v5976 = vunpack.c.l.b16 %v5958
      %v5977 = vunpack.c.l.b16 %v5959
      %v5978 = vpack.c.b16 %v5971, %v5970
      %v5979 = vpack.c.b16 %v5973, %v5972
      %v5980 = vpack.c.b16 %v5975, %v5974
      %v5981 = vpack.c.b16 %v5977, %v5976
      %v5987 = vsel %vm1514, %v5936, 0
      %v5990 = vsel %vm1514, %v5937, 0
      %v5993 = vsel %vm1514, %v5938, 0
      %v5996 = vsel %vm1514, %v5939, 0
      %v5999 = vsel %vm1514, %v5940, 0
      %v6002 = vsel %vm1514, %v5941, 0
      %v6005 = vsel %vm1514, %v5942, 0
      %v6008 = vsel %vm1514, %v5943, 0
      %v6011 = vsel %vm1514, %v5944, 0
      %v6014 = vsel %vm1514, %v5945, 0
      %v6017 = vsel %vm1514, %v5946, 0
      %v6020 = vsel %vm1514, %v5947, 0
      %v6023 = vsel %vm1514, %v5948, 0
      %v6026 = vsel %vm1514, %v5949, 0
      %v6029 = vsel %vm1514, %v5950, 0
      %v6032 = vsel %vm1514, %v5951, 0
      %6034 = vmatpush.bf16.msra.mxu0 0
      %6035 = vmatpush.bf16.msra.mxu0 0
      %6036 = vmatpush.bf16.msra.mxu0 0
      %6037 = vmatpush.bf16.msra.mxu0 0
      %6038 = vmatpush.bf16.msra.mxu0 %v5981
      %6039 = vmatpush.bf16.msra.mxu0 %v5980
      %6040 = vmatpush.bf16.msra.mxu0 %v5979
      %6041 = vmatpush.bf16.msra.mxu0 %v5978
      %6042 = vmatmul.bf16.gmra.mxu0 %v5987
      %v6043 = vpop.f32.mrf.mxu0
      %v6044 = vadd.f32 %v5961, %v6043
      %v6045 = vpop.f32.mrf.mxu0
      %v6046 = vadd.f32 %v5961, %v6045
      %6047 = vmatmul.bf16.gmra.mxu0 %v5990
      %v6048 = vpop.f32.mrf.mxu0
      %v6049 = vadd.f32 %v5961, %v6048
      %v6050 = vpop.f32.mrf.mxu0
      %v6051 = vadd.f32 %v5961, %v6050
      %6052 = vmatmul.bf16.gmra.mxu0 %v5993
      %v6053 = vpop.f32.mrf.mxu0
      %v6054 = vadd.f32 %v5961, %v6053
      %v6055 = vpop.f32.mrf.mxu0
      %v6056 = vadd.f32 %v5961, %v6055
      %6057 = vmatmul.bf16.gmra.mxu0 %v5996
      %v6058 = vpop.f32.mrf.mxu0
      %v6059 = vadd.f32 %v5961, %v6058
      %v6060 = vpop.f32.mrf.mxu0
      %v6061 = vadd.f32 %v5961, %v6060
      %6062 = vmatmul.bf16.gmra.mxu0 %v5999
      %v6063 = vpop.f32.mrf.mxu0
      %v6064 = vadd.f32 %v5961, %v6063
      %v6065 = vpop.f32.mrf.mxu0
      %v6066 = vadd.f32 %v5961, %v6065
      %6067 = vmatmul.bf16.gmra.mxu0 %v6002
      %v6068 = vpop.f32.mrf.mxu0
      %v6069 = vadd.f32 %v5961, %v6068
      %v6070 = vpop.f32.mrf.mxu0
      %v6071 = vadd.f32 %v5961, %v6070
      %6072 = vmatmul.bf16.gmra.mxu0 %v6005
      %v6073 = vpop.f32.mrf.mxu0
      %v6074 = vadd.f32 %v5961, %v6073
      %v6075 = vpop.f32.mrf.mxu0
      %v6076 = vadd.f32 %v5961, %v6075
      %6077 = vmatmul.bf16.gmra.mxu0 %v6008
      %v6078 = vpop.f32.mrf.mxu0
      %v6079 = vadd.f32 %v5961, %v6078
      %v6080 = vpop.f32.mrf.mxu0
      %v6081 = vadd.f32 %v5961, %v6080
      %6082 = vmatmul.bf16.gmra.mxu0 %v6011
      %v6083 = vpop.f32.mrf.mxu0
      %v6084 = vadd.f32 %v5961, %v6083
      %v6085 = vpop.f32.mrf.mxu0
      %v6086 = vadd.f32 %v5961, %v6085
      %6087 = vmatmul.bf16.gmra.mxu0 %v6014
      %v6088 = vpop.f32.mrf.mxu0
      %v6089 = vadd.f32 %v5961, %v6088
      %v6090 = vpop.f32.mrf.mxu0
      %v6091 = vadd.f32 %v5961, %v6090
      %6092 = vmatmul.bf16.gmra.mxu0 %v6017
      %v6093 = vpop.f32.mrf.mxu0
      %v6094 = vadd.f32 %v5961, %v6093
      %v6095 = vpop.f32.mrf.mxu0
      %v6096 = vadd.f32 %v5961, %v6095
      %6097 = vmatmul.bf16.gmra.mxu0 %v6020
      %v6098 = vpop.f32.mrf.mxu0
      %v6099 = vadd.f32 %v5961, %v6098
      %v6100 = vpop.f32.mrf.mxu0
      %v6101 = vadd.f32 %v5961, %v6100
      %6102 = vmatmul.bf16.gmra.mxu0 %v6023
      %v6103 = vpop.f32.mrf.mxu0
      %v6104 = vadd.f32 %v5961, %v6103
      %v6105 = vpop.f32.mrf.mxu0
      %v6106 = vadd.f32 %v5961, %v6105
      %6107 = vmatmul.bf16.gmra.mxu0 %v6026
      %v6108 = vpop.f32.mrf.mxu0
      %v6109 = vadd.f32 %v5961, %v6108
      %v6110 = vpop.f32.mrf.mxu0
      %v6111 = vadd.f32 %v5961, %v6110
      %6112 = vmatmul.bf16.gmra.mxu0 %v6029
      %v6113 = vpop.f32.mrf.mxu0
      %v6114 = vadd.f32 %v5961, %v6113
      %v6115 = vpop.f32.mrf.mxu0
      %v6116 = vadd.f32 %v5961, %v6115
      %6117 = vmatmul.bf16.gmra.mxu0 %v6032
      %v6118 = vpop.f32.mrf.mxu0
      %v6119 = vadd.f32 %v5961, %v6118
      %v6120 = vpop.f32.mrf.mxu0
      %v6121 = vadd.f32 %v5961, %v6120
      %6122 = vdwg.mxu0
      %v6123 = vmax.f32 %v6044, 0.0
      %v6124 = vmax.f32 %v6046, 0.0
      %v6125 = vmax.f32 %v6049, 0.0
      %v6126 = vmax.f32 %v6051, 0.0
      %v6127 = vmax.f32 %v6054, 0.0
      %v6128 = vmax.f32 %v6056, 0.0
      %v6129 = vmax.f32 %v6059, 0.0
      %v6130 = vmax.f32 %v6061, 0.0
      %v6131 = vmax.f32 %v6064, 0.0
      %v6132 = vmax.f32 %v6066, 0.0
      %v6133 = vmax.f32 %v6069, 0.0
      %v6134 = vmax.f32 %v6071, 0.0
      %v6135 = vmax.f32 %v6074, 0.0
      %v6136 = vmax.f32 %v6076, 0.0
      %v6137 = vmax.f32 %v6079, 0.0
      %v6138 = vmax.f32 %v6081, 0.0
      %v6139 = vmax.f32 %v6084, 0.0
      %v6140 = vmax.f32 %v6086, 0.0
      %v6141 = vmax.f32 %v6089, 0.0
      %v6142 = vmax.f32 %v6091, 0.0
      %v6143 = vmax.f32 %v6094, 0.0
      %v6144 = vmax.f32 %v6096, 0.0
      %v6145 = vmax.f32 %v6099, 0.0
      %v6146 = vmax.f32 %v6101, 0.0
      %v6147 = vmax.f32 %v6104, 0.0
      %v6148 = vmax.f32 %v6106, 0.0
      %v6149 = vmax.f32 %v6109, 0.0
      %v6150 = vmax.f32 %v6111, 0.0
      %v6151 = vmax.f32 %v6114, 0.0
      %v6152 = vmax.f32 %v6116, 0.0
      %v6153 = vmax.f32 %v6119, 0.0
      %v6154 = vmax.f32 %v6121, 0.0
      %v6155 = vpack.c.bf16 %v6124, %v6123
      %v6156 = vpack.c.bf16 %v6126, %v6125
      %v6157 = vpack.c.bf16 %v6128, %v6127
      %v6158 = vpack.c.bf16 %v6130, %v6129
      %v6159 = vpack.c.bf16 %v6132, %v6131
      %v6160 = vpack.c.bf16 %v6134, %v6133
      %v6161 = vpack.c.bf16 %v6136, %v6135
      %v6162 = vpack.c.bf16 %v6138, %v6137
      %v6163 = vpack.c.bf16 %v6140, %v6139
      %v6164 = vpack.c.bf16 %v6142, %v6141
      %v6165 = vpack.c.bf16 %v6144, %v6143
      %v6166 = vpack.c.bf16 %v6146, %v6145
      %v6167 = vpack.c.bf16 %v6148, %v6147
      %v6168 = vpack.c.bf16 %v6150, %v6149
      %v6169 = vpack.c.bf16 %v6152, %v6151
      %v6170 = vpack.c.bf16 %v6154, %v6153
      %v6171 = vld [vmem:[%s5] sm:$0xf]
      %v6172 = vld [vmem:[%s5 + $0x4] sm:$0xf]
      %v6173 = vld [vmem:[%s5 + $0x8] sm:$0xf]
      %v6174 = vld [vmem:[%s5 + $0xc] sm:$0xf]
      %v6175 = vld [vmem:[%s5 + $0x10] sm:$0xf]
      %v6176 = vld [vmem:[%s5 + $0x14] sm:$0xf]
      %v6177 = vld [vmem:[%s5 + $0x18] sm:$0xf]
      %v6178 = vld [vmem:[%s5 + $0x1c] sm:$0xf]
      %v6179 = vld [vmem:[%s5 + $0x20] sm:$0xf]
      %v6180 = vld [vmem:[%s5 + $0x24] sm:$0xf]
      %v6181 = vld [vmem:[%s5 + $0x28] sm:$0xf]
      %v6182 = vld [vmem:[%s5 + $0x2c] sm:$0xf]
      %v6183 = vld [vmem:[%s5 + $0x30] sm:$0xf]
      %v6184 = vld [vmem:[%s5 + $0x34] sm:$0xf]
      %v6185 = vld [vmem:[%s5 + $0x38] sm:$0xf]
      %v6186 = vld [vmem:[%s5 + $0x3c] sm:$0xf]
      %v6187 = vld [vmem:[%s9 + $0x2] sm:$0x1]
      %v6188 = vperm.slane %v6187, 0
      %v6205 = vunpack.c.l.b16 %v6171
      %v6206 = vunpack.c.l.b16 %v6172
      %v6207 = vunpack.c.l.b16 %v6173
      %v6208 = vunpack.c.l.b16 %v6174
      %v6209 = vunpack.c.l.b16 %v6175
      %v6210 = vunpack.c.l.b16 %v6176
      %v6211 = vunpack.c.l.b16 %v6177
      %v6212 = vunpack.c.l.b16 %v6178
      %v6213 = vunpack.c.l.b16 %v6179
      %v6214 = vunpack.c.l.b16 %v6180
      %v6215 = vunpack.c.l.b16 %v6181
      %v6216 = vunpack.c.l.b16 %v6182
      %v6217 = vunpack.c.l.b16 %v6183
      %v6218 = vunpack.c.l.b16 %v6184
      %v6219 = vunpack.c.l.b16 %v6185
      %v6220 = vunpack.c.l.b16 %v6186
      %v6221 = vpack.c.b16 %v6206, %v6205
      %v6222 = vpack.c.b16 %v6208, %v6207
      %v6223 = vpack.c.b16 %v6210, %v6209
      %v6224 = vpack.c.b16 %v6212, %v6211
      %v6225 = vpack.c.b16 %v6214, %v6213
      %v6226 = vpack.c.b16 %v6216, %v6215
      %v6227 = vpack.c.b16 %v6218, %v6217
      %v6228 = vpack.c.b16 %v6220, %v6219
      %6237 = vmatpush.bf16.msra.mxu0 %v6228
      %6238 = vmatpush.bf16.msra.mxu0 %v6227
      %6239 = vmatpush.bf16.msra.mxu0 %v6226
      %6240 = vmatpush.bf16.msra.mxu0 %v6225
      %6241 = vmatpush.bf16.msra.mxu0 %v6224
      %6242 = vmatpush.bf16.msra.mxu0 %v6223
      %6243 = vmatpush.bf16.msra.mxu0 %v6222
      %6244 = vmatpush.bf16.msra.mxu0 %v6221
      %6245 = vmatmul.bf16.gmra.mxu0 %v6155
      %v6246 = vpop.f32.mrf.mxu0
      %v6247 = vadd.f32 %v6188, %v6246
      %v6248 = vpop.f32.mrf.mxu0
      %v6249 = vadd.f32 %v6188, %v6248
      %6250 = vmatmul.bf16.gmra.mxu0 %v6156
      %v6251 = vpop.f32.mrf.mxu0
      %v6252 = vadd.f32 %v6188, %v6251
      %v6253 = vpop.f32.mrf.mxu0
      %v6254 = vadd.f32 %v6188, %v6253
      %6255 = vmatmul.bf16.gmra.mxu0 %v6157
      %v6256 = vpop.f32.mrf.mxu0
      %v6257 = vadd.f32 %v6188, %v6256
      %v6258 = vpop.f32.mrf.mxu0
      %v6259 = vadd.f32 %v6188, %v6258
      %6260 = vmatmul.bf16.gmra.mxu0 %v6158
      %v6261 = vpop.f32.mrf.mxu0
      %v6262 = vadd.f32 %v6188, %v6261
      %v6263 = vpop.f32.mrf.mxu0
      %v6264 = vadd.f32 %v6188, %v6263
      %6265 = vmatmul.bf16.gmra.mxu0 %v6159
      %v6266 = vpop.f32.mrf.mxu0
      %v6267 = vadd.f32 %v6188, %v6266
      %v6268 = vpop.f32.mrf.mxu0
      %v6269 = vadd.f32 %v6188, %v6268
      %6270 = vmatmul.bf16.gmra.mxu0 %v6160
      %v6271 = vpop.f32.mrf.mxu0
      %v6272 = vadd.f32 %v6188, %v6271
      %v6273 = vpop.f32.mrf.mxu0
      %v6274 = vadd.f32 %v6188, %v6273
      %6275 = vmatmul.bf16.gmra.mxu0 %v6161
      %v6276 = vpop.f32.mrf.mxu0
      %v6277 = vadd.f32 %v6188, %v6276
      %v6278 = vpop.f32.mrf.mxu0
      %v6279 = vadd.f32 %v6188, %v6278
      %6280 = vmatmul.bf16.gmra.mxu0 %v6162
      %v6281 = vpop.f32.mrf.mxu0
      %v6282 = vadd.f32 %v6188, %v6281
      %v6283 = vpop.f32.mrf.mxu0
      %v6284 = vadd.f32 %v6188, %v6283
      %6285 = vmatmul.bf16.gmra.mxu0 %v6163
      %v6286 = vpop.f32.mrf.mxu0
      %v6287 = vadd.f32 %v6188, %v6286
      %v6288 = vpop.f32.mrf.mxu0
      %v6289 = vadd.f32 %v6188, %v6288
      %6290 = vmatmul.bf16.gmra.mxu0 %v6164
      %v6291 = vpop.f32.mrf.mxu0
      %v6292 = vadd.f32 %v6188, %v6291
      %v6293 = vpop.f32.mrf.mxu0
      %v6294 = vadd.f32 %v6188, %v6293
      %6295 = vmatmul.bf16.gmra.mxu0 %v6165
      %v6296 = vpop.f32.mrf.mxu0
      %v6297 = vadd.f32 %v6188, %v6296
      %v6298 = vpop.f32.mrf.mxu0
      %v6299 = vadd.f32 %v6188, %v6298
      %6300 = vmatmul.bf16.gmra.mxu0 %v6166
      %v6301 = vpop.f32.mrf.mxu0
      %v6302 = vadd.f32 %v6188, %v6301
      %v6303 = vpop.f32.mrf.mxu0
      %v6304 = vadd.f32 %v6188, %v6303
      %6305 = vmatmul.bf16.gmra.mxu0 %v6167
      %v6306 = vpop.f32.mrf.mxu0
      %v6307 = vadd.f32 %v6188, %v6306
      %v6308 = vpop.f32.mrf.mxu0
      %v6309 = vadd.f32 %v6188, %v6308
      %6310 = vmatmul.bf16.gmra.mxu0 %v6168
      %v6311 = vpop.f32.mrf.mxu0
      %v6312 = vadd.f32 %v6188, %v6311
      %v6313 = vpop.f32.mrf.mxu0
      %v6314 = vadd.f32 %v6188, %v6313
      %6315 = vmatmul.bf16.gmra.mxu0 %v6169
      %v6316 = vpop.f32.mrf.mxu0
      %v6317 = vadd.f32 %v6188, %v6316
      %v6318 = vpop.f32.mrf.mxu0
      %v6319 = vadd.f32 %v6188, %v6318
      %6320 = vmatmul.bf16.gmra.mxu0 %v6170
      %v6321 = vpop.f32.mrf.mxu0
      %v6322 = vadd.f32 %v6188, %v6321
      %v6323 = vpop.f32.mrf.mxu0
      %v6324 = vadd.f32 %v6188, %v6323
      %6325 = vdwg.mxu0
      %v6326 = vpack.c.bf16 %v6249, %v6247
      %v6327 = vpack.c.bf16 %v6254, %v6252
      %v6328 = vpack.c.bf16 %v6259, %v6257
      %v6329 = vpack.c.bf16 %v6264, %v6262
      %v6330 = vpack.c.bf16 %v6269, %v6267
      %v6331 = vpack.c.bf16 %v6274, %v6272
      %v6332 = vpack.c.bf16 %v6279, %v6277
      %v6333 = vpack.c.bf16 %v6284, %v6282
      %v6334 = vpack.c.bf16 %v6289, %v6287
      %v6335 = vpack.c.bf16 %v6294, %v6292
      %v6336 = vpack.c.bf16 %v6299, %v6297
      %v6337 = vpack.c.bf16 %v6304, %v6302
      %v6338 = vpack.c.bf16 %v6309, %v6307
      %v6339 = vpack.c.bf16 %v6314, %v6312
      %v6340 = vpack.c.bf16 %v6319, %v6317
      %v6341 = vpack.c.bf16 %v6324, %v6322
      %v6342 = vsel %vm1514, %v5904, 0.0
      %v6343 = vsel %vm1514, %v5905, 0.0
      %v6344 = vadd.f32 %v6342, %v6343
      %v6345 = vsel %vm1514, %v5906, 0.0
      %v6346 = vadd.f32 %v6344, %v6345
      %v6347 = vsel %vm1514, %v5907, 0.0
      %v6348 = vadd.f32 %v6346, %v6347
      %v6349 = vsel %vm1514, %v5908, 0.0
      %v6350 = vadd.f32 %v6348, %v6349
      %v6351 = vsel %vm1514, %v5909, 0.0
      %v6352 = vadd.f32 %v6350, %v6351
      %v6353 = vsel %vm1514, %v5910, 0.0
      %v6354 = vadd.f32 %v6352, %v6353
      %v6355 = vsel %vm1514, %v5911, 0.0
      %v6356 = vadd.f32 %v6354, %v6355
      %v6357 = vsel %vm1514, %v5912, 0.0
      %v6358 = vadd.f32 %v6356, %v6357
      %v6359 = vsel %vm1514, %v5913, 0.0
      %v6360 = vadd.f32 %v6358, %v6359
      %v6361 = vsel %vm1514, %v5914, 0.0
      %v6362 = vadd.f32 %v6360, %v6361
      %v6363 = vsel %vm1514, %v5915, 0.0
      %v6364 = vadd.f32 %v6362, %v6363
      %v6365 = vsel %vm1514, %v5916, 0.0
      %v6366 = vadd.f32 %v6364, %v6365
      %v6367 = vsel %vm1514, %v5917, 0.0
      %v6368 = vadd.f32 %v6366, %v6367
      %v6369 = vsel %vm1514, %v5918, 0.0
      %v6370 = vadd.f32 %v6368, %v6369
      %v6371 = vsel %vm1514, %v5919, 0.0
      %v6372 = vadd.f32 %v6370, %v6371
      %v6373 = vsel %vm1514, %v5920, 0.0
      %v6374 = vadd.f32 %v6372, %v6373
      %v6375 = vsel %vm1514, %v5921, 0.0
      %v6376 = vadd.f32 %v6374, %v6375
      %v6377 = vsel %vm1514, %v5922, 0.0
      %v6378 = vadd.f32 %v6376, %v6377
      %v6379 = vsel %vm1514, %v5923, 0.0
      %v6380 = vadd.f32 %v6378, %v6379
      %v6381 = vsel %vm1514, %v5924, 0.0
      %v6382 = vadd.f32 %v6380, %v6381
      %v6383 = vsel %vm1514, %v5925, 0.0
      %v6384 = vadd.f32 %v6382, %v6383
      %v6385 = vsel %vm1514, %v5926, 0.0
      %v6386 = vadd.f32 %v6384, %v6385
      %v6387 = vsel %vm1514, %v5927, 0.0
      %v6388 = vadd.f32 %v6386, %v6387
      %v6389 = vsel %vm1514, %v5928, 0.0
      %v6390 = vadd.f32 %v6388, %v6389
      %v6391 = vsel %vm1514, %v5929, 0.0
      %v6392 = vadd.f32 %v6390, %v6391
      %v6393 = vsel %vm1514, %v5930, 0.0
      %v6394 = vadd.f32 %v6392, %v6393
      %v6395 = vsel %vm1514, %v5931, 0.0
      %v6396 = vadd.f32 %v6394, %v6395
      %v6397 = vsel %vm1514, %v5932, 0.0
      %v6398 = vadd.f32 %v6396, %v6397
      %v6399 = vsel %vm1514, %v5933, 0.0
      %v6400 = vadd.f32 %v6398, %v6399
      %v6401 = vsel %vm1514, %v5934, 0.0
      %v6402 = vadd.f32 %v6400, %v6401
      %v6403 = vsel %vm1514, %v5935, 0.0
      %v6404 = vadd.f32 %v6402, %v6403
      %v6405 = vrot.slane %v6404, 4
      %v6406 = vadd.f32 %v6404, %v6405
      %v6407 = vrot.slane %v6406, 2
      %v6408 = vadd.f32 %v6406, %v6407
      %v6409 = vrot.slane %v6408, 1
      %v6410 = vadd.f32 %v6408, %v6409
      %v6411 = vrcp.pop 256.0
      %v6412 = vmul.f32 256.0, %v6411
      %v6413 = vsub.f32 1.0, %v6412
      %v6414 = vmul.f32 %v6411, %v6413
      %v6415 = vadd.f32 %v6411, %v6414
      %vm6416 = vweird.f32 %v6411
      %v6417 = vsel %vm6416, %v6411, %v6415
      %v6418 = vmul.f32 %v6410, %v6417
      %v6419 = vsel %vm1514, %v6247, 0.0
      %v6420 = vsel %vm1514, %v6249, 0.0
      %v6421 = vadd.f32 %v6419, %v6420
      %v6422 = vsel %vm1514, %v6252, 0.0
      %v6423 = vadd.f32 %v6421, %v6422
      %v6424 = vsel %vm1514, %v6254, 0.0
      %v6425 = vadd.f32 %v6423, %v6424
      %v6426 = vsel %vm1514, %v6257, 0.0
      %v6427 = vadd.f32 %v6425, %v6426
      %v6428 = vsel %vm1514, %v6259, 0.0
      %v6429 = vadd.f32 %v6427, %v6428
      %v6430 = vsel %vm1514, %v6262, 0.0
      %v6431 = vadd.f32 %v6429, %v6430
      %v6432 = vsel %vm1514, %v6264, 0.0
      %v6433 = vadd.f32 %v6431, %v6432
      %v6434 = vsel %vm1514, %v6267, 0.0
      %v6435 = vadd.f32 %v6433, %v6434
      %v6436 = vsel %vm1514, %v6269, 0.0
      %v6437 = vadd.f32 %v6435, %v6436
      %v6438 = vsel %vm1514, %v6272, 0.0
      %v6439 = vadd.f32 %v6437, %v6438
      %v6440 = vsel %vm1514, %v6274, 0.0
      %v6441 = vadd.f32 %v6439, %v6440
      %v6442 = vsel %vm1514, %v6277, 0.0
      %v6443 = vadd.f32 %v6441, %v6442
      %v6444 = vsel %vm1514, %v6279, 0.0
      %v6445 = vadd.f32 %v6443, %v6444
      %v6446 = vsel %vm1514, %v6282, 0.0
      %v6447 = vadd.f32 %v6445, %v6446
      %v6448 = vsel %vm1514, %v6284, 0.0
      %v6449 = vadd.f32 %v6447, %v6448
      %v6450 = vsel %vm1514, %v6287, 0.0
      %v6451 = vadd.f32 %v6449, %v6450
      %v6452 = vsel %vm1514, %v6289, 0.0
      %v6453 = vadd.f32 %v6451, %v6452
      %v6454 = vsel %vm1514, %v6292, 0.0
      %v6455 = vadd.f32 %v6453, %v6454
      %v6456 = vsel %vm1514, %v6294, 0.0
      %v6457 = vadd.f32 %v6455, %v6456
      %v6458 = vsel %vm1514, %v6297, 0.0
      %v6459 = vadd.f32 %v6457, %v6458
      %v6460 = vsel %vm1514, %v6299, 0.0
      %v6461 = vadd.f32 %v6459, %v6460
      %v6462 = vsel %vm1514, %v6302, 0.0
      %v6463 = vadd.f32 %v6461, %v6462
      %v6464 = vsel %vm1514, %v6304, 0.0
      %v6465 = vadd.f32 %v6463, %v6464
      %v6466 = vsel %vm1514, %v6307, 0.0
      %v6467 = vadd.f32 %v6465, %v6466
      %v6468 = vsel %vm1514, %v6309, 0.0
      %v6469 = vadd.f32 %v6467, %v6468
      %v6470 = vsel %vm1514, %v6312, 0.0
      %v6471 = vadd.f32 %v6469, %v6470
      %v6472 = vsel %vm1514, %v6314, 0.0
      %v6473 = vadd.f32 %v6471, %v6472
      %v6474 = vsel %vm1514, %v6317, 0.0
      %v6475 = vadd.f32 %v6473, %v6474
      %v6476 = vsel %vm1514, %v6319, 0.0
      %v6477 = vadd.f32 %v6475, %v6476
      %v6478 = vsel %vm1514, %v6322, 0.0
      %v6479 = vadd.f32 %v6477, %v6478
      %v6480 = vsel %vm1514, %v6324, 0.0
      %v6481 = vadd.f32 %v6479, %v6480
      %v6482 = vrot.slane %v6481, 4
      %v6483 = vadd.f32 %v6481, %v6482
      %v6484 = vrot.slane %v6483, 2
      %v6485 = vadd.f32 %v6483, %v6484
      %v6486 = vrot.slane %v6485, 1
      %v6487 = vadd.f32 %v6485, %v6486
      %v6488 = vmul.f32 %v6487, %v6417
      %6490 = vrot.lane.b32.xlu0 %v6488, 64
      %v6491 = vpop.permute.xlu0 %6490
      %v6493 = vsel %vm1514, %v6418, %v6491
      %v6494 = vld [vmem:[%s6] sm:$0xff]
      %v6495 = vld [vmem:[%s6 + $0x8] sm:$0xff]
      %v6496 = vld [vmem:[%s6 + $0x10] sm:$0xff]
      %v6497 = vld [vmem:[%s6 + $0x18] sm:$0xff]
      %v6498 = vld [vmem:[%s6 + $0x20] sm:$0xff]
      %v6499 = vld [vmem:[%s6 + $0x28] sm:$0xff]
      %v6500 = vld [vmem:[%s6 + $0x30] sm:$0xff]
      %v6501 = vld [vmem:[%s6 + $0x38] sm:$0xff]
      %v6502 = vld [vmem:[%s6 + $0x40] sm:$0xff]
      %v6503 = vld [vmem:[%s6 + $0x48] sm:$0xff]
      %v6504 = vld [vmem:[%s6 + $0x50] sm:$0xff]
      %v6505 = vld [vmem:[%s6 + $0x58] sm:$0xff]
      %v6506 = vld [vmem:[%s6 + $0x60] sm:$0xff]
      %v6507 = vld [vmem:[%s6 + $0x68] sm:$0xff]
      %v6508 = vld [vmem:[%s6 + $0x70] sm:$0xff]
      %v6509 = vld [vmem:[%s6 + $0x78] sm:$0xff]
      %v6510 = vld [vmem:[%s9 + $0x3] sm:$0x1]
      %6511 = vmatpush.msra.mxu0 %v6509
      %6512 = vmatpush.msra.mxu0 %v6508
      %6513 = vmatpush.msra.mxu0 %v6507
      %6514 = vmatpush.msra.mxu0 %v6506
      %6515 = vmatpush.msra.mxu0 %v6505
      %6516 = vmatpush.msra.mxu0 %v6504
      %6517 = vmatpush.msra.mxu0 %v6503
      %6518 = vmatpush.msra.mxu0 %v6502
      %6519 = vmatpush.msra.mxu0 %v6501
      %6520 = vmatpush.msra.mxu0 %v6500
      %6521 = vmatpush.msra.mxu0 %v6499
      %6522 = vmatpush.msra.mxu0 %v6498
      %6523 = vmatpush.msra.mxu0 %v6497
      %6524 = vmatpush.msra.mxu0 %v6496
      %6525 = vmatpush.msra.mxu0 %v6495
      %6526 = vmatpush.msra.mxu0 %v6494
      %6527 = vmatmul.f32.gmra.mxu0 %v6493
      %v6528 = vpop.f32.mrf.mxu0
      %v6529 = vadd.f32 %v6510, %v6528
      %6530 = vdwg.mxu0
      %v6531 = vmax.f32 %v6529, 0.0
      %v6532 = vld [vmem:[%s7] sm:$0xff]
      %v6533 = vld [vmem:[%s9 + $0x4] sm:$0x1]
      %vm6534 = vcmask 64512
      %v6536 = vsel %vm6534, %v6531, 0
      %6538 = vmatpush.msra.mxu0 0.0
      %6539 = vmatpush.msra.mxu0 0.0
      %6540 = vmatpush.msra.mxu0 0.0
      %6541 = vmatpush.msra.mxu0 0.0
      %6542 = vmatpush.msra.mxu0 0.0
      %6543 = vmatpush.msra.mxu0 0.0
      %6544 = vmatpush.msra.mxu0 0.0
      %6545 = vmatpush.msra.mxu0 0.0
      %6546 = vmatpush.msra.mxu0 0.0
      %6547 = vmatpush.msra.mxu0 0.0
      %6548 = vmatpush.msra.mxu0 0.0
      %6549 = vmatpush.msra.mxu0 0.0
      %6550 = vmatpush.msra.mxu0 0.0
      %6551 = vmatpush.msra.mxu0 0.0
      %6552 = vmatpush.msra.mxu0 0.0
      %6553 = vmatpush.msra.mxu0 %v6532
      %6554 = vmatmul.f32.gmra.mxu0 %v6536
      %v6555 = vpop.f32.mrf.mxu0
      %v6556 = vadd.f32 %v6533, %v6555
      %6557 = vdwg.mxu0
      %v6558 = vxor.u32 %v6556, 2147483648
      %v6559 = vmul.f32 %v6558, 1.442695
      %v6560 = vpow.pop %v6559
      %v6561 = vadd.f32 %v6560, 1.0
      %v6562 = vrcp.pop %v6561
      %v6563 = vmul.f32 %v6561, %v6562
      %v6564 = vsub.f32 1.0, %v6563
      %v6565 = vmul.f32 %v6562, %v6564
      %v6566 = vadd.f32 %v6562, %v6565
      %vm6567 = vweird.f32 %v6561
      %vm6568 = vweird.f32 %v6562
      %vm6569 = vmor %vm6567, %vm6568
      %v6570 = vsel %vm6569, %v6562, %v6566
      %v6571 = vand.u32 2147483647, %v6561
      %vm6572 = vcmp.eq.f32.partialorder %v6571, 8.507059e+37
      %v6573 = vand.u32 %v6561, 2147483648
      %v6574 = vor.u32 1.1754944e-38, %v6573
      %v6575 = vsel %vm6572, %v6574, %v6570
      %v6576 = vmul.f32 1.0, %v6575
      %v6577 = vlaneseq
      %v6578 = vshrl.u32 %v6577, 7
      %v6579 = vadd.s32 %v6578, 8
      %v6580 = vadd.s32 %v6578, 16
      %v6581 = vadd.s32 %v6578, 24
      %v6582 = vadd.s32 %v6578, 32
      %v6583 = vadd.s32 %v6578, 40
      %v6584 = vadd.s32 %v6578, 48
      %v6585 = vadd.s32 %v6578, 56
      %v6586 = vadd.s32 %v6578, 64
      %v6587 = vadd.s32 %v6578, 72
      %v6588 = vadd.s32 %v6578, 80
      %v6589 = vadd.s32 %v6578, 88
      %v6590 = vadd.s32 %v6578, 96
      %v6591 = vadd.s32 %v6578, 104
      %v6592 = vadd.s32 %v6578, 112
      %v6593 = vadd.s32 %v6578, 120
      %v6594 = vlaneseq
      %v6595 = vand.u32 %v6594, 127
      %vm6596 = vcmp.eq.s32.totalorder %v6578, %v6595
      %vm6597 = vcmp.eq.s32.totalorder %v6579, %v6595
      %vm6598 = vcmp.eq.s32.totalorder %v6580, %v6595
      %vm6599 = vcmp.eq.s32.totalorder %v6581, %v6595
      %vm6600 = vcmp.eq.s32.totalorder %v6582, %v6595
      %vm6601 = vcmp.eq.s32.totalorder %v6583, %v6595
      %vm6602 = vcmp.eq.s32.totalorder %v6584, %v6595
      %vm6603 = vcmp.eq.s32.totalorder %v6585, %v6595
      %vm6604 = vcmp.eq.s32.totalorder %v6586, %v6595
      %vm6605 = vcmp.eq.s32.totalorder %v6587, %v6595
      %vm6606 = vcmp.eq.s32.totalorder %v6588, %v6595
      %vm6607 = vcmp.eq.s32.totalorder %v6589, %v6595
      %vm6608 = vcmp.eq.s32.totalorder %v6590, %v6595
      %vm6609 = vcmp.eq.s32.totalorder %v6591, %v6595
      %vm6610 = vcmp.eq.s32.totalorder %v6592, %v6595
      %vm6611 = vcmp.eq.s32.totalorder %v6593, %v6595
      %v6612 = vperm.slane %v6576, 0
      %v6613 = vsel %vm6596, %v6612, 0.0
      %v6614 = vsel %vm6597, %v6612, 0.0
      %v6615 = vsel %vm6598, %v6612, 0.0
      %v6616 = vsel %vm6599, %v6612, 0.0
      %v6617 = vsel %vm6600, %v6612, 0.0
      %v6618 = vsel %vm6601, %v6612, 0.0
      %v6619 = vsel %vm6602, %v6612, 0.0
      %v6620 = vsel %vm6603, %v6612, 0.0
      %v6621 = vsel %vm6604, %v6612, 0.0
      %v6622 = vsel %vm6605, %v6612, 0.0
      %v6623 = vsel %vm6606, %v6612, 0.0
      %v6624 = vsel %vm6607, %v6612, 0.0
      %v6625 = vsel %vm6608, %v6612, 0.0
      %v6626 = vsel %vm6609, %v6612, 0.0
      %v6627 = vsel %vm6610, %v6612, 0.0
      %v6628 = vsel %vm6611, %v6612, 0.0
      %v6629 = vld [vmem:[%s8] sm:$0xff]
      %v6630 = vld [vmem:[%s8 + $0x8] sm:$0xff]
      %v6631 = vld [vmem:[%s8 + $0x10] sm:$0xff]
      %v6632 = vld [vmem:[%s8 + $0x18] sm:$0xff]
      %v6633 = vld [vmem:[%s8 + $0x20] sm:$0xff]
      %v6634 = vld [vmem:[%s8 + $0x28] sm:$0xff]
      %v6635 = vld [vmem:[%s8 + $0x30] sm:$0xff]
      %v6636 = vld [vmem:[%s8 + $0x38] sm:$0xff]
      %v6637 = vld [vmem:[%s8 + $0x40] sm:$0xff]
      %v6638 = vld [vmem:[%s8 + $0x48] sm:$0xff]
      %v6639 = vld [vmem:[%s8 + $0x50] sm:$0xff]
      %v6640 = vld [vmem:[%s8 + $0x58] sm:$0xff]
      %v6641 = vld [vmem:[%s8 + $0x60] sm:$0xff]
      %v6642 = vld [vmem:[%s8 + $0x68] sm:$0xff]
      %v6643 = vld [vmem:[%s8 + $0x70] sm:$0xff]
      %v6644 = vld [vmem:[%s8 + $0x78] sm:$0xff]
      %6645 = vmatpush.msra.mxu0 %v6644
      %6646 = vmatpush.msra.mxu0 %v6643
      %6647 = vmatpush.msra.mxu0 %v6642
      %6648 = vmatpush.msra.mxu0 %v6641
      %6649 = vmatpush.msra.mxu0 %v6640
      %6650 = vmatpush.msra.mxu0 %v6639
      %6651 = vmatpush.msra.mxu0 %v6638
      %6652 = vmatpush.msra.mxu0 %v6637
      %6653 = vmatpush.msra.mxu0 %v6636
      %6654 = vmatpush.msra.mxu0 %v6635
      %6655 = vmatpush.msra.mxu0 %v6634
      %6656 = vmatpush.msra.mxu0 %v6633
      %6657 = vmatpush.msra.mxu0 %v6632
      %6658 = vmatpush.msra.mxu0 %v6631
      %6659 = vmatpush.msra.mxu0 %v6630
      %6660 = vmatpush.msra.mxu0 %v6629
      %6661 = vmatmul.f32.gmra.mxu0 %v6613
      %v6662 = vpop.f32.mrf.mxu0
      %v6663 = vadd.f32 0.0, %v6662
      %6664 = vmatmul.f32.gmra.mxu0 %v6614
      %v6665 = vpop.f32.mrf.mxu0
      %v6666 = vadd.f32 0.0, %v6665
      %6667 = vmatmul.f32.gmra.mxu0 %v6615
      %v6668 = vpop.f32.mrf.mxu0
      %v6669 = vadd.f32 0.0, %v6668
      %6670 = vmatmul.f32.gmra.mxu0 %v6616
      %v6671 = vpop.f32.mrf.mxu0
      %v6672 = vadd.f32 0.0, %v6671
      %6673 = vmatmul.f32.gmra.mxu0 %v6617
      %v6674 = vpop.f32.mrf.mxu0
      %v6675 = vadd.f32 0.0, %v6674
      %6676 = vmatmul.f32.gmra.mxu0 %v6618
      %v6677 = vpop.f32.mrf.mxu0
      %v6678 = vadd.f32 0.0, %v6677
      %6679 = vmatmul.f32.gmra.mxu0 %v6619
      %v6680 = vpop.f32.mrf.mxu0
      %v6681 = vadd.f32 0.0, %v6680
      %6682 = vmatmul.f32.gmra.mxu0 %v6620
      %v6683 = vpop.f32.mrf.mxu0
      %v6684 = vadd.f32 0.0, %v6683
      %6685 = vmatmul.f32.gmra.mxu0 %v6621
      %v6686 = vpop.f32.mrf.mxu0
      %v6687 = vadd.f32 0.0, %v6686
      %6688 = vmatmul.f32.gmra.mxu0 %v6622
      %v6689 = vpop.f32.mrf.mxu0
      %v6690 = vadd.f32 0.0, %v6689
      %6691 = vmatmul.f32.gmra.mxu0 %v6623
      %v6692 = vpop.f32.mrf.mxu0
      %v6693 = vadd.f32 0.0, %v6692
      %6694 = vmatmul.f32.gmra.mxu0 %v6624
      %v6695 = vpop.f32.mrf.mxu0
      %v6696 = vadd.f32 0.0, %v6695
      %6697 = vmatmul.f32.gmra.mxu0 %v6625
      %v6698 = vpop.f32.mrf.mxu0
      %v6699 = vadd.f32 0.0, %v6698
      %6700 = vmatmul.f32.gmra.mxu0 %v6626
      %v6701 = vpop.f32.mrf.mxu0
      %v6702 = vadd.f32 0.0, %v6701
      %6703 = vmatmul.f32.gmra.mxu0 %v6627
      %v6704 = vpop.f32.mrf.mxu0
      %v6705 = vadd.f32 0.0, %v6704
      %6706 = vmatmul.f32.gmra.mxu0 %v6628
      %v6707 = vpop.f32.mrf.mxu0
      %v6708 = vadd.f32 0.0, %v6707
      %6709 = vdwg.mxu0
      %v6710 = vpack.c.bf16 %v6663, %v6663
      %v6711 = vpack.c.bf16 %v6666, %v6666
      %v6712 = vpack.c.bf16 %v6669, %v6669
      %v6713 = vpack.c.bf16 %v6672, %v6672
      %v6714 = vpack.c.bf16 %v6675, %v6675
      %v6715 = vpack.c.bf16 %v6678, %v6678
      %v6716 = vpack.c.bf16 %v6681, %v6681
      %v6717 = vpack.c.bf16 %v6684, %v6684
      %v6718 = vpack.c.bf16 %v6687, %v6687
      %v6719 = vpack.c.bf16 %v6690, %v6690
      %v6720 = vpack.c.bf16 %v6693, %v6693
      %v6721 = vpack.c.bf16 %v6696, %v6696
      %v6722 = vpack.c.bf16 %v6699, %v6699
      %v6723 = vpack.c.bf16 %v6702, %v6702
      %v6724 = vpack.c.bf16 %v6705, %v6705
      %v6725 = vpack.c.bf16 %v6708, %v6708
      %v6734 = vunpack.c.l.b16 %v6718
      %v6735 = vunpack.c.l.b16 %v6719
      %v6736 = vunpack.c.l.b16 %v6720
      %v6737 = vunpack.c.l.b16 %v6721
      %v6738 = vunpack.c.l.b16 %v6722
      %v6739 = vunpack.c.l.b16 %v6723
      %v6740 = vunpack.c.l.b16 %v6724
      %v6741 = vunpack.c.l.b16 %v6725
      %v6742 = vpack.c.b16 %v6735, %v6734
      %v6743 = vpack.c.b16 %v6737, %v6736
      %v6744 = vpack.c.b16 %v6739, %v6738
      %v6745 = vpack.c.b16 %v6741, %v6740
      %v6751 = vsel %vm1514, %v6326, 0
      %v6754 = vsel %vm1514, %v6327, 0
      %v6757 = vsel %vm1514, %v6328, 0
      %v6760 = vsel %vm1514, %v6329, 0
      %v6763 = vsel %vm1514, %v6330, 0
      %v6766 = vsel %vm1514, %v6331, 0
      %v6769 = vsel %vm1514, %v6332, 0
      %v6772 = vsel %vm1514, %v6333, 0
      %v6775 = vsel %vm1514, %v6334, 0
      %v6778 = vsel %vm1514, %v6335, 0
      %v6781 = vsel %vm1514, %v6336, 0
      %v6784 = vsel %vm1514, %v6337, 0
      %v6787 = vsel %vm1514, %v6338, 0
      %v6790 = vsel %vm1514, %v6339, 0
      %v6793 = vsel %vm1514, %v6340, 0
      %v6796 = vsel %vm1514, %v6341, 0
      %6798 = vmatpush.bf16.msra.mxu0 0
      %6799 = vmatpush.bf16.msra.mxu0 0
      %6800 = vmatpush.bf16.msra.mxu0 0
      %6801 = vmatpush.bf16.msra.mxu0 0
      %6802 = vmatpush.bf16.msra.mxu0 %v6745
      %6803 = vmatpush.bf16.msra.mxu0 %v6744
      %6804 = vmatpush.bf16.msra.mxu0 %v6743
      %6805 = vmatpush.bf16.msra.mxu0 %v6742
      %6806 = vmatmul.bf16.gmra.mxu0 %v6751
      %v6807 = vpop.f32.mrf.mxu0
      %v6808 = vadd.f32 0.0, %v6807
      %v6809 = vpop.f32.mrf.mxu0
      %v6810 = vadd.f32 0.0, %v6809
      %6811 = vmatmul.bf16.gmra.mxu0 %v6754
      %v6812 = vpop.f32.mrf.mxu0
      %v6813 = vadd.f32 0.0, %v6812
      %v6814 = vpop.f32.mrf.mxu0
      %v6815 = vadd.f32 0.0, %v6814
      %6816 = vmatmul.bf16.gmra.mxu0 %v6757
      %v6817 = vpop.f32.mrf.mxu0
      %v6818 = vadd.f32 0.0, %v6817
      %v6819 = vpop.f32.mrf.mxu0
      %v6820 = vadd.f32 0.0, %v6819
      %6821 = vmatmul.bf16.gmra.mxu0 %v6760
      %v6822 = vpop.f32.mrf.mxu0
      %v6823 = vadd.f32 0.0, %v6822
      %v6824 = vpop.f32.mrf.mxu0
      %v6825 = vadd.f32 0.0, %v6824
      %6826 = vmatmul.bf16.gmra.mxu0 %v6763
      %v6827 = vpop.f32.mrf.mxu0
      %v6828 = vadd.f32 0.0, %v6827
      %v6829 = vpop.f32.mrf.mxu0
      %v6830 = vadd.f32 0.0, %v6829
      %6831 = vmatmul.bf16.gmra.mxu0 %v6766
      %v6832 = vpop.f32.mrf.mxu0
      %v6833 = vadd.f32 0.0, %v6832
      %v6834 = vpop.f32.mrf.mxu0
      %v6835 = vadd.f32 0.0, %v6834
      %6836 = vmatmul.bf16.gmra.mxu0 %v6769
      %v6837 = vpop.f32.mrf.mxu0
      %v6838 = vadd.f32 0.0, %v6837
      %v6839 = vpop.f32.mrf.mxu0
      %v6840 = vadd.f32 0.0, %v6839
      %6841 = vmatmul.bf16.gmra.mxu0 %v6772
      %v6842 = vpop.f32.mrf.mxu0
      %v6843 = vadd.f32 0.0, %v6842
      %v6844 = vpop.f32.mrf.mxu0
      %v6845 = vadd.f32 0.0, %v6844
      %6846 = vmatmul.bf16.gmra.mxu0 %v6775
      %v6847 = vpop.f32.mrf.mxu0
      %v6848 = vadd.f32 0.0, %v6847
      %v6849 = vpop.f32.mrf.mxu0
      %v6850 = vadd.f32 0.0, %v6849
      %6851 = vmatmul.bf16.gmra.mxu0 %v6778
      %v6852 = vpop.f32.mrf.mxu0
      %v6853 = vadd.f32 0.0, %v6852
      %v6854 = vpop.f32.mrf.mxu0
      %v6855 = vadd.f32 0.0, %v6854
      %6856 = vmatmul.bf16.gmra.mxu0 %v6781
      %v6857 = vpop.f32.mrf.mxu0
      %v6858 = vadd.f32 0.0, %v6857
      %v6859 = vpop.f32.mrf.mxu0
      %v6860 = vadd.f32 0.0, %v6859
      %6861 = vmatmul.bf16.gmra.mxu0 %v6784
      %v6862 = vpop.f32.mrf.mxu0
      %v6863 = vadd.f32 0.0, %v6862
      %v6864 = vpop.f32.mrf.mxu0
      %v6865 = vadd.f32 0.0, %v6864
      %6866 = vmatmul.bf16.gmra.mxu0 %v6787
      %v6867 = vpop.f32.mrf.mxu0
      %v6868 = vadd.f32 0.0, %v6867
      %v6869 = vpop.f32.mrf.mxu0
      %v6870 = vadd.f32 0.0, %v6869
      %6871 = vmatmul.bf16.gmra.mxu0 %v6790
      %v6872 = vpop.f32.mrf.mxu0
      %v6873 = vadd.f32 0.0, %v6872
      %v6874 = vpop.f32.mrf.mxu0
      %v6875 = vadd.f32 0.0, %v6874
      %6876 = vmatmul.bf16.gmra.mxu0 %v6793
      %v6877 = vpop.f32.mrf.mxu0
      %v6878 = vadd.f32 0.0, %v6877
      %v6879 = vpop.f32.mrf.mxu0
      %v6880 = vadd.f32 0.0, %v6879
      %6881 = vmatmul.bf16.gmra.mxu0 %v6796
      %v6882 = vpop.f32.mrf.mxu0
      %v6883 = vadd.f32 0.0, %v6882
      %v6884 = vpop.f32.mrf.mxu0
      %v6885 = vadd.f32 0.0, %v6884
      %6886 = vdwg.mxu0
      %v6895 = vunpack.c.l.b16 %v6710
      %v6896 = vunpack.c.l.b16 %v6711
      %v6897 = vunpack.c.l.b16 %v6712
      %v6898 = vunpack.c.l.b16 %v6713
      %v6899 = vunpack.c.l.b16 %v6714
      %v6900 = vunpack.c.l.b16 %v6715
      %v6901 = vunpack.c.l.b16 %v6716
      %v6902 = vunpack.c.l.b16 %v6717
      %v6903 = vpack.c.b16 %v6896, %v6895
      %v6904 = vpack.c.b16 %v6898, %v6897
      %v6905 = vpack.c.b16 %v6900, %v6899
      %v6906 = vpack.c.b16 %v6902, %v6901
      %6911 = vmatpush.bf16.msra.mxu0 0
      %6912 = vmatpush.bf16.msra.mxu0 0
      %6913 = vmatpush.bf16.msra.mxu0 0
      %6914 = vmatpush.bf16.msra.mxu0 0
      %6915 = vmatpush.bf16.msra.mxu0 %v6906
      %6916 = vmatpush.bf16.msra.mxu0 %v6905
      %6917 = vmatpush.bf16.msra.mxu0 %v6904
      %6918 = vmatpush.bf16.msra.mxu0 %v6903
      %6919 = vmatmul.bf16.gmra.mxu0 %v5987
      %v6920 = vpop.f32.mrf.mxu0
      %v6921 = vadd.f32 %v6808, %v6920
      %v6922 = vpop.f32.mrf.mxu0
      %v6923 = vadd.f32 %v6810, %v6922
      %6924 = vmatmul.bf16.gmra.mxu0 %v5990
      %v6925 = vpop.f32.mrf.mxu0
      %v6926 = vadd.f32 %v6813, %v6925
      %v6927 = vpop.f32.mrf.mxu0
      %v6928 = vadd.f32 %v6815, %v6927
      %6929 = vmatmul.bf16.gmra.mxu0 %v5993
      %v6930 = vpop.f32.mrf.mxu0
      %v6931 = vadd.f32 %v6818, %v6930
      %v6932 = vpop.f32.mrf.mxu0
      %v6933 = vadd.f32 %v6820, %v6932
      %6934 = vmatmul.bf16.gmra.mxu0 %v5996
      %v6935 = vpop.f32.mrf.mxu0
      %v6936 = vadd.f32 %v6823, %v6935
      %v6937 = vpop.f32.mrf.mxu0
      %v6938 = vadd.f32 %v6825, %v6937
      %6939 = vmatmul.bf16.gmra.mxu0 %v5999
      %v6940 = vpop.f32.mrf.mxu0
      %v6941 = vadd.f32 %v6828, %v6940
      %v6942 = vpop.f32.mrf.mxu0
      %v6943 = vadd.f32 %v6830, %v6942
      %6944 = vmatmul.bf16.gmra.mxu0 %v6002
      %v6945 = vpop.f32.mrf.mxu0
      %v6946 = vadd.f32 %v6833, %v6945
      %v6947 = vpop.f32.mrf.mxu0
      %v6948 = vadd.f32 %v6835, %v6947
      %6949 = vmatmul.bf16.gmra.mxu0 %v6005
      %v6950 = vpop.f32.mrf.mxu0
      %v6951 = vadd.f32 %v6838, %v6950
      %v6952 = vpop.f32.mrf.mxu0
      %v6953 = vadd.f32 %v6840, %v6952
      %6954 = vmatmul.bf16.gmra.mxu0 %v6008
      %v6955 = vpop.f32.mrf.mxu0
      %v6956 = vadd.f32 %v6843, %v6955
      %v6957 = vpop.f32.mrf.mxu0
      %v6958 = vadd.f32 %v6845, %v6957
      %6959 = vmatmul.bf16.gmra.mxu0 %v6011
      %v6960 = vpop.f32.mrf.mxu0
      %v6961 = vadd.f32 %v6848, %v6960
      %v6962 = vpop.f32.mrf.mxu0
      %v6963 = vadd.f32 %v6850, %v6962
      %6964 = vmatmul.bf16.gmra.mxu0 %v6014
      %v6965 = vpop.f32.mrf.mxu0
      %v6966 = vadd.f32 %v6853, %v6965
      %v6967 = vpop.f32.mrf.mxu0
      %v6968 = vadd.f32 %v6855, %v6967
      %6969 = vmatmul.bf16.gmra.mxu0 %v6017
      %v6970 = vpop.f32.mrf.mxu0
      %v6971 = vadd.f32 %v6858, %v6970
      %v6972 = vpop.f32.mrf.mxu0
      %v6973 = vadd.f32 %v6860, %v6972
      %6974 = vmatmul.bf16.gmra.mxu0 %v6020
      %v6975 = vpop.f32.mrf.mxu0
      %v6976 = vadd.f32 %v6863, %v6975
      %v6977 = vpop.f32.mrf.mxu0
      %v6978 = vadd.f32 %v6865, %v6977
      %6979 = vmatmul.bf16.gmra.mxu0 %v6023
      %v6980 = vpop.f32.mrf.mxu0
      %v6981 = vadd.f32 %v6868, %v6980
      %v6982 = vpop.f32.mrf.mxu0
      %v6983 = vadd.f32 %v6870, %v6982
      %6984 = vmatmul.bf16.gmra.mxu0 %v6026
      %v6985 = vpop.f32.mrf.mxu0
      %v6986 = vadd.f32 %v6873, %v6985
      %v6987 = vpop.f32.mrf.mxu0
      %v6988 = vadd.f32 %v6875, %v6987
      %6989 = vmatmul.bf16.gmra.mxu0 %v6029
      %v6990 = vpop.f32.mrf.mxu0
      %v6991 = vadd.f32 %v6878, %v6990
      %v6992 = vpop.f32.mrf.mxu0
      %v6993 = vadd.f32 %v6880, %v6992
      %6994 = vmatmul.bf16.gmra.mxu0 %v6032
      %v6995 = vpop.f32.mrf.mxu0
      %v6996 = vadd.f32 %v6883, %v6995
      %v6997 = vpop.f32.mrf.mxu0
      %v6998 = vadd.f32 %v6885, %v6997
      %6999 = vdwg.mxu0
      %v7000 = vld [vmem:[%s9 + $0x5] sm:$0x1]
      %v7001 = vperm.slane %v7000, 0
      %v7002 = vadd.f32 %v6921, %v7001
      %v7003 = vadd.f32 %v6923, %v7001
      %v7004 = vadd.f32 %v6926, %v7001
      %v7005 = vadd.f32 %v6928, %v7001
      %v7006 = vadd.f32 %v6931, %v7001
      %v7007 = vadd.f32 %v6933, %v7001
      %v7008 = vadd.f32 %v6936, %v7001
      %v7009 = vadd.f32 %v6938, %v7001
      %v7010 = vadd.f32 %v6941, %v7001
      %v7011 = vadd.f32 %v6943, %v7001
      %v7012 = vadd.f32 %v6946, %v7001
      %v7013 = vadd.f32 %v6948, %v7001
      %v7014 = vadd.f32 %v6951, %v7001
      %v7015 = vadd.f32 %v6953, %v7001
      %v7016 = vadd.f32 %v6956, %v7001
      %v7017 = vadd.f32 %v6958, %v7001
      %v7018 = vadd.f32 %v6961, %v7001
      %v7019 = vadd.f32 %v6963, %v7001
      %v7020 = vadd.f32 %v6966, %v7001
      %v7021 = vadd.f32 %v6968, %v7001
      %v7022 = vadd.f32 %v6971, %v7001
      %v7023 = vadd.f32 %v6973, %v7001
      %v7024 = vadd.f32 %v6976, %v7001
      %v7025 = vadd.f32 %v6978, %v7001
      %v7026 = vadd.f32 %v6981, %v7001
      %v7027 = vadd.f32 %v6983, %v7001
      %v7028 = vadd.f32 %v6986, %v7001
      %v7029 = vadd.f32 %v6988, %v7001
      %v7030 = vadd.f32 %v6991, %v7001
      %v7031 = vadd.f32 %v6993, %v7001
      %v7032 = vadd.f32 %v6996, %v7001
      %v7033 = vadd.f32 %v6998, %v7001
      %v7034 = vpack.c.bf16 %v7002, %v7002
      %v7035 = vpack.c.bf16 %v7003, %v7003
      %v7036 = vpack.c.bf16 %v7004, %v7004
      %v7037 = vpack.c.bf16 %v7005, %v7005
      %v7038 = vpack.c.bf16 %v7006, %v7006
      %v7039 = vpack.c.bf16 %v7007, %v7007
      %v7040 = vpack.c.bf16 %v7008, %v7008
      %v7041 = vpack.c.bf16 %v7009, %v7009
      %v7042 = vpack.c.bf16 %v7010, %v7010
      %v7043 = vpack.c.bf16 %v7011, %v7011
      %v7044 = vpack.c.bf16 %v7012, %v7012
      %v7045 = vpack.c.bf16 %v7013, %v7013
      %v7046 = vpack.c.bf16 %v7014, %v7014
      %v7047 = vpack.c.bf16 %v7015, %v7015
      %v7048 = vpack.c.bf16 %v7016, %v7016
      %v7049 = vpack.c.bf16 %v7017, %v7017
      %v7050 = vpack.c.bf16 %v7018, %v7018
      %v7051 = vpack.c.bf16 %v7019, %v7019
      %v7052 = vpack.c.bf16 %v7020, %v7020
      %v7053 = vpack.c.bf16 %v7021, %v7021
      %v7054 = vpack.c.bf16 %v7022, %v7022
      %v7055 = vpack.c.bf16 %v7023, %v7023
      %v7056 = vpack.c.bf16 %v7024, %v7024
      %v7057 = vpack.c.bf16 %v7025, %v7025
      %v7058 = vpack.c.bf16 %v7026, %v7026
      %v7059 = vpack.c.bf16 %v7027, %v7027
      %v7060 = vpack.c.bf16 %v7028, %v7028
      %v7061 = vpack.c.bf16 %v7029, %v7029
      %v7062 = vpack.c.bf16 %v7030, %v7030
      %v7063 = vpack.c.bf16 %v7031, %v7031
      %v7064 = vpack.c.bf16 %v7032, %v7032
      %v7065 = vpack.c.bf16 %v7033, %v7033
      %7066 = vst [vmem:[%s359] sm:$0xf] %v7034
      %7067 = vst [vmem:[%s359 + $0x4] sm:$0xf] %v7035
      %7068 = vst [vmem:[%s359 + $0x8] sm:$0xf] %v7036
      %7069 = vst [vmem:[%s359 + $0xc] sm:$0xf] %v7037
      %7070 = vst [vmem:[%s359 + $0x10] sm:$0xf] %v7038
      %7071 = vst [vmem:[%s359 + $0x14] sm:$0xf] %v7039
      %7072 = vst [vmem:[%s359 + $0x18] sm:$0xf] %v7040
      %7073 = vst [vmem:[%s359 + $0x1c] sm:$0xf] %v7041
      %7074 = vst [vmem:[%s359 + $0x20] sm:$0xf] %v7042
      %7075 = vst [vmem:[%s359 + $0x24] sm:$0xf] %v7043
      %7076 = vst [vmem:[%s359 + $0x28] sm:$0xf] %v7044
      %7077 = vst [vmem:[%s359 + $0x2c] sm:$0xf] %v7045
      %7078 = vst [vmem:[%s359 + $0x30] sm:$0xf] %v7046
      %7079 = vst [vmem:[%s359 + $0x34] sm:$0xf] %v7047
      %7080 = vst [vmem:[%s359 + $0x38] sm:$0xf] %v7048
      %7081 = vst [vmem:[%s359 + $0x3c] sm:$0xf] %v7049
      %7082 = vst [vmem:[%s359 + $0x40] sm:$0xf] %v7050
      %7083 = vst [vmem:[%s359 + $0x44] sm:$0xf] %v7051
      %7084 = vst [vmem:[%s359 + $0x48] sm:$0xf] %v7052
      %7085 = vst [vmem:[%s359 + $0x4c] sm:$0xf] %v7053
      %7086 = vst [vmem:[%s359 + $0x50] sm:$0xf] %v7054
      %7087 = vst [vmem:[%s359 + $0x54] sm:$0xf] %v7055
      %7088 = vst [vmem:[%s359 + $0x58] sm:$0xf] %v7056
      %7089 = vst [vmem:[%s359 + $0x5c] sm:$0xf] %v7057
      %7090 = vst [vmem:[%s359 + $0x60] sm:$0xf] %v7058
      %7091 = vst [vmem:[%s359 + $0x64] sm:$0xf] %v7059
      %7092 = vst [vmem:[%s359 + $0x68] sm:$0xf] %v7060
      %7093 = vst [vmem:[%s359 + $0x6c] sm:$0xf] %v7061
      %7094 = vst [vmem:[%s359 + $0x70] sm:$0xf] %v7062
      %7095 = vst [vmem:[%s359 + $0x74] sm:$0xf] %v7063
      %7096 = vst [vmem:[%s359 + $0x78] sm:$0xf] %v7064
      %7097 = vst [vmem:[%s359 + $0x7c] sm:$0xf] %v7065
      %p7098 = scmp.lt.s32.totalorder %s21, 1
      %s7099 = scalar_select %p7098, %s21, 1
      %s7100 = smul.addr %s7099, 32
      %s7101 = smul.addr %s7100, 4
      %s7102 = scalar_lea.vmem %s10, %s7101
      // Predicated region
      $region61: #{psp_fusion2.1} parent=59 // pred_check
        %p7103 = pneg %p254
      $region62: #{psp_fusion2.1} parent=59 // pred_check_branch
        %7105 = sbr.rel (%p7103) target = $region64
      $region63: #{psp_fusion2.1} parent=59 // pred_region
        _
      $region64: #{psp_fusion2.1} parent=59 // pred_fallthru
        _
    $region60: #{psp_fusion2.1} parent=5 // pred_fallthru
      _
    %p7106 = scmp.le.s32.totalorder 2, %s16
    // Predicated region
    $region65: #{psp_fusion2.1} parent=5 // pred_check
      %p7107 = pneg %p7106
    $region66: #{psp_fusion2.1} parent=5 // pred_check_branch
      %7109 = sbr.rel (%p7107) target = $region68
    $region67: #{psp_fusion2.1} parent=5 // pred_region
      %s7110 = ssub.s32 %s16, 2
      // Predicated region
      $region69: #{psp_fusion2.1} parent=67 // pred_check
        %p7111 = pneg %p260
      $region70: #{psp_fusion2.1} parent=67 // pred_check_branch
        %7113 = sbr.rel (%p7111) target = $region72
      $region71: #{psp_fusion2.1} parent=67 // pred_region
        %p7114 = scmp.lt.s32.totalorder %s22, 1
        %s7115 = scalar_select %p7114, %s22, 1
        %s7116 = smul.addr %s7115, 32
        %s7117 = smul.addr %s7116, 4
        %s7118 = scalar_lea.vmem %s10, %s7117
      $region72: #{psp_fusion2.1} parent=67 // pred_fallthru
        _
    $region68: #{psp_fusion2.1} parent=5 // pred_fallthru
      _
  $region6: #{psp_fusion2.1} parent=0 // loop_footer
    %s20 = sadd.s32 1, %s16
  $region7: #{psp_fusion2.1} parent=0 // loop_footer_branch
    %15 = sbr.rel target = $region3
  $region8: #{psp_fusion2.1} parent=0 // loop_exit
    _

</llo_original>
